<compile_context>
chip_gen: v7x
topology: tpu7x:2x2x1
jax: 0.10.0
libtpu: 0.0.40
codegen_flags: <defaults>
</compile_context>

<pallas_src>
import jax
import jax.numpy as jnp
from jax.experimental import pallas as pl
from jax.experimental.pallas import tpu as pltpu


STEM_CH = 32
HEAD_DIM = 1280
BN_EPS = 1e-3

FRAME_TILE_CAP = 64      # frames per encoder grid step (rows axis, "parallel")
SPATIAL_TILE_CAP = 32    # spatial positions per encoder grid step ("arbitrary")


def _pick_tile(total, cap, align=8):
    """Largest divisor of `total` that is <= cap and (multiple of `align` or == total)."""
    for cand in range(min(total, cap), 0, -1):
        if total % cand == 0 and (cand % align == 0 or cand == total):
            return cand
    return total


# ----------------------------------------------------------------------------
# Kernel 1: fused encoder
#   stem(conv3x3 via im2col)+BN+swish -> head(1x1)+BN+swish -> avg-pool
#   -> top Linear -> LSTM input projection (x @ W_ih + b_lstm)
# Grid: (frame_tiles, spatial_tiles).  Pool accumulates in VMEM scratch.
# ----------------------------------------------------------------------------
def encoder_forward(patches, params):
    BT, S, K9 = patches.shape
    NC = params["top_w"].shape[1]        # num_classes
    F4 = params["wih"].shape[1]          # 4 * num_classes
    FB = _pick_tile(BT, FRAME_TILE_CAP)
    SB = _pick_tile(S, SPATIAL_TILE_CAP)
    inv_s = 1.0 / float(S)

    def kernel(p_ref, sw_ref, ssc_ref, sbi_ref,
               hw_ref, hsc_ref, hbi_ref,
               tw_ref, tb_ref, wih_ref, lb_ref,
               o_ref, pool_acc):
        k = pl.program_id(1)

        @pl.when(k == 0)
        def _():
            pool_acc[...] = jnp.zeros_like(pool_acc)

        fb, sb, kc = p_ref.shape
        pat = p_ref[...].reshape(fb * sb, kc)                     # bf16 rows

        # stem conv (im2col matmul) + folded BN + swish (f32 epilogue)
        stem = jnp.dot(pat, sw_ref[...], preferred_element_type=jnp.float32)
        stem = stem * ssc_ref[...] + sbi_ref[...]
        stem = stem * jax.nn.sigmoid(stem)

        # head 1x1 conv + folded BN + swish; stem activation never leaves VMEM
        head = jnp.dot(stem.astype(jnp.bfloat16), hw_ref[...],
                       preferred_element_type=jnp.float32)
        head = head * hsc_ref[...] + hbi_ref[...]
        head = head * jax.nn.sigmoid(head)

        # global-average-pool: accumulate spatial sum per frame
        pool_acc[...] += head.reshape(fb, sb, HEAD_DIM).sum(axis=1)

        @pl.when(k == pl.num_programs(1) - 1)
        def _():
            pooled = pool_acc[...] * inv_s                        # (fb, 1280) f32
            # EfficientNet top Linear (include_top)
            feats = jnp.dot(pooled.astype(jnp.bfloat16), tw_ref[...],
                            preferred_element_type=jnp.float32) + tb_ref[...]
            # F.dropout(p=0.5) -> identity (inference)
            # hoisted LSTM input projection: gates_x = feats @ W_ih + (b_ih + b_hh)
            o_ref[...] = jnp.dot(feats.astype(jnp.bfloat16), wih_ref[...],
                                 preferred_element_type=jnp.float32) + lb_ref[...]

    return pl.pallas_call(
        kernel,
        out_shape=jax.ShapeDtypeStruct((BT, F4), jnp.float32),
        grid=(BT // FB, S // SB),
        in_specs=[
            pl.BlockSpec((FB, SB, K9), lambda i, k: (i, k, 0)),
            pl.BlockSpec((K9, STEM_CH), lambda i, k: (0, 0)),
            pl.BlockSpec((1, STEM_CH), lambda i, k: (0, 0)),
            pl.BlockSpec((1, STEM_CH), lambda i, k: (0, 0)),
            pl.BlockSpec((STEM_CH, HEAD_DIM), lambda i, k: (0, 0)),
            pl.BlockSpec((1, HEAD_DIM), lambda i, k: (0, 0)),
            pl.BlockSpec((1, HEAD_DIM), lambda i, k: (0, 0)),
            pl.BlockSpec((HEAD_DIM, NC), lambda i, k: (0, 0)),
            pl.BlockSpec((1, NC), lambda i, k: (0, 0)),
            pl.BlockSpec((NC, F4), lambda i, k: (0, 0)),
            pl.BlockSpec((1, F4), lambda i, k: (0, 0)),
        ],
        out_specs=pl.BlockSpec((FB, F4), lambda i, k: (i, 0)),
        scratch_shapes=[pltpu.VMEM((FB, HEAD_DIM), jnp.float32)],
        compiler_params=pltpu.CompilerParams(
            dimension_semantics=("parallel", "arbitrary")),
    )(patches,
      params["stem_w"], params["stem_scale"], params["stem_bias"],
      params["head_w"], params["head_scale"], params["head_bias"],
      params["top_w"], params["top_b"],
      params["wih"], params["lstm_b"])


# ----------------------------------------------------------------------------
# Kernel 2: LSTM recurrence + fc_speed + ReLU.
# Grid iterates the sequence axis (= B, PyTorch batch_first=False quirk).
# gates_x is precomputed; each step only does h @ W_hh (the sequential part).
# h/c persist in VMEM scratch.  lstm_out[:, -1, :] selects batch column T-1,
# so only that column's hidden state is pushed through fc_speed (VPU multiply
# + lane reduction) and written out — no (B, T, F) lstm_out in HBM.
# ----------------------------------------------------------------------------
def lstm_speed_forward(gates_x, params):
    B, T, F4 = gates_x.shape
    F = F4 // 4

    def kernel(gx_ref, whh_ref, spw_ref, spb_ref, o_ref, h_scr, c_scr):
        s = pl.program_id(0)

        @pl.when(s == 0)
        def _():
            h_scr[...] = jnp.zeros_like(h_scr)
            c_scr[...] = jnp.zeros_like(c_scr)

        gates = gx_ref[0] + jnp.dot(
            h_scr[...].astype(jnp.bfloat16), whh_ref[...],
            preferred_element_type=jnp.float32)            # (T, 4F), order i,f,g,o

        i_g = jax.nn.sigmoid(gates[:, 0 * F:1 * F])
        f_g = jax.nn.sigmoid(gates[:, 1 * F:2 * F])
        g_g = jnp.tanh(gates[:, 2 * F:3 * F])
        o_g = jax.nn.sigmoid(gates[:, 3 * F:4 * F])

        c_new = f_g * c_scr[...] + i_g * g_g
        h_new = o_g * jnp.tanh(c_new)
        c_scr[...] = c_new
        h_scr[...] = h_new

        # lstm_out[:, -1, :] == batch column T-1; F.dropout -> identity
        h_last = h_new[T - 1:T, :]                                     # (1, F)
        speed = jnp.sum(h_last * spw_ref[...], axis=-1, keepdims=True) \
            + spb_ref[...]                                             # (1, 1)
        o_ref[0] = jnp.maximum(speed, 0.0)

    return pl.pallas_call(
        kernel,
        out_shape=jax.ShapeDtypeStruct((B, 1, 1), jnp.float32),
        grid=(B,),
        in_specs=[
            pl.BlockSpec((1, T, F4), lambda s: (s, 0, 0)),
            pl.BlockSpec((F, F4), lambda s: (0, 0)),
            pl.BlockSpec((1, F), lambda s: (0, 0)),
            pl.BlockSpec((1, 1), lambda s: (0, 0)),
        ],
        out_specs=pl.BlockSpec((1, 1, 1), lambda s: (s, 0, 0)),
        scratch_shapes=[
            pltpu.VMEM((T, F), jnp.float32),   # h
            pltpu.VMEM((T, F), jnp.float32),   # c
        ],
        compiler_params=pltpu.CompilerParams(
            dimension_semantics=("arbitrary",)),
    )(gates_x, params["whh"], params["speed_w"], params["speed_b"])


# ----------------------------------------------------------------------------
# Glue: im2col patch extraction for the stem conv (k=3, stride=2,
# EfficientNet static-same asymmetric padding).  Pure layout work.
# ----------------------------------------------------------------------------
def im2col_same_s2(x_nhwc, k=3, s=2):
    N, H, W, C = x_nhwc.shape
    OH = -(-H // s)
    OW = -(-W // s)
    pad_h = max((OH - 1) * s + k - H, 0)
    pad_w = max((OW - 1) * s + k - W, 0)
    xp = jnp.pad(
        x_nhwc,
        ((0, 0),
         (pad_h // 2, pad_h - pad_h // 2),
         (pad_w // 2, pad_w - pad_w // 2),
         (0, 0)),
    )
    patches = []
    for kh in range(k):
        for kw in range(k):
            patches.append(xp[:, kh:kh + s * OH:s, kw:kw + s * OW:s, :])
    patches = jnp.concatenate(patches, axis=-1)          # (N, OH, OW, k*k*C)
    return patches.reshape(N, OH * OW, k * k * C), (OH, OW)


# ----------------------------------------------------------------------------
# Deterministic parameter construction (synthetic weights, bf16 matmul operands)
# ----------------------------------------------------------------------------
def _bn_fold(key, n):
    k1, k2, k3 = jax.random.split(key, 3)
    gamma = 1.0 + 0.01 * jax.random.normal(k1, (n,), jnp.float32)
    beta = 0.01 * jax.random.normal(k2, (n,), jnp.float32)
    mean = 0.01 * jax.random.normal(k3, (n,), jnp.float32)
    var = jnp.ones((n,), jnp.float32)
    scale = gamma / jnp.sqrt(var + BN_EPS)
    bias = beta - mean * scale
    return scale.reshape(1, n), bias.reshape(1, n)


def init_params(key, in_ch, num_classes):
    ks = jax.random.split(key, 12)

    def nrm(k, shape, scale=0.05):
        return scale * jax.random.normal(k, shape, jnp.float32)

    bf = lambda a: a.astype(jnp.bfloat16)

    # stem conv: PyTorch weight (32, C, 3, 3) -> im2col matmul weight (9C, 32)
    w_stem = nrm(ks[0], (STEM_CH, in_ch, 3, 3))
    stem_w = jnp.transpose(w_stem, (2, 3, 1, 0)).reshape(9 * in_ch, STEM_CH)
    stem_scale, stem_bias = _bn_fold(ks[1], STEM_CH)

    # head 1x1 conv: (HEAD, 32) -> (32, HEAD)
    head_w = jnp.transpose(nrm(ks[2], (HEAD_DIM, STEM_CH)), (1, 0))
    head_scale, head_bias = _bn_fold(ks[3], HEAD_DIM)

    # EfficientNet top Linear(HEAD, num_classes)
    top_w = jnp.transpose(nrm(ks[4], (num_classes, HEAD_DIM)), (1, 0))
    top_b = nrm(ks[5], (1, num_classes))

    # LSTM(num_classes, num_classes): PyTorch (4F, F) weights, gate order i,f,g,o
    wih = jnp.transpose(nrm(ks[6], (4 * num_classes, num_classes)), (1, 0))
    whh = jnp.transpose(nrm(ks[7], (4 * num_classes, num_classes)), (1, 0))
    lstm_b = (nrm(ks[8], (4 * num_classes,))
              + nrm(ks[9], (4 * num_classes,))).reshape(1, 4 * num_classes)

    # fc_speed: Linear(num_classes, 1) — kept as a row vector for lane reduce
    speed_w = nrm(ks[10], (1, num_classes))
    speed_b = nrm(ks[11], (1, 1))

    return dict(
        stem_w=bf(stem_w), stem_scale=stem_scale, stem_bias=stem_bias,
        head_w=bf(head_w), head_scale=head_scale, head_bias=head_bias,
        top_w=bf(top_w), top_b=top_b,
        wih=bf(wih), whh=bf(whh), lstm_b=lstm_b,
        speed_w=speed_w, speed_b=speed_b,
    )


# ----------------------------------------------------------------------------
# Full forward: fused EfficientNet encoder per frame -> LSTM -> fc_speed+ReLU
# ----------------------------------------------------------------------------
def forward(x, params, num_classes):
    B, T, C, H, W = x.shape

    # frames: unbind over T + encoder per frame  ==  run encoder on B*T frames
    frames = x.reshape(B * T, C, H, W).transpose(0, 2, 3, 1)   # NCHW -> NHWC
    patches, _ = im2col_same_s2(frames, k=3, s=2)              # (B*T, S, 9C)
    patches = patches.astype(jnp.bfloat16)                     # bf16 HBM traffic

    # fused: stem -> head -> pool -> top Linear -> LSTM input projection
    # TODO(synk): EfficientNet-B0 MBConv block stack is not implemented
    #             between stem and head.
    gates_x = encoder_forward(patches, params)                 # (B*T, 4F) f32

    # stack over T then permute(1, 0, 2): seq axis = B, batch axis = T
    gates_x = gates_x.reshape(B, T, 4 * num_classes)

    # LSTM recurrence + lstm_out[:, -1, :] + fc_speed + ReLU (fused epilogue)
    out_speed = lstm_speed_forward(gates_x, params)            # (B, 1, 1)
    return out_speed.reshape(B, 1)


if __name__ == "__main__":
    B, T, C, H, W = 2, 4, 4, 16, 16
    NUM_CLASSES = 128          # num_classes hyperparameter (1024 in default ctor)

    key = jax.random.PRNGKey(0)
    x = jax.random.normal(key, (B, T, C, H, W), jnp.float32)
    params = init_params(jax.random.PRNGKey(1), C, NUM_CLASSES)

    out = forward(x, params, NUM_CLASSES)
    out = jax.block_until_ready(out)

    assert out.shape == (B, 1), out.shape
    assert bool(jnp.all(jnp.isfinite(out)))
    assert bool(jnp.all(out >= 0.0))          # ReLU output
    print("KERNEL_OK")
</pallas_src>

<mosaic_0001>
module attributes {stable_mosaic.version = 11 : i64} {
  func.func @kernel(%arg0: i32, %arg1: i32, %arg2: memref<8x32x36xbf16, #tpu.memory_space<vmem>>, %arg3: memref<36x32xbf16, #tpu.memory_space<vmem>>, %arg4: memref<1x32xf32, #tpu.memory_space<vmem>>, %arg5: memref<1x32xf32, #tpu.memory_space<vmem>>, %arg6: memref<32x1280xbf16, #tpu.memory_space<vmem>>, %arg7: memref<1x1280xf32, #tpu.memory_space<vmem>>, %arg8: memref<1x1280xf32, #tpu.memory_space<vmem>>, %arg9: memref<1280x128xbf16, #tpu.memory_space<vmem>>, %arg10: memref<1x128xf32, #tpu.memory_space<vmem>>, %arg11: memref<128x512xbf16, #tpu.memory_space<vmem>>, %arg12: memref<1x512xf32, #tpu.memory_space<vmem>>, %arg13: memref<8x512xf32, #tpu.memory_space<vmem>>, %arg14: memref<8x1280xf32, #tpu.memory_space<vmem>>) attributes {dimension_semantics = [#tpu.dimension_semantics<parallel>, #tpu.dimension_semantics<arbitrary>], iteration_bounds = array<i64: 1, 2>, scalar_prefetch = 0 : i64, scratch_operands = 1 : i64, tpu.core_type = #tpu.core_type<tc>, window_params = [{transform_indices = @transform_0, window_bounds = array<i64: 8, 32, 36>}, {pipeline_mode = #tpu.pipeline_mode<synchronous>, transform_indices = @transform_1, window_bounds = array<i64: 36, 32>}, {pipeline_mode = #tpu.pipeline_mode<synchronous>, transform_indices = @transform_2, window_bounds = array<i64: 1, 32>}, {pipeline_mode = #tpu.pipeline_mode<synchronous>, transform_indices = @transform_3, window_bounds = array<i64: 1, 32>}, {pipeline_mode = #tpu.pipeline_mode<synchronous>, transform_indices = @transform_4, window_bounds = array<i64: 32, 1280>}, {pipeline_mode = #tpu.pipeline_mode<synchronous>, transform_indices = @transform_5, window_bounds = array<i64: 1, 1280>}, {pipeline_mode = #tpu.pipeline_mode<synchronous>, transform_indices = @transform_6, window_bounds = array<i64: 1, 1280>}, {pipeline_mode = #tpu.pipeline_mode<synchronous>, transform_indices = @transform_7, window_bounds = array<i64: 1280, 128>}, {pipeline_mode = #tpu.pipeline_mode<synchronous>, transform_indices = @transform_8, window_bounds = array<i64: 1, 128>}, {pipeline_mode = #tpu.pipeline_mode<synchronous>, transform_indices = @transform_9, window_bounds = array<i64: 128, 512>}, {pipeline_mode = #tpu.pipeline_mode<synchronous>, transform_indices = @transform_10, window_bounds = array<i64: 1, 512>}, {transform_indices = @transform_11, window_bounds = array<i64: 8, 512>}]} {
    %c0_i32 = arith.constant 0 : i32
    %0 = arith.cmpi eq, %arg1, %c0_i32 : i32
    %1 = arith.extui %0 : i1 to i32
    %c0_i32_0 = arith.constant 0 : i32
    %2 = arith.cmpi ne, %1, %c0_i32_0 : i32
    scf.if %2 {
      %cst_24 = arith.constant 0.000000e+00 : f32
      %42 = vector.broadcast %cst_24 : f32 to vector<8x1280xf32>
      %c0_25 = arith.constant 0 : index
      %c0_26 = arith.constant 0 : index
      %43 = vector.load %arg14[%c0_25, %c0_26] : memref<8x1280xf32, #tpu.memory_space<vmem>>, vector<8x1280xf32>
      tpu.vector_store %arg14[%c0_25, %c0_26], %42 {strides = array<i32>} : memref<8x1280xf32, #tpu.memory_space<vmem>>, vector<8x1280xf32>,
    } else {
    }
    %c0 = arith.constant 0 : index
    %c0_1 = arith.constant 0 : index
    %c0_2 = arith.constant 0 : index
    %3 = vector.load %arg2[%c0, %c0_1, %c0_2] : memref<8x32x36xbf16, #tpu.memory_space<vmem>>, vector<8x32x36xbf16>
    %4 = vector.shape_cast %3 : vector<8x32x36xbf16> to vector<256x36xbf16>
    %c0_3 = arith.constant 0 : index
    %c0_4 = arith.constant 0 : index
    %5 = vector.load %arg3[%c0_3, %c0_4] : memref<36x32xbf16, #tpu.memory_space<vmem>>, vector<36x32xbf16>
    %cst = arith.constant dense<0.000000e+00> : vector<256x32xf32>
    %6 = tpu.matmul %4, %5, %cst {dimension_numbers = #tpu.dot_dimension_numbers<[1], [0], [0], [1], [0, 0, 1, 1], [], []>} : vector<256x36xbf16>, vector<36x32xbf16>, vector<256x32xf32> -> vector<256x32xf32>
    %c0_5 = arith.constant 0 : index
    %c0_6 = arith.constant 0 : index
    %7 = vector.load %arg4[%c0_5, %c0_6] : memref<1x32xf32, #tpu.memory_space<vmem>>, vector<1x32xf32>
    %8 = vector.broadcast %7 : vector<1x32xf32> to vector<256x32xf32>
    %9 = arith.mulf %6, %8 : vector<256x32xf32>
    %c0_7 = arith.constant 0 : index
    %c0_8 = arith.constant 0 : index
    %10 = vector.load %arg5[%c0_7, %c0_8] : memref<1x32xf32, #tpu.memory_space<vmem>>, vector<1x32xf32>
    %11 = vector.broadcast %10 : vector<1x32xf32> to vector<256x32xf32>
    %12 = arith.addf %9, %11 : vector<256x32xf32>
    %13 = arith.negf %12 : vector<256x32xf32>
    %14 = math.exp %13 : vector<256x32xf32>
    %cst_9 = arith.constant 1.000000e+00 : f32
    %15 = vector.broadcast %cst_9 : f32 to vector<256x32xf32>
    %16 = arith.addf %15, %14 : vector<256x32xf32>
    %17 = arith.divf %15, %16 : vector<256x32xf32>
    %18 = arith.mulf %12, %17 : vector<256x32xf32>
    %19 = arith.truncf %18 : vector<256x32xf32> to vector<256x32xbf16>
    %c0_10 = arith.constant 0 : index
    %c0_11 = arith.constant 0 : index
    %20 = vector.load %arg6[%c0_10, %c0_11] : memref<32x1280xbf16, #tpu.memory_space<vmem>>, vector<32x1280xbf16>
    %cst_12 = arith.constant dense<0.000000e+00> : vector<256x1280xf32>
    %21 = tpu.matmul %19, %20, %cst_12 {dimension_numbers = #tpu.dot_dimension_numbers<[1], [0], [0], [1], [0, 0, 1, 1], [], []>} : vector<256x32xbf16>, vector<32x1280xbf16>, vector<256x1280xf32> -> vector<256x1280xf32>
    %c0_13 = arith.constant 0 : index
    %c0_14 = arith.constant 0 : index
    %22 = vector.load %arg7[%c0_13, %c0_14] : memref<1x1280xf32, #tpu.memory_space<vmem>>, vector<1x1280xf32>
    %23 = vector.broadcast %22 : vector<1x1280xf32> to vector<256x1280xf32>
    %24 = arith.mulf %21, %23 : vector<256x1280xf32>
    %c0_15 = arith.constant 0 : index
    %c0_16 = arith.constant 0 : index
    %25 = vector.load %arg8[%c0_15, %c0_16] : memref<1x1280xf32, #tpu.memory_space<vmem>>, vector<1x1280xf32>
    %26 = vector.broadcast %25 : vector<1x1280xf32> to vector<256x1280xf32>
    %27 = arith.addf %24, %26 : vector<256x1280xf32>
    %28 = arith.negf %27 : vector<256x1280xf32>
    %29 = math.exp %28 : vector<256x1280xf32>
    %cst_17 = arith.constant 1.000000e+00 : f32
    %30 = vector.broadcast %cst_17 : f32 to vector<256x1280xf32>
    %31 = arith.addf %30, %29 : vector<256x1280xf32>
    %32 = arith.divf %30, %31 : vector<256x1280xf32>
    %33 = arith.mulf %27, %32 : vector<256x1280xf32>
    %c0_18 = arith.constant 0 : index
    %c0_19 = arith.constant 0 : index
    %34 = vector.load %arg14[%c0_18, %c0_19] : memref<8x1280xf32, #tpu.memory_space<vmem>>, vector<8x1280xf32>
    %35 = vector.shape_cast %33 : vector<256x1280xf32> to vector<8x32x1280xf32>
    %cst_20 = arith.constant dense<0.000000e+00> : vector<8x1280xf32>
    %36 = vector.multi_reduction <add>, %35, %cst_20 [1] : vector<8x32x1280xf32> to vector<8x1280xf32>
    %37 = arith.addf %34, %36 : vector<8x1280xf32>
    %c0_21 = arith.constant 0 : index
    %c0_22 = arith.constant 0 : index
    %38 = vector.load %arg14[%c0_21, %c0_22] : memref<8x1280xf32, #tpu.memory_space<vmem>>, vector<8x1280xf32>
    tpu.vector_store %arg14[%c0_21, %c0_22], %37 {strides = array<i32>} : memref<8x1280xf32, #tpu.memory_space<vmem>>, vector<8x1280xf32>,
    %c1_i32 = arith.constant 1 : i32
    %39 = arith.cmpi eq, %arg1, %c1_i32 : i32
    %40 = arith.extui %39 : i1 to i32
    %c0_i32_23 = arith.constant 0 : i32
    %41 = arith.cmpi ne, %40, %c0_i32_23 : i32
    scf.if %41 {
      %c0_24 = arith.constant 0 : index
      %c0_25 = arith.constant 0 : index
      %42 = vector.load %arg14[%c0_24, %c0_25] : memref<8x1280xf32, #tpu.memory_space<vmem>>, vector<8x1280xf32>
      %cst_26 = arith.constant 1.562500e-02 : f32
      %43 = vector.broadcast %cst_26 : f32 to vector<8x1280xf32>
      %44 = arith.mulf %42, %43 : vector<8x1280xf32>
      %45 = arith.truncf %44 : vector<8x1280xf32> to vector<8x1280xbf16>
      %c0_27 = arith.constant 0 : index
      %c0_28 = arith.constant 0 : index
      %46 = vector.load %arg9[%c0_27, %c0_28] : memref<1280x128xbf16, #tpu.memory_space<vmem>>, vector<1280x128xbf16>
      %cst_29 = arith.constant dense<0.000000e+00> : vector<8x128xf32>
      %47 = tpu.matmul %45, %46, %cst_29 {dimension_numbers = #tpu.dot_dimension_numbers<[1], [0], [0], [1], [0, 0, 1, 1], [], []>} : vector<8x1280xbf16>, vector<1280x128xbf16>, vector<8x128xf32> -> vector<8x128xf32>
      %c0_30 = arith.constant 0 : index
      %c0_31 = arith.constant 0 : index
      %48 = vector.load %arg10[%c0_30, %c0_31] : memref<1x128xf32, #tpu.memory_space<vmem>>, vector<1x128xf32>
      %49 = vector.broadcast %48 : vector<1x128xf32> to vector<8x128xf32>
      %50 = arith.addf %47, %49 : vector<8x128xf32>
      %51 = arith.truncf %50 : vector<8x128xf32> to vector<8x128xbf16>
      %c0_32 = arith.constant 0 : index
      %c0_33 = arith.constant 0 : index
      %52 = vector.load %arg11[%c0_32, %c0_33] : memref<128x512xbf16, #tpu.memory_space<vmem>>, vector<128x512xbf16>
      %cst_34 = arith.constant dense<0.000000e+00> : vector<8x512xf32>
      %53 = tpu.matmul %51, %52, %cst_34 {dimension_numbers = #tpu.dot_dimension_numbers<[1], [0], [0], [1], [0, 0, 1, 1], [], []>} : vector<8x128xbf16>, vector<128x512xbf16>, vector<8x512xf32> -> vector<8x512xf32>
      %c0_35 = arith.constant 0 : index
      %c0_36 = arith.constant 0 : index
      %54 = vector.load %arg12[%c0_35, %c0_36] : memref<1x512xf32, #tpu.memory_space<vmem>>, vector<1x512xf32>
      %55 = vector.broadcast %54 : vector<1x512xf32> to vector<8x512xf32>
      %56 = arith.addf %53, %55 : vector<8x512xf32>
      %c0_37 = arith.constant 0 : index
      %c0_38 = arith.constant 0 : index
      %57 = vector.load %arg13[%c0_37, %c0_38] : memref<8x512xf32, #tpu.memory_space<vmem>>, vector<8x512xf32>
      tpu.vector_store %arg13[%c0_37, %c0_38], %56 {strides = array<i32>} : memref<8x512xf32, #tpu.memory_space<vmem>>, vector<8x512xf32>,
    } else {
    }
    return
  }
  func.func @transform_0(%arg0: i32, %arg1: i32) -> (i32, i32, i32) {
    %c0_i32 = arith.constant 0 : i32
    %c0_i32_0 = arith.constant 0 : i32
    return %arg0, %arg1, %c0_i32 : i32, i32, i32
  }
  func.func @transform_1(%arg0: i32, %arg1: i32) -> (i32, i32) {
    %c0_i32 = arith.constant 0 : i32
    %c0_i32_0 = arith.constant 0 : i32
    %c0_i32_1 = arith.constant 0 : i32
    return %c0_i32, %c0_i32_0 : i32, i32
  }
  func.func @transform_2(%arg0: i32, %arg1: i32) -> (i32, i32) {
    %c0_i32 = arith.constant 0 : i32
    %c0_i32_0 = arith.constant 0 : i32
    %c0_i32_1 = arith.constant 0 : i32
    return %c0_i32, %c0_i32_0 : i32, i32
  }
  func.func @transform_3(%arg0: i32, %arg1: i32) -> (i32, i32) {
    %c0_i32 = arith.constant 0 : i32
    %c0_i32_0 = arith.constant 0 : i32
    %c0_i32_1 = arith.constant 0 : i32
    return %c0_i32, %c0_i32_0 : i32, i32
  }
  func.func @transform_4(%arg0: i32, %arg1: i32) -> (i32, i32) {
    %c0_i32 = arith.constant 0 : i32
    %c0_i32_0 = arith.constant 0 : i32
    %c0_i32_1 = arith.constant 0 : i32
    return %c0_i32, %c0_i32_0 : i32, i32
  }
  func.func @transform_5(%arg0: i32, %arg1: i32) -> (i32, i32) {
    %c0_i32 = arith.constant 0 : i32
    %c0_i32_0 = arith.constant 0 : i32
    %c0_i32_1 = arith.constant 0 : i32
    return %c0_i32, %c0_i32_0 : i32, i32
  }
  func.func @transform_6(%arg0: i32, %arg1: i32) -> (i32, i32) {
    %c0_i32 = arith.constant 0 : i32
    %c0_i32_0 = arith.constant 0 : i32
    %c0_i32_1 = arith.constant 0 : i32
    return %c0_i32, %c0_i32_0 : i32, i32
  }
  func.func @transform_7(%arg0: i32, %arg1: i32) -> (i32, i32) {
    %c0_i32 = arith.constant 0 : i32
    %c0_i32_0 = arith.constant 0 : i32
    %c0_i32_1 = arith.constant 0 : i32
    return %c0_i32, %c0_i32_0 : i32, i32
  }
  func.func @transform_8(%arg0: i32, %arg1: i32) -> (i32, i32) {
    %c0_i32 = arith.constant 0 : i32
    %c0_i32_0 = arith.constant 0 : i32
    %c0_i32_1 = arith.constant 0 : i32
    return %c0_i32, %c0_i32_0 : i32, i32
  }
  func.func @transform_9(%arg0: i32, %arg1: i32) -> (i32, i32) {
    %c0_i32 = arith.constant 0 : i32
    %c0_i32_0 = arith.constant 0 : i32
    %c0_i32_1 = arith.constant 0 : i32
    return %c0_i32, %c0_i32_0 : i32, i32
  }
  func.func @transform_10(%arg0: i32, %arg1: i32) -> (i32, i32) {
    %c0_i32 = arith.constant 0 : i32
    %c0_i32_0 = arith.constant 0 : i32
    %c0_i32_1 = arith.constant 0 : i32
    return %c0_i32, %c0_i32_0 : i32, i32
  }
  func.func @transform_11(%arg0: i32, %arg1: i32) -> (i32, i32) {
    %c0_i32 = arith.constant 0 : i32
    %c0_i32_0 = arith.constant 0 : i32
    return %arg0, %c0_i32 : i32, i32
  }
}

</mosaic_0001>

<llo_original>
// kernel: tpu_custom_call.1
$region0: #{tpu_custom_call.1}
  #allocation0 [shape = 'u32[]', space=smem, size = 0x4, offset = 0x4, fixed_abs, tag = 'smem constant byte address 0x4 - core index']
  #allocation1 [shape = 'u32[144,128]{1,0:T(1,128)}', space=vmem, size = 0x12000, scoped, tag = 'internal scratch']
  #allocation2 [shape = 'f32[8,1280]{1,0:T(8,128)}', space=vmem, size = 0xa000, scoped, tag = 'scratch operand']
  %s0 = inlined_call_operand.vmem [shape: bf16[8,64,36], index: 0, kind: input, shape index: {}]
  %s1 = inlined_call_operand.vmem [shape: bf16[36,32], index: 1, kind: input, shape index: {}]
  %s2 = inlined_call_operand.vmem [shape: f32[1,32], index: 2, kind: input, shape index: {}]
  %s3 = inlined_call_operand.vmem [shape: f32[1,32], index: 3, kind: input, shape index: {}]
  %s4 = inlined_call_operand.vmem [shape: bf16[32,1280], index: 4, kind: input, shape index: {}]
  %s5 = inlined_call_operand.vmem [shape: f32[1,1280], index: 5, kind: input, shape index: {}]
  %s6 = inlined_call_operand.vmem [shape: f32[1,1280], index: 6, kind: input, shape index: {}]
  %s7 = inlined_call_operand.hbm [shape: bf16[1280,128], index: 7, kind: input, shape index: {}]
  %s8 = inlined_call_operand.vmem [shape: f32[1,128], index: 8, kind: input, shape index: {}]
  %s9 = inlined_call_operand.vmem [shape: bf16[128,512], index: 9, kind: input, shape index: {}]
  %s10 = inlined_call_operand.vmem [shape: f32[1,512], index: 10, kind: input, shape index: {}]
  %s11 = inlined_call_operand.hbm [shape: f32[8,512], index: 11, kind: output, shape index: {}]
  %s12 = sld [smem:[#allocation0]]
  $region130: #{tpu_custom_call.1} parent=0
    _
  %s14 = ssub.s32 1, %s12
  %s15 = scalar_select 0, %s14, %s12
  $region1: #{tpu_custom_call.1} parent=0
    #allocation3 [shape = 'u8[131072]{0}', space=vmem, size = 0x20000, scoped, tag = 'input window, operand 0']
    #allocation4 [shape = 'u8[327680]{0}', space=vmem, size = 0x50000, scoped, tag = 'input window, operand 7, single buffered']
    #allocation5 [shape = 's32[2]{0}', space=sflag, size = 0x8, scoped, tag = 'scoped memory for tpu_custom_call.1']
    #allocation6 [shape = 's32[2]{0}', space=sflag, size = 0x8, scoped, tag = 'scoped memory for tpu_custom_call.1']
    #allocation7 [shape = 'u8[16384]{0}', space=vmem, size = 0x4000, scoped, tag = 'output window, operand 0, single buffered']
    %16 = vsyncpa [#allocation5], 0
    %17 = vsyncpa [#allocation6], 0
    loop: start=0, step=1, limit=4
    $region2: #{tpu_custom_call.1} parent=1 // loop_pre_header
      _
    $region3: #{tpu_custom_call.1} parent=1 // loop_header
      %s19 = sphi 0, %s23
      %p20 = scmp.ge.s32.totalorder %s19, 4
      %s26 = sphi 0, %s38
      %s27 = sphi 0, %s34
      %s28 = sphi 0, %s26
      %s29 = sphi 0, %s27
      %s30 = sphi 0, %s28
      %s31 = sphi 0, %s29
      %s43 = sphi 0, %s45
      %s46 = sphi 0, %s43
      %s47 = sphi 0, %s46
      %s63 = sphi 0, %s47
      %s67 = sphi 0, %s67
      %s69 = sphi 0, %s67
      %s70 = sphi 0, %s69
      %s84 = sphi 0, %s70
      %s88 = sphi 0, %s88
      %s90 = sphi 0, %s88
      %s91 = sphi 0, %s90
      %s105 = sphi 0, %s91
      %s109 = sphi 0, %s109
      %s111 = sphi 0, %s109
      %s112 = sphi 0, %s111
      %s126 = sphi 0, %s112
      %s130 = sphi 0, %s130
      %s132 = sphi 0, %s130
      %s133 = sphi 0, %s132
      %s147 = sphi 0, %s133
      %s151 = sphi 0, %s151
      %s153 = sphi 0, %s151
      %s154 = sphi 0, %s153
      %s168 = sphi 0, %s154
      %s172 = sphi 0, %s172
      %s174 = sphi 0, %s172
      %s175 = sphi 0, %s174
      %s189 = sphi 0, %s175
      %s193 = sphi 0, %s193
      %s195 = sphi 0, %s193
      %s196 = sphi 0, %s195
      %s210 = sphi 0, %s196
      %s214 = sphi 0, %s214
      %s216 = sphi 0, %s214
      %s217 = sphi 0, %s216
      %s231 = sphi 0, %s217
      %s235 = sphi 0, %s235
      %s237 = sphi 0, %s235
      %s238 = sphi 0, %s237
      %s252 = sphi 0, %s238
      %s256 = sphi 0, %s256
      %s258 = sphi 0, %s256
      %s259 = sphi 0, %s258
      %s273 = sphi 0, %s259
      %s279 = sphi 0, %s281
      %s282 = sphi 0, %s279
      %s283 = sphi 0, %s282
      %s299 = sphi 0, %s283
    $region4: #{tpu_custom_call.1} parent=1 // loop_header_branch
      %22 = sbr.rel (%p20) target = $region8
    $region5: #{tpu_custom_call.1} parent=1 // loop_body
      %s24 = ssub.s32 %s19, 1
      %s25 = ssub.s32 %s19, 2
      %s32 = sadd.s32 1, %s27
      %p33 = scmp.ge.s32.totalorder %s32, 2
      %s34 = scalar_select %p33, 0, %s32
      %s35 = sadd.s32 1, %s26
      %s36 = scalar_select %p33, %s35, %s26
      %p37 = scmp.ge.s32.totalorder %s36, 1
      %s38 = scalar_select %p37, 0, %s36
      %s39 = ssub.s32 %s26, %s38
      %s40 = ssub.s32 %s27, %s34
      %s41 = sor.u32 %s39, %s40
      %p42 = scmp.eq.s32.totalorder %s41, 0
      %s44 = sadd.s32 %s43, 1
      %s45 = scalar_select %p42, %s43, %s44
      %p48 = pneg %p42
      %p49 = scmp.eq.s32.totalorder %s19, 1
      %p50 = por %p48, %p49
      %p51 = scmp.ne.s32.totalorder %s43, %s46
      %p52 = scmp.eq.s32.totalorder %s19, 0
      %p53 = por %p51, %p52
      %p54 = scmp.ne.s32.totalorder %s43, %s46
      %p55 = scmp.eq.s32.totalorder %s24, 1
      %p56 = por %p54, %p55
      %p57 = scmp.ne.s32.totalorder %s46, %s47
      %p58 = scmp.eq.s32.totalorder %s24, 0
      %p59 = por %p57, %p58
      %p60 = scmp.ne.s32.totalorder %s46, %s47
      %p61 = scmp.eq.s32.totalorder %s25, 1
      %p62 = por %p60, %p61
      %p64 = scmp.ne.s32.totalorder %s47, %s63
      %p65 = scmp.eq.s32.totalorder %s25, 0
      %p66 = por %p64, %p65
      %s68 = sadd.s32 %s67, 1
      %p71 = scmp.eq.s32.totalorder %s19, 1
      %p72 = scmp.ne.s32.totalorder %s67, %s69
      %p73 = scmp.eq.s32.totalorder %s19, 0
      %p74 = por %p72, %p73
      %p75 = scmp.ne.s32.totalorder %s67, %s69
      %p76 = scmp.eq.s32.totalorder %s24, 1
      %p77 = por %p75, %p76
      %p78 = scmp.ne.s32.totalorder %s69, %s70
      %p79 = scmp.eq.s32.totalorder %s24, 0
      %p80 = por %p78, %p79
      %p81 = scmp.ne.s32.totalorder %s69, %s70
      %p82 = scmp.eq.s32.totalorder %s25, 1
      %p83 = por %p81, %p82
      %p85 = scmp.ne.s32.totalorder %s70, %s84
      %p86 = scmp.eq.s32.totalorder %s25, 0
      %p87 = por %p85, %p86
      %s89 = sadd.s32 %s88, 1
      %p92 = scmp.eq.s32.totalorder %s19, 1
      %p93 = scmp.ne.s32.totalorder %s88, %s90
      %p94 = scmp.eq.s32.totalorder %s19, 0
      %p95 = por %p93, %p94
      %p96 = scmp.ne.s32.totalorder %s88, %s90
      %p97 = scmp.eq.s32.totalorder %s24, 1
      %p98 = por %p96, %p97
      %p99 = scmp.ne.s32.totalorder %s90, %s91
      %p100 = scmp.eq.s32.totalorder %s24, 0
      %p101 = por %p99, %p100
      %p102 = scmp.ne.s32.totalorder %s90, %s91
      %p103 = scmp.eq.s32.totalorder %s25, 1
      %p104 = por %p102, %p103
      %p106 = scmp.ne.s32.totalorder %s91, %s105
      %p107 = scmp.eq.s32.totalorder %s25, 0
      %p108 = por %p106, %p107
      %s110 = sadd.s32 %s109, 1
      %p113 = scmp.eq.s32.totalorder %s19, 1
      %p114 = scmp.ne.s32.totalorder %s109, %s111
      %p115 = scmp.eq.s32.totalorder %s19, 0
      %p116 = por %p114, %p115
      %p117 = scmp.ne.s32.totalorder %s109, %s111
      %p118 = scmp.eq.s32.totalorder %s24, 1
      %p119 = por %p117, %p118
      %p120 = scmp.ne.s32.totalorder %s111, %s112
      %p121 = scmp.eq.s32.totalorder %s24, 0
      %p122 = por %p120, %p121
      %p123 = scmp.ne.s32.totalorder %s111, %s112
      %p124 = scmp.eq.s32.totalorder %s25, 1
      %p125 = por %p123, %p124
      %p127 = scmp.ne.s32.totalorder %s112, %s126
      %p128 = scmp.eq.s32.totalorder %s25, 0
      %p129 = por %p127, %p128
      %s131 = sadd.s32 %s130, 1
      %p134 = scmp.eq.s32.totalorder %s19, 1
      %p135 = scmp.ne.s32.totalorder %s130, %s132
      %p136 = scmp.eq.s32.totalorder %s19, 0
      %p137 = por %p135, %p136
      %p138 = scmp.ne.s32.totalorder %s130, %s132
      %p139 = scmp.eq.s32.totalorder %s24, 1
      %p140 = por %p138, %p139
      %p141 = scmp.ne.s32.totalorder %s132, %s133
      %p142 = scmp.eq.s32.totalorder %s24, 0
      %p143 = por %p141, %p142
      %p144 = scmp.ne.s32.totalorder %s132, %s133
      %p145 = scmp.eq.s32.totalorder %s25, 1
      %p146 = por %p144, %p145
      %p148 = scmp.ne.s32.totalorder %s133, %s147
      %p149 = scmp.eq.s32.totalorder %s25, 0
      %p150 = por %p148, %p149
      %s152 = sadd.s32 %s151, 1
      %p155 = scmp.eq.s32.totalorder %s19, 1
      %p156 = scmp.ne.s32.totalorder %s151, %s153
      %p157 = scmp.eq.s32.totalorder %s19, 0
      %p158 = por %p156, %p157
      %p159 = scmp.ne.s32.totalorder %s151, %s153
      %p160 = scmp.eq.s32.totalorder %s24, 1
      %p161 = por %p159, %p160
      %p162 = scmp.ne.s32.totalorder %s153, %s154
      %p163 = scmp.eq.s32.totalorder %s24, 0
      %p164 = por %p162, %p163
      %p165 = scmp.ne.s32.totalorder %s153, %s154
      %p166 = scmp.eq.s32.totalorder %s25, 1
      %p167 = por %p165, %p166
      %p169 = scmp.ne.s32.totalorder %s154, %s168
      %p170 = scmp.eq.s32.totalorder %s25, 0
      %p171 = por %p169, %p170
      %s173 = sadd.s32 %s172, 1
      %p176 = scmp.eq.s32.totalorder %s19, 1
      %p177 = scmp.ne.s32.totalorder %s172, %s174
      %p178 = scmp.eq.s32.totalorder %s19, 0
      %p179 = por %p177, %p178
      %p180 = scmp.ne.s32.totalorder %s172, %s174
      %p181 = scmp.eq.s32.totalorder %s24, 1
      %p182 = por %p180, %p181
      %p183 = scmp.ne.s32.totalorder %s174, %s175
      %p184 = scmp.eq.s32.totalorder %s24, 0
      %p185 = por %p183, %p184
      %p186 = scmp.ne.s32.totalorder %s174, %s175
      %p187 = scmp.eq.s32.totalorder %s25, 1
      %p188 = por %p186, %p187
      %p190 = scmp.ne.s32.totalorder %s175, %s189
      %p191 = scmp.eq.s32.totalorder %s25, 0
      %p192 = por %p190, %p191
      %s194 = sadd.s32 %s193, 1
      %p197 = scmp.eq.s32.totalorder %s19, 1
      %p198 = scmp.ne.s32.totalorder %s193, %s195
      %p199 = scmp.eq.s32.totalorder %s19, 0
      %p200 = por %p198, %p199
      %p201 = scmp.ne.s32.totalorder %s193, %s195
      %p202 = scmp.eq.s32.totalorder %s24, 1
      %p203 = por %p201, %p202
      %p204 = scmp.ne.s32.totalorder %s195, %s196
      %p205 = scmp.eq.s32.totalorder %s24, 0
      %p206 = por %p204, %p205
      %p207 = scmp.ne.s32.totalorder %s195, %s196
      %p208 = scmp.eq.s32.totalorder %s25, 1
      %p209 = por %p207, %p208
      %p211 = scmp.ne.s32.totalorder %s196, %s210
      %p212 = scmp.eq.s32.totalorder %s25, 0
      %p213 = por %p211, %p212
      %s215 = sadd.s32 %s214, 1
      %p218 = scmp.eq.s32.totalorder %s19, 1
      %p219 = scmp.ne.s32.totalorder %s214, %s216
      %p220 = scmp.eq.s32.totalorder %s19, 0
      %p221 = por %p219, %p220
      %p222 = scmp.ne.s32.totalorder %s214, %s216
      %p223 = scmp.eq.s32.totalorder %s24, 1
      %p224 = por %p222, %p223
      %p225 = scmp.ne.s32.totalorder %s216, %s217
      %p226 = scmp.eq.s32.totalorder %s24, 0
      %p227 = por %p225, %p226
      %p228 = scmp.ne.s32.totalorder %s216, %s217
      %p229 = scmp.eq.s32.totalorder %s25, 1
      %p230 = por %p228, %p229
      %p232 = scmp.ne.s32.totalorder %s217, %s231
      %p233 = scmp.eq.s32.totalorder %s25, 0
      %p234 = por %p232, %p233
      %s236 = sadd.s32 %s235, 1
      %p239 = scmp.eq.s32.totalorder %s19, 1
      %p240 = scmp.ne.s32.totalorder %s235, %s237
      %p241 = scmp.eq.s32.totalorder %s19, 0
      %p242 = por %p240, %p241
      %p243 = scmp.ne.s32.totalorder %s235, %s237
      %p244 = scmp.eq.s32.totalorder %s24, 1
      %p245 = por %p243, %p244
      %p246 = scmp.ne.s32.totalorder %s237, %s238
      %p247 = scmp.eq.s32.totalorder %s24, 0
      %p248 = por %p246, %p247
      %p249 = scmp.ne.s32.totalorder %s237, %s238
      %p250 = scmp.eq.s32.totalorder %s25, 1
      %p251 = por %p249, %p250
      %p253 = scmp.ne.s32.totalorder %s238, %s252
      %p254 = scmp.eq.s32.totalorder %s25, 0
      %p255 = por %p253, %p254
      %s257 = sadd.s32 %s256, 1
      %p260 = scmp.eq.s32.totalorder %s19, 1
      %p261 = scmp.ne.s32.totalorder %s256, %s258
      %p262 = scmp.eq.s32.totalorder %s19, 0
      %p263 = por %p261, %p262
      %p264 = scmp.ne.s32.totalorder %s256, %s258
      %p265 = scmp.eq.s32.totalorder %s24, 1
      %p266 = por %p264, %p265
      %p267 = scmp.ne.s32.totalorder %s258, %s259
      %p268 = scmp.eq.s32.totalorder %s24, 0
      %p269 = por %p267, %p268
      %p270 = scmp.ne.s32.totalorder %s258, %s259
      %p271 = scmp.eq.s32.totalorder %s25, 1
      %p272 = por %p270, %p271
      %p274 = scmp.ne.s32.totalorder %s259, %s273
      %p275 = scmp.eq.s32.totalorder %s25, 0
      %p276 = por %p274, %p275
      %s277 = ssub.s32 %s26, %s38
      %p278 = scmp.eq.s32.totalorder %s277, 0
      %s280 = sadd.s32 %s279, 1
      %s281 = scalar_select %p278, %s279, %s280
      %p284 = pneg %p278
      %p285 = scmp.eq.s32.totalorder %s19, 1
      %p286 = por %p284, %p285
      %p287 = scmp.ne.s32.totalorder %s279, %s282
      %p288 = scmp.eq.s32.totalorder %s19, 0
      %p289 = por %p287, %p288
      %p290 = scmp.ne.s32.totalorder %s279, %s282
      %p291 = scmp.eq.s32.totalorder %s24, 1
      %p292 = por %p290, %p291
      %p293 = scmp.ne.s32.totalorder %s282, %s283
      %p294 = scmp.eq.s32.totalorder %s24, 0
      %p295 = por %p293, %p294
      %p296 = scmp.ne.s32.totalorder %s282, %s283
      %p297 = scmp.eq.s32.totalorder %s25, 1
      %p298 = por %p296, %p297
      %p300 = scmp.ne.s32.totalorder %s283, %s299
      %p301 = scmp.eq.s32.totalorder %s25, 0
      %p302 = por %p300, %p301
      %p303 = scmp.le.s32.totalorder 1, %s19
      %p304 = scmp.lt.s32.totalorder %s19, 3
      %p305 = pnand %p303, %p304
      %p306 = pneg %p305
      // Predicated region
      $region9: #{tpu_custom_call.1} parent=5 // pred_check
        _
      $region10: #{tpu_custom_call.1} parent=5 // pred_check_branch
        %308 = sbr.rel (%p305) target = $region12
      $region11: #{tpu_custom_call.1} parent=5 // pred_region
        %s309 = ssub.s32 %s19, 1
        // Predicated region
        $region13: #{tpu_custom_call.1} parent=11 // pred_check
          %p310 = pneg %p80
        $region14: #{tpu_custom_call.1} parent=11 // pred_check_branch
          %312 = sbr.rel (%p310) target = $region16
        $region15: #{tpu_custom_call.1} parent=11 // pred_region
          _
        $region16: #{tpu_custom_call.1} parent=11 // pred_fallthru
          _
        // Predicated region
        $region17: #{tpu_custom_call.1} parent=11 // pred_check
          %p313 = pneg %p101
        $region18: #{tpu_custom_call.1} parent=11 // pred_check_branch
          %315 = sbr.rel (%p313) target = $region20
        $region19: #{tpu_custom_call.1} parent=11 // pred_region
          _
        $region20: #{tpu_custom_call.1} parent=11 // pred_fallthru
          _
        // Predicated region
        $region21: #{tpu_custom_call.1} parent=11 // pred_check
          %p316 = pneg %p122
        $region22: #{tpu_custom_call.1} parent=11 // pred_check_branch
          %318 = sbr.rel (%p316) target = $region24
        $region23: #{tpu_custom_call.1} parent=11 // pred_region
          _
        $region24: #{tpu_custom_call.1} parent=11 // pred_fallthru
          _
        // Predicated region
        $region25: #{tpu_custom_call.1} parent=11 // pred_check
          %p319 = pneg %p143
        $region26: #{tpu_custom_call.1} parent=11 // pred_check_branch
          %321 = sbr.rel (%p319) target = $region28
        $region27: #{tpu_custom_call.1} parent=11 // pred_region
          _
        $region28: #{tpu_custom_call.1} parent=11 // pred_fallthru
          _
        // Predicated region
        $region29: #{tpu_custom_call.1} parent=11 // pred_check
          %p322 = pneg %p164
        $region30: #{tpu_custom_call.1} parent=11 // pred_check_branch
          %324 = sbr.rel (%p322) target = $region32
        $region31: #{tpu_custom_call.1} parent=11 // pred_region
          _
        $region32: #{tpu_custom_call.1} parent=11 // pred_fallthru
          _
        // Predicated region
        $region33: #{tpu_custom_call.1} parent=11 // pred_check
          %p325 = pneg %p185
        $region34: #{tpu_custom_call.1} parent=11 // pred_check_branch
          %327 = sbr.rel (%p325) target = $region36
        $region35: #{tpu_custom_call.1} parent=11 // pred_region
          _
        $region36: #{tpu_custom_call.1} parent=11 // pred_fallthru
          _
        // Predicated region
        $region37: #{tpu_custom_call.1} parent=11 // pred_check
          %p328 = pneg %p206
        $region38: #{tpu_custom_call.1} parent=11 // pred_check_branch
          %330 = sbr.rel (%p328) target = $region40
        $region39: #{tpu_custom_call.1} parent=11 // pred_region
          %s332 = ssub.s32 10240, 10240
          %333 = vsyncadd [#allocation5], %s332
          %s334 = sshll.u32 [#allocation4], 4
          %s335 = int_to_ptr.vmem [resolvable:$true] %s334
          %340 = dma.hbm_to_vmem [thread:$0]  %s7, 10240, %s335, [#allocation5], 64, 64, 4
        $region40: #{tpu_custom_call.1} parent=11 // pred_fallthru
          _
        // Predicated region
        $region41: #{tpu_custom_call.1} parent=11 // pred_check
          %p341 = pneg %p227
        $region42: #{tpu_custom_call.1} parent=11 // pred_check_branch
          %343 = sbr.rel (%p341) target = $region44
        $region43: #{tpu_custom_call.1} parent=11 // pred_region
          _
        $region44: #{tpu_custom_call.1} parent=11 // pred_fallthru
          _
        // Predicated region
        $region45: #{tpu_custom_call.1} parent=11 // pred_check
          %p344 = pneg %p248
        $region46: #{tpu_custom_call.1} parent=11 // pred_check_branch
          %346 = sbr.rel (%p344) target = $region48
        $region47: #{tpu_custom_call.1} parent=11 // pred_region
          _
        $region48: #{tpu_custom_call.1} parent=11 // pred_fallthru
          _
        // Predicated region
        $region49: #{tpu_custom_call.1} parent=11 // pred_check
          %p347 = pneg %p269
        $region50: #{tpu_custom_call.1} parent=11 // pred_check_branch
          %349 = sbr.rel (%p347) target = $region52
        $region51: #{tpu_custom_call.1} parent=11 // pred_region
          _
        $region52: #{tpu_custom_call.1} parent=11 // pred_fallthru
          _
      $region12: #{tpu_custom_call.1} parent=5 // pred_fallthru
        _
      %p350 = scmp.lt.s32.totalorder %s19, 2
      // Predicated region
      $region53: #{tpu_custom_call.1} parent=5 // pred_check
        %p351 = pneg %p350
      $region54: #{tpu_custom_call.1} parent=5 // pred_check_branch
        %353 = sbr.rel (%p351) target = $region56
      $region55: #{tpu_custom_call.1} parent=5 // pred_region
        // Predicated region
        $region57: #{tpu_custom_call.1} parent=55 // pred_check
          %p354 = pneg %p53
        $region58: #{tpu_custom_call.1} parent=55 // pred_check_branch
          %356 = sbr.rel (%p354) target = $region60
        $region59: #{tpu_custom_call.1} parent=55 // pred_region
          %s357 = sand.u32 %s43, 1
          %s358 = sand.u32 %s43, 1
          %s359 = smul.addr %s358, 128
          %s360 = scalar_lea.vmem [#allocation3], %s359
          %s361 = smul.u32 8, %s26
          %s362 = smul.u32 4, %s27
          %s363 = smul.addr %s361, 8
          %s364 = sadd.s32 %s362, %s363
          %s365 = smul.addr %s364, 4
          %s366 = scalar_lea.vmem %s0, %s365
          // Predicated region
          $region61: #{tpu_custom_call.1} parent=59 // pred_check
            _
          $region62: #{tpu_custom_call.1} parent=59 // pred_check_branch
            %368 = sbr.rel (0) target = $region64
          $region63: #{tpu_custom_call.1} parent=59 // pred_region
            // Predicated region
            $region65: #{tpu_custom_call.1} parent=63 // pred_check
              _
            $region66: #{tpu_custom_call.1} parent=63 // pred_check_branch
              %370 = sbr.rel target = $region68
            $region67: #{tpu_custom_call.1} parent=63 // pred_region
              // Predicated region
              $region80: #{tpu_custom_call.1} parent=67 // pred_check
                _
              $region81: #{tpu_custom_call.1} parent=67 // pred_check_branch
                %447 = sbr.rel (0) target = $region83
              $region82: #{tpu_custom_call.1} parent=67 // pred_region
                loop: start=0, step=1, limit=1
                $region84: #{tpu_custom_call.1} parent=82 // loop_pre_header
                  _
                $region85: #{tpu_custom_call.1} parent=82 // loop_header
                  %s449 = sphi 0, %s453
                  %p450 = scmp.ge.s32.totalorder %s449, 1
                  %s454 = sphi %s366, %s366
                  %s455 = sphi %s360, %s360
                $region86: #{tpu_custom_call.1} parent=82 // loop_header_branch
                  %452 = sbr.rel (%p450) target = $region90
                $region87: #{tpu_custom_call.1} parent=82 // loop_body
                  _
                $region88: #{tpu_custom_call.1} parent=82 // loop_footer
                  %s453 = sadd.s32 1, %s449
                $region89: #{tpu_custom_call.1} parent=82 // loop_footer_branch
                  %448 = sbr.rel target = $region85
                $region90: #{tpu_custom_call.1} parent=82 // loop_exit
                  _
                loop: start=0, step=1, limit=1
                $region91: #{tpu_custom_call.1} parent=82 // loop_pre_header
                  _
                $region92: #{tpu_custom_call.1} parent=82 // loop_header
                  %s458 = sphi 0, %s462
                  %p459 = scmp.ge.s32.totalorder %s458, 1
                  %s463 = sphi %s366, %s366
                  %s464 = sphi %s360, %s360
                $region93: #{tpu_custom_call.1} parent=82 // loop_header_branch
                  %461 = sbr.rel (%p459) target = $region97
                $region94: #{tpu_custom_call.1} parent=82 // loop_body
                  %v465 = vld [vmem:[%s463] sm:$0xf]
                  %466 = vst [vmem:[%s464] sm:$0xf] %v465
                  %v467 = vld [vmem:[%s463 + $0x4] sm:$0xf]
                  %468 = vst [vmem:[%s464 + $0x4] sm:$0xf] %v467
                  %v469 = vld [vmem:[%s463 + $0x8] sm:$0xf]
                  %470 = vst [vmem:[%s464 + $0x8] sm:$0xf] %v469
                  %v471 = vld [vmem:[%s463 + $0xc] sm:$0xf]
                  %472 = vst [vmem:[%s464 + $0xc] sm:$0xf] %v471
                  %v473 = vld [vmem:[%s463 + $0x20] sm:$0xf]
                  %474 = vst [vmem:[%s464 + $0x10] sm:$0xf] %v473
                  %v475 = vld [vmem:[%s463 + $0x24] sm:$0xf]
                  %476 = vst [vmem:[%s464 + $0x14] sm:$0xf] %v475
                  %v477 = vld [vmem:[%s463 + $0x28] sm:$0xf]
                  %478 = vst [vmem:[%s464 + $0x18] sm:$0xf] %v477
                  %v479 = vld [vmem:[%s463 + $0x2c] sm:$0xf]
                  %480 = vst [vmem:[%s464 + $0x1c] sm:$0xf] %v479
                  %v481 = vld [vmem:[%s463 + $0x40] sm:$0xf]
                  %482 = vst [vmem:[%s464 + $0x20] sm:$0xf] %v481
                  %v483 = vld [vmem:[%s463 + $0x44] sm:$0xf]
                  %484 = vst [vmem:[%s464 + $0x24] sm:$0xf] %v483
                  %v485 = vld [vmem:[%s463 + $0x48] sm:$0xf]
                  %486 = vst [vmem:[%s464 + $0x28] sm:$0xf] %v485
                  %v487 = vld [vmem:[%s463 + $0x4c] sm:$0xf]
                  %488 = vst [vmem:[%s464 + $0x2c] sm:$0xf] %v487
                  %v489 = vld [vmem:[%s463 + $0x60] sm:$0xf]
                  %490 = vst [vmem:[%s464 + $0x30] sm:$0xf] %v489
                  %v491 = vld [vmem:[%s463 + $0x64] sm:$0xf]
                  %492 = vst [vmem:[%s464 + $0x34] sm:$0xf] %v491
                  %v493 = vld [vmem:[%s463 + $0x68] sm:$0xf]
                  %494 = vst [vmem:[%s464 + $0x38] sm:$0xf] %v493
                  %v495 = vld [vmem:[%s463 + $0x6c] sm:$0xf]
                  %496 = vst [vmem:[%s464 + $0x3c] sm:$0xf] %v495
                  %v497 = vld [vmem:[%s463 + $0x80] sm:$0xf]
                  %498 = vst [vmem:[%s464 + $0x40] sm:$0xf] %v497
                  %v499 = vld [vmem:[%s463 + $0x84] sm:$0xf]
                  %500 = vst [vmem:[%s464 + $0x44] sm:$0xf] %v499
                  %v501 = vld [vmem:[%s463 + $0x88] sm:$0xf]
                  %502 = vst [vmem:[%s464 + $0x48] sm:$0xf] %v501
                  %v503 = vld [vmem:[%s463 + $0x8c] sm:$0xf]
                  %504 = vst [vmem:[%s464 + $0x4c] sm:$0xf] %v503
                  %v505 = vld [vmem:[%s463 + $0xa0] sm:$0xf]
                  %506 = vst [vmem:[%s464 + $0x50] sm:$0xf] %v505
                  %v507 = vld [vmem:[%s463 + $0xa4] sm:$0xf]
                  %508 = vst [vmem:[%s464 + $0x54] sm:$0xf] %v507
                  %v509 = vld [vmem:[%s463 + $0xa8] sm:$0xf]
                  %510 = vst [vmem:[%s464 + $0x58] sm:$0xf] %v509
                  %v511 = vld [vmem:[%s463 + $0xac] sm:$0xf]
                  %512 = vst [vmem:[%s464 + $0x5c] sm:$0xf] %v511
                  %v513 = vld [vmem:[%s463 + $0xc0] sm:$0xf]
                  %514 = vst [vmem:[%s464 + $0x60] sm:$0xf] %v513
                  %v515 = vld [vmem:[%s463 + $0xc4] sm:$0xf]
                  %516 = vst [vmem:[%s464 + $0x64] sm:$0xf] %v515
                  %v517 = vld [vmem:[%s463 + $0xc8] sm:$0xf]
                  %518 = vst [vmem:[%s464 + $0x68] sm:$0xf] %v517
                  %v519 = vld [vmem:[%s463 + $0xcc] sm:$0xf]
                  %520 = vst [vmem:[%s464 + $0x6c] sm:$0xf] %v519
                  %v521 = vld [vmem:[%s463 + $0xe0] sm:$0xf]
                  %522 = vst [vmem:[%s464 + $0x70] sm:$0xf] %v521
                  %v523 = vld [vmem:[%s463 + $0xe4] sm:$0xf]
                  %524 = vst [vmem:[%s464 + $0x74] sm:$0xf] %v523
                  %v525 = vld [vmem:[%s463 + $0xe8] sm:$0xf]
                  %526 = vst [vmem:[%s464 + $0x78] sm:$0xf] %v525
                  %v527 = vld [vmem:[%s463 + $0xec] sm:$0xf]
                  %528 = vst [vmem:[%s464 + $0x7c] sm:$0xf] %v527
                $region95: #{tpu_custom_call.1} parent=82 // loop_footer
                  %s462 = sadd.s32 1, %s458
                $region96: #{tpu_custom_call.1} parent=82 // loop_footer_branch
                  %457 = sbr.rel target = $region92
                $region97: #{tpu_custom_call.1} parent=82 // loop_exit
                  _
              $region83: #{tpu_custom_call.1} parent=67 // pred_fallthru
                _
            $region68: #{tpu_custom_call.1} parent=63 // pred_fallthru
              _
            // Predicated region
            $region69: #{tpu_custom_call.1} parent=63 // pred_check
              _
            $region70: #{tpu_custom_call.1} parent=63 // pred_check_branch
              %372 = sbr.rel (0) target = $region72
            $region71: #{tpu_custom_call.1} parent=63 // pred_region
              loop: start=0, step=1, limit=1
              $region73: #{tpu_custom_call.1} parent=71 // loop_pre_header
                _
              $region74: #{tpu_custom_call.1} parent=71 // loop_header
                %s375 = sphi 0, %s379
                %p376 = scmp.ge.s32.totalorder %s375, 1
                %s380 = sphi %s366, %s366
                %s381 = sphi %s360, %s360
              $region75: #{tpu_custom_call.1} parent=71 // loop_header_branch
                %378 = sbr.rel (%p376) target = $region79
              $region76: #{tpu_custom_call.1} parent=71 // loop_body
                %v382 = vld [vmem:[%s380] sm:$0xf]
                %383 = vst [vmem:[%s381] sm:$0xf] %v382
                %v384 = vld [vmem:[%s380 + $0x4] sm:$0xf]
                %385 = vst [vmem:[%s381 + $0x4] sm:$0xf] %v384
                %v386 = vld [vmem:[%s380 + $0x8] sm:$0xf]
                %387 = vst [vmem:[%s381 + $0x8] sm:$0xf] %v386
                %v388 = vld [vmem:[%s380 + $0xc] sm:$0xf]
                %389 = vst [vmem:[%s381 + $0xc] sm:$0xf] %v388
                %v390 = vld [vmem:[%s380 + $0x20] sm:$0xf]
                %391 = vst [vmem:[%s381 + $0x10] sm:$0xf] %v390
                %v392 = vld [vmem:[%s380 + $0x24] sm:$0xf]
                %393 = vst [vmem:[%s381 + $0x14] sm:$0xf] %v392
                %v394 = vld [vmem:[%s380 + $0x28] sm:$0xf]
                %395 = vst [vmem:[%s381 + $0x18] sm:$0xf] %v394
                %v396 = vld [vmem:[%s380 + $0x2c] sm:$0xf]
                %397 = vst [vmem:[%s381 + $0x1c] sm:$0xf] %v396
                %v398 = vld [vmem:[%s380 + $0x40] sm:$0xf]
                %399 = vst [vmem:[%s381 + $0x20] sm:$0xf] %v398
                %v400 = vld [vmem:[%s380 + $0x44] sm:$0xf]
                %401 = vst [vmem:[%s381 + $0x24] sm:$0xf] %v400
                %v402 = vld [vmem:[%s380 + $0x48] sm:$0xf]
                %403 = vst [vmem:[%s381 + $0x28] sm:$0xf] %v402
                %v404 = vld [vmem:[%s380 + $0x4c] sm:$0xf]
                %405 = vst [vmem:[%s381 + $0x2c] sm:$0xf] %v404
                %v406 = vld [vmem:[%s380 + $0x60] sm:$0xf]
                %407 = vst [vmem:[%s381 + $0x30] sm:$0xf] %v406
                %v408 = vld [vmem:[%s380 + $0x64] sm:$0xf]
                %409 = vst [vmem:[%s381 + $0x34] sm:$0xf] %v408
                %v410 = vld [vmem:[%s380 + $0x68] sm:$0xf]
                %411 = vst [vmem:[%s381 + $0x38] sm:$0xf] %v410
                %v412 = vld [vmem:[%s380 + $0x6c] sm:$0xf]
                %413 = vst [vmem:[%s381 + $0x3c] sm:$0xf] %v412
                %v414 = vld [vmem:[%s380 + $0x80] sm:$0xf]
                %415 = vst [vmem:[%s381 + $0x40] sm:$0xf] %v414
                %v416 = vld [vmem:[%s380 + $0x84] sm:$0xf]
                %417 = vst [vmem:[%s381 + $0x44] sm:$0xf] %v416
                %v418 = vld [vmem:[%s380 + $0x88] sm:$0xf]
                %419 = vst [vmem:[%s381 + $0x48] sm:$0xf] %v418
                %v420 = vld [vmem:[%s380 + $0x8c] sm:$0xf]
                %421 = vst [vmem:[%s381 + $0x4c] sm:$0xf] %v420
                %v422 = vld [vmem:[%s380 + $0xa0] sm:$0xf]
                %423 = vst [vmem:[%s381 + $0x50] sm:$0xf] %v422
                %v424 = vld [vmem:[%s380 + $0xa4] sm:$0xf]
                %425 = vst [vmem:[%s381 + $0x54] sm:$0xf] %v424
                %v426 = vld [vmem:[%s380 + $0xa8] sm:$0xf]
                %427 = vst [vmem:[%s381 + $0x58] sm:$0xf] %v426
                %v428 = vld [vmem:[%s380 + $0xac] sm:$0xf]
                %429 = vst [vmem:[%s381 + $0x5c] sm:$0xf] %v428
                %v430 = vld [vmem:[%s380 + $0xc0] sm:$0xf]
                %431 = vst [vmem:[%s381 + $0x60] sm:$0xf] %v430
                %v432 = vld [vmem:[%s380 + $0xc4] sm:$0xf]
                %433 = vst [vmem:[%s381 + $0x64] sm:$0xf] %v432
                %v434 = vld [vmem:[%s380 + $0xc8] sm:$0xf]
                %435 = vst [vmem:[%s381 + $0x68] sm:$0xf] %v434
                %v436 = vld [vmem:[%s380 + $0xcc] sm:$0xf]
                %437 = vst [vmem:[%s381 + $0x6c] sm:$0xf] %v436
                %v438 = vld [vmem:[%s380 + $0xe0] sm:$0xf]
                %439 = vst [vmem:[%s381 + $0x70] sm:$0xf] %v438
                %v440 = vld [vmem:[%s380 + $0xe4] sm:$0xf]
                %441 = vst [vmem:[%s381 + $0x74] sm:$0xf] %v440
                %v442 = vld [vmem:[%s380 + $0xe8] sm:$0xf]
                %443 = vst [vmem:[%s381 + $0x78] sm:$0xf] %v442
                %v444 = vld [vmem:[%s380 + $0xec] sm:$0xf]
                %445 = vst [vmem:[%s381 + $0x7c] sm:$0xf] %v444
              $region77: #{tpu_custom_call.1} parent=71 // loop_footer
                %s379 = sadd.s32 1, %s375
              $region78: #{tpu_custom_call.1} parent=71 // loop_footer_branch
                %374 = sbr.rel target = $region74
              $region79: #{tpu_custom_call.1} parent=71 // loop_exit
                _
            $region72: #{tpu_custom_call.1} parent=63 // pred_fallthru
              _
          $region64: #{tpu_custom_call.1} parent=59 // pred_fallthru
            _
          %529 = vnop
        $region60: #{tpu_custom_call.1} parent=55 // pred_fallthru
          _
      $region56: #{tpu_custom_call.1} parent=5 // pred_fallthru
        _
      %p530 = scmp.le.s32.totalorder 1, %s19
      %p531 = scmp.lt.s32.totalorder %s19, 3
      %p532 = pnand %p530, %p531
      %p533 = pneg %p532
      // Predicated region
      $region98: #{tpu_custom_call.1} parent=5 // pred_check
        _
      $region99: #{tpu_custom_call.1} parent=5 // pred_check_branch
        %535 = sbr.rel (%p532) target = $region101
      $region100: #{tpu_custom_call.1} parent=5 // pred_region
        %s536 = ssub.s32 %s19, 1
        %s537 = sand.u32 %s46, 1
        %s538 = sand.u32 %s46, 1
        %s539 = smul.addr %s538, 128
        %s540 = scalar_lea.vmem [#allocation3], %s539
        // Predicated region
        $region102: #{tpu_custom_call.1} parent=100 // pred_check
          %p541 = pneg %p59
        $region103: #{tpu_custom_call.1} parent=100 // pred_check_branch
          %543 = sbr.rel (%p541) target = $region105
        $region104: #{tpu_custom_call.1} parent=100 // pred_region
          _
        $region105: #{tpu_custom_call.1} parent=100 // pred_fallthru
          _
        // Predicated region
        $region106: #{tpu_custom_call.1} parent=100 // pred_check
          %p544 = pneg %p206
        $region107: #{tpu_custom_call.1} parent=100 // pred_check_branch
          %546 = sbr.rel (%p544) target = $region109
        $region108: #{tpu_custom_call.1} parent=100 // pred_region
          %547 = dma.done [#allocation5], 10240
        $region109: #{tpu_custom_call.1} parent=100 // pred_fallthru
          _
        %s548 = sand.u32 %s46, 1
        %s549 = sand.u32 %s46, 1
        %s550 = smul.addr %s549, 128
        %s551 = scalar_lea.vmem [#allocation3], %s550
        %p552 = pneg %p59
        %p553 = pneg %p56
        %p554 = pneg %p80
        %p555 = pneg %p77
        %p556 = pneg %p101
        %p557 = pneg %p98
        %p558 = pneg %p122
        %p559 = pneg %p119
        %p560 = pneg %p143
        %p561 = pneg %p140
        %p562 = pneg %p164
        %p563 = pneg %p161
        %p564 = pneg %p185
        %p565 = pneg %p182
        %p566 = pneg %p206
        %p567 = pneg %p203
        %p568 = pneg %p227
        %p569 = pneg %p224
        %p570 = pneg %p248
        %p571 = pneg %p245
        %p572 = pneg %p269
        %p573 = pneg %p266
        %p574 = pneg %p295
        %p575 = pneg %p292
        %s576 = smul.u32 8, %s28
        %s577 = smul.u32 4, %s29
        %p579 = scmp.eq.s32.totalorder %s29, 0
        // Predicated region
        $region110: #{tpu_custom_call.1} parent=100 // pred_check
          %p580 = pneg %p579
        $region111: #{tpu_custom_call.1} parent=100 // pred_check_branch
          %582 = sbr.rel (%p580) target = $region113
        $region112: #{tpu_custom_call.1} parent=100 // pred_region
          %583 = vst [vmem:[#allocation2] sm:$0xff] 0.0
          %584 = vst [vmem:[#allocation2 + $0x8] sm:$0xff] 0.0
          %585 = vst [vmem:[#allocation2 + $0x10] sm:$0xff] 0.0
          %586 = vst [vmem:[#allocation2 + $0x18] sm:$0xff] 0.0
          %587 = vst [vmem:[#allocation2 + $0x20] sm:$0xff] 0.0
          %588 = vst [vmem:[#allocation2 + $0x28] sm:$0xff] 0.0
          %589 = vst [vmem:[#allocation2 + $0x30] sm:$0xff] 0.0
          %590 = vst [vmem:[#allocation2 + $0x38] sm:$0xff] 0.0
          %591 = vst [vmem:[#allocation2 + $0x40] sm:$0xff] 0.0
          %592 = vst [vmem:[#allocation2 + $0x48] sm:$0xff] 0.0
        $region113: #{tpu_custom_call.1} parent=100 // pred_fallthru
          _
        %v593 = vld [vmem:[%s540] sm:$0xf]
        %v594 = vld [vmem:[%s540 + $0x4] sm:$0xf]
        %v595 = vld [vmem:[%s540 + $0x8] sm:$0xf]
        %v596 = vld [vmem:[%s540 + $0xc] sm:$0xf]
        %v597 = vld [vmem:[%s540 + $0x10] sm:$0xf]
        %v598 = vld [vmem:[%s540 + $0x14] sm:$0xf]
        %v599 = vld [vmem:[%s540 + $0x18] sm:$0xf]
        %v600 = vld [vmem:[%s540 + $0x1c] sm:$0xf]
        %v601 = vld [vmem:[%s540 + $0x20] sm:$0xf]
        %v602 = vld [vmem:[%s540 + $0x24] sm:$0xf]
        %v603 = vld [vmem:[%s540 + $0x28] sm:$0xf]
        %v604 = vld [vmem:[%s540 + $0x2c] sm:$0xf]
        %v605 = vld [vmem:[%s540 + $0x30] sm:$0xf]
        %v606 = vld [vmem:[%s540 + $0x34] sm:$0xf]
        %v607 = vld [vmem:[%s540 + $0x38] sm:$0xf]
        %v608 = vld [vmem:[%s540 + $0x3c] sm:$0xf]
        %v609 = vld [vmem:[%s540 + $0x40] sm:$0xf]
        %v610 = vld [vmem:[%s540 + $0x44] sm:$0xf]
        %v611 = vld [vmem:[%s540 + $0x48] sm:$0xf]
        %v612 = vld [vmem:[%s540 + $0x4c] sm:$0xf]
        %v613 = vld [vmem:[%s540 + $0x50] sm:$0xf]
        %v614 = vld [vmem:[%s540 + $0x54] sm:$0xf]
        %v615 = vld [vmem:[%s540 + $0x58] sm:$0xf]
        %v616 = vld [vmem:[%s540 + $0x5c] sm:$0xf]
        %v617 = vld [vmem:[%s540 + $0x60] sm:$0xf]
        %v618 = vld [vmem:[%s540 + $0x64] sm:$0xf]
        %v619 = vld [vmem:[%s540 + $0x68] sm:$0xf]
        %v620 = vld [vmem:[%s540 + $0x6c] sm:$0xf]
        %v621 = vld [vmem:[%s540 + $0x70] sm:$0xf]
        %v622 = vld [vmem:[%s540 + $0x74] sm:$0xf]
        %v623 = vld [vmem:[%s540 + $0x78] sm:$0xf]
        %v624 = vld [vmem:[%s540 + $0x7c] sm:$0xf]
        %v625 = vld [vmem:[%s1] sm:$0xf]
        %v626 = vld [vmem:[%s1 + $0x4] sm:$0xf]
        %v627 = vld [vmem:[%s1 + $0x8] sm:$0xf]
        %v628 = vld [vmem:[%s1 + $0xc] sm:$0xf]
        %v629 = vld [vmem:[%s1 + $0x10] sm:$0x3]
        %v662 = vunpack.c.l.b16 %v593
        %v663 = vunpack.c.l.b16 %v594
        %v664 = vunpack.c.l.b16 %v595
        %v665 = vunpack.c.l.b16 %v596
        %v666 = vunpack.c.l.b16 %v597
        %v667 = vunpack.c.l.b16 %v598
        %v668 = vunpack.c.l.b16 %v599
        %v669 = vunpack.c.l.b16 %v600
        %v670 = vunpack.c.l.b16 %v601
        %v671 = vunpack.c.l.b16 %v602
        %v672 = vunpack.c.l.b16 %v603
        %v673 = vunpack.c.l.b16 %v604
        %v674 = vunpack.c.l.b16 %v605
        %v675 = vunpack.c.l.b16 %v606
        %v676 = vunpack.c.l.b16 %v607
        %v677 = vunpack.c.l.b16 %v608
        %v678 = vunpack.c.l.b16 %v609
        %v679 = vunpack.c.l.b16 %v610
        %v680 = vunpack.c.l.b16 %v611
        %v681 = vunpack.c.l.b16 %v612
        %v682 = vunpack.c.l.b16 %v613
        %v683 = vunpack.c.l.b16 %v614
        %v684 = vunpack.c.l.b16 %v615
        %v685 = vunpack.c.l.b16 %v616
        %v686 = vunpack.c.l.b16 %v617
        %v687 = vunpack.c.l.b16 %v618
        %v688 = vunpack.c.l.b16 %v619
        %v689 = vunpack.c.l.b16 %v620
        %v690 = vunpack.c.l.b16 %v621
        %v691 = vunpack.c.l.b16 %v622
        %v692 = vunpack.c.l.b16 %v623
        %v693 = vunpack.c.l.b16 %v624
        %v694 = vpack.c.b16 %v663, %v662
        %v695 = vpack.c.b16 %v665, %v664
        %v696 = vpack.c.b16 %v667, %v666
        %v697 = vpack.c.b16 %v669, %v668
        %v698 = vpack.c.b16 %v671, %v670
        %v699 = vpack.c.b16 %v673, %v672
        %v700 = vpack.c.b16 %v675, %v674
        %v701 = vpack.c.b16 %v677, %v676
        %v702 = vpack.c.b16 %v679, %v678
        %v703 = vpack.c.b16 %v681, %v680
        %v704 = vpack.c.b16 %v683, %v682
        %v705 = vpack.c.b16 %v685, %v684
        %v706 = vpack.c.b16 %v687, %v686
        %v707 = vpack.c.b16 %v689, %v688
        %v708 = vpack.c.b16 %v691, %v690
        %v709 = vpack.c.b16 %v693, %v692
        %v715 = vunpack.c.l.b16 %v625
        %v716 = vunpack.c.l.b16 %v626
        %v717 = vunpack.c.l.b16 %v627
        %v718 = vunpack.c.l.b16 %v628
        %v719 = vunpack.c.l.b16 %v629
        %v720 = vpack.c.b16 %v716, %v715
        %v721 = vpack.c.b16 %v718, %v717
        %v722 = vpack.c.b16 %v719, %v719
        %vm725 = vcmask 293888
        %v727 = vsel %vm725, %v694, 0
        %v730 = vsel %vm725, %v695, 0
        %v733 = vsel %vm725, %v696, 0
        %v736 = vsel %vm725, %v697, 0
        %v739 = vsel %vm725, %v698, 0
        %v742 = vsel %vm725, %v699, 0
        %v745 = vsel %vm725, %v700, 0
        %v748 = vsel %vm725, %v701, 0
        %v751 = vsel %vm725, %v702, 0
        %v754 = vsel %vm725, %v703, 0
        %v757 = vsel %vm725, %v704, 0
        %v760 = vsel %vm725, %v705, 0
        %v763 = vsel %vm725, %v706, 0
        %v766 = vsel %vm725, %v707, 0
        %v769 = vsel %vm725, %v708, 0
        %v772 = vsel %vm725, %v709, 0
        %vm774 = vcmask 1041408
        %v776 = vsel %vm774, %v722, 0
        %778 = vmatprep.subr.bf16.mxu0 0
        %779 = vmatpush1.bf16.msra.mxu0 %v720
        %780 = vmatprep.subr.bf16.mxu0 0
        %781 = vmatpush1.bf16.msra.mxu0 %v721
        %782 = vmatprep.subr.bf16.mxu0 0
        %783 = vmatpush1.bf16.msra.mxu0 %v776
        %784 = vmatprep.subr.bf16.mxu0 0
        %785 = vmatpush1.bf16.msra.mxu0 0
        %786 = vmatprep.subr.bf16.mxu0 0
        %787 = vmatpush1.bf16.msra.mxu0 0
        %788 = vmatprep.subr.bf16.mxu0 0
        %789 = vmatpush1.bf16.msra.mxu0 0
        %790 = vmatprep.subr.bf16.mxu0 0
        %791 = vmatpush1.bf16.msra.mxu0 0
        %792 = vmatprep.subr.bf16.mxu0 0
        %793 = vmatpush1.bf16.msra.mxu0 0
        %794 = vmatprep.subr.bf16.mxu0 0
        %795 = vmatpush1.bf16.msra.mxu0 0
        %796 = vmatprep.subr.bf16.mxu0 0
        %797 = vmatpush1.bf16.msra.mxu0 0
        %798 = vmatprep.subr.bf16.mxu0 0
        %799 = vmatpush1.bf16.msra.mxu0 0
        %800 = vmatprep.subr.bf16.mxu0 0
        %801 = vmatpush1.bf16.msra.mxu0 0
        %802 = vmatprep.subr.bf16.mxu0 0
        %803 = vmatpush1.bf16.msra.mxu0 0
        %804 = vmatprep.subr.bf16.mxu0 0
        %805 = vmatpush1.bf16.msra.mxu0 0
        %806 = vmatprep.subr.bf16.mxu0 0
        %807 = vmatpush1.bf16.msra.mxu0 0
        %808 = vmatprep.subr.bf16.mxu0 0
        %809 = vmatpush1.bf16.msra.mxu0 0
        %810 = vmatprep.mubr.bf16.mxu0 0
        %811 = vmatmul.mubr.bf16.gmra.mrb[0].mxu0 %v727
        %v812 = vpop.f32.mrb[0].mxu0
        %v813 = vadd.f32 0.0, %v812
        %v814 = vpop.f32.mrb[0].mxu0
        %v815 = vpop.f32.mrb[0].mxu0
        %v816 = vadd.f32 0.0, %v815
        %v817 = vpop.f32.mrb[0].mxu0
        %818 = vmatprep.mubr.bf16.mxu0 0
        %819 = vmatmul.mubr.bf16.gmra.mrb[0].mxu0 %v730
        %v820 = vpop.f32.mrb[0].mxu0
        %v821 = vadd.f32 0.0, %v820
        %v822 = vpop.f32.mrb[0].mxu0
        %v823 = vpop.f32.mrb[0].mxu0
        %v824 = vadd.f32 0.0, %v823
        %v825 = vpop.f32.mrb[0].mxu0
        %826 = vmatprep.mubr.bf16.mxu0 0
        %827 = vmatmul.mubr.bf16.gmra.mrb[0].mxu0 %v733
        %v828 = vpop.f32.mrb[0].mxu0
        %v829 = vadd.f32 0.0, %v828
        %v830 = vpop.f32.mrb[0].mxu0
        %v831 = vpop.f32.mrb[0].mxu0
        %v832 = vadd.f32 0.0, %v831
        %v833 = vpop.f32.mrb[0].mxu0
        %834 = vmatprep.mubr.bf16.mxu0 0
        %835 = vmatmul.mubr.bf16.gmra.mrb[0].mxu0 %v736
        %v836 = vpop.f32.mrb[0].mxu0
        %v837 = vadd.f32 0.0, %v836
        %v838 = vpop.f32.mrb[0].mxu0
        %v839 = vpop.f32.mrb[0].mxu0
        %v840 = vadd.f32 0.0, %v839
        %v841 = vpop.f32.mrb[0].mxu0
        %842 = vmatprep.mubr.bf16.mxu0 0
        %843 = vmatmul.mubr.bf16.gmra.mrb[0].mxu0 %v739
        %v844 = vpop.f32.mrb[0].mxu0
        %v845 = vadd.f32 0.0, %v844
        %v846 = vpop.f32.mrb[0].mxu0
        %v847 = vpop.f32.mrb[0].mxu0
        %v848 = vadd.f32 0.0, %v847
        %v849 = vpop.f32.mrb[0].mxu0
        %850 = vmatprep.mubr.bf16.mxu0 0
        %851 = vmatmul.mubr.bf16.gmra.mrb[0].mxu0 %v742
        %v852 = vpop.f32.mrb[0].mxu0
        %v853 = vadd.f32 0.0, %v852
        %v854 = vpop.f32.mrb[0].mxu0
        %v855 = vpop.f32.mrb[0].mxu0
        %v856 = vadd.f32 0.0, %v855
        %v857 = vpop.f32.mrb[0].mxu0
        %858 = vmatprep.mubr.bf16.mxu0 0
        %859 = vmatmul.mubr.bf16.gmra.mrb[0].mxu0 %v745
        %v860 = vpop.f32.mrb[0].mxu0
        %v861 = vadd.f32 0.0, %v860
        %v862 = vpop.f32.mrb[0].mxu0
        %v863 = vpop.f32.mrb[0].mxu0
        %v864 = vadd.f32 0.0, %v863
        %v865 = vpop.f32.mrb[0].mxu0
        %866 = vmatprep.mubr.bf16.mxu0 0
        %867 = vmatmul.mubr.bf16.gmra.mrb[0].mxu0 %v748
        %v868 = vpop.f32.mrb[0].mxu0
        %v869 = vadd.f32 0.0, %v868
        %v870 = vpop.f32.mrb[0].mxu0
        %v871 = vpop.f32.mrb[0].mxu0
        %v872 = vadd.f32 0.0, %v871
        %v873 = vpop.f32.mrb[0].mxu0
        %874 = vmatprep.mubr.bf16.mxu0 0
        %875 = vmatmul.mubr.bf16.gmra.mrb[0].mxu0 %v751
        %v876 = vpop.f32.mrb[0].mxu0
        %v877 = vadd.f32 0.0, %v876
        %v878 = vpop.f32.mrb[0].mxu0
        %v879 = vpop.f32.mrb[0].mxu0
        %v880 = vadd.f32 0.0, %v879
        %v881 = vpop.f32.mrb[0].mxu0
        %882 = vmatprep.mubr.bf16.mxu0 0
        %883 = vmatmul.mubr.bf16.gmra.mrb[0].mxu0 %v754
        %v884 = vpop.f32.mrb[0].mxu0
        %v885 = vadd.f32 0.0, %v884
        %v886 = vpop.f32.mrb[0].mxu0
        %v887 = vpop.f32.mrb[0].mxu0
        %v888 = vadd.f32 0.0, %v887
        %v889 = vpop.f32.mrb[0].mxu0
        %890 = vmatprep.mubr.bf16.mxu0 0
        %891 = vmatmul.mubr.bf16.gmra.mrb[0].mxu0 %v757
        %v892 = vpop.f32.mrb[0].mxu0
        %v893 = vadd.f32 0.0, %v892
        %v894 = vpop.f32.mrb[0].mxu0
        %v895 = vpop.f32.mrb[0].mxu0
        %v896 = vadd.f32 0.0, %v895
        %v897 = vpop.f32.mrb[0].mxu0
        %898 = vmatprep.mubr.bf16.mxu0 0
        %899 = vmatmul.mubr.bf16.gmra.mrb[0].mxu0 %v760
        %v900 = vpop.f32.mrb[0].mxu0
        %v901 = vadd.f32 0.0, %v900
        %v902 = vpop.f32.mrb[0].mxu0
        %v903 = vpop.f32.mrb[0].mxu0
        %v904 = vadd.f32 0.0, %v903
        %v905 = vpop.f32.mrb[0].mxu0
        %906 = vmatprep.mubr.bf16.mxu0 0
        %907 = vmatmul.mubr.bf16.gmra.mrb[0].mxu0 %v763
        %v908 = vpop.f32.mrb[0].mxu0
        %v909 = vadd.f32 0.0, %v908
        %v910 = vpop.f32.mrb[0].mxu0
        %v911 = vpop.f32.mrb[0].mxu0
        %v912 = vadd.f32 0.0, %v911
        %v913 = vpop.f32.mrb[0].mxu0
        %914 = vmatprep.mubr.bf16.mxu0 0
        %915 = vmatmul.mubr.bf16.gmra.mrb[0].mxu0 %v766
        %v916 = vpop.f32.mrb[0].mxu0
        %v917 = vadd.f32 0.0, %v916
        %v918 = vpop.f32.mrb[0].mxu0
        %v919 = vpop.f32.mrb[0].mxu0
        %v920 = vadd.f32 0.0, %v919
        %v921 = vpop.f32.mrb[0].mxu0
        %922 = vmatprep.mubr.bf16.mxu0 0
        %923 = vmatmul.mubr.bf16.gmra.mrb[0].mxu0 %v769
        %v924 = vpop.f32.mrb[0].mxu0
        %v925 = vadd.f32 0.0, %v924
        %v926 = vpop.f32.mrb[0].mxu0
        %v927 = vpop.f32.mrb[0].mxu0
        %v928 = vadd.f32 0.0, %v927
        %v929 = vpop.f32.mrb[0].mxu0
        %930 = vmatprep.mubr.bf16.mxu0 0
        %931 = vmatmul.mubr.bf16.gmra.mrb[0].mxu0 %v772
        %v932 = vpop.f32.mrb[0].mxu0
        %v933 = vadd.f32 0.0, %v932
        %v934 = vpop.f32.mrb[0].mxu0
        %v935 = vpop.f32.mrb[0].mxu0
        %v936 = vadd.f32 0.0, %v935
        %v937 = vpop.f32.mrb[0].mxu0
        %938 = vdwg.mxu0
        %v939 = vld [vmem:[%s2] sm:$0x1]
        %v941 = vlaneseq
        %v942 = vshrl.u32 %v941, 7
        %v943 = vsub.s32 0, %v942
        %v944 = vrot.slane %v939, %v943
        %v946 = vmul.f32 %v813, %v944
        %v947 = vmul.f32 %v816, %v944
        %v948 = vmul.f32 %v821, %v944
        %v949 = vmul.f32 %v824, %v944
        %v950 = vmul.f32 %v829, %v944
        %v951 = vmul.f32 %v832, %v944
        %v952 = vmul.f32 %v837, %v944
        %v953 = vmul.f32 %v840, %v944
        %v954 = vmul.f32 %v845, %v944
        %v955 = vmul.f32 %v848, %v944
        %v956 = vmul.f32 %v853, %v944
        %v957 = vmul.f32 %v856, %v944
        %v958 = vmul.f32 %v861, %v944
        %v959 = vmul.f32 %v864, %v944
        %v960 = vmul.f32 %v869, %v944
        %v961 = vmul.f32 %v872, %v944
        %v962 = vmul.f32 %v877, %v944
        %v963 = vmul.f32 %v880, %v944
        %v964 = vmul.f32 %v885, %v944
        %v965 = vmul.f32 %v888, %v944
        %v966 = vmul.f32 %v893, %v944
        %v967 = vmul.f32 %v896, %v944
        %v968 = vmul.f32 %v901, %v944
        %v969 = vmul.f32 %v904, %v944
        %v970 = vmul.f32 %v909, %v944
        %v971 = vmul.f32 %v912, %v944
        %v972 = vmul.f32 %v917, %v944
        %v973 = vmul.f32 %v920, %v944
        %v974 = vmul.f32 %v925, %v944
        %v975 = vmul.f32 %v928, %v944
        %v976 = vmul.f32 %v933, %v944
        %v977 = vmul.f32 %v936, %v944
        %v978 = vld [vmem:[%s3] sm:$0x1]
        %v980 = vlaneseq
        %v981 = vshrl.u32 %v980, 7
        %v982 = vsub.s32 0, %v981
        %v983 = vrot.slane %v978, %v982
        %v985 = vadd.f32 %v946, %v983
        %v986 = vadd.f32 %v947, %v983
        %v987 = vadd.f32 %v948, %v983
        %v988 = vadd.f32 %v949, %v983
        %v989 = vadd.f32 %v950, %v983
        %v990 = vadd.f32 %v951, %v983
        %v991 = vadd.f32 %v952, %v983
        %v992 = vadd.f32 %v953, %v983
        %v993 = vadd.f32 %v954, %v983
        %v994 = vadd.f32 %v955, %v983
        %v995 = vadd.f32 %v956, %v983
        %v996 = vadd.f32 %v957, %v983
        %v997 = vadd.f32 %v958, %v983
        %v998 = vadd.f32 %v959, %v983
        %v999 = vadd.f32 %v960, %v983
        %v1000 = vadd.f32 %v961, %v983
        %v1001 = vadd.f32 %v962, %v983
        %v1002 = vadd.f32 %v963, %v983
        %v1003 = vadd.f32 %v964, %v983
        %v1004 = vadd.f32 %v965, %v983
        %v1005 = vadd.f32 %v966, %v983
        %v1006 = vadd.f32 %v967, %v983
        %v1007 = vadd.f32 %v968, %v983
        %v1008 = vadd.f32 %v969, %v983
        %v1009 = vadd.f32 %v970, %v983
        %v1010 = vadd.f32 %v971, %v983
        %v1011 = vadd.f32 %v972, %v983
        %v1012 = vadd.f32 %v973, %v983
        %v1013 = vadd.f32 %v974, %v983
        %v1014 = vadd.f32 %v975, %v983
        %v1015 = vadd.f32 %v976, %v983
        %v1016 = vadd.f32 %v977, %v983
        %v1017 = vxor.u32 %v985, 2147483648
        %v1018 = vxor.u32 %v986, 2147483648
        %v1019 = vxor.u32 %v987, 2147483648
        %v1020 = vxor.u32 %v988, 2147483648
        %v1021 = vxor.u32 %v989, 2147483648
        %v1022 = vxor.u32 %v990, 2147483648
        %v1023 = vxor.u32 %v991, 2147483648
        %v1024 = vxor.u32 %v992, 2147483648
        %v1025 = vxor.u32 %v993, 2147483648
        %v1026 = vxor.u32 %v994, 2147483648
        %v1027 = vxor.u32 %v995, 2147483648
        %v1028 = vxor.u32 %v996, 2147483648
        %v1029 = vxor.u32 %v997, 2147483648
        %v1030 = vxor.u32 %v998, 2147483648
        %v1031 = vxor.u32 %v999, 2147483648
        %v1032 = vxor.u32 %v1000, 2147483648
        %v1033 = vxor.u32 %v1001, 2147483648
        %v1034 = vxor.u32 %v1002, 2147483648
        %v1035 = vxor.u32 %v1003, 2147483648
        %v1036 = vxor.u32 %v1004, 2147483648
        %v1037 = vxor.u32 %v1005, 2147483648
        %v1038 = vxor.u32 %v1006, 2147483648
        %v1039 = vxor.u32 %v1007, 2147483648
        %v1040 = vxor.u32 %v1008, 2147483648
        %v1041 = vxor.u32 %v1009, 2147483648
        %v1042 = vxor.u32 %v1010, 2147483648
        %v1043 = vxor.u32 %v1011, 2147483648
        %v1044 = vxor.u32 %v1012, 2147483648
        %v1045 = vxor.u32 %v1013, 2147483648
        %v1046 = vxor.u32 %v1014, 2147483648
        %v1047 = vxor.u32 %v1015, 2147483648
        %v1048 = vxor.u32 %v1016, 2147483648
        %v1049 = vmul.f32 %v1017, 1.442695
        %v1050 = vpow.pop %v1049
        %v1051 = vmul.f32 %v1018, 1.442695
        %v1052 = vpow.pop %v1051
        %v1053 = vmul.f32 %v1019, 1.442695
        %v1054 = vpow.pop %v1053
        %v1055 = vmul.f32 %v1020, 1.442695
        %v1056 = vpow.pop %v1055
        %v1057 = vmul.f32 %v1021, 1.442695
        %v1058 = vpow.pop %v1057
        %v1059 = vmul.f32 %v1022, 1.442695
        %v1060 = vpow.pop %v1059
        %v1061 = vmul.f32 %v1023, 1.442695
        %v1062 = vpow.pop %v1061
        %v1063 = vmul.f32 %v1024, 1.442695
        %v1064 = vpow.pop %v1063
        %v1065 = vmul.f32 %v1025, 1.442695
        %v1066 = vpow.pop %v1065
        %v1067 = vmul.f32 %v1026, 1.442695
        %v1068 = vpow.pop %v1067
        %v1069 = vmul.f32 %v1027, 1.442695
        %v1070 = vpow.pop %v1069
        %v1071 = vmul.f32 %v1028, 1.442695
        %v1072 = vpow.pop %v1071
        %v1073 = vmul.f32 %v1029, 1.442695
        %v1074 = vpow.pop %v1073
        %v1075 = vmul.f32 %v1030, 1.442695
        %v1076 = vpow.pop %v1075
        %v1077 = vmul.f32 %v1031, 1.442695
        %v1078 = vpow.pop %v1077
        %v1079 = vmul.f32 %v1032, 1.442695
        %v1080 = vpow.pop %v1079
        %v1081 = vmul.f32 %v1033, 1.442695
        %v1082 = vpow.pop %v1081
        %v1083 = vmul.f32 %v1034, 1.442695
        %v1084 = vpow.pop %v1083
        %v1085 = vmul.f32 %v1035, 1.442695
        %v1086 = vpow.pop %v1085
        %v1087 = vmul.f32 %v1036, 1.442695
        %v1088 = vpow.pop %v1087
        %v1089 = vmul.f32 %v1037, 1.442695
        %v1090 = vpow.pop %v1089
        %v1091 = vmul.f32 %v1038, 1.442695
        %v1092 = vpow.pop %v1091
        %v1093 = vmul.f32 %v1039, 1.442695
        %v1094 = vpow.pop %v1093
        %v1095 = vmul.f32 %v1040, 1.442695
        %v1096 = vpow.pop %v1095
        %v1097 = vmul.f32 %v1041, 1.442695
        %v1098 = vpow.pop %v1097
        %v1099 = vmul.f32 %v1042, 1.442695
        %v1100 = vpow.pop %v1099
        %v1101 = vmul.f32 %v1043, 1.442695
        %v1102 = vpow.pop %v1101
        %v1103 = vmul.f32 %v1044, 1.442695
        %v1104 = vpow.pop %v1103
        %v1105 = vmul.f32 %v1045, 1.442695
        %v1106 = vpow.pop %v1105
        %v1107 = vmul.f32 %v1046, 1.442695
        %v1108 = vpow.pop %v1107
        %v1109 = vmul.f32 %v1047, 1.442695
        %v1110 = vpow.pop %v1109
        %v1111 = vmul.f32 %v1048, 1.442695
        %v1112 = vpow.pop %v1111
        %v1113 = vadd.f32 %v1050, 1.0
        %v1114 = vadd.f32 %v1052, 1.0
        %v1115 = vadd.f32 %v1054, 1.0
        %v1116 = vadd.f32 %v1056, 1.0
        %v1117 = vadd.f32 %v1058, 1.0
        %v1118 = vadd.f32 %v1060, 1.0
        %v1119 = vadd.f32 %v1062, 1.0
        %v1120 = vadd.f32 %v1064, 1.0
        %v1121 = vadd.f32 %v1066, 1.0
        %v1122 = vadd.f32 %v1068, 1.0
        %v1123 = vadd.f32 %v1070, 1.0
        %v1124 = vadd.f32 %v1072, 1.0
        %v1125 = vadd.f32 %v1074, 1.0
        %v1126 = vadd.f32 %v1076, 1.0
        %v1127 = vadd.f32 %v1078, 1.0
        %v1128 = vadd.f32 %v1080, 1.0
        %v1129 = vadd.f32 %v1082, 1.0
        %v1130 = vadd.f32 %v1084, 1.0
        %v1131 = vadd.f32 %v1086, 1.0
        %v1132 = vadd.f32 %v1088, 1.0
        %v1133 = vadd.f32 %v1090, 1.0
        %v1134 = vadd.f32 %v1092, 1.0
        %v1135 = vadd.f32 %v1094, 1.0
        %v1136 = vadd.f32 %v1096, 1.0
        %v1137 = vadd.f32 %v1098, 1.0
        %v1138 = vadd.f32 %v1100, 1.0
        %v1139 = vadd.f32 %v1102, 1.0
        %v1140 = vadd.f32 %v1104, 1.0
        %v1141 = vadd.f32 %v1106, 1.0
        %v1142 = vadd.f32 %v1108, 1.0
        %v1143 = vadd.f32 %v1110, 1.0
        %v1144 = vadd.f32 %v1112, 1.0
        %v1145 = vrcp.pop %v1113
        %v1146 = vmul.f32 1.0, %v1145
        %v1147 = vrcp.pop %v1114
        %v1148 = vmul.f32 1.0, %v1147
        %v1149 = vrcp.pop %v1115
        %v1150 = vmul.f32 1.0, %v1149
        %v1151 = vrcp.pop %v1116
        %v1152 = vmul.f32 1.0, %v1151
        %v1153 = vrcp.pop %v1117
        %v1154 = vmul.f32 1.0, %v1153
        %v1155 = vrcp.pop %v1118
        %v1156 = vmul.f32 1.0, %v1155
        %v1157 = vrcp.pop %v1119
        %v1158 = vmul.f32 1.0, %v1157
        %v1159 = vrcp.pop %v1120
        %v1160 = vmul.f32 1.0, %v1159
        %v1161 = vrcp.pop %v1121
        %v1162 = vmul.f32 1.0, %v1161
        %v1163 = vrcp.pop %v1122
        %v1164 = vmul.f32 1.0, %v1163
        %v1165 = vrcp.pop %v1123
        %v1166 = vmul.f32 1.0, %v1165
        %v1167 = vrcp.pop %v1124
        %v1168 = vmul.f32 1.0, %v1167
        %v1169 = vrcp.pop %v1125
        %v1170 = vmul.f32 1.0, %v1169
        %v1171 = vrcp.pop %v1126
        %v1172 = vmul.f32 1.0, %v1171
        %v1173 = vrcp.pop %v1127
        %v1174 = vmul.f32 1.0, %v1173
        %v1175 = vrcp.pop %v1128
        %v1176 = vmul.f32 1.0, %v1175
        %v1177 = vrcp.pop %v1129
        %v1178 = vmul.f32 1.0, %v1177
        %v1179 = vrcp.pop %v1130
        %v1180 = vmul.f32 1.0, %v1179
        %v1181 = vrcp.pop %v1131
        %v1182 = vmul.f32 1.0, %v1181
        %v1183 = vrcp.pop %v1132
        %v1184 = vmul.f32 1.0, %v1183
        %v1185 = vrcp.pop %v1133
        %v1186 = vmul.f32 1.0, %v1185
        %v1187 = vrcp.pop %v1134
        %v1188 = vmul.f32 1.0, %v1187
        %v1189 = vrcp.pop %v1135
        %v1190 = vmul.f32 1.0, %v1189
        %v1191 = vrcp.pop %v1136
        %v1192 = vmul.f32 1.0, %v1191
        %v1193 = vrcp.pop %v1137
        %v1194 = vmul.f32 1.0, %v1193
        %v1195 = vrcp.pop %v1138
        %v1196 = vmul.f32 1.0, %v1195
        %v1197 = vrcp.pop %v1139
        %v1198 = vmul.f32 1.0, %v1197
        %v1199 = vrcp.pop %v1140
        %v1200 = vmul.f32 1.0, %v1199
        %v1201 = vrcp.pop %v1141
        %v1202 = vmul.f32 1.0, %v1201
        %v1203 = vrcp.pop %v1142
        %v1204 = vmul.f32 1.0, %v1203
        %v1205 = vrcp.pop %v1143
        %v1206 = vmul.f32 1.0, %v1205
        %v1207 = vrcp.pop %v1144
        %v1208 = vmul.f32 1.0, %v1207
        %v1209 = vmul.f32 %v985, %v1146
        %v1210 = vmul.f32 %v986, %v1148
        %v1211 = vmul.f32 %v987, %v1150
        %v1212 = vmul.f32 %v988, %v1152
        %v1213 = vmul.f32 %v989, %v1154
        %v1214 = vmul.f32 %v990, %v1156
        %v1215 = vmul.f32 %v991, %v1158
        %v1216 = vmul.f32 %v992, %v1160
        %v1217 = vmul.f32 %v993, %v1162
        %v1218 = vmul.f32 %v994, %v1164
        %v1219 = vmul.f32 %v995, %v1166
        %v1220 = vmul.f32 %v996, %v1168
        %v1221 = vmul.f32 %v997, %v1170
        %v1222 = vmul.f32 %v998, %v1172
        %v1223 = vmul.f32 %v999, %v1174
        %v1224 = vmul.f32 %v1000, %v1176
        %v1225 = vmul.f32 %v1001, %v1178
        %v1226 = vmul.f32 %v1002, %v1180
        %v1227 = vmul.f32 %v1003, %v1182
        %v1228 = vmul.f32 %v1004, %v1184
        %v1229 = vmul.f32 %v1005, %v1186
        %v1230 = vmul.f32 %v1006, %v1188
        %v1231 = vmul.f32 %v1007, %v1190
        %v1232 = vmul.f32 %v1008, %v1192
        %v1233 = vmul.f32 %v1009, %v1194
        %v1234 = vmul.f32 %v1010, %v1196
        %v1235 = vmul.f32 %v1011, %v1198
        %v1236 = vmul.f32 %v1012, %v1200
        %v1237 = vmul.f32 %v1013, %v1202
        %v1238 = vmul.f32 %v1014, %v1204
        %v1239 = vmul.f32 %v1015, %v1206
        %v1240 = vmul.f32 %v1016, %v1208
        %v1241 = vpack.c.bf16 %v1210, %v1209
        %v1242 = vpack.c.bf16 %v1212, %v1211
        %v1243 = vpack.c.bf16 %v1214, %v1213
        %v1244 = vpack.c.bf16 %v1216, %v1215
        %v1245 = vpack.c.bf16 %v1218, %v1217
        %v1246 = vpack.c.bf16 %v1220, %v1219
        %v1247 = vpack.c.bf16 %v1222, %v1221
        %v1248 = vpack.c.bf16 %v1224, %v1223
        %v1249 = vpack.c.bf16 %v1226, %v1225
        %v1250 = vpack.c.bf16 %v1228, %v1227
        %v1251 = vpack.c.bf16 %v1230, %v1229
        %v1252 = vpack.c.bf16 %v1232, %v1231
        %v1253 = vpack.c.bf16 %v1234, %v1233
        %v1254 = vpack.c.bf16 %v1236, %v1235
        %v1255 = vpack.c.bf16 %v1238, %v1237
        %v1256 = vpack.c.bf16 %v1240, %v1239
        %v1257 = vld [vmem:[%s4] sm:$0xff]
        %v1258 = vld [vmem:[%s4 + $0x8] sm:$0xff]
        %v1259 = vld [vmem:[%s4 + $0x10] sm:$0xff]
        %v1260 = vld [vmem:[%s4 + $0x18] sm:$0xff]
        %v1261 = vld [vmem:[%s4 + $0x20] sm:$0xff]
        %v1262 = vld [vmem:[%s4 + $0x28] sm:$0xff]
        %v1263 = vld [vmem:[%s4 + $0x30] sm:$0xff]
        %v1264 = vld [vmem:[%s4 + $0x38] sm:$0xff]
        %v1265 = vld [vmem:[%s4 + $0x40] sm:$0xff]
        %v1266 = vld [vmem:[%s4 + $0x48] sm:$0xff]
        %v1267 = vld [vmem:[%s4 + $0x50] sm:$0xff]
        %v1268 = vld [vmem:[%s4 + $0x58] sm:$0xff]
        %v1269 = vld [vmem:[%s4 + $0x60] sm:$0xff]
        %v1270 = vld [vmem:[%s4 + $0x68] sm:$0xff]
        %v1271 = vld [vmem:[%s4 + $0x70] sm:$0xff]
        %v1272 = vld [vmem:[%s4 + $0x78] sm:$0xff]
        %v1273 = vld [vmem:[%s4 + $0x80] sm:$0xff]
        %v1274 = vld [vmem:[%s4 + $0x88] sm:$0xff]
        %v1275 = vld [vmem:[%s4 + $0x90] sm:$0xff]
        %v1276 = vld [vmem:[%s4 + $0x98] sm:$0xff]
        %v1297 = vunpack.c.l.b16 %v1257
        %v1298 = vunpack.c.h.b16 %v1257
        %v1299 = vunpack.c.l.b16 %v1258
        %v1300 = vunpack.c.h.b16 %v1258
        %v1301 = vunpack.c.l.b16 %v1259
        %v1302 = vunpack.c.h.b16 %v1259
        %v1303 = vunpack.c.l.b16 %v1260
        %v1304 = vunpack.c.h.b16 %v1260
        %v1305 = vunpack.c.l.b16 %v1261
        %v1306 = vunpack.c.h.b16 %v1261
        %v1307 = vunpack.c.l.b16 %v1262
        %v1308 = vunpack.c.h.b16 %v1262
        %v1309 = vunpack.c.l.b16 %v1263
        %v1310 = vunpack.c.h.b16 %v1263
        %v1311 = vunpack.c.l.b16 %v1264
        %v1312 = vunpack.c.h.b16 %v1264
        %v1313 = vunpack.c.l.b16 %v1265
        %v1314 = vunpack.c.h.b16 %v1265
        %v1315 = vunpack.c.l.b16 %v1266
        %v1316 = vunpack.c.h.b16 %v1266
        %v1317 = vunpack.c.l.b16 %v1267
        %v1318 = vunpack.c.h.b16 %v1267
        %v1319 = vunpack.c.l.b16 %v1268
        %v1320 = vunpack.c.h.b16 %v1268
        %v1321 = vunpack.c.l.b16 %v1269
        %v1322 = vunpack.c.h.b16 %v1269
        %v1323 = vunpack.c.l.b16 %v1270
        %v1324 = vunpack.c.h.b16 %v1270
        %v1325 = vunpack.c.l.b16 %v1271
        %v1326 = vunpack.c.h.b16 %v1271
        %v1327 = vunpack.c.l.b16 %v1272
        %v1328 = vunpack.c.h.b16 %v1272
        %v1329 = vunpack.c.l.b16 %v1273
        %v1330 = vunpack.c.h.b16 %v1273
        %v1331 = vunpack.c.l.b16 %v1274
        %v1332 = vunpack.c.h.b16 %v1274
        %v1333 = vunpack.c.l.b16 %v1275
        %v1334 = vunpack.c.h.b16 %v1275
        %v1335 = vunpack.c.l.b16 %v1276
        %v1336 = vunpack.c.h.b16 %v1276
        %v1337 = vpack.c.b16 %v1307, %v1297
        %v1338 = vpack.c.b16 %v1308, %v1298
        %v1339 = vpack.c.b16 %v1309, %v1299
        %v1340 = vpack.c.b16 %v1310, %v1300
        %v1341 = vpack.c.b16 %v1311, %v1301
        %v1342 = vpack.c.b16 %v1312, %v1302
        %v1343 = vpack.c.b16 %v1313, %v1303
        %v1344 = vpack.c.b16 %v1314, %v1304
        %v1345 = vpack.c.b16 %v1315, %v1305
        %v1346 = vpack.c.b16 %v1316, %v1306
        %v1347 = vpack.c.b16 %v1327, %v1317
        %v1348 = vpack.c.b16 %v1328, %v1318
        %v1349 = vpack.c.b16 %v1329, %v1319
        %v1350 = vpack.c.b16 %v1330, %v1320
        %v1351 = vpack.c.b16 %v1331, %v1321
        %v1352 = vpack.c.b16 %v1332, %v1322
        %v1353 = vpack.c.b16 %v1333, %v1323
        %v1354 = vpack.c.b16 %v1334, %v1324
        %v1355 = vpack.c.b16 %v1335, %v1325
        %v1356 = vpack.c.b16 %v1336, %v1326
        %vm1377 = vcmask 261120
        %v1379 = vsel %vm1377, %v1241, 0
        %v1382 = vsel %vm1377, %v1242, 0
        %v1385 = vsel %vm1377, %v1243, 0
        %v1388 = vsel %vm1377, %v1244, 0
        %v1391 = vsel %vm1377, %v1245, 0
        %v1394 = vsel %vm1377, %v1246, 0
        %v1397 = vsel %vm1377, %v1247, 0
        %v1400 = vsel %vm1377, %v1248, 0
        %v1403 = vsel %vm1377, %v1249, 0
        %v1406 = vsel %vm1377, %v1250, 0
        %v1409 = vsel %vm1377, %v1251, 0
        %v1412 = vsel %vm1377, %v1252, 0
        %v1415 = vsel %vm1377, %v1253, 0
        %v1418 = vsel %vm1377, %v1254, 0
        %v1421 = vsel %vm1377, %v1255, 0
        %v1424 = vsel %vm1377, %v1256, 0
        %1426 = vmatprep.subr.bf16.mxu0 %v1338
        %1427 = vmatpush1.bf16.msra.mxu0 %v1337
        %1428 = vmatprep.subr.bf16.mxu0 %v1348
        %1429 = vmatpush1.bf16.msra.mxu0 %v1347
        %1430 = vmatprep.subr.bf16.mxu0 0
        %1431 = vmatpush1.bf16.msra.mxu0 0
        %1432 = vmatprep.subr.bf16.mxu0 0
        %1433 = vmatpush1.bf16.msra.mxu0 0
        %1434 = vmatprep.subr.bf16.mxu0 0
        %1435 = vmatpush1.bf16.msra.mxu0 0
        %1436 = vmatprep.subr.bf16.mxu0 0
        %1437 = vmatpush1.bf16.msra.mxu0 0
        %1438 = vmatprep.subr.bf16.mxu0 0
        %1439 = vmatpush1.bf16.msra.mxu0 0
        %1440 = vmatprep.subr.bf16.mxu0 0
        %1441 = vmatpush1.bf16.msra.mxu0 0
        %1442 = vmatprep.subr.bf16.mxu0 0
        %1443 = vmatpush1.bf16.msra.mxu0 0
        %1444 = vmatprep.subr.bf16.mxu0 0
        %1445 = vmatpush1.bf16.msra.mxu0 0
        %1446 = vmatprep.subr.bf16.mxu0 0
        %1447 = vmatpush1.bf16.msra.mxu0 0
        %1448 = vmatprep.subr.bf16.mxu0 0
        %1449 = vmatpush1.bf16.msra.mxu0 0
        %1450 = vmatprep.subr.bf16.mxu0 0
        %1451 = vmatpush1.bf16.msra.mxu0 0
        %1452 = vmatprep.subr.bf16.mxu0 0
        %1453 = vmatpush1.bf16.msra.mxu0 0
        %1454 = vmatprep.subr.bf16.mxu0 0
        %1455 = vmatpush1.bf16.msra.mxu0 0
        %1456 = vmatprep.subr.bf16.mxu0 0
        %1457 = vmatpush1.bf16.msra.mxu0 0
        %1458 = vmatprep.mubr.bf16.mxu0 0
        %1459 = vmatmul.mubr.bf16.gmra.mrb[0].mxu0 %v1379
        %v1460 = vpop.f32.mrb[0].mxu0
        %v1461 = vadd.f32 0.0, %v1460
        %v1462 = vpop.f32.mrb[0].mxu0
        %v1463 = vadd.f32 0.0, %v1462
        %v1464 = vpop.f32.mrb[0].mxu0
        %v1465 = vadd.f32 0.0, %v1464
        %v1466 = vpop.f32.mrb[0].mxu0
        %v1467 = vadd.f32 0.0, %v1466
        %1468 = vmatprep.mubr.bf16.mxu0 0
        %1469 = vmatmul.mubr.bf16.gmra.mrb[0].mxu0 %v1382
        %v1470 = vpop.f32.mrb[0].mxu0
        %v1471 = vadd.f32 0.0, %v1470
        %v1472 = vpop.f32.mrb[0].mxu0
        %v1473 = vadd.f32 0.0, %v1472
        %v1474 = vpop.f32.mrb[0].mxu0
        %v1475 = vadd.f32 0.0, %v1474
        %v1476 = vpop.f32.mrb[0].mxu0
        %v1477 = vadd.f32 0.0, %v1476
        %1478 = vmatprep.mubr.bf16.mxu0 0
        %1479 = vmatmul.mubr.bf16.gmra.mrb[0].mxu0 %v1385
        %v1480 = vpop.f32.mrb[0].mxu0
        %v1481 = vadd.f32 0.0, %v1480
        %v1482 = vpop.f32.mrb[0].mxu0
        %v1483 = vadd.f32 0.0, %v1482
        %v1484 = vpop.f32.mrb[0].mxu0
        %v1485 = vadd.f32 0.0, %v1484
        %v1486 = vpop.f32.mrb[0].mxu0
        %v1487 = vadd.f32 0.0, %v1486
        %1488 = vmatprep.mubr.bf16.mxu0 0
        %1489 = vmatmul.mubr.bf16.gmra.mrb[0].mxu0 %v1388
        %v1490 = vpop.f32.mrb[0].mxu0
        %v1491 = vadd.f32 0.0, %v1490
        %v1492 = vpop.f32.mrb[0].mxu0
        %v1493 = vadd.f32 0.0, %v1492
        %v1494 = vpop.f32.mrb[0].mxu0
        %v1495 = vadd.f32 0.0, %v1494
        %v1496 = vpop.f32.mrb[0].mxu0
        %v1497 = vadd.f32 0.0, %v1496
        %1498 = vmatprep.mubr.bf16.mxu0 0
        %1499 = vmatmul.mubr.bf16.gmra.mrb[0].mxu0 %v1391
        %v1500 = vpop.f32.mrb[0].mxu0
        %v1501 = vadd.f32 0.0, %v1500
        %v1502 = vpop.f32.mrb[0].mxu0
        %v1503 = vadd.f32 0.0, %v1502
        %v1504 = vpop.f32.mrb[0].mxu0
        %v1505 = vadd.f32 0.0, %v1504
        %v1506 = vpop.f32.mrb[0].mxu0
        %v1507 = vadd.f32 0.0, %v1506
        %1508 = vmatprep.mubr.bf16.mxu0 0
        %1509 = vmatmul.mubr.bf16.gmra.mrb[0].mxu0 %v1394
        %v1510 = vpop.f32.mrb[0].mxu0
        %v1511 = vadd.f32 0.0, %v1510
        %v1512 = vpop.f32.mrb[0].mxu0
        %v1513 = vadd.f32 0.0, %v1512
        %v1514 = vpop.f32.mrb[0].mxu0
        %v1515 = vadd.f32 0.0, %v1514
        %v1516 = vpop.f32.mrb[0].mxu0
        %v1517 = vadd.f32 0.0, %v1516
        %1518 = vmatprep.mubr.bf16.mxu0 0
        %1519 = vmatmul.mubr.bf16.gmra.mrb[0].mxu0 %v1397
        %v1520 = vpop.f32.mrb[0].mxu0
        %v1521 = vadd.f32 0.0, %v1520
        %v1522 = vpop.f32.mrb[0].mxu0
        %v1523 = vadd.f32 0.0, %v1522
        %v1524 = vpop.f32.mrb[0].mxu0
        %v1525 = vadd.f32 0.0, %v1524
        %v1526 = vpop.f32.mrb[0].mxu0
        %v1527 = vadd.f32 0.0, %v1526
        %1528 = vmatprep.mubr.bf16.mxu0 0
        %1529 = vmatmul.mubr.bf16.gmra.mrb[0].mxu0 %v1400
        %v1530 = vpop.f32.mrb[0].mxu0
        %v1531 = vadd.f32 0.0, %v1530
        %v1532 = vpop.f32.mrb[0].mxu0
        %v1533 = vadd.f32 0.0, %v1532
        %v1534 = vpop.f32.mrb[0].mxu0
        %v1535 = vadd.f32 0.0, %v1534
        %v1536 = vpop.f32.mrb[0].mxu0
        %v1537 = vadd.f32 0.0, %v1536
        %1538 = vmatprep.mubr.bf16.mxu0 0
        %1539 = vmatmul.mubr.bf16.gmra.mrb[0].mxu0 %v1403
        %v1540 = vpop.f32.mrb[0].mxu0
        %v1541 = vadd.f32 0.0, %v1540
        %v1542 = vpop.f32.mrb[0].mxu0
        %v1543 = vadd.f32 0.0, %v1542
        %v1544 = vpop.f32.mrb[0].mxu0
        %v1545 = vadd.f32 0.0, %v1544
        %v1546 = vpop.f32.mrb[0].mxu0
        %v1547 = vadd.f32 0.0, %v1546
        %1548 = vmatprep.mubr.bf16.mxu0 0
        %1549 = vmatmul.mubr.bf16.gmra.mrb[0].mxu0 %v1406
        %v1550 = vpop.f32.mrb[0].mxu0
        %v1551 = vadd.f32 0.0, %v1550
        %v1552 = vpop.f32.mrb[0].mxu0
        %v1553 = vadd.f32 0.0, %v1552
        %v1554 = vpop.f32.mrb[0].mxu0
        %v1555 = vadd.f32 0.0, %v1554
        %v1556 = vpop.f32.mrb[0].mxu0
        %v1557 = vadd.f32 0.0, %v1556
        %1558 = vmatprep.mubr.bf16.mxu0 0
        %1559 = vmatmul.mubr.bf16.gmra.mrb[0].mxu0 %v1409
        %v1560 = vpop.f32.mrb[0].mxu0
        %v1561 = vadd.f32 0.0, %v1560
        %v1562 = vpop.f32.mrb[0].mxu0
        %v1563 = vadd.f32 0.0, %v1562
        %v1564 = vpop.f32.mrb[0].mxu0
        %v1565 = vadd.f32 0.0, %v1564
        %v1566 = vpop.f32.mrb[0].mxu0
        %v1567 = vadd.f32 0.0, %v1566
        %1568 = vmatprep.mubr.bf16.mxu0 0
        %1569 = vmatmul.mubr.bf16.gmra.mrb[0].mxu0 %v1412
        %v1570 = vpop.f32.mrb[0].mxu0
        %v1571 = vadd.f32 0.0, %v1570
        %v1572 = vpop.f32.mrb[0].mxu0
        %v1573 = vadd.f32 0.0, %v1572
        %v1574 = vpop.f32.mrb[0].mxu0
        %v1575 = vadd.f32 0.0, %v1574
        %v1576 = vpop.f32.mrb[0].mxu0
        %v1577 = vadd.f32 0.0, %v1576
        %1578 = vmatprep.mubr.bf16.mxu0 0
        %1579 = vmatmul.mubr.bf16.gmra.mrb[0].mxu0 %v1415
        %v1580 = vpop.f32.mrb[0].mxu0
        %v1581 = vadd.f32 0.0, %v1580
        %v1582 = vpop.f32.mrb[0].mxu0
        %v1583 = vadd.f32 0.0, %v1582
        %v1584 = vpop.f32.mrb[0].mxu0
        %v1585 = vadd.f32 0.0, %v1584
        %v1586 = vpop.f32.mrb[0].mxu0
        %v1587 = vadd.f32 0.0, %v1586
        %1588 = vmatprep.mubr.bf16.mxu0 0
        %1589 = vmatmul.mubr.bf16.gmra.mrb[0].mxu0 %v1418
        %v1590 = vpop.f32.mrb[0].mxu0
        %v1591 = vadd.f32 0.0, %v1590
        %v1592 = vpop.f32.mrb[0].mxu0
        %v1593 = vadd.f32 0.0, %v1592
        %v1594 = vpop.f32.mrb[0].mxu0
        %v1595 = vadd.f32 0.0, %v1594
        %v1596 = vpop.f32.mrb[0].mxu0
        %v1597 = vadd.f32 0.0, %v1596
        %1598 = vmatprep.mubr.bf16.mxu0 0
        %1599 = vmatmul.mubr.bf16.gmra.mrb[0].mxu0 %v1421
        %v1600 = vpop.f32.mrb[0].mxu0
        %v1601 = vadd.f32 0.0, %v1600
        %v1602 = vpop.f32.mrb[0].mxu0
        %v1603 = vadd.f32 0.0, %v1602
        %v1604 = vpop.f32.mrb[0].mxu0
        %v1605 = vadd.f32 0.0, %v1604
        %v1606 = vpop.f32.mrb[0].mxu0
        %v1607 = vadd.f32 0.0, %v1606
        %1608 = vmatprep.mubr.bf16.mxu0 0
        %1609 = vmatmul.mubr.bf16.gmra.mrb[0].mxu0 %v1424
        %v1610 = vpop.f32.mrb[0].mxu0
        %v1611 = vadd.f32 0.0, %v1610
        %v1612 = vpop.f32.mrb[0].mxu0
        %v1613 = vadd.f32 0.0, %v1612
        %v1614 = vpop.f32.mrb[0].mxu0
        %v1615 = vadd.f32 0.0, %v1614
        %v1616 = vpop.f32.mrb[0].mxu0
        %v1617 = vadd.f32 0.0, %v1616
        %1618 = vdwg.mxu0
        %1619 = vmatprep.subr.bf16.mxu0 %v1340
        %1620 = vmatpush1.bf16.msra.mxu0 %v1339
        %1621 = vmatprep.subr.bf16.mxu0 %v1350
        %1622 = vmatpush1.bf16.msra.mxu0 %v1349
        %1623 = vmatprep.subr.bf16.mxu0 0
        %1624 = vmatpush1.bf16.msra.mxu0 0
        %1625 = vmatprep.subr.bf16.mxu0 0
        %1626 = vmatpush1.bf16.msra.mxu0 0
        %1627 = vmatprep.subr.bf16.mxu0 0
        %1628 = vmatpush1.bf16.msra.mxu0 0
        %1629 = vmatprep.subr.bf16.mxu0 0
        %1630 = vmatpush1.bf16.msra.mxu0 0
        %1631 = vmatprep.subr.bf16.mxu0 0
        %1632 = vmatpush1.bf16.msra.mxu0 0
        %1633 = vmatprep.subr.bf16.mxu0 0
        %1634 = vmatpush1.bf16.msra.mxu0 0
        %1635 = vmatprep.subr.bf16.mxu0 0
        %1636 = vmatpush1.bf16.msra.mxu0 0
        %1637 = vmatprep.subr.bf16.mxu0 0
        %1638 = vmatpush1.bf16.msra.mxu0 0
        %1639 = vmatprep.subr.bf16.mxu0 0
        %1640 = vmatpush1.bf16.msra.mxu0 0
        %1641 = vmatprep.subr.bf16.mxu0 0
        %1642 = vmatpush1.bf16.msra.mxu0 0
        %1643 = vmatprep.subr.bf16.mxu0 0
        %1644 = vmatpush1.bf16.msra.mxu0 0
        %1645 = vmatprep.subr.bf16.mxu0 0
        %1646 = vmatpush1.bf16.msra.mxu0 0
        %1647 = vmatprep.subr.bf16.mxu0 0
        %1648 = vmatpush1.bf16.msra.mxu0 0
        %1649 = vmatprep.subr.bf16.mxu0 0
        %1650 = vmatpush1.bf16.msra.mxu0 0
        %1651 = vmatprep.mubr.bf16.mxu0 0
        %1652 = vmatmul.mubr.bf16.gmra.mrb[0].mxu0 %v1379
        %v1653 = vpop.f32.mrb[0].mxu0
        %v1654 = vadd.f32 0.0, %v1653
        %v1655 = vpop.f32.mrb[0].mxu0
        %v1656 = vadd.f32 0.0, %v1655
        %v1657 = vpop.f32.mrb[0].mxu0
        %v1658 = vadd.f32 0.0, %v1657
        %v1659 = vpop.f32.mrb[0].mxu0
        %v1660 = vadd.f32 0.0, %v1659
        %1661 = vmatprep.mubr.bf16.mxu0 0
        %1662 = vmatmul.mubr.bf16.gmra.mrb[0].mxu0 %v1382
        %v1663 = vpop.f32.mrb[0].mxu0
        %v1664 = vadd.f32 0.0, %v1663
        %v1665 = vpop.f32.mrb[0].mxu0
        %v1666 = vadd.f32 0.0, %v1665
        %v1667 = vpop.f32.mrb[0].mxu0
        %v1668 = vadd.f32 0.0, %v1667
        %v1669 = vpop.f32.mrb[0].mxu0
        %v1670 = vadd.f32 0.0, %v1669
        %1671 = vmatprep.mubr.bf16.mxu0 0
        %1672 = vmatmul.mubr.bf16.gmra.mrb[0].mxu0 %v1385
        %v1673 = vpop.f32.mrb[0].mxu0
        %v1674 = vadd.f32 0.0, %v1673
        %v1675 = vpop.f32.mrb[0].mxu0
        %v1676 = vadd.f32 0.0, %v1675
        %v1677 = vpop.f32.mrb[0].mxu0
        %v1678 = vadd.f32 0.0, %v1677
        %v1679 = vpop.f32.mrb[0].mxu0
        %v1680 = vadd.f32 0.0, %v1679
        %1681 = vmatprep.mubr.bf16.mxu0 0
        %1682 = vmatmul.mubr.bf16.gmra.mrb[0].mxu0 %v1388
        %v1683 = vpop.f32.mrb[0].mxu0
        %v1684 = vadd.f32 0.0, %v1683
        %v1685 = vpop.f32.mrb[0].mxu0
        %v1686 = vadd.f32 0.0, %v1685
        %v1687 = vpop.f32.mrb[0].mxu0
        %v1688 = vadd.f32 0.0, %v1687
        %v1689 = vpop.f32.mrb[0].mxu0
        %v1690 = vadd.f32 0.0, %v1689
        %1691 = vmatprep.mubr.bf16.mxu0 0
        %1692 = vmatmul.mubr.bf16.gmra.mrb[0].mxu0 %v1391
        %v1693 = vpop.f32.mrb[0].mxu0
        %v1694 = vadd.f32 0.0, %v1693
        %v1695 = vpop.f32.mrb[0].mxu0
        %v1696 = vadd.f32 0.0, %v1695
        %v1697 = vpop.f32.mrb[0].mxu0
        %v1698 = vadd.f32 0.0, %v1697
        %v1699 = vpop.f32.mrb[0].mxu0
        %v1700 = vadd.f32 0.0, %v1699
        %1701 = vmatprep.mubr.bf16.mxu0 0
        %1702 = vmatmul.mubr.bf16.gmra.mrb[0].mxu0 %v1394
        %v1703 = vpop.f32.mrb[0].mxu0
        %v1704 = vadd.f32 0.0, %v1703
        %v1705 = vpop.f32.mrb[0].mxu0
        %v1706 = vadd.f32 0.0, %v1705
        %v1707 = vpop.f32.mrb[0].mxu0
        %v1708 = vadd.f32 0.0, %v1707
        %v1709 = vpop.f32.mrb[0].mxu0
        %v1710 = vadd.f32 0.0, %v1709
        %1711 = vmatprep.mubr.bf16.mxu0 0
        %1712 = vmatmul.mubr.bf16.gmra.mrb[0].mxu0 %v1397
        %v1713 = vpop.f32.mrb[0].mxu0
        %v1714 = vadd.f32 0.0, %v1713
        %v1715 = vpop.f32.mrb[0].mxu0
        %v1716 = vadd.f32 0.0, %v1715
        %v1717 = vpop.f32.mrb[0].mxu0
        %v1718 = vadd.f32 0.0, %v1717
        %v1719 = vpop.f32.mrb[0].mxu0
        %v1720 = vadd.f32 0.0, %v1719
        %1721 = vmatprep.mubr.bf16.mxu0 0
        %1722 = vmatmul.mubr.bf16.gmra.mrb[0].mxu0 %v1400
        %v1723 = vpop.f32.mrb[0].mxu0
        %v1724 = vadd.f32 0.0, %v1723
        %v1725 = vpop.f32.mrb[0].mxu0
        %v1726 = vadd.f32 0.0, %v1725
        %v1727 = vpop.f32.mrb[0].mxu0
        %v1728 = vadd.f32 0.0, %v1727
        %v1729 = vpop.f32.mrb[0].mxu0
        %v1730 = vadd.f32 0.0, %v1729
        %1731 = vmatprep.mubr.bf16.mxu0 0
        %1732 = vmatmul.mubr.bf16.gmra.mrb[0].mxu0 %v1403
        %v1733 = vpop.f32.mrb[0].mxu0
        %v1734 = vadd.f32 0.0, %v1733
        %v1735 = vpop.f32.mrb[0].mxu0
        %v1736 = vadd.f32 0.0, %v1735
        %v1737 = vpop.f32.mrb[0].mxu0
        %v1738 = vadd.f32 0.0, %v1737
        %v1739 = vpop.f32.mrb[0].mxu0
        %v1740 = vadd.f32 0.0, %v1739
        %1741 = vmatprep.mubr.bf16.mxu0 0
        %1742 = vmatmul.mubr.bf16.gmra.mrb[0].mxu0 %v1406
        %v1743 = vpop.f32.mrb[0].mxu0
        %v1744 = vadd.f32 0.0, %v1743
        %v1745 = vpop.f32.mrb[0].mxu0
        %v1746 = vadd.f32 0.0, %v1745
        %v1747 = vpop.f32.mrb[0].mxu0
        %v1748 = vadd.f32 0.0, %v1747
        %v1749 = vpop.f32.mrb[0].mxu0
        %v1750 = vadd.f32 0.0, %v1749
        %1751 = vmatprep.mubr.bf16.mxu0 0
        %1752 = vmatmul.mubr.bf16.gmra.mrb[0].mxu0 %v1409
        %v1753 = vpop.f32.mrb[0].mxu0
        %v1754 = vadd.f32 0.0, %v1753
        %v1755 = vpop.f32.mrb[0].mxu0
        %v1756 = vadd.f32 0.0, %v1755
        %v1757 = vpop.f32.mrb[0].mxu0
        %v1758 = vadd.f32 0.0, %v1757
        %v1759 = vpop.f32.mrb[0].mxu0
        %v1760 = vadd.f32 0.0, %v1759
        %1761 = vmatprep.mubr.bf16.mxu0 0
        %1762 = vmatmul.mubr.bf16.gmra.mrb[0].mxu0 %v1412
        %v1763 = vpop.f32.mrb[0].mxu0
        %v1764 = vadd.f32 0.0, %v1763
        %v1765 = vpop.f32.mrb[0].mxu0
        %v1766 = vadd.f32 0.0, %v1765
        %v1767 = vpop.f32.mrb[0].mxu0
        %v1768 = vadd.f32 0.0, %v1767
        %v1769 = vpop.f32.mrb[0].mxu0
        %v1770 = vadd.f32 0.0, %v1769
        %1771 = vmatprep.mubr.bf16.mxu0 0
        %1772 = vmatmul.mubr.bf16.gmra.mrb[0].mxu0 %v1415
        %v1773 = vpop.f32.mrb[0].mxu0
        %v1774 = vadd.f32 0.0, %v1773
        %v1775 = vpop.f32.mrb[0].mxu0
        %v1776 = vadd.f32 0.0, %v1775
        %v1777 = vpop.f32.mrb[0].mxu0
        %v1778 = vadd.f32 0.0, %v1777
        %v1779 = vpop.f32.mrb[0].mxu0
        %v1780 = vadd.f32 0.0, %v1779
        %1781 = vmatprep.mubr.bf16.mxu0 0
        %1782 = vmatmul.mubr.bf16.gmra.mrb[0].mxu0 %v1418
        %v1783 = vpop.f32.mrb[0].mxu0
        %v1784 = vadd.f32 0.0, %v1783
        %v1785 = vpop.f32.mrb[0].mxu0
        %v1786 = vadd.f32 0.0, %v1785
        %v1787 = vpop.f32.mrb[0].mxu0
        %v1788 = vadd.f32 0.0, %v1787
        %v1789 = vpop.f32.mrb[0].mxu0
        %v1790 = vadd.f32 0.0, %v1789
        %1791 = vmatprep.mubr.bf16.mxu0 0
        %1792 = vmatmul.mubr.bf16.gmra.mrb[0].mxu0 %v1421
        %v1793 = vpop.f32.mrb[0].mxu0
        %v1794 = vadd.f32 0.0, %v1793
        %v1795 = vpop.f32.mrb[0].mxu0
        %v1796 = vadd.f32 0.0, %v1795
        %v1797 = vpop.f32.mrb[0].mxu0
        %v1798 = vadd.f32 0.0, %v1797
        %v1799 = vpop.f32.mrb[0].mxu0
        %v1800 = vadd.f32 0.0, %v1799
        %1801 = vmatprep.mubr.bf16.mxu0 0
        %1802 = vmatmul.mubr.bf16.gmra.mrb[0].mxu0 %v1424
        %v1803 = vpop.f32.mrb[0].mxu0
        %v1804 = vadd.f32 0.0, %v1803
        %v1805 = vpop.f32.mrb[0].mxu0
        %v1806 = vadd.f32 0.0, %v1805
        %v1807 = vpop.f32.mrb[0].mxu0
        %v1808 = vadd.f32 0.0, %v1807
        %v1809 = vpop.f32.mrb[0].mxu0
        %v1810 = vadd.f32 0.0, %v1809
        %1811 = vdwg.mxu0
        %1812 = vmatprep.subr.bf16.mxu0 %v1342
        %1813 = vmatpush1.bf16.msra.mxu0 %v1341
        %1814 = vmatprep.subr.bf16.mxu0 %v1352
        %1815 = vmatpush1.bf16.msra.mxu0 %v1351
        %1816 = vmatprep.subr.bf16.mxu0 0
        %1817 = vmatpush1.bf16.msra.mxu0 0
        %1818 = vmatprep.subr.bf16.mxu0 0
        %1819 = vmatpush1.bf16.msra.mxu0 0
        %1820 = vmatprep.subr.bf16.mxu0 0
        %1821 = vmatpush1.bf16.msra.mxu0 0
        %1822 = vmatprep.subr.bf16.mxu0 0
        %1823 = vmatpush1.bf16.msra.mxu0 0
        %1824 = vmatprep.subr.bf16.mxu0 0
        %1825 = vmatpush1.bf16.msra.mxu0 0
        %1826 = vmatprep.subr.bf16.mxu0 0
        %1827 = vmatpush1.bf16.msra.mxu0 0
        %1828 = vmatprep.subr.bf16.mxu0 0
        %1829 = vmatpush1.bf16.msra.mxu0 0
        %1830 = vmatprep.subr.bf16.mxu0 0
        %1831 = vmatpush1.bf16.msra.mxu0 0
        %1832 = vmatprep.subr.bf16.mxu0 0
        %1833 = vmatpush1.bf16.msra.mxu0 0
        %1834 = vmatprep.subr.bf16.mxu0 0
        %1835 = vmatpush1.bf16.msra.mxu0 0
        %1836 = vmatprep.subr.bf16.mxu0 0
        %1837 = vmatpush1.bf16.msra.mxu0 0
        %1838 = vmatprep.subr.bf16.mxu0 0
        %1839 = vmatpush1.bf16.msra.mxu0 0
        %1840 = vmatprep.subr.bf16.mxu0 0
        %1841 = vmatpush1.bf16.msra.mxu0 0
        %1842 = vmatprep.subr.bf16.mxu0 0
        %1843 = vmatpush1.bf16.msra.mxu0 0
        %1844 = vmatprep.mubr.bf16.mxu0 0
        %1845 = vmatmul.mubr.bf16.gmra.mrb[0].mxu0 %v1379
        %v1846 = vpop.f32.mrb[0].mxu0
        %v1847 = vadd.f32 0.0, %v1846
        %v1848 = vpop.f32.mrb[0].mxu0
        %v1849 = vadd.f32 0.0, %v1848
        %v1850 = vpop.f32.mrb[0].mxu0
        %v1851 = vadd.f32 0.0, %v1850
        %v1852 = vpop.f32.mrb[0].mxu0
        %v1853 = vadd.f32 0.0, %v1852
        %1854 = vmatprep.mubr.bf16.mxu0 0
        %1855 = vmatmul.mubr.bf16.gmra.mrb[0].mxu0 %v1382
        %v1856 = vpop.f32.mrb[0].mxu0
        %v1857 = vadd.f32 0.0, %v1856
        %v1858 = vpop.f32.mrb[0].mxu0
        %v1859 = vadd.f32 0.0, %v1858
        %v1860 = vpop.f32.mrb[0].mxu0
        %v1861 = vadd.f32 0.0, %v1860
        %v1862 = vpop.f32.mrb[0].mxu0
        %v1863 = vadd.f32 0.0, %v1862
        %1864 = vmatprep.mubr.bf16.mxu0 0
        %1865 = vmatmul.mubr.bf16.gmra.mrb[0].mxu0 %v1385
        %v1866 = vpop.f32.mrb[0].mxu0
        %v1867 = vadd.f32 0.0, %v1866
        %v1868 = vpop.f32.mrb[0].mxu0
        %v1869 = vadd.f32 0.0, %v1868
        %v1870 = vpop.f32.mrb[0].mxu0
        %v1871 = vadd.f32 0.0, %v1870
        %v1872 = vpop.f32.mrb[0].mxu0
        %v1873 = vadd.f32 0.0, %v1872
        %1874 = vmatprep.mubr.bf16.mxu0 0
        %1875 = vmatmul.mubr.bf16.gmra.mrb[0].mxu0 %v1388
        %v1876 = vpop.f32.mrb[0].mxu0
        %v1877 = vadd.f32 0.0, %v1876
        %v1878 = vpop.f32.mrb[0].mxu0
        %v1879 = vadd.f32 0.0, %v1878
        %v1880 = vpop.f32.mrb[0].mxu0
        %v1881 = vadd.f32 0.0, %v1880
        %v1882 = vpop.f32.mrb[0].mxu0
        %v1883 = vadd.f32 0.0, %v1882
        %1884 = vmatprep.mubr.bf16.mxu0 0
        %1885 = vmatmul.mubr.bf16.gmra.mrb[0].mxu0 %v1391
        %v1886 = vpop.f32.mrb[0].mxu0
        %v1887 = vadd.f32 0.0, %v1886
        %v1888 = vpop.f32.mrb[0].mxu0
        %v1889 = vadd.f32 0.0, %v1888
        %v1890 = vpop.f32.mrb[0].mxu0
        %v1891 = vadd.f32 0.0, %v1890
        %v1892 = vpop.f32.mrb[0].mxu0
        %v1893 = vadd.f32 0.0, %v1892
        %1894 = vmatprep.mubr.bf16.mxu0 0
        %1895 = vmatmul.mubr.bf16.gmra.mrb[0].mxu0 %v1394
        %v1896 = vpop.f32.mrb[0].mxu0
        %v1897 = vadd.f32 0.0, %v1896
        %v1898 = vpop.f32.mrb[0].mxu0
        %v1899 = vadd.f32 0.0, %v1898
        %v1900 = vpop.f32.mrb[0].mxu0
        %v1901 = vadd.f32 0.0, %v1900
        %v1902 = vpop.f32.mrb[0].mxu0
        %v1903 = vadd.f32 0.0, %v1902
        %1904 = vmatprep.mubr.bf16.mxu0 0
        %1905 = vmatmul.mubr.bf16.gmra.mrb[0].mxu0 %v1397
        %v1906 = vpop.f32.mrb[0].mxu0
        %v1907 = vadd.f32 0.0, %v1906
        %v1908 = vpop.f32.mrb[0].mxu0
        %v1909 = vadd.f32 0.0, %v1908
        %v1910 = vpop.f32.mrb[0].mxu0
        %v1911 = vadd.f32 0.0, %v1910
        %v1912 = vpop.f32.mrb[0].mxu0
        %v1913 = vadd.f32 0.0, %v1912
        %1914 = vmatprep.mubr.bf16.mxu0 0
        %1915 = vmatmul.mubr.bf16.gmra.mrb[0].mxu0 %v1400
        %v1916 = vpop.f32.mrb[0].mxu0
        %v1917 = vadd.f32 0.0, %v1916
        %v1918 = vpop.f32.mrb[0].mxu0
        %v1919 = vadd.f32 0.0, %v1918
        %v1920 = vpop.f32.mrb[0].mxu0
        %v1921 = vadd.f32 0.0, %v1920
        %v1922 = vpop.f32.mrb[0].mxu0
        %v1923 = vadd.f32 0.0, %v1922
        %1924 = vmatprep.mubr.bf16.mxu0 0
        %1925 = vmatmul.mubr.bf16.gmra.mrb[0].mxu0 %v1403
        %v1926 = vpop.f32.mrb[0].mxu0
        %v1927 = vadd.f32 0.0, %v1926
        %v1928 = vpop.f32.mrb[0].mxu0
        %v1929 = vadd.f32 0.0, %v1928
        %v1930 = vpop.f32.mrb[0].mxu0
        %v1931 = vadd.f32 0.0, %v1930
        %v1932 = vpop.f32.mrb[0].mxu0
        %v1933 = vadd.f32 0.0, %v1932
        %1934 = vmatprep.mubr.bf16.mxu0 0
        %1935 = vmatmul.mubr.bf16.gmra.mrb[0].mxu0 %v1406
        %v1936 = vpop.f32.mrb[0].mxu0
        %v1937 = vadd.f32 0.0, %v1936
        %v1938 = vpop.f32.mrb[0].mxu0
        %v1939 = vadd.f32 0.0, %v1938
        %v1940 = vpop.f32.mrb[0].mxu0
        %v1941 = vadd.f32 0.0, %v1940
        %v1942 = vpop.f32.mrb[0].mxu0
        %v1943 = vadd.f32 0.0, %v1942
        %1944 = vmatprep.mubr.bf16.mxu0 0
        %1945 = vmatmul.mubr.bf16.gmra.mrb[0].mxu0 %v1409
        %v1946 = vpop.f32.mrb[0].mxu0
        %v1947 = vadd.f32 0.0, %v1946
        %v1948 = vpop.f32.mrb[0].mxu0
        %v1949 = vadd.f32 0.0, %v1948
        %v1950 = vpop.f32.mrb[0].mxu0
        %v1951 = vadd.f32 0.0, %v1950
        %v1952 = vpop.f32.mrb[0].mxu0
        %v1953 = vadd.f32 0.0, %v1952
        %1954 = vmatprep.mubr.bf16.mxu0 0
        %1955 = vmatmul.mubr.bf16.gmra.mrb[0].mxu0 %v1412
        %v1956 = vpop.f32.mrb[0].mxu0
        %v1957 = vadd.f32 0.0, %v1956
        %v1958 = vpop.f32.mrb[0].mxu0
        %v1959 = vadd.f32 0.0, %v1958
        %v1960 = vpop.f32.mrb[0].mxu0
        %v1961 = vadd.f32 0.0, %v1960
        %v1962 = vpop.f32.mrb[0].mxu0
        %v1963 = vadd.f32 0.0, %v1962
        %1964 = vmatprep.mubr.bf16.mxu0 0
        %1965 = vmatmul.mubr.bf16.gmra.mrb[0].mxu0 %v1415
        %v1966 = vpop.f32.mrb[0].mxu0
        %v1967 = vadd.f32 0.0, %v1966
        %v1968 = vpop.f32.mrb[0].mxu0
        %v1969 = vadd.f32 0.0, %v1968
        %v1970 = vpop.f32.mrb[0].mxu0
        %v1971 = vadd.f32 0.0, %v1970
        %v1972 = vpop.f32.mrb[0].mxu0
        %v1973 = vadd.f32 0.0, %v1972
        %1974 = vmatprep.mubr.bf16.mxu0 0
        %1975 = vmatmul.mubr.bf16.gmra.mrb[0].mxu0 %v1418
        %v1976 = vpop.f32.mrb[0].mxu0
        %v1977 = vadd.f32 0.0, %v1976
        %v1978 = vpop.f32.mrb[0].mxu0
        %v1979 = vadd.f32 0.0, %v1978
        %v1980 = vpop.f32.mrb[0].mxu0
        %v1981 = vadd.f32 0.0, %v1980
        %v1982 = vpop.f32.mrb[0].mxu0
        %v1983 = vadd.f32 0.0, %v1982
        %1984 = vmatprep.mubr.bf16.mxu0 0
        %1985 = vmatmul.mubr.bf16.gmra.mrb[0].mxu0 %v1421
        %v1986 = vpop.f32.mrb[0].mxu0
        %v1987 = vadd.f32 0.0, %v1986
        %v1988 = vpop.f32.mrb[0].mxu0
        %v1989 = vadd.f32 0.0, %v1988
        %v1990 = vpop.f32.mrb[0].mxu0
        %v1991 = vadd.f32 0.0, %v1990
        %v1992 = vpop.f32.mrb[0].mxu0
        %v1993 = vadd.f32 0.0, %v1992
        %1994 = vmatprep.mubr.bf16.mxu0 0
        %1995 = vmatmul.mubr.bf16.gmra.mrb[0].mxu0 %v1424
        %v1996 = vpop.f32.mrb[0].mxu0
        %v1997 = vadd.f32 0.0, %v1996
        %v1998 = vpop.f32.mrb[0].mxu0
        %v1999 = vadd.f32 0.0, %v1998
        %v2000 = vpop.f32.mrb[0].mxu0
        %v2001 = vadd.f32 0.0, %v2000
        %v2002 = vpop.f32.mrb[0].mxu0
        %v2003 = vadd.f32 0.0, %v2002
        %2004 = vdwg.mxu0
        %2005 = vmatprep.subr.bf16.mxu0 %v1344
        %2006 = vmatpush1.bf16.msra.mxu0 %v1343
        %2007 = vmatprep.subr.bf16.mxu0 %v1354
        %2008 = vmatpush1.bf16.msra.mxu0 %v1353
        %2009 = vmatprep.subr.bf16.mxu0 0
        %2010 = vmatpush1.bf16.msra.mxu0 0
        %2011 = vmatprep.subr.bf16.mxu0 0
        %2012 = vmatpush1.bf16.msra.mxu0 0
        %2013 = vmatprep.subr.bf16.mxu0 0
        %2014 = vmatpush1.bf16.msra.mxu0 0
        %2015 = vmatprep.subr.bf16.mxu0 0
        %2016 = vmatpush1.bf16.msra.mxu0 0
        %2017 = vmatprep.subr.bf16.mxu0 0
        %2018 = vmatpush1.bf16.msra.mxu0 0
        %2019 = vmatprep.subr.bf16.mxu0 0
        %2020 = vmatpush1.bf16.msra.mxu0 0
        %2021 = vmatprep.subr.bf16.mxu0 0
        %2022 = vmatpush1.bf16.msra.mxu0 0
        %2023 = vmatprep.subr.bf16.mxu0 0
        %2024 = vmatpush1.bf16.msra.mxu0 0
        %2025 = vmatprep.subr.bf16.mxu0 0
        %2026 = vmatpush1.bf16.msra.mxu0 0
        %2027 = vmatprep.subr.bf16.mxu0 0
        %2028 = vmatpush1.bf16.msra.mxu0 0
        %2029 = vmatprep.subr.bf16.mxu0 0
        %2030 = vmatpush1.bf16.msra.mxu0 0
        %2031 = vmatprep.subr.bf16.mxu0 0
        %2032 = vmatpush1.bf16.msra.mxu0 0
        %2033 = vmatprep.subr.bf16.mxu0 0
        %2034 = vmatpush1.bf16.msra.mxu0 0
        %2035 = vmatprep.subr.bf16.mxu0 0
        %2036 = vmatpush1.bf16.msra.mxu0 0
        %2037 = vmatprep.mubr.bf16.mxu0 0
        %2038 = vmatmul.mubr.bf16.gmra.mrb[0].mxu0 %v1379
        %v2039 = vpop.f32.mrb[0].mxu0
        %v2040 = vadd.f32 0.0, %v2039
        %v2041 = vpop.f32.mrb[0].mxu0
        %v2042 = vadd.f32 0.0, %v2041
        %v2043 = vpop.f32.mrb[0].mxu0
        %v2044 = vadd.f32 0.0, %v2043
        %v2045 = vpop.f32.mrb[0].mxu0
        %v2046 = vadd.f32 0.0, %v2045
        %2047 = vmatprep.mubr.bf16.mxu0 0
        %2048 = vmatmul.mubr.bf16.gmra.mrb[0].mxu0 %v1382
        %v2049 = vpop.f32.mrb[0].mxu0
        %v2050 = vadd.f32 0.0, %v2049
        %v2051 = vpop.f32.mrb[0].mxu0
        %v2052 = vadd.f32 0.0, %v2051
        %v2053 = vpop.f32.mrb[0].mxu0
        %v2054 = vadd.f32 0.0, %v2053
        %v2055 = vpop.f32.mrb[0].mxu0
        %v2056 = vadd.f32 0.0, %v2055
        %2057 = vmatprep.mubr.bf16.mxu0 0
        %2058 = vmatmul.mubr.bf16.gmra.mrb[0].mxu0 %v1385
        %v2059 = vpop.f32.mrb[0].mxu0
        %v2060 = vadd.f32 0.0, %v2059
        %v2061 = vpop.f32.mrb[0].mxu0
        %v2062 = vadd.f32 0.0, %v2061
        %v2063 = vpop.f32.mrb[0].mxu0
        %v2064 = vadd.f32 0.0, %v2063
        %v2065 = vpop.f32.mrb[0].mxu0
        %v2066 = vadd.f32 0.0, %v2065
        %2067 = vmatprep.mubr.bf16.mxu0 0
        %2068 = vmatmul.mubr.bf16.gmra.mrb[0].mxu0 %v1388
        %v2069 = vpop.f32.mrb[0].mxu0
        %v2070 = vadd.f32 0.0, %v2069
        %v2071 = vpop.f32.mrb[0].mxu0
        %v2072 = vadd.f32 0.0, %v2071
        %v2073 = vpop.f32.mrb[0].mxu0
        %v2074 = vadd.f32 0.0, %v2073
        %v2075 = vpop.f32.mrb[0].mxu0
        %v2076 = vadd.f32 0.0, %v2075
        %2077 = vmatprep.mubr.bf16.mxu0 0
        %2078 = vmatmul.mubr.bf16.gmra.mrb[0].mxu0 %v1391
        %v2079 = vpop.f32.mrb[0].mxu0
        %v2080 = vadd.f32 0.0, %v2079
        %v2081 = vpop.f32.mrb[0].mxu0
        %v2082 = vadd.f32 0.0, %v2081
        %v2083 = vpop.f32.mrb[0].mxu0
        %v2084 = vadd.f32 0.0, %v2083
        %v2085 = vpop.f32.mrb[0].mxu0
        %v2086 = vadd.f32 0.0, %v2085
        %2087 = vmatprep.mubr.bf16.mxu0 0
        %2088 = vmatmul.mubr.bf16.gmra.mrb[0].mxu0 %v1394
        %v2089 = vpop.f32.mrb[0].mxu0
        %v2090 = vadd.f32 0.0, %v2089
        %v2091 = vpop.f32.mrb[0].mxu0
        %v2092 = vadd.f32 0.0, %v2091
        %v2093 = vpop.f32.mrb[0].mxu0
        %v2094 = vadd.f32 0.0, %v2093
        %v2095 = vpop.f32.mrb[0].mxu0
        %v2096 = vadd.f32 0.0, %v2095
        %2097 = vmatprep.mubr.bf16.mxu0 0
        %2098 = vmatmul.mubr.bf16.gmra.mrb[0].mxu0 %v1397
        %v2099 = vpop.f32.mrb[0].mxu0
        %v2100 = vadd.f32 0.0, %v2099
        %v2101 = vpop.f32.mrb[0].mxu0
        %v2102 = vadd.f32 0.0, %v2101
        %v2103 = vpop.f32.mrb[0].mxu0
        %v2104 = vadd.f32 0.0, %v2103
        %v2105 = vpop.f32.mrb[0].mxu0
        %v2106 = vadd.f32 0.0, %v2105
        %2107 = vmatprep.mubr.bf16.mxu0 0
        %2108 = vmatmul.mubr.bf16.gmra.mrb[0].mxu0 %v1400
        %v2109 = vpop.f32.mrb[0].mxu0
        %v2110 = vadd.f32 0.0, %v2109
        %v2111 = vpop.f32.mrb[0].mxu0
        %v2112 = vadd.f32 0.0, %v2111
        %v2113 = vpop.f32.mrb[0].mxu0
        %v2114 = vadd.f32 0.0, %v2113
        %v2115 = vpop.f32.mrb[0].mxu0
        %v2116 = vadd.f32 0.0, %v2115
        %2117 = vmatprep.mubr.bf16.mxu0 0
        %2118 = vmatmul.mubr.bf16.gmra.mrb[0].mxu0 %v1403
        %v2119 = vpop.f32.mrb[0].mxu0
        %v2120 = vadd.f32 0.0, %v2119
        %v2121 = vpop.f32.mrb[0].mxu0
        %v2122 = vadd.f32 0.0, %v2121
        %v2123 = vpop.f32.mrb[0].mxu0
        %v2124 = vadd.f32 0.0, %v2123
        %v2125 = vpop.f32.mrb[0].mxu0
        %v2126 = vadd.f32 0.0, %v2125
        %2127 = vmatprep.mubr.bf16.mxu0 0
        %2128 = vmatmul.mubr.bf16.gmra.mrb[0].mxu0 %v1406
        %v2129 = vpop.f32.mrb[0].mxu0
        %v2130 = vadd.f32 0.0, %v2129
        %v2131 = vpop.f32.mrb[0].mxu0
        %v2132 = vadd.f32 0.0, %v2131
        %v2133 = vpop.f32.mrb[0].mxu0
        %v2134 = vadd.f32 0.0, %v2133
        %v2135 = vpop.f32.mrb[0].mxu0
        %v2136 = vadd.f32 0.0, %v2135
        %2137 = vmatprep.mubr.bf16.mxu0 0
        %2138 = vmatmul.mubr.bf16.gmra.mrb[0].mxu0 %v1409
        %v2139 = vpop.f32.mrb[0].mxu0
        %v2140 = vadd.f32 0.0, %v2139
        %v2141 = vpop.f32.mrb[0].mxu0
        %v2142 = vadd.f32 0.0, %v2141
        %v2143 = vpop.f32.mrb[0].mxu0
        %v2144 = vadd.f32 0.0, %v2143
        %v2145 = vpop.f32.mrb[0].mxu0
        %v2146 = vadd.f32 0.0, %v2145
        %2147 = vmatprep.mubr.bf16.mxu0 0
        %2148 = vmatmul.mubr.bf16.gmra.mrb[0].mxu0 %v1412
        %v2149 = vpop.f32.mrb[0].mxu0
        %v2150 = vadd.f32 0.0, %v2149
        %v2151 = vpop.f32.mrb[0].mxu0
        %v2152 = vadd.f32 0.0, %v2151
        %v2153 = vpop.f32.mrb[0].mxu0
        %v2154 = vadd.f32 0.0, %v2153
        %v2155 = vpop.f32.mrb[0].mxu0
        %v2156 = vadd.f32 0.0, %v2155
        %2157 = vmatprep.mubr.bf16.mxu0 0
        %2158 = vmatmul.mubr.bf16.gmra.mrb[0].mxu0 %v1415
        %v2159 = vpop.f32.mrb[0].mxu0
        %v2160 = vadd.f32 0.0, %v2159
        %v2161 = vpop.f32.mrb[0].mxu0
        %v2162 = vadd.f32 0.0, %v2161
        %v2163 = vpop.f32.mrb[0].mxu0
        %v2164 = vadd.f32 0.0, %v2163
        %v2165 = vpop.f32.mrb[0].mxu0
        %v2166 = vadd.f32 0.0, %v2165
        %2167 = vmatprep.mubr.bf16.mxu0 0
        %2168 = vmatmul.mubr.bf16.gmra.mrb[0].mxu0 %v1418
        %v2169 = vpop.f32.mrb[0].mxu0
        %v2170 = vadd.f32 0.0, %v2169
        %v2171 = vpop.f32.mrb[0].mxu0
        %v2172 = vadd.f32 0.0, %v2171
        %v2173 = vpop.f32.mrb[0].mxu0
        %v2174 = vadd.f32 0.0, %v2173
        %v2175 = vpop.f32.mrb[0].mxu0
        %v2176 = vadd.f32 0.0, %v2175
        %2177 = vmatprep.mubr.bf16.mxu0 0
        %2178 = vmatmul.mubr.bf16.gmra.mrb[0].mxu0 %v1421
        %v2179 = vpop.f32.mrb[0].mxu0
        %v2180 = vadd.f32 0.0, %v2179
        %v2181 = vpop.f32.mrb[0].mxu0
        %v2182 = vadd.f32 0.0, %v2181
        %v2183 = vpop.f32.mrb[0].mxu0
        %v2184 = vadd.f32 0.0, %v2183
        %v2185 = vpop.f32.mrb[0].mxu0
        %v2186 = vadd.f32 0.0, %v2185
        %2187 = vmatprep.mubr.bf16.mxu0 0
        %2188 = vmatmul.mubr.bf16.gmra.mrb[0].mxu0 %v1424
        %v2189 = vpop.f32.mrb[0].mxu0
        %v2190 = vadd.f32 0.0, %v2189
        %v2191 = vpop.f32.mrb[0].mxu0
        %v2192 = vadd.f32 0.0, %v2191
        %v2193 = vpop.f32.mrb[0].mxu0
        %v2194 = vadd.f32 0.0, %v2193
        %v2195 = vpop.f32.mrb[0].mxu0
        %v2196 = vadd.f32 0.0, %v2195
        %2197 = vdwg.mxu0
        %2198 = vmatprep.subr.bf16.mxu0 %v1346
        %2199 = vmatpush1.bf16.msra.mxu0 %v1345
        %2200 = vmatprep.subr.bf16.mxu0 %v1356
        %2201 = vmatpush1.bf16.msra.mxu0 %v1355
        %2202 = vmatprep.subr.bf16.mxu0 0
        %2203 = vmatpush1.bf16.msra.mxu0 0
        %2204 = vmatprep.subr.bf16.mxu0 0
        %2205 = vmatpush1.bf16.msra.mxu0 0
        %2206 = vmatprep.subr.bf16.mxu0 0
        %2207 = vmatpush1.bf16.msra.mxu0 0
        %2208 = vmatprep.subr.bf16.mxu0 0
        %2209 = vmatpush1.bf16.msra.mxu0 0
        %2210 = vmatprep.subr.bf16.mxu0 0
        %2211 = vmatpush1.bf16.msra.mxu0 0
        %2212 = vmatprep.subr.bf16.mxu0 0
        %2213 = vmatpush1.bf16.msra.mxu0 0
        %2214 = vmatprep.subr.bf16.mxu0 0
        %2215 = vmatpush1.bf16.msra.mxu0 0
        %2216 = vmatprep.subr.bf16.mxu0 0
        %2217 = vmatpush1.bf16.msra.mxu0 0
        %2218 = vmatprep.subr.bf16.mxu0 0
        %2219 = vmatpush1.bf16.msra.mxu0 0
        %2220 = vmatprep.subr.bf16.mxu0 0
        %2221 = vmatpush1.bf16.msra.mxu0 0
        %2222 = vmatprep.subr.bf16.mxu0 0
        %2223 = vmatpush1.bf16.msra.mxu0 0
        %2224 = vmatprep.subr.bf16.mxu0 0
        %2225 = vmatpush1.bf16.msra.mxu0 0
        %2226 = vmatprep.subr.bf16.mxu0 0
        %2227 = vmatpush1.bf16.msra.mxu0 0
        %2228 = vmatprep.subr.bf16.mxu0 0
        %2229 = vmatpush1.bf16.msra.mxu0 0
        %2230 = vmatprep.mubr.bf16.mxu0 0
        %2231 = vmatmul.mubr.bf16.gmra.mrb[0].mxu0 %v1379
        %v2232 = vpop.f32.mrb[0].mxu0
        %v2233 = vadd.f32 0.0, %v2232
        %v2234 = vpop.f32.mrb[0].mxu0
        %v2235 = vadd.f32 0.0, %v2234
        %v2236 = vpop.f32.mrb[0].mxu0
        %v2237 = vadd.f32 0.0, %v2236
        %v2238 = vpop.f32.mrb[0].mxu0
        %v2239 = vadd.f32 0.0, %v2238
        %2240 = vmatprep.mubr.bf16.mxu0 0
        %2241 = vmatmul.mubr.bf16.gmra.mrb[0].mxu0 %v1382
        %v2242 = vpop.f32.mrb[0].mxu0
        %v2243 = vadd.f32 0.0, %v2242
        %v2244 = vpop.f32.mrb[0].mxu0
        %v2245 = vadd.f32 0.0, %v2244
        %v2246 = vpop.f32.mrb[0].mxu0
        %v2247 = vadd.f32 0.0, %v2246
        %v2248 = vpop.f32.mrb[0].mxu0
        %v2249 = vadd.f32 0.0, %v2248
        %2250 = vmatprep.mubr.bf16.mxu0 0
        %2251 = vmatmul.mubr.bf16.gmra.mrb[0].mxu0 %v1385
        %v2252 = vpop.f32.mrb[0].mxu0
        %v2253 = vadd.f32 0.0, %v2252
        %v2254 = vpop.f32.mrb[0].mxu0
        %v2255 = vadd.f32 0.0, %v2254
        %v2256 = vpop.f32.mrb[0].mxu0
        %v2257 = vadd.f32 0.0, %v2256
        %v2258 = vpop.f32.mrb[0].mxu0
        %v2259 = vadd.f32 0.0, %v2258
        %2260 = vmatprep.mubr.bf16.mxu0 0
        %2261 = vmatmul.mubr.bf16.gmra.mrb[0].mxu0 %v1388
        %v2262 = vpop.f32.mrb[0].mxu0
        %v2263 = vadd.f32 0.0, %v2262
        %v2264 = vpop.f32.mrb[0].mxu0
        %v2265 = vadd.f32 0.0, %v2264
        %v2266 = vpop.f32.mrb[0].mxu0
        %v2267 = vadd.f32 0.0, %v2266
        %v2268 = vpop.f32.mrb[0].mxu0
        %v2269 = vadd.f32 0.0, %v2268
        %2270 = vmatprep.mubr.bf16.mxu0 0
        %2271 = vmatmul.mubr.bf16.gmra.mrb[0].mxu0 %v1391
        %v2272 = vpop.f32.mrb[0].mxu0
        %v2273 = vadd.f32 0.0, %v2272
        %v2274 = vpop.f32.mrb[0].mxu0
        %v2275 = vadd.f32 0.0, %v2274
        %v2276 = vpop.f32.mrb[0].mxu0
        %v2277 = vadd.f32 0.0, %v2276
        %v2278 = vpop.f32.mrb[0].mxu0
        %v2279 = vadd.f32 0.0, %v2278
        %2280 = vmatprep.mubr.bf16.mxu0 0
        %2281 = vmatmul.mubr.bf16.gmra.mrb[0].mxu0 %v1394
        %v2282 = vpop.f32.mrb[0].mxu0
        %v2283 = vadd.f32 0.0, %v2282
        %v2284 = vpop.f32.mrb[0].mxu0
        %v2285 = vadd.f32 0.0, %v2284
        %v2286 = vpop.f32.mrb[0].mxu0
        %v2287 = vadd.f32 0.0, %v2286
        %v2288 = vpop.f32.mrb[0].mxu0
        %v2289 = vadd.f32 0.0, %v2288
        %2290 = vmatprep.mubr.bf16.mxu0 0
        %2291 = vmatmul.mubr.bf16.gmra.mrb[0].mxu0 %v1397
        %v2292 = vpop.f32.mrb[0].mxu0
        %v2293 = vadd.f32 0.0, %v2292
        %v2294 = vpop.f32.mrb[0].mxu0
        %v2295 = vadd.f32 0.0, %v2294
        %v2296 = vpop.f32.mrb[0].mxu0
        %v2297 = vadd.f32 0.0, %v2296
        %v2298 = vpop.f32.mrb[0].mxu0
        %v2299 = vadd.f32 0.0, %v2298
        %2300 = vmatprep.mubr.bf16.mxu0 0
        %2301 = vmatmul.mubr.bf16.gmra.mrb[0].mxu0 %v1400
        %v2302 = vpop.f32.mrb[0].mxu0
        %v2303 = vadd.f32 0.0, %v2302
        %v2304 = vpop.f32.mrb[0].mxu0
        %v2305 = vadd.f32 0.0, %v2304
        %v2306 = vpop.f32.mrb[0].mxu0
        %v2307 = vadd.f32 0.0, %v2306
        %v2308 = vpop.f32.mrb[0].mxu0
        %v2309 = vadd.f32 0.0, %v2308
        %2310 = vmatprep.mubr.bf16.mxu0 0
        %2311 = vmatmul.mubr.bf16.gmra.mrb[0].mxu0 %v1403
        %v2312 = vpop.f32.mrb[0].mxu0
        %v2313 = vadd.f32 0.0, %v2312
        %v2314 = vpop.f32.mrb[0].mxu0
        %v2315 = vadd.f32 0.0, %v2314
        %v2316 = vpop.f32.mrb[0].mxu0
        %v2317 = vadd.f32 0.0, %v2316
        %v2318 = vpop.f32.mrb[0].mxu0
        %v2319 = vadd.f32 0.0, %v2318
        %2320 = vmatprep.mubr.bf16.mxu0 0
        %2321 = vmatmul.mubr.bf16.gmra.mrb[0].mxu0 %v1406
        %v2322 = vpop.f32.mrb[0].mxu0
        %v2323 = vadd.f32 0.0, %v2322
        %v2324 = vpop.f32.mrb[0].mxu0
        %v2325 = vadd.f32 0.0, %v2324
        %v2326 = vpop.f32.mrb[0].mxu0
        %v2327 = vadd.f32 0.0, %v2326
        %v2328 = vpop.f32.mrb[0].mxu0
        %v2329 = vadd.f32 0.0, %v2328
        %2330 = vmatprep.mubr.bf16.mxu0 0
        %2331 = vmatmul.mubr.bf16.gmra.mrb[0].mxu0 %v1409
        %v2332 = vpop.f32.mrb[0].mxu0
        %v2333 = vadd.f32 0.0, %v2332
        %v2334 = vpop.f32.mrb[0].mxu0
        %v2335 = vadd.f32 0.0, %v2334
        %v2336 = vpop.f32.mrb[0].mxu0
        %v2337 = vadd.f32 0.0, %v2336
        %v2338 = vpop.f32.mrb[0].mxu0
        %v2339 = vadd.f32 0.0, %v2338
        %2340 = vmatprep.mubr.bf16.mxu0 0
        %2341 = vmatmul.mubr.bf16.gmra.mrb[0].mxu0 %v1412
        %v2342 = vpop.f32.mrb[0].mxu0
        %v2343 = vadd.f32 0.0, %v2342
        %v2344 = vpop.f32.mrb[0].mxu0
        %v2345 = vadd.f32 0.0, %v2344
        %v2346 = vpop.f32.mrb[0].mxu0
        %v2347 = vadd.f32 0.0, %v2346
        %v2348 = vpop.f32.mrb[0].mxu0
        %v2349 = vadd.f32 0.0, %v2348
        %2350 = vmatprep.mubr.bf16.mxu0 0
        %2351 = vmatmul.mubr.bf16.gmra.mrb[0].mxu0 %v1415
        %v2352 = vpop.f32.mrb[0].mxu0
        %v2353 = vadd.f32 0.0, %v2352
        %v2354 = vpop.f32.mrb[0].mxu0
        %v2355 = vadd.f32 0.0, %v2354
        %v2356 = vpop.f32.mrb[0].mxu0
        %v2357 = vadd.f32 0.0, %v2356
        %v2358 = vpop.f32.mrb[0].mxu0
        %v2359 = vadd.f32 0.0, %v2358
        %2360 = vmatprep.mubr.bf16.mxu0 0
        %2361 = vmatmul.mubr.bf16.gmra.mrb[0].mxu0 %v1418
        %v2362 = vpop.f32.mrb[0].mxu0
        %v2363 = vadd.f32 0.0, %v2362
        %v2364 = vpop.f32.mrb[0].mxu0
        %v2365 = vadd.f32 0.0, %v2364
        %v2366 = vpop.f32.mrb[0].mxu0
        %v2367 = vadd.f32 0.0, %v2366
        %v2368 = vpop.f32.mrb[0].mxu0
        %v2369 = vadd.f32 0.0, %v2368
        %2370 = vmatprep.mubr.bf16.mxu0 0
        %2371 = vmatmul.mubr.bf16.gmra.mrb[0].mxu0 %v1421
        %v2372 = vpop.f32.mrb[0].mxu0
        %v2373 = vadd.f32 0.0, %v2372
        %v2374 = vpop.f32.mrb[0].mxu0
        %v2375 = vadd.f32 0.0, %v2374
        %v2376 = vpop.f32.mrb[0].mxu0
        %v2377 = vadd.f32 0.0, %v2376
        %v2378 = vpop.f32.mrb[0].mxu0
        %v2379 = vadd.f32 0.0, %v2378
        %2380 = vmatprep.mubr.bf16.mxu0 0
        %2381 = vmatmul.mubr.bf16.gmra.mrb[0].mxu0 %v1424
        %v2382 = vpop.f32.mrb[0].mxu0
        %v2383 = vadd.f32 0.0, %v2382
        %v2384 = vpop.f32.mrb[0].mxu0
        %v2385 = vadd.f32 0.0, %v2384
        %v2386 = vpop.f32.mrb[0].mxu0
        %v2387 = vadd.f32 0.0, %v2386
        %v2388 = vpop.f32.mrb[0].mxu0
        %v2389 = vadd.f32 0.0, %v2388
        %2390 = vdwg.mxu0
        %v2391 = vld [vmem:[%s5] sm:$0xff]
        %v2392 = vld [vmem:[%s5 + $0x8] sm:$0x3]
        %v2395 = vlaneseq
        %v2396 = vshrl.u32 %v2395, 7
        %v2397 = vsub.s32 0, %v2396
        %v2398 = vrot.slane %v2391, %v2397
        %v2399 = vlaneseq
        %v2400 = vshrl.u32 %v2399, 7
        %v2401 = vsub.s32 1, %v2400
        %v2402 = vrot.slane %v2391, %v2401
        %v2403 = vlaneseq
        %v2404 = vshrl.u32 %v2403, 7
        %v2405 = vsub.s32 2, %v2404
        %v2406 = vrot.slane %v2391, %v2405
        %v2407 = vlaneseq
        %v2408 = vshrl.u32 %v2407, 7
        %v2409 = vsub.s32 3, %v2408
        %v2410 = vrot.slane %v2391, %v2409
        %v2411 = vlaneseq
        %v2412 = vshrl.u32 %v2411, 7
        %v2413 = vsub.s32 4, %v2412
        %v2414 = vrot.slane %v2391, %v2413
        %v2415 = vlaneseq
        %v2416 = vshrl.u32 %v2415, 7
        %v2417 = vsub.s32 5, %v2416
        %v2418 = vrot.slane %v2391, %v2417
        %v2419 = vlaneseq
        %v2420 = vshrl.u32 %v2419, 7
        %v2421 = vsub.s32 6, %v2420
        %v2422 = vrot.slane %v2391, %v2421
        %v2423 = vlaneseq
        %v2424 = vshrl.u32 %v2423, 7
        %v2425 = vsub.s32 7, %v2424
        %v2426 = vrot.slane %v2391, %v2425
        %v2427 = vlaneseq
        %v2428 = vshrl.u32 %v2427, 7
        %v2429 = vsub.s32 0, %v2428
        %v2430 = vrot.slane %v2392, %v2429
        %v2431 = vlaneseq
        %v2432 = vshrl.u32 %v2431, 7
        %v2433 = vsub.s32 1, %v2432
        %v2434 = vrot.slane %v2392, %v2433
        %v2445 = vmul.f32 %v1461, %v2398
        %v2446 = vmul.f32 %v1463, %v2402
        %v2447 = vmul.f32 %v1654, %v2406
        %v2448 = vmul.f32 %v1656, %v2410
        %v2449 = vmul.f32 %v1847, %v2414
        %v2450 = vmul.f32 %v1849, %v2418
        %v2451 = vmul.f32 %v2040, %v2422
        %v2452 = vmul.f32 %v2042, %v2426
        %v2453 = vmul.f32 %v2233, %v2430
        %v2454 = vmul.f32 %v2235, %v2434
        %v2455 = vmul.f32 %v1465, %v2398
        %v2456 = vmul.f32 %v1467, %v2402
        %v2457 = vmul.f32 %v1658, %v2406
        %v2458 = vmul.f32 %v1660, %v2410
        %v2459 = vmul.f32 %v1851, %v2414
        %v2460 = vmul.f32 %v1853, %v2418
        %v2461 = vmul.f32 %v2044, %v2422
        %v2462 = vmul.f32 %v2046, %v2426
        %v2463 = vmul.f32 %v2237, %v2430
        %v2464 = vmul.f32 %v2239, %v2434
        %v2465 = vmul.f32 %v1471, %v2398
        %v2466 = vmul.f32 %v1473, %v2402
        %v2467 = vmul.f32 %v1664, %v2406
        %v2468 = vmul.f32 %v1666, %v2410
        %v2469 = vmul.f32 %v1857, %v2414
        %v2470 = vmul.f32 %v1859, %v2418
        %v2471 = vmul.f32 %v2050, %v2422
        %v2472 = vmul.f32 %v2052, %v2426
        %v2473 = vmul.f32 %v2243, %v2430
        %v2474 = vmul.f32 %v2245, %v2434
        %v2475 = vmul.f32 %v1475, %v2398
        %v2476 = vmul.f32 %v1477, %v2402
        %v2477 = vmul.f32 %v1668, %v2406
        %v2478 = vmul.f32 %v1670, %v2410
        %v2479 = vmul.f32 %v1861, %v2414
        %v2480 = vmul.f32 %v1863, %v2418
        %v2481 = vmul.f32 %v2054, %v2422
        %v2482 = vmul.f32 %v2056, %v2426
        %v2483 = vmul.f32 %v2247, %v2430
        %v2484 = vmul.f32 %v2249, %v2434
        %v2485 = vmul.f32 %v1481, %v2398
        %v2486 = vmul.f32 %v1483, %v2402
        %v2487 = vmul.f32 %v1674, %v2406
        %v2488 = vmul.f32 %v1676, %v2410
        %v2489 = vmul.f32 %v1867, %v2414
        %v2490 = vmul.f32 %v1869, %v2418
        %v2491 = vmul.f32 %v2060, %v2422
        %v2492 = vmul.f32 %v2062, %v2426
        %v2493 = vmul.f32 %v2253, %v2430
        %v2494 = vmul.f32 %v2255, %v2434
        %v2495 = vmul.f32 %v1485, %v2398
        %v2496 = vmul.f32 %v1487, %v2402
        %v2497 = vmul.f32 %v1678, %v2406
        %v2498 = vmul.f32 %v1680, %v2410
        %v2499 = vmul.f32 %v1871, %v2414
        %v2500 = vmul.f32 %v1873, %v2418
        %v2501 = vmul.f32 %v2064, %v2422
        %v2502 = vmul.f32 %v2066, %v2426
        %v2503 = vmul.f32 %v2257, %v2430
        %v2504 = vmul.f32 %v2259, %v2434
        %v2505 = vmul.f32 %v1491, %v2398
        %v2506 = vmul.f32 %v1493, %v2402
        %v2507 = vmul.f32 %v1684, %v2406
        %v2508 = vmul.f32 %v1686, %v2410
        %v2509 = vmul.f32 %v1877, %v2414
        %v2510 = vmul.f32 %v1879, %v2418
        %v2511 = vmul.f32 %v2070, %v2422
        %v2512 = vmul.f32 %v2072, %v2426
        %v2513 = vmul.f32 %v2263, %v2430
        %v2514 = vmul.f32 %v2265, %v2434
        %v2515 = vmul.f32 %v1495, %v2398
        %v2516 = vmul.f32 %v1497, %v2402
        %v2517 = vmul.f32 %v1688, %v2406
        %v2518 = vmul.f32 %v1690, %v2410
        %v2519 = vmul.f32 %v1881, %v2414
        %v2520 = vmul.f32 %v1883, %v2418
        %v2521 = vmul.f32 %v2074, %v2422
        %v2522 = vmul.f32 %v2076, %v2426
        %v2523 = vmul.f32 %v2267, %v2430
        %v2524 = vmul.f32 %v2269, %v2434
        %v2525 = vmul.f32 %v1501, %v2398
        %v2526 = vmul.f32 %v1503, %v2402
        %v2527 = vmul.f32 %v1694, %v2406
        %v2528 = vmul.f32 %v1696, %v2410
        %v2529 = vmul.f32 %v1887, %v2414
        %v2530 = vmul.f32 %v1889, %v2418
        %v2531 = vmul.f32 %v2080, %v2422
        %v2532 = vmul.f32 %v2082, %v2426
        %v2533 = vmul.f32 %v2273, %v2430
        %v2534 = vmul.f32 %v2275, %v2434
        %v2535 = vmul.f32 %v1505, %v2398
        %v2536 = vmul.f32 %v1507, %v2402
        %v2537 = vmul.f32 %v1698, %v2406
        %v2538 = vmul.f32 %v1700, %v2410
        %v2539 = vmul.f32 %v1891, %v2414
        %v2540 = vmul.f32 %v1893, %v2418
        %v2541 = vmul.f32 %v2084, %v2422
        %v2542 = vmul.f32 %v2086, %v2426
        %v2543 = vmul.f32 %v2277, %v2430
        %v2544 = vmul.f32 %v2279, %v2434
        %v2545 = vmul.f32 %v1511, %v2398
        %v2546 = vmul.f32 %v1513, %v2402
        %v2547 = vmul.f32 %v1704, %v2406
        %v2548 = vmul.f32 %v1706, %v2410
        %v2549 = vmul.f32 %v1897, %v2414
        %v2550 = vmul.f32 %v1899, %v2418
        %v2551 = vmul.f32 %v2090, %v2422
        %v2552 = vmul.f32 %v2092, %v2426
        %v2553 = vmul.f32 %v2283, %v2430
        %v2554 = vmul.f32 %v2285, %v2434
        %v2555 = vmul.f32 %v1515, %v2398
        %v2556 = vmul.f32 %v1517, %v2402
        %v2557 = vmul.f32 %v1708, %v2406
        %v2558 = vmul.f32 %v1710, %v2410
        %v2559 = vmul.f32 %v1901, %v2414
        %v2560 = vmul.f32 %v1903, %v2418
        %v2561 = vmul.f32 %v2094, %v2422
        %v2562 = vmul.f32 %v2096, %v2426
        %v2563 = vmul.f32 %v2287, %v2430
        %v2564 = vmul.f32 %v2289, %v2434
        %v2565 = vmul.f32 %v1521, %v2398
        %v2566 = vmul.f32 %v1523, %v2402
        %v2567 = vmul.f32 %v1714, %v2406
        %v2568 = vmul.f32 %v1716, %v2410
        %v2569 = vmul.f32 %v1907, %v2414
        %v2570 = vmul.f32 %v1909, %v2418
        %v2571 = vmul.f32 %v2100, %v2422
        %v2572 = vmul.f32 %v2102, %v2426
        %v2573 = vmul.f32 %v2293, %v2430
        %v2574 = vmul.f32 %v2295, %v2434
        %v2575 = vmul.f32 %v1525, %v2398
        %v2576 = vmul.f32 %v1527, %v2402
        %v2577 = vmul.f32 %v1718, %v2406
        %v2578 = vmul.f32 %v1720, %v2410
        %v2579 = vmul.f32 %v1911, %v2414
        %v2580 = vmul.f32 %v1913, %v2418
        %v2581 = vmul.f32 %v2104, %v2422
        %v2582 = vmul.f32 %v2106, %v2426
        %v2583 = vmul.f32 %v2297, %v2430
        %v2584 = vmul.f32 %v2299, %v2434
        %v2585 = vmul.f32 %v1531, %v2398
        %v2586 = vmul.f32 %v1533, %v2402
        %v2587 = vmul.f32 %v1724, %v2406
        %v2588 = vmul.f32 %v1726, %v2410
        %v2589 = vmul.f32 %v1917, %v2414
        %v2590 = vmul.f32 %v1919, %v2418
        %v2591 = vmul.f32 %v2110, %v2422
        %v2592 = vmul.f32 %v2112, %v2426
        %v2593 = vmul.f32 %v2303, %v2430
        %v2594 = vmul.f32 %v2305, %v2434
        %v2595 = vmul.f32 %v1535, %v2398
        %v2596 = vmul.f32 %v1537, %v2402
        %v2597 = vmul.f32 %v1728, %v2406
        %v2598 = vmul.f32 %v1730, %v2410
        %v2599 = vmul.f32 %v1921, %v2414
        %v2600 = vmul.f32 %v1923, %v2418
        %v2601 = vmul.f32 %v2114, %v2422
        %v2602 = vmul.f32 %v2116, %v2426
        %v2603 = vmul.f32 %v2307, %v2430
        %v2604 = vmul.f32 %v2309, %v2434
        %v2605 = vmul.f32 %v1541, %v2398
        %v2606 = vmul.f32 %v1543, %v2402
        %v2607 = vmul.f32 %v1734, %v2406
        %v2608 = vmul.f32 %v1736, %v2410
        %v2609 = vmul.f32 %v1927, %v2414
        %v2610 = vmul.f32 %v1929, %v2418
        %v2611 = vmul.f32 %v2120, %v2422
        %v2612 = vmul.f32 %v2122, %v2426
        %v2613 = vmul.f32 %v2313, %v2430
        %v2614 = vmul.f32 %v2315, %v2434
        %v2615 = vmul.f32 %v1545, %v2398
        %v2616 = vmul.f32 %v1547, %v2402
        %v2617 = vmul.f32 %v1738, %v2406
        %v2618 = vmul.f32 %v1740, %v2410
        %v2619 = vmul.f32 %v1931, %v2414
        %v2620 = vmul.f32 %v1933, %v2418
        %v2621 = vmul.f32 %v2124, %v2422
        %v2622 = vmul.f32 %v2126, %v2426
        %v2623 = vmul.f32 %v2317, %v2430
        %v2624 = vmul.f32 %v2319, %v2434
        %v2625 = vmul.f32 %v1551, %v2398
        %v2626 = vmul.f32 %v1553, %v2402
        %v2627 = vmul.f32 %v1744, %v2406
        %v2628 = vmul.f32 %v1746, %v2410
        %v2629 = vmul.f32 %v1937, %v2414
        %v2630 = vmul.f32 %v1939, %v2418
        %v2631 = vmul.f32 %v2130, %v2422
        %v2632 = vmul.f32 %v2132, %v2426
        %v2633 = vmul.f32 %v2323, %v2430
        %v2634 = vmul.f32 %v2325, %v2434
        %v2635 = vmul.f32 %v1555, %v2398
        %v2636 = vmul.f32 %v1557, %v2402
        %v2637 = vmul.f32 %v1748, %v2406
        %v2638 = vmul.f32 %v1750, %v2410
        %v2639 = vmul.f32 %v1941, %v2414
        %v2640 = vmul.f32 %v1943, %v2418
        %v2641 = vmul.f32 %v2134, %v2422
        %v2642 = vmul.f32 %v2136, %v2426
        %v2643 = vmul.f32 %v2327, %v2430
        %v2644 = vmul.f32 %v2329, %v2434
        %v2645 = vmul.f32 %v1561, %v2398
        %v2646 = vmul.f32 %v1563, %v2402
        %v2647 = vmul.f32 %v1754, %v2406
        %v2648 = vmul.f32 %v1756, %v2410
        %v2649 = vmul.f32 %v1947, %v2414
        %v2650 = vmul.f32 %v1949, %v2418
        %v2651 = vmul.f32 %v2140, %v2422
        %v2652 = vmul.f32 %v2142, %v2426
        %v2653 = vmul.f32 %v2333, %v2430
        %v2654 = vmul.f32 %v2335, %v2434
        %v2655 = vmul.f32 %v1565, %v2398
        %v2656 = vmul.f32 %v1567, %v2402
        %v2657 = vmul.f32 %v1758, %v2406
        %v2658 = vmul.f32 %v1760, %v2410
        %v2659 = vmul.f32 %v1951, %v2414
        %v2660 = vmul.f32 %v1953, %v2418
        %v2661 = vmul.f32 %v2144, %v2422
        %v2662 = vmul.f32 %v2146, %v2426
        %v2663 = vmul.f32 %v2337, %v2430
        %v2664 = vmul.f32 %v2339, %v2434
        %v2665 = vmul.f32 %v1571, %v2398
        %v2666 = vmul.f32 %v1573, %v2402
        %v2667 = vmul.f32 %v1764, %v2406
        %v2668 = vmul.f32 %v1766, %v2410
        %v2669 = vmul.f32 %v1957, %v2414
        %v2670 = vmul.f32 %v1959, %v2418
        %v2671 = vmul.f32 %v2150, %v2422
        %v2672 = vmul.f32 %v2152, %v2426
        %v2673 = vmul.f32 %v2343, %v2430
        %v2674 = vmul.f32 %v2345, %v2434
        %v2675 = vmul.f32 %v1575, %v2398
        %v2676 = vmul.f32 %v1577, %v2402
        %v2677 = vmul.f32 %v1768, %v2406
        %v2678 = vmul.f32 %v1770, %v2410
        %v2679 = vmul.f32 %v1961, %v2414
        %v2680 = vmul.f32 %v1963, %v2418
        %v2681 = vmul.f32 %v2154, %v2422
        %v2682 = vmul.f32 %v2156, %v2426
        %v2683 = vmul.f32 %v2347, %v2430
        %v2684 = vmul.f32 %v2349, %v2434
        %v2685 = vmul.f32 %v1581, %v2398
        %v2686 = vmul.f32 %v1583, %v2402
        %v2687 = vmul.f32 %v1774, %v2406
        %v2688 = vmul.f32 %v1776, %v2410
        %v2689 = vmul.f32 %v1967, %v2414
        %v2690 = vmul.f32 %v1969, %v2418
        %v2691 = vmul.f32 %v2160, %v2422
        %v2692 = vmul.f32 %v2162, %v2426
        %v2693 = vmul.f32 %v2353, %v2430
        %v2694 = vmul.f32 %v2355, %v2434
        %v2695 = vmul.f32 %v1585, %v2398
        %v2696 = vmul.f32 %v1587, %v2402
        %v2697 = vmul.f32 %v1778, %v2406
        %v2698 = vmul.f32 %v1780, %v2410
        %v2699 = vmul.f32 %v1971, %v2414
        %v2700 = vmul.f32 %v1973, %v2418
        %v2701 = vmul.f32 %v2164, %v2422
        %v2702 = vmul.f32 %v2166, %v2426
        %v2703 = vmul.f32 %v2357, %v2430
        %v2704 = vmul.f32 %v2359, %v2434
        %v2705 = vmul.f32 %v1591, %v2398
        %v2706 = vmul.f32 %v1593, %v2402
        %v2707 = vmul.f32 %v1784, %v2406
        %v2708 = vmul.f32 %v1786, %v2410
        %v2709 = vmul.f32 %v1977, %v2414
        %v2710 = vmul.f32 %v1979, %v2418
        %v2711 = vmul.f32 %v2170, %v2422
        %v2712 = vmul.f32 %v2172, %v2426
        %v2713 = vmul.f32 %v2363, %v2430
        %v2714 = vmul.f32 %v2365, %v2434
        %v2715 = vmul.f32 %v1595, %v2398
        %v2716 = vmul.f32 %v1597, %v2402
        %v2717 = vmul.f32 %v1788, %v2406
        %v2718 = vmul.f32 %v1790, %v2410
        %v2719 = vmul.f32 %v1981, %v2414
        %v2720 = vmul.f32 %v1983, %v2418
        %v2721 = vmul.f32 %v2174, %v2422
        %v2722 = vmul.f32 %v2176, %v2426
        %v2723 = vmul.f32 %v2367, %v2430
        %v2724 = vmul.f32 %v2369, %v2434
        %v2725 = vmul.f32 %v1601, %v2398
        %v2726 = vmul.f32 %v1603, %v2402
        %v2727 = vmul.f32 %v1794, %v2406
        %v2728 = vmul.f32 %v1796, %v2410
        %v2729 = vmul.f32 %v1987, %v2414
        %v2730 = vmul.f32 %v1989, %v2418
        %v2731 = vmul.f32 %v2180, %v2422
        %v2732 = vmul.f32 %v2182, %v2426
        %v2733 = vmul.f32 %v2373, %v2430
        %v2734 = vmul.f32 %v2375, %v2434
        %v2735 = vmul.f32 %v1605, %v2398
        %v2736 = vmul.f32 %v1607, %v2402
        %v2737 = vmul.f32 %v1798, %v2406
        %v2738 = vmul.f32 %v1800, %v2410
        %v2739 = vmul.f32 %v1991, %v2414
        %v2740 = vmul.f32 %v1993, %v2418
        %v2741 = vmul.f32 %v2184, %v2422
        %v2742 = vmul.f32 %v2186, %v2426
        %v2743 = vmul.f32 %v2377, %v2430
        %v2744 = vmul.f32 %v2379, %v2434
        %v2745 = vmul.f32 %v1611, %v2398
        %v2746 = vmul.f32 %v1613, %v2402
        %v2747 = vmul.f32 %v1804, %v2406
        %v2748 = vmul.f32 %v1806, %v2410
        %v2749 = vmul.f32 %v1997, %v2414
        %v2750 = vmul.f32 %v1999, %v2418
        %v2751 = vmul.f32 %v2190, %v2422
        %v2752 = vmul.f32 %v2192, %v2426
        %v2753 = vmul.f32 %v2383, %v2430
        %v2754 = vmul.f32 %v2385, %v2434
        %v2755 = vmul.f32 %v1615, %v2398
        %v2756 = vmul.f32 %v1617, %v2402
        %v2757 = vmul.f32 %v1808, %v2406
        %v2758 = vmul.f32 %v1810, %v2410
        %v2759 = vmul.f32 %v2001, %v2414
        %v2760 = vmul.f32 %v2003, %v2418
        %v2761 = vmul.f32 %v2194, %v2422
        %v2762 = vmul.f32 %v2196, %v2426
        %v2763 = vmul.f32 %v2387, %v2430
        %v2764 = vmul.f32 %v2389, %v2434
        %v2765 = vld [vmem:[%s6] sm:$0xff]
        %v2766 = vld [vmem:[%s6 + $0x8] sm:$0x3]
        %v2769 = vlaneseq
        %v2770 = vshrl.u32 %v2769, 7
        %v2771 = vsub.s32 0, %v2770
        %v2772 = vrot.slane %v2765, %v2771
        %v2773 = vlaneseq
        %v2774 = vshrl.u32 %v2773, 7
        %v2775 = vsub.s32 1, %v2774
        %v2776 = vrot.slane %v2765, %v2775
        %v2777 = vlaneseq
        %v2778 = vshrl.u32 %v2777, 7
        %v2779 = vsub.s32 2, %v2778
        %v2780 = vrot.slane %v2765, %v2779
        %v2781 = vlaneseq
        %v2782 = vshrl.u32 %v2781, 7
        %v2783 = vsub.s32 3, %v2782
        %v2784 = vrot.slane %v2765, %v2783
        %v2785 = vlaneseq
        %v2786 = vshrl.u32 %v2785, 7
        %v2787 = vsub.s32 4, %v2786
        %v2788 = vrot.slane %v2765, %v2787
        %v2789 = vlaneseq
        %v2790 = vshrl.u32 %v2789, 7
        %v2791 = vsub.s32 5, %v2790
        %v2792 = vrot.slane %v2765, %v2791
        %v2793 = vlaneseq
        %v2794 = vshrl.u32 %v2793, 7
        %v2795 = vsub.s32 6, %v2794
        %v2796 = vrot.slane %v2765, %v2795
        %v2797 = vlaneseq
        %v2798 = vshrl.u32 %v2797, 7
        %v2799 = vsub.s32 7, %v2798
        %v2800 = vrot.slane %v2765, %v2799
        %v2801 = vlaneseq
        %v2802 = vshrl.u32 %v2801, 7
        %v2803 = vsub.s32 0, %v2802
        %v2804 = vrot.slane %v2766, %v2803
        %v2805 = vlaneseq
        %v2806 = vshrl.u32 %v2805, 7
        %v2807 = vsub.s32 1, %v2806
        %v2808 = vrot.slane %v2766, %v2807
        %v2819 = vadd.f32 %v2445, %v2772
        %v2820 = vadd.f32 %v2446, %v2776
        %v2821 = vadd.f32 %v2447, %v2780
        %v2822 = vadd.f32 %v2448, %v2784
        %v2823 = vadd.f32 %v2449, %v2788
        %v2824 = vadd.f32 %v2450, %v2792
        %v2825 = vadd.f32 %v2451, %v2796
        %v2826 = vadd.f32 %v2452, %v2800
        %v2827 = vadd.f32 %v2453, %v2804
        %v2828 = vadd.f32 %v2454, %v2808
        %v2829 = vadd.f32 %v2455, %v2772
        %v2830 = vadd.f32 %v2456, %v2776
        %v2831 = vadd.f32 %v2457, %v2780
        %v2832 = vadd.f32 %v2458, %v2784
        %v2833 = vadd.f32 %v2459, %v2788
        %v2834 = vadd.f32 %v2460, %v2792
        %v2835 = vadd.f32 %v2461, %v2796
        %v2836 = vadd.f32 %v2462, %v2800
        %v2837 = vadd.f32 %v2463, %v2804
        %v2838 = vadd.f32 %v2464, %v2808
        %v2839 = vadd.f32 %v2465, %v2772
        %v2840 = vadd.f32 %v2466, %v2776
        %v2841 = vadd.f32 %v2467, %v2780
        %v2842 = vadd.f32 %v2468, %v2784
        %v2843 = vadd.f32 %v2469, %v2788
        %v2844 = vadd.f32 %v2470, %v2792
        %v2845 = vadd.f32 %v2471, %v2796
        %v2846 = vadd.f32 %v2472, %v2800
        %v2847 = vadd.f32 %v2473, %v2804
        %v2848 = vadd.f32 %v2474, %v2808
        %v2849 = vadd.f32 %v2475, %v2772
        %v2850 = vadd.f32 %v2476, %v2776
        %v2851 = vadd.f32 %v2477, %v2780
        %v2852 = vadd.f32 %v2478, %v2784
        %v2853 = vadd.f32 %v2479, %v2788
        %v2854 = vadd.f32 %v2480, %v2792
        %v2855 = vadd.f32 %v2481, %v2796
        %v2856 = vadd.f32 %v2482, %v2800
        %v2857 = vadd.f32 %v2483, %v2804
        %v2858 = vadd.f32 %v2484, %v2808
        %v2859 = vadd.f32 %v2485, %v2772
        %v2860 = vadd.f32 %v2486, %v2776
        %v2861 = vadd.f32 %v2487, %v2780
        %v2862 = vadd.f32 %v2488, %v2784
        %v2863 = vadd.f32 %v2489, %v2788
        %v2864 = vadd.f32 %v2490, %v2792
        %v2865 = vadd.f32 %v2491, %v2796
        %v2866 = vadd.f32 %v2492, %v2800
        %v2867 = vadd.f32 %v2493, %v2804
        %v2868 = vadd.f32 %v2494, %v2808
        %v2869 = vadd.f32 %v2495, %v2772
        %v2870 = vadd.f32 %v2496, %v2776
        %v2871 = vadd.f32 %v2497, %v2780
        %v2872 = vadd.f32 %v2498, %v2784
        %v2873 = vadd.f32 %v2499, %v2788
        %v2874 = vadd.f32 %v2500, %v2792
        %v2875 = vadd.f32 %v2501, %v2796
        %v2876 = vadd.f32 %v2502, %v2800
        %v2877 = vadd.f32 %v2503, %v2804
        %v2878 = vadd.f32 %v2504, %v2808
        %v2879 = vadd.f32 %v2505, %v2772
        %v2880 = vadd.f32 %v2506, %v2776
        %v2881 = vadd.f32 %v2507, %v2780
        %v2882 = vadd.f32 %v2508, %v2784
        %v2883 = vadd.f32 %v2509, %v2788
        %v2884 = vadd.f32 %v2510, %v2792
        %v2885 = vadd.f32 %v2511, %v2796
        %v2886 = vadd.f32 %v2512, %v2800
        %v2887 = vadd.f32 %v2513, %v2804
        %v2888 = vadd.f32 %v2514, %v2808
        %v2889 = vadd.f32 %v2515, %v2772
        %v2890 = vadd.f32 %v2516, %v2776
        %v2891 = vadd.f32 %v2517, %v2780
        %v2892 = vadd.f32 %v2518, %v2784
        %v2893 = vadd.f32 %v2519, %v2788
        %v2894 = vadd.f32 %v2520, %v2792
        %v2895 = vadd.f32 %v2521, %v2796
        %v2896 = vadd.f32 %v2522, %v2800
        %v2897 = vadd.f32 %v2523, %v2804
        %v2898 = vadd.f32 %v2524, %v2808
        %v2899 = vadd.f32 %v2525, %v2772
        %v2900 = vadd.f32 %v2526, %v2776
        %v2901 = vadd.f32 %v2527, %v2780
        %v2902 = vadd.f32 %v2528, %v2784
        %v2903 = vadd.f32 %v2529, %v2788
        %v2904 = vadd.f32 %v2530, %v2792
        %v2905 = vadd.f32 %v2531, %v2796
        %v2906 = vadd.f32 %v2532, %v2800
        %v2907 = vadd.f32 %v2533, %v2804
        %v2908 = vadd.f32 %v2534, %v2808
        %v2909 = vadd.f32 %v2535, %v2772
        %v2910 = vadd.f32 %v2536, %v2776
        %v2911 = vadd.f32 %v2537, %v2780
        %v2912 = vadd.f32 %v2538, %v2784
        %v2913 = vadd.f32 %v2539, %v2788
        %v2914 = vadd.f32 %v2540, %v2792
        %v2915 = vadd.f32 %v2541, %v2796
        %v2916 = vadd.f32 %v2542, %v2800
        %v2917 = vadd.f32 %v2543, %v2804
        %v2918 = vadd.f32 %v2544, %v2808
        %v2919 = vadd.f32 %v2545, %v2772
        %v2920 = vadd.f32 %v2546, %v2776
        %v2921 = vadd.f32 %v2547, %v2780
        %v2922 = vadd.f32 %v2548, %v2784
        %v2923 = vadd.f32 %v2549, %v2788
        %v2924 = vadd.f32 %v2550, %v2792
        %v2925 = vadd.f32 %v2551, %v2796
        %v2926 = vadd.f32 %v2552, %v2800
        %v2927 = vadd.f32 %v2553, %v2804
        %v2928 = vadd.f32 %v2554, %v2808
        %v2929 = vadd.f32 %v2555, %v2772
        %v2930 = vadd.f32 %v2556, %v2776
        %v2931 = vadd.f32 %v2557, %v2780
        %v2932 = vadd.f32 %v2558, %v2784
        %v2933 = vadd.f32 %v2559, %v2788
        %v2934 = vadd.f32 %v2560, %v2792
        %v2935 = vadd.f32 %v2561, %v2796
        %v2936 = vadd.f32 %v2562, %v2800
        %v2937 = vadd.f32 %v2563, %v2804
        %v2938 = vadd.f32 %v2564, %v2808
        %v2939 = vadd.f32 %v2565, %v2772
        %v2940 = vadd.f32 %v2566, %v2776
        %v2941 = vadd.f32 %v2567, %v2780
        %v2942 = vadd.f32 %v2568, %v2784
        %v2943 = vadd.f32 %v2569, %v2788
        %v2944 = vadd.f32 %v2570, %v2792
        %v2945 = vadd.f32 %v2571, %v2796
        %v2946 = vadd.f32 %v2572, %v2800
        %v2947 = vadd.f32 %v2573, %v2804
        %v2948 = vadd.f32 %v2574, %v2808
        %v2949 = vadd.f32 %v2575, %v2772
        %v2950 = vadd.f32 %v2576, %v2776
        %v2951 = vadd.f32 %v2577, %v2780
        %v2952 = vadd.f32 %v2578, %v2784
        %v2953 = vadd.f32 %v2579, %v2788
        %v2954 = vadd.f32 %v2580, %v2792
        %v2955 = vadd.f32 %v2581, %v2796
        %v2956 = vadd.f32 %v2582, %v2800
        %v2957 = vadd.f32 %v2583, %v2804
        %v2958 = vadd.f32 %v2584, %v2808
        %v2959 = vadd.f32 %v2585, %v2772
        %v2960 = vadd.f32 %v2586, %v2776
        %v2961 = vadd.f32 %v2587, %v2780
        %v2962 = vadd.f32 %v2588, %v2784
        %v2963 = vadd.f32 %v2589, %v2788
        %v2964 = vadd.f32 %v2590, %v2792
        %v2965 = vadd.f32 %v2591, %v2796
        %v2966 = vadd.f32 %v2592, %v2800
        %v2967 = vadd.f32 %v2593, %v2804
        %v2968 = vadd.f32 %v2594, %v2808
        %v2969 = vadd.f32 %v2595, %v2772
        %v2970 = vadd.f32 %v2596, %v2776
        %v2971 = vadd.f32 %v2597, %v2780
        %v2972 = vadd.f32 %v2598, %v2784
        %v2973 = vadd.f32 %v2599, %v2788
        %v2974 = vadd.f32 %v2600, %v2792
        %v2975 = vadd.f32 %v2601, %v2796
        %v2976 = vadd.f32 %v2602, %v2800
        %v2977 = vadd.f32 %v2603, %v2804
        %v2978 = vadd.f32 %v2604, %v2808
        %v2979 = vadd.f32 %v2605, %v2772
        %v2980 = vadd.f32 %v2606, %v2776
        %v2981 = vadd.f32 %v2607, %v2780
        %v2982 = vadd.f32 %v2608, %v2784
        %v2983 = vadd.f32 %v2609, %v2788
        %v2984 = vadd.f32 %v2610, %v2792
        %v2985 = vadd.f32 %v2611, %v2796
        %v2986 = vadd.f32 %v2612, %v2800
        %v2987 = vadd.f32 %v2613, %v2804
        %v2988 = vadd.f32 %v2614, %v2808
        %v2989 = vadd.f32 %v2615, %v2772
        %v2990 = vadd.f32 %v2616, %v2776
        %v2991 = vadd.f32 %v2617, %v2780
        %v2992 = vadd.f32 %v2618, %v2784
        %v2993 = vadd.f32 %v2619, %v2788
        %v2994 = vadd.f32 %v2620, %v2792
        %v2995 = vadd.f32 %v2621, %v2796
        %v2996 = vadd.f32 %v2622, %v2800
        %v2997 = vadd.f32 %v2623, %v2804
        %v2998 = vadd.f32 %v2624, %v2808
        %v2999 = vadd.f32 %v2625, %v2772
        %v3000 = vadd.f32 %v2626, %v2776
        %v3001 = vadd.f32 %v2627, %v2780
        %v3002 = vadd.f32 %v2628, %v2784
        %v3003 = vadd.f32 %v2629, %v2788
        %v3004 = vadd.f32 %v2630, %v2792
        %v3005 = vadd.f32 %v2631, %v2796
        %v3006 = vadd.f32 %v2632, %v2800
        %v3007 = vadd.f32 %v2633, %v2804
        %v3008 = vadd.f32 %v2634, %v2808
        %v3009 = vadd.f32 %v2635, %v2772
        %v3010 = vadd.f32 %v2636, %v2776
        %v3011 = vadd.f32 %v2637, %v2780
        %v3012 = vadd.f32 %v2638, %v2784
        %v3013 = vadd.f32 %v2639, %v2788
        %v3014 = vadd.f32 %v2640, %v2792
        %v3015 = vadd.f32 %v2641, %v2796
        %v3016 = vadd.f32 %v2642, %v2800
        %v3017 = vadd.f32 %v2643, %v2804
        %v3018 = vadd.f32 %v2644, %v2808
        %v3019 = vadd.f32 %v2645, %v2772
        %v3020 = vadd.f32 %v2646, %v2776
        %v3021 = vadd.f32 %v2647, %v2780
        %v3022 = vadd.f32 %v2648, %v2784
        %v3023 = vadd.f32 %v2649, %v2788
        %v3024 = vadd.f32 %v2650, %v2792
        %v3025 = vadd.f32 %v2651, %v2796
        %v3026 = vadd.f32 %v2652, %v2800
        %v3027 = vadd.f32 %v2653, %v2804
        %v3028 = vadd.f32 %v2654, %v2808
        %v3029 = vadd.f32 %v2655, %v2772
        %v3030 = vadd.f32 %v2656, %v2776
        %v3031 = vadd.f32 %v2657, %v2780
        %v3032 = vadd.f32 %v2658, %v2784
        %v3033 = vadd.f32 %v2659, %v2788
        %v3034 = vadd.f32 %v2660, %v2792
        %v3035 = vadd.f32 %v2661, %v2796
        %v3036 = vadd.f32 %v2662, %v2800
        %v3037 = vadd.f32 %v2663, %v2804
        %v3038 = vadd.f32 %v2664, %v2808
        %v3039 = vadd.f32 %v2665, %v2772
        %v3040 = vadd.f32 %v2666, %v2776
        %v3041 = vadd.f32 %v2667, %v2780
        %v3042 = vadd.f32 %v2668, %v2784
        %v3043 = vadd.f32 %v2669, %v2788
        %v3044 = vadd.f32 %v2670, %v2792
        %v3045 = vadd.f32 %v2671, %v2796
        %v3046 = vadd.f32 %v2672, %v2800
        %v3047 = vadd.f32 %v2673, %v2804
        %v3048 = vadd.f32 %v2674, %v2808
        %v3049 = vadd.f32 %v2675, %v2772
        %v3050 = vadd.f32 %v2676, %v2776
        %v3051 = vadd.f32 %v2677, %v2780
        %v3052 = vadd.f32 %v2678, %v2784
        %v3053 = vadd.f32 %v2679, %v2788
        %v3054 = vadd.f32 %v2680, %v2792
        %v3055 = vadd.f32 %v2681, %v2796
        %v3056 = vadd.f32 %v2682, %v2800
        %v3057 = vadd.f32 %v2683, %v2804
        %v3058 = vadd.f32 %v2684, %v2808
        %v3059 = vadd.f32 %v2685, %v2772
        %v3060 = vadd.f32 %v2686, %v2776
        %v3061 = vadd.f32 %v2687, %v2780
        %v3062 = vadd.f32 %v2688, %v2784
        %v3063 = vadd.f32 %v2689, %v2788
        %v3064 = vadd.f32 %v2690, %v2792
        %v3065 = vadd.f32 %v2691, %v2796
        %v3066 = vadd.f32 %v2692, %v2800
        %v3067 = vadd.f32 %v2693, %v2804
        %v3068 = vadd.f32 %v2694, %v2808
        %v3069 = vadd.f32 %v2695, %v2772
        %v3070 = vadd.f32 %v2696, %v2776
        %v3071 = vadd.f32 %v2697, %v2780
        %v3072 = vadd.f32 %v2698, %v2784
        %v3073 = vadd.f32 %v2699, %v2788
        %v3074 = vadd.f32 %v2700, %v2792
        %v3075 = vadd.f32 %v2701, %v2796
        %v3076 = vadd.f32 %v2702, %v2800
        %v3077 = vadd.f32 %v2703, %v2804
        %v3078 = vadd.f32 %v2704, %v2808
        %v3079 = vadd.f32 %v2705, %v2772
        %v3080 = vadd.f32 %v2706, %v2776
        %v3081 = vadd.f32 %v2707, %v2780
        %v3082 = vadd.f32 %v2708, %v2784
        %v3083 = vadd.f32 %v2709, %v2788
        %v3084 = vadd.f32 %v2710, %v2792
        %v3085 = vadd.f32 %v2711, %v2796
        %v3086 = vadd.f32 %v2712, %v2800
        %v3087 = vadd.f32 %v2713, %v2804
        %v3088 = vadd.f32 %v2714, %v2808
        %v3089 = vadd.f32 %v2715, %v2772
        %v3090 = vadd.f32 %v2716, %v2776
        %v3091 = vadd.f32 %v2717, %v2780
        %v3092 = vadd.f32 %v2718, %v2784
        %v3093 = vadd.f32 %v2719, %v2788
        %v3094 = vadd.f32 %v2720, %v2792
        %v3095 = vadd.f32 %v2721, %v2796
        %v3096 = vadd.f32 %v2722, %v2800
        %v3097 = vadd.f32 %v2723, %v2804
        %v3098 = vadd.f32 %v2724, %v2808
        %v3099 = vadd.f32 %v2725, %v2772
        %v3100 = vadd.f32 %v2726, %v2776
        %v3101 = vadd.f32 %v2727, %v2780
        %v3102 = vadd.f32 %v2728, %v2784
        %v3103 = vadd.f32 %v2729, %v2788
        %v3104 = vadd.f32 %v2730, %v2792
        %v3105 = vadd.f32 %v2731, %v2796
        %v3106 = vadd.f32 %v2732, %v2800
        %v3107 = vadd.f32 %v2733, %v2804
        %v3108 = vadd.f32 %v2734, %v2808
        %v3109 = vadd.f32 %v2735, %v2772
        %v3110 = vadd.f32 %v2736, %v2776
        %v3111 = vadd.f32 %v2737, %v2780
        %v3112 = vadd.f32 %v2738, %v2784
        %v3113 = vadd.f32 %v2739, %v2788
        %v3114 = vadd.f32 %v2740, %v2792
        %v3115 = vadd.f32 %v2741, %v2796
        %v3116 = vadd.f32 %v2742, %v2800
        %v3117 = vadd.f32 %v2743, %v2804
        %v3118 = vadd.f32 %v2744, %v2808
        %v3119 = vadd.f32 %v2745, %v2772
        %v3120 = vadd.f32 %v2746, %v2776
        %v3121 = vadd.f32 %v2747, %v2780
        %v3122 = vadd.f32 %v2748, %v2784
        %v3123 = vadd.f32 %v2749, %v2788
        %v3124 = vadd.f32 %v2750, %v2792
        %v3125 = vadd.f32 %v2751, %v2796
        %v3126 = vadd.f32 %v2752, %v2800
        %v3127 = vadd.f32 %v2753, %v2804
        %v3128 = vadd.f32 %v2754, %v2808
        %v3129 = vadd.f32 %v2755, %v2772
        %v3130 = vadd.f32 %v2756, %v2776
        %v3131 = vadd.f32 %v2757, %v2780
        %v3132 = vadd.f32 %v2758, %v2784
        %v3133 = vadd.f32 %v2759, %v2788
        %v3134 = vadd.f32 %v2760, %v2792
        %v3135 = vadd.f32 %v2761, %v2796
        %v3136 = vadd.f32 %v2762, %v2800
        %v3137 = vadd.f32 %v2763, %v2804
        %v3138 = vadd.f32 %v2764, %v2808
        %v3139 = vxor.u32 %v2819, 2147483648
        %v3140 = vxor.u32 %v2820, 2147483648
        %v3141 = vxor.u32 %v2821, 2147483648
        %v3142 = vxor.u32 %v2822, 2147483648
        %v3143 = vxor.u32 %v2823, 2147483648
        %v3144 = vxor.u32 %v2824, 2147483648
        %v3145 = vxor.u32 %v2825, 2147483648
        %v3146 = vxor.u32 %v2826, 2147483648
        %v3147 = vxor.u32 %v2827, 2147483648
        %v3148 = vxor.u32 %v2828, 2147483648
        %v3149 = vxor.u32 %v2829, 2147483648
        %v3150 = vxor.u32 %v2830, 2147483648
        %v3151 = vxor.u32 %v2831, 2147483648
        %v3152 = vxor.u32 %v2832, 2147483648
        %v3153 = vxor.u32 %v2833, 2147483648
        %v3154 = vxor.u32 %v2834, 2147483648
        %v3155 = vxor.u32 %v2835, 2147483648
        %v3156 = vxor.u32 %v2836, 2147483648
        %v3157 = vxor.u32 %v2837, 2147483648
        %v3158 = vxor.u32 %v2838, 2147483648
        %v3159 = vxor.u32 %v2839, 2147483648
        %v3160 = vxor.u32 %v2840, 2147483648
        %v3161 = vxor.u32 %v2841, 2147483648
        %v3162 = vxor.u32 %v2842, 2147483648
        %v3163 = vxor.u32 %v2843, 2147483648
        %v3164 = vxor.u32 %v2844, 2147483648
        %v3165 = vxor.u32 %v2845, 2147483648
        %v3166 = vxor.u32 %v2846, 2147483648
        %v3167 = vxor.u32 %v2847, 2147483648
        %v3168 = vxor.u32 %v2848, 2147483648
        %v3169 = vxor.u32 %v2849, 2147483648
        %v3170 = vxor.u32 %v2850, 2147483648
        %v3171 = vxor.u32 %v2851, 2147483648
        %v3172 = vxor.u32 %v2852, 2147483648
        %v3173 = vxor.u32 %v2853, 2147483648
        %v3174 = vxor.u32 %v2854, 2147483648
        %v3175 = vxor.u32 %v2855, 2147483648
        %v3176 = vxor.u32 %v2856, 2147483648
        %v3177 = vxor.u32 %v2857, 2147483648
        %v3178 = vxor.u32 %v2858, 2147483648
        %v3179 = vxor.u32 %v2859, 2147483648
        %v3180 = vxor.u32 %v2860, 2147483648
        %v3181 = vxor.u32 %v2861, 2147483648
        %v3182 = vxor.u32 %v2862, 2147483648
        %v3183 = vxor.u32 %v2863, 2147483648
        %v3184 = vxor.u32 %v2864, 2147483648
        %v3185 = vxor.u32 %v2865, 2147483648
        %v3186 = vxor.u32 %v2866, 2147483648
        %v3187 = vxor.u32 %v2867, 2147483648
        %v3188 = vxor.u32 %v2868, 2147483648
        %v3189 = vxor.u32 %v2869, 2147483648
        %v3190 = vxor.u32 %v2870, 2147483648
        %v3191 = vxor.u32 %v2871, 2147483648
        %v3192 = vxor.u32 %v2872, 2147483648
        %v3193 = vxor.u32 %v2873, 2147483648
        %v3194 = vxor.u32 %v2874, 2147483648
        %v3195 = vxor.u32 %v2875, 2147483648
        %v3196 = vxor.u32 %v2876, 2147483648
        %v3197 = vxor.u32 %v2877, 2147483648
        %v3198 = vxor.u32 %v2878, 2147483648
        %v3199 = vxor.u32 %v2879, 2147483648
        %v3200 = vxor.u32 %v2880, 2147483648
        %v3201 = vxor.u32 %v2881, 2147483648
        %v3202 = vxor.u32 %v2882, 2147483648
        %v3203 = vxor.u32 %v2883, 2147483648
        %v3204 = vxor.u32 %v2884, 2147483648
        %v3205 = vxor.u32 %v2885, 2147483648
        %v3206 = vxor.u32 %v2886, 2147483648
        %v3207 = vxor.u32 %v2887, 2147483648
        %v3208 = vxor.u32 %v2888, 2147483648
        %v3209 = vxor.u32 %v2889, 2147483648
        %v3210 = vxor.u32 %v2890, 2147483648
        %v3211 = vxor.u32 %v2891, 2147483648
        %v3212 = vxor.u32 %v2892, 2147483648
        %v3213 = vxor.u32 %v2893, 2147483648
        %v3214 = vxor.u32 %v2894, 2147483648
        %v3215 = vxor.u32 %v2895, 2147483648
        %v3216 = vxor.u32 %v2896, 2147483648
        %v3217 = vxor.u32 %v2897, 2147483648
        %v3218 = vxor.u32 %v2898, 2147483648
        %v3219 = vxor.u32 %v2899, 2147483648
        %v3220 = vxor.u32 %v2900, 2147483648
        %v3221 = vxor.u32 %v2901, 2147483648
        %v3222 = vxor.u32 %v2902, 2147483648
        %v3223 = vxor.u32 %v2903, 2147483648
        %v3224 = vxor.u32 %v2904, 2147483648
        %v3225 = vxor.u32 %v2905, 2147483648
        %v3226 = vxor.u32 %v2906, 2147483648
        %v3227 = vxor.u32 %v2907, 2147483648
        %v3228 = vxor.u32 %v2908, 2147483648
        %v3229 = vxor.u32 %v2909, 2147483648
        %v3230 = vxor.u32 %v2910, 2147483648
        %v3231 = vxor.u32 %v2911, 2147483648
        %v3232 = vxor.u32 %v2912, 2147483648
        %v3233 = vxor.u32 %v2913, 2147483648
        %v3234 = vxor.u32 %v2914, 2147483648
        %v3235 = vxor.u32 %v2915, 2147483648
        %v3236 = vxor.u32 %v2916, 2147483648
        %v3237 = vxor.u32 %v2917, 2147483648
        %v3238 = vxor.u32 %v2918, 2147483648
        %v3239 = vxor.u32 %v2919, 2147483648
        %v3240 = vxor.u32 %v2920, 2147483648
        %v3241 = vxor.u32 %v2921, 2147483648
        %v3242 = vxor.u32 %v2922, 2147483648
        %v3243 = vxor.u32 %v2923, 2147483648
        %v3244 = vxor.u32 %v2924, 2147483648
        %v3245 = vxor.u32 %v2925, 2147483648
        %v3246 = vxor.u32 %v2926, 2147483648
        %v3247 = vxor.u32 %v2927, 2147483648
        %v3248 = vxor.u32 %v2928, 2147483648
        %v3249 = vxor.u32 %v2929, 2147483648
        %v3250 = vxor.u32 %v2930, 2147483648
        %v3251 = vxor.u32 %v2931, 2147483648
        %v3252 = vxor.u32 %v2932, 2147483648
        %v3253 = vxor.u32 %v2933, 2147483648
        %v3254 = vxor.u32 %v2934, 2147483648
        %v3255 = vxor.u32 %v2935, 2147483648
        %v3256 = vxor.u32 %v2936, 2147483648
        %v3257 = vxor.u32 %v2937, 2147483648
        %v3258 = vxor.u32 %v2938, 2147483648
        %v3259 = vxor.u32 %v2939, 2147483648
        %v3260 = vxor.u32 %v2940, 2147483648
        %v3261 = vxor.u32 %v2941, 2147483648
        %v3262 = vxor.u32 %v2942, 2147483648
        %v3263 = vxor.u32 %v2943, 2147483648
        %v3264 = vxor.u32 %v2944, 2147483648
        %v3265 = vxor.u32 %v2945, 2147483648
        %v3266 = vxor.u32 %v2946, 2147483648
        %v3267 = vxor.u32 %v2947, 2147483648
        %v3268 = vxor.u32 %v2948, 2147483648
        %v3269 = vxor.u32 %v2949, 2147483648
        %v3270 = vxor.u32 %v2950, 2147483648
        %v3271 = vxor.u32 %v2951, 2147483648
        %v3272 = vxor.u32 %v2952, 2147483648
        %v3273 = vxor.u32 %v2953, 2147483648
        %v3274 = vxor.u32 %v2954, 2147483648
        %v3275 = vxor.u32 %v2955, 2147483648
        %v3276 = vxor.u32 %v2956, 2147483648
        %v3277 = vxor.u32 %v2957, 2147483648
        %v3278 = vxor.u32 %v2958, 2147483648
        %v3279 = vxor.u32 %v2959, 2147483648
        %v3280 = vxor.u32 %v2960, 2147483648
        %v3281 = vxor.u32 %v2961, 2147483648
        %v3282 = vxor.u32 %v2962, 2147483648
        %v3283 = vxor.u32 %v2963, 2147483648
        %v3284 = vxor.u32 %v2964, 2147483648
        %v3285 = vxor.u32 %v2965, 2147483648
        %v3286 = vxor.u32 %v2966, 2147483648
        %v3287 = vxor.u32 %v2967, 2147483648
        %v3288 = vxor.u32 %v2968, 2147483648
        %v3289 = vxor.u32 %v2969, 2147483648
        %v3290 = vxor.u32 %v2970, 2147483648
        %v3291 = vxor.u32 %v2971, 2147483648
        %v3292 = vxor.u32 %v2972, 2147483648
        %v3293 = vxor.u32 %v2973, 2147483648
        %v3294 = vxor.u32 %v2974, 2147483648
        %v3295 = vxor.u32 %v2975, 2147483648
        %v3296 = vxor.u32 %v2976, 2147483648
        %v3297 = vxor.u32 %v2977, 2147483648
        %v3298 = vxor.u32 %v2978, 2147483648
        %v3299 = vxor.u32 %v2979, 2147483648
        %v3300 = vxor.u32 %v2980, 2147483648
        %v3301 = vxor.u32 %v2981, 2147483648
        %v3302 = vxor.u32 %v2982, 2147483648
        %v3303 = vxor.u32 %v2983, 2147483648
        %v3304 = vxor.u32 %v2984, 2147483648
        %v3305 = vxor.u32 %v2985, 2147483648
        %v3306 = vxor.u32 %v2986, 2147483648
        %v3307 = vxor.u32 %v2987, 2147483648
        %v3308 = vxor.u32 %v2988, 2147483648
        %v3309 = vxor.u32 %v2989, 2147483648
        %v3310 = vxor.u32 %v2990, 2147483648
        %v3311 = vxor.u32 %v2991, 2147483648
        %v3312 = vxor.u32 %v2992, 2147483648
        %v3313 = vxor.u32 %v2993, 2147483648
        %v3314 = vxor.u32 %v2994, 2147483648
        %v3315 = vxor.u32 %v2995, 2147483648
        %v3316 = vxor.u32 %v2996, 2147483648
        %v3317 = vxor.u32 %v2997, 2147483648
        %v3318 = vxor.u32 %v2998, 2147483648
        %v3319 = vxor.u32 %v2999, 2147483648
        %v3320 = vxor.u32 %v3000, 2147483648
        %v3321 = vxor.u32 %v3001, 2147483648
        %v3322 = vxor.u32 %v3002, 2147483648
        %v3323 = vxor.u32 %v3003, 2147483648
        %v3324 = vxor.u32 %v3004, 2147483648
        %v3325 = vxor.u32 %v3005, 2147483648
        %v3326 = vxor.u32 %v3006, 2147483648
        %v3327 = vxor.u32 %v3007, 2147483648
        %v3328 = vxor.u32 %v3008, 2147483648
        %v3329 = vxor.u32 %v3009, 2147483648
        %v3330 = vxor.u32 %v3010, 2147483648
        %v3331 = vxor.u32 %v3011, 2147483648
        %v3332 = vxor.u32 %v3012, 2147483648
        %v3333 = vxor.u32 %v3013, 2147483648
        %v3334 = vxor.u32 %v3014, 2147483648
        %v3335 = vxor.u32 %v3015, 2147483648
        %v3336 = vxor.u32 %v3016, 2147483648
        %v3337 = vxor.u32 %v3017, 2147483648
        %v3338 = vxor.u32 %v3018, 2147483648
        %v3339 = vxor.u32 %v3019, 2147483648
        %v3340 = vxor.u32 %v3020, 2147483648
        %v3341 = vxor.u32 %v3021, 2147483648
        %v3342 = vxor.u32 %v3022, 2147483648
        %v3343 = vxor.u32 %v3023, 2147483648
        %v3344 = vxor.u32 %v3024, 2147483648
        %v3345 = vxor.u32 %v3025, 2147483648
        %v3346 = vxor.u32 %v3026, 2147483648
        %v3347 = vxor.u32 %v3027, 2147483648
        %v3348 = vxor.u32 %v3028, 2147483648
        %v3349 = vxor.u32 %v3029, 2147483648
        %v3350 = vxor.u32 %v3030, 2147483648
        %v3351 = vxor.u32 %v3031, 2147483648
        %v3352 = vxor.u32 %v3032, 2147483648
        %v3353 = vxor.u32 %v3033, 2147483648
        %v3354 = vxor.u32 %v3034, 2147483648
        %v3355 = vxor.u32 %v3035, 2147483648
        %v3356 = vxor.u32 %v3036, 2147483648
        %v3357 = vxor.u32 %v3037, 2147483648
        %v3358 = vxor.u32 %v3038, 2147483648
        %v3359 = vxor.u32 %v3039, 2147483648
        %v3360 = vxor.u32 %v3040, 2147483648
        %v3361 = vxor.u32 %v3041, 2147483648
        %v3362 = vxor.u32 %v3042, 2147483648
        %v3363 = vxor.u32 %v3043, 2147483648
        %v3364 = vxor.u32 %v3044, 2147483648
        %v3365 = vxor.u32 %v3045, 2147483648
        %v3366 = vxor.u32 %v3046, 2147483648
        %v3367 = vxor.u32 %v3047, 2147483648
        %v3368 = vxor.u32 %v3048, 2147483648
        %v3369 = vxor.u32 %v3049, 2147483648
        %v3370 = vxor.u32 %v3050, 2147483648
        %v3371 = vxor.u32 %v3051, 2147483648
        %v3372 = vxor.u32 %v3052, 2147483648
        %v3373 = vxor.u32 %v3053, 2147483648
        %v3374 = vxor.u32 %v3054, 2147483648
        %v3375 = vxor.u32 %v3055, 2147483648
        %v3376 = vxor.u32 %v3056, 2147483648
        %v3377 = vxor.u32 %v3057, 2147483648
        %v3378 = vxor.u32 %v3058, 2147483648
        %v3379 = vxor.u32 %v3059, 2147483648
        %v3380 = vxor.u32 %v3060, 2147483648
        %v3381 = vxor.u32 %v3061, 2147483648
        %v3382 = vxor.u32 %v3062, 2147483648
        %v3383 = vxor.u32 %v3063, 2147483648
        %v3384 = vxor.u32 %v3064, 2147483648
        %v3385 = vxor.u32 %v3065, 2147483648
        %v3386 = vxor.u32 %v3066, 2147483648
        %v3387 = vxor.u32 %v3067, 2147483648
        %v3388 = vxor.u32 %v3068, 2147483648
        %v3389 = vxor.u32 %v3069, 2147483648
        %v3390 = vxor.u32 %v3070, 2147483648
        %v3391 = vxor.u32 %v3071, 2147483648
        %v3392 = vxor.u32 %v3072, 2147483648
        %v3393 = vxor.u32 %v3073, 2147483648
        %v3394 = vxor.u32 %v3074, 2147483648
        %v3395 = vxor.u32 %v3075, 2147483648
        %v3396 = vxor.u32 %v3076, 2147483648
        %v3397 = vxor.u32 %v3077, 2147483648
        %v3398 = vxor.u32 %v3078, 2147483648
        %v3399 = vxor.u32 %v3079, 2147483648
        %v3400 = vxor.u32 %v3080, 2147483648
        %v3401 = vxor.u32 %v3081, 2147483648
        %v3402 = vxor.u32 %v3082, 2147483648
        %v3403 = vxor.u32 %v3083, 2147483648
        %v3404 = vxor.u32 %v3084, 2147483648
        %v3405 = vxor.u32 %v3085, 2147483648
        %v3406 = vxor.u32 %v3086, 2147483648
        %v3407 = vxor.u32 %v3087, 2147483648
        %v3408 = vxor.u32 %v3088, 2147483648
        %v3409 = vxor.u32 %v3089, 2147483648
        %v3410 = vxor.u32 %v3090, 2147483648
        %v3411 = vxor.u32 %v3091, 2147483648
        %v3412 = vxor.u32 %v3092, 2147483648
        %v3413 = vxor.u32 %v3093, 2147483648
        %v3414 = vxor.u32 %v3094, 2147483648
        %v3415 = vxor.u32 %v3095, 2147483648
        %v3416 = vxor.u32 %v3096, 2147483648
        %v3417 = vxor.u32 %v3097, 2147483648
        %v3418 = vxor.u32 %v3098, 2147483648
        %v3419 = vxor.u32 %v3099, 2147483648
        %v3420 = vxor.u32 %v3100, 2147483648
        %v3421 = vxor.u32 %v3101, 2147483648
        %v3422 = vxor.u32 %v3102, 2147483648
        %v3423 = vxor.u32 %v3103, 2147483648
        %v3424 = vxor.u32 %v3104, 2147483648
        %v3425 = vxor.u32 %v3105, 2147483648
        %v3426 = vxor.u32 %v3106, 2147483648
        %v3427 = vxor.u32 %v3107, 2147483648
        %v3428 = vxor.u32 %v3108, 2147483648
        %v3429 = vxor.u32 %v3109, 2147483648
        %v3430 = vxor.u32 %v3110, 2147483648
        %v3431 = vxor.u32 %v3111, 2147483648
        %v3432 = vxor.u32 %v3112, 2147483648
        %v3433 = vxor.u32 %v3113, 2147483648
        %v3434 = vxor.u32 %v3114, 2147483648
        %v3435 = vxor.u32 %v3115, 2147483648
        %v3436 = vxor.u32 %v3116, 2147483648
        %v3437 = vxor.u32 %v3117, 2147483648
        %v3438 = vxor.u32 %v3118, 2147483648
        %v3439 = vxor.u32 %v3119, 2147483648
        %v3440 = vxor.u32 %v3120, 2147483648
        %v3441 = vxor.u32 %v3121, 2147483648
        %v3442 = vxor.u32 %v3122, 2147483648
        %v3443 = vxor.u32 %v3123, 2147483648
        %v3444 = vxor.u32 %v3124, 2147483648
        %v3445 = vxor.u32 %v3125, 2147483648
        %v3446 = vxor.u32 %v3126, 2147483648
        %v3447 = vxor.u32 %v3127, 2147483648
        %v3448 = vxor.u32 %v3128, 2147483648
        %v3449 = vxor.u32 %v3129, 2147483648
        %v3450 = vxor.u32 %v3130, 2147483648
        %v3451 = vxor.u32 %v3131, 2147483648
        %v3452 = vxor.u32 %v3132, 2147483648
        %v3453 = vxor.u32 %v3133, 2147483648
        %v3454 = vxor.u32 %v3134, 2147483648
        %v3455 = vxor.u32 %v3135, 2147483648
        %v3456 = vxor.u32 %v3136, 2147483648
        %v3457 = vxor.u32 %v3137, 2147483648
        %v3458 = vxor.u32 %v3138, 2147483648
        %v3459 = vmul.f32 %v3139, 1.442695
        %v3460 = vpow.pop %v3459
        %v3461 = vmul.f32 %v3140, 1.442695
        %v3462 = vpow.pop %v3461
        %v3463 = vmul.f32 %v3141, 1.442695
        %v3464 = vpow.pop %v3463
        %v3465 = vmul.f32 %v3142, 1.442695
        %v3466 = vpow.pop %v3465
        %v3467 = vmul.f32 %v3143, 1.442695
        %v3468 = vpow.pop %v3467
        %v3469 = vmul.f32 %v3144, 1.442695
        %v3470 = vpow.pop %v3469
        %v3471 = vmul.f32 %v3145, 1.442695
        %v3472 = vpow.pop %v3471
        %v3473 = vmul.f32 %v3146, 1.442695
        %v3474 = vpow.pop %v3473
        %v3475 = vmul.f32 %v3147, 1.442695
        %v3476 = vpow.pop %v3475
        %v3477 = vmul.f32 %v3148, 1.442695
        %v3478 = vpow.pop %v3477
        %v3479 = vmul.f32 %v3149, 1.442695
        %v3480 = vpow.pop %v3479
        %v3481 = vmul.f32 %v3150, 1.442695
        %v3482 = vpow.pop %v3481
        %v3483 = vmul.f32 %v3151, 1.442695
        %v3484 = vpow.pop %v3483
        %v3485 = vmul.f32 %v3152, 1.442695
        %v3486 = vpow.pop %v3485
        %v3487 = vmul.f32 %v3153, 1.442695
        %v3488 = vpow.pop %v3487
        %v3489 = vmul.f32 %v3154, 1.442695
        %v3490 = vpow.pop %v3489
        %v3491 = vmul.f32 %v3155, 1.442695
        %v3492 = vpow.pop %v3491
        %v3493 = vmul.f32 %v3156, 1.442695
        %v3494 = vpow.pop %v3493
        %v3495 = vmul.f32 %v3157, 1.442695
        %v3496 = vpow.pop %v3495
        %v3497 = vmul.f32 %v3158, 1.442695
        %v3498 = vpow.pop %v3497
        %v3499 = vmul.f32 %v3159, 1.442695
        %v3500 = vpow.pop %v3499
        %v3501 = vmul.f32 %v3160, 1.442695
        %v3502 = vpow.pop %v3501
        %v3503 = vmul.f32 %v3161, 1.442695
        %v3504 = vpow.pop %v3503
        %v3505 = vmul.f32 %v3162, 1.442695
        %v3506 = vpow.pop %v3505
        %v3507 = vmul.f32 %v3163, 1.442695
        %v3508 = vpow.pop %v3507
        %v3509 = vmul.f32 %v3164, 1.442695
        %v3510 = vpow.pop %v3509
        %v3511 = vmul.f32 %v3165, 1.442695
        %v3512 = vpow.pop %v3511
        %v3513 = vmul.f32 %v3166, 1.442695
        %v3514 = vpow.pop %v3513
        %v3515 = vmul.f32 %v3167, 1.442695
        %v3516 = vpow.pop %v3515
        %v3517 = vmul.f32 %v3168, 1.442695
        %v3518 = vpow.pop %v3517
        %v3519 = vmul.f32 %v3169, 1.442695
        %v3520 = vpow.pop %v3519
        %v3521 = vmul.f32 %v3170, 1.442695
        %v3522 = vpow.pop %v3521
        %v3523 = vmul.f32 %v3171, 1.442695
        %v3524 = vpow.pop %v3523
        %v3525 = vmul.f32 %v3172, 1.442695
        %v3526 = vpow.pop %v3525
        %v3527 = vmul.f32 %v3173, 1.442695
        %v3528 = vpow.pop %v3527
        %v3529 = vmul.f32 %v3174, 1.442695
        %v3530 = vpow.pop %v3529
        %v3531 = vmul.f32 %v3175, 1.442695
        %v3532 = vpow.pop %v3531
        %v3533 = vmul.f32 %v3176, 1.442695
        %v3534 = vpow.pop %v3533
        %v3535 = vmul.f32 %v3177, 1.442695
        %v3536 = vpow.pop %v3535
        %v3537 = vmul.f32 %v3178, 1.442695
        %v3538 = vpow.pop %v3537
        %v3539 = vmul.f32 %v3179, 1.442695
        %v3540 = vpow.pop %v3539
        %v3541 = vmul.f32 %v3180, 1.442695
        %v3542 = vpow.pop %v3541
        %v3543 = vmul.f32 %v3181, 1.442695
        %v3544 = vpow.pop %v3543
        %v3545 = vmul.f32 %v3182, 1.442695
        %v3546 = vpow.pop %v3545
        %v3547 = vmul.f32 %v3183, 1.442695
        %v3548 = vpow.pop %v3547
        %v3549 = vmul.f32 %v3184, 1.442695
        %v3550 = vpow.pop %v3549
        %v3551 = vmul.f32 %v3185, 1.442695
        %v3552 = vpow.pop %v3551
        %v3553 = vmul.f32 %v3186, 1.442695
        %v3554 = vpow.pop %v3553
        %v3555 = vmul.f32 %v3187, 1.442695
        %v3556 = vpow.pop %v3555
        %v3557 = vmul.f32 %v3188, 1.442695
        %v3558 = vpow.pop %v3557
        %v3559 = vmul.f32 %v3189, 1.442695
        %v3560 = vpow.pop %v3559
        %v3561 = vmul.f32 %v3190, 1.442695
        %v3562 = vpow.pop %v3561
        %v3563 = vmul.f32 %v3191, 1.442695
        %v3564 = vpow.pop %v3563
        %v3565 = vmul.f32 %v3192, 1.442695
        %v3566 = vpow.pop %v3565
        %v3567 = vmul.f32 %v3193, 1.442695
        %v3568 = vpow.pop %v3567
        %v3569 = vmul.f32 %v3194, 1.442695
        %v3570 = vpow.pop %v3569
        %v3571 = vmul.f32 %v3195, 1.442695
        %v3572 = vpow.pop %v3571
        %v3573 = vmul.f32 %v3196, 1.442695
        %v3574 = vpow.pop %v3573
        %v3575 = vmul.f32 %v3197, 1.442695
        %v3576 = vpow.pop %v3575
        %v3577 = vmul.f32 %v3198, 1.442695
        %v3578 = vpow.pop %v3577
        %v3579 = vmul.f32 %v3199, 1.442695
        %v3580 = vpow.pop %v3579
        %v3581 = vmul.f32 %v3200, 1.442695
        %v3582 = vpow.pop %v3581
        %v3583 = vmul.f32 %v3201, 1.442695
        %v3584 = vpow.pop %v3583
        %v3585 = vmul.f32 %v3202, 1.442695
        %v3586 = vpow.pop %v3585
        %v3587 = vmul.f32 %v3203, 1.442695
        %v3588 = vpow.pop %v3587
        %v3589 = vmul.f32 %v3204, 1.442695
        %v3590 = vpow.pop %v3589
        %v3591 = vmul.f32 %v3205, 1.442695
        %v3592 = vpow.pop %v3591
        %v3593 = vmul.f32 %v3206, 1.442695
        %v3594 = vpow.pop %v3593
        %v3595 = vmul.f32 %v3207, 1.442695
        %v3596 = vpow.pop %v3595
        %v3597 = vmul.f32 %v3208, 1.442695
        %v3598 = vpow.pop %v3597
        %v3599 = vmul.f32 %v3209, 1.442695
        %v3600 = vpow.pop %v3599
        %v3601 = vmul.f32 %v3210, 1.442695
        %v3602 = vpow.pop %v3601
        %v3603 = vmul.f32 %v3211, 1.442695
        %v3604 = vpow.pop %v3603
        %v3605 = vmul.f32 %v3212, 1.442695
        %v3606 = vpow.pop %v3605
        %v3607 = vmul.f32 %v3213, 1.442695
        %v3608 = vpow.pop %v3607
        %v3609 = vmul.f32 %v3214, 1.442695
        %v3610 = vpow.pop %v3609
        %v3611 = vmul.f32 %v3215, 1.442695
        %v3612 = vpow.pop %v3611
        %v3613 = vmul.f32 %v3216, 1.442695
        %v3614 = vpow.pop %v3613
        %v3615 = vmul.f32 %v3217, 1.442695
        %v3616 = vpow.pop %v3615
        %v3617 = vmul.f32 %v3218, 1.442695
        %v3618 = vpow.pop %v3617
        %v3619 = vmul.f32 %v3219, 1.442695
        %v3620 = vpow.pop %v3619
        %v3621 = vmul.f32 %v3220, 1.442695
        %v3622 = vpow.pop %v3621
        %v3623 = vmul.f32 %v3221, 1.442695
        %v3624 = vpow.pop %v3623
        %v3625 = vmul.f32 %v3222, 1.442695
        %v3626 = vpow.pop %v3625
        %v3627 = vmul.f32 %v3223, 1.442695
        %v3628 = vpow.pop %v3627
        %v3629 = vmul.f32 %v3224, 1.442695
        %v3630 = vpow.pop %v3629
        %v3631 = vmul.f32 %v3225, 1.442695
        %v3632 = vpow.pop %v3631
        %v3633 = vmul.f32 %v3226, 1.442695
        %v3634 = vpow.pop %v3633
        %v3635 = vmul.f32 %v3227, 1.442695
        %v3636 = vpow.pop %v3635
        %v3637 = vmul.f32 %v3228, 1.442695
        %v3638 = vpow.pop %v3637
        %v3639 = vmul.f32 %v3229, 1.442695
        %v3640 = vpow.pop %v3639
        %v3641 = vmul.f32 %v3230, 1.442695
        %v3642 = vpow.pop %v3641
        %v3643 = vmul.f32 %v3231, 1.442695
        %v3644 = vpow.pop %v3643
        %v3645 = vmul.f32 %v3232, 1.442695
        %v3646 = vpow.pop %v3645
        %v3647 = vmul.f32 %v3233, 1.442695
        %v3648 = vpow.pop %v3647
        %v3649 = vmul.f32 %v3234, 1.442695
        %v3650 = vpow.pop %v3649
        %v3651 = vmul.f32 %v3235, 1.442695
        %v3652 = vpow.pop %v3651
        %v3653 = vmul.f32 %v3236, 1.442695
        %v3654 = vpow.pop %v3653
        %v3655 = vmul.f32 %v3237, 1.442695
        %v3656 = vpow.pop %v3655
        %v3657 = vmul.f32 %v3238, 1.442695
        %v3658 = vpow.pop %v3657
        %v3659 = vmul.f32 %v3239, 1.442695
        %v3660 = vpow.pop %v3659
        %v3661 = vmul.f32 %v3240, 1.442695
        %v3662 = vpow.pop %v3661
        %v3663 = vmul.f32 %v3241, 1.442695
        %v3664 = vpow.pop %v3663
        %v3665 = vmul.f32 %v3242, 1.442695
        %v3666 = vpow.pop %v3665
        %v3667 = vmul.f32 %v3243, 1.442695
        %v3668 = vpow.pop %v3667
        %v3669 = vmul.f32 %v3244, 1.442695
        %v3670 = vpow.pop %v3669
        %v3671 = vmul.f32 %v3245, 1.442695
        %v3672 = vpow.pop %v3671
        %v3673 = vmul.f32 %v3246, 1.442695
        %v3674 = vpow.pop %v3673
        %v3675 = vmul.f32 %v3247, 1.442695
        %v3676 = vpow.pop %v3675
        %v3677 = vmul.f32 %v3248, 1.442695
        %v3678 = vpow.pop %v3677
        %v3679 = vmul.f32 %v3249, 1.442695
        %v3680 = vpow.pop %v3679
        %v3681 = vmul.f32 %v3250, 1.442695
        %v3682 = vpow.pop %v3681
        %v3683 = vmul.f32 %v3251, 1.442695
        %v3684 = vpow.pop %v3683
        %v3685 = vmul.f32 %v3252, 1.442695
        %v3686 = vpow.pop %v3685
        %v3687 = vmul.f32 %v3253, 1.442695
        %v3688 = vpow.pop %v3687
        %v3689 = vmul.f32 %v3254, 1.442695
        %v3690 = vpow.pop %v3689
        %v3691 = vmul.f32 %v3255, 1.442695
        %v3692 = vpow.pop %v3691
        %v3693 = vmul.f32 %v3256, 1.442695
        %v3694 = vpow.pop %v3693
        %v3695 = vmul.f32 %v3257, 1.442695
        %v3696 = vpow.pop %v3695
        %v3697 = vmul.f32 %v3258, 1.442695
        %v3698 = vpow.pop %v3697
        %v3699 = vmul.f32 %v3259, 1.442695
        %v3700 = vpow.pop %v3699
        %v3701 = vmul.f32 %v3260, 1.442695
        %v3702 = vpow.pop %v3701
        %v3703 = vmul.f32 %v3261, 1.442695
        %v3704 = vpow.pop %v3703
        %v3705 = vmul.f32 %v3262, 1.442695
        %v3706 = vpow.pop %v3705
        %v3707 = vmul.f32 %v3263, 1.442695
        %v3708 = vpow.pop %v3707
        %v3709 = vmul.f32 %v3264, 1.442695
        %v3710 = vpow.pop %v3709
        %v3711 = vmul.f32 %v3265, 1.442695
        %v3712 = vpow.pop %v3711
        %v3713 = vmul.f32 %v3266, 1.442695
        %v3714 = vpow.pop %v3713
        %v3715 = vmul.f32 %v3267, 1.442695
        %v3716 = vpow.pop %v3715
        %v3717 = vmul.f32 %v3268, 1.442695
        %v3718 = vpow.pop %v3717
        %v3719 = vmul.f32 %v3269, 1.442695
        %v3720 = vpow.pop %v3719
        %v3721 = vmul.f32 %v3270, 1.442695
        %v3722 = vpow.pop %v3721
        %v3723 = vmul.f32 %v3271, 1.442695
        %v3724 = vpow.pop %v3723
        %v3725 = vmul.f32 %v3272, 1.442695
        %v3726 = vpow.pop %v3725
        %v3727 = vmul.f32 %v3273, 1.442695
        %v3728 = vpow.pop %v3727
        %v3729 = vmul.f32 %v3274, 1.442695
        %v3730 = vpow.pop %v3729
        %v3731 = vmul.f32 %v3275, 1.442695
        %v3732 = vpow.pop %v3731
        %v3733 = vmul.f32 %v3276, 1.442695
        %v3734 = vpow.pop %v3733
        %v3735 = vmul.f32 %v3277, 1.442695
        %v3736 = vpow.pop %v3735
        %v3737 = vmul.f32 %v3278, 1.442695
        %v3738 = vpow.pop %v3737
        %v3739 = vmul.f32 %v3279, 1.442695
        %v3740 = vpow.pop %v3739
        %v3741 = vmul.f32 %v3280, 1.442695
        %v3742 = vpow.pop %v3741
        %v3743 = vmul.f32 %v3281, 1.442695
        %v3744 = vpow.pop %v3743
        %v3745 = vmul.f32 %v3282, 1.442695
        %v3746 = vpow.pop %v3745
        %v3747 = vmul.f32 %v3283, 1.442695
        %v3748 = vpow.pop %v3747
        %v3749 = vmul.f32 %v3284, 1.442695
        %v3750 = vpow.pop %v3749
        %v3751 = vmul.f32 %v3285, 1.442695
        %v3752 = vpow.pop %v3751
        %v3753 = vmul.f32 %v3286, 1.442695
        %v3754 = vpow.pop %v3753
        %v3755 = vmul.f32 %v3287, 1.442695
        %v3756 = vpow.pop %v3755
        %v3757 = vmul.f32 %v3288, 1.442695
        %v3758 = vpow.pop %v3757
        %v3759 = vmul.f32 %v3289, 1.442695
        %v3760 = vpow.pop %v3759
        %v3761 = vmul.f32 %v3290, 1.442695
        %v3762 = vpow.pop %v3761
        %v3763 = vmul.f32 %v3291, 1.442695
        %v3764 = vpow.pop %v3763
        %v3765 = vmul.f32 %v3292, 1.442695
        %v3766 = vpow.pop %v3765
        %v3767 = vmul.f32 %v3293, 1.442695
        %v3768 = vpow.pop %v3767
        %v3769 = vmul.f32 %v3294, 1.442695
        %v3770 = vpow.pop %v3769
        %v3771 = vmul.f32 %v3295, 1.442695
        %v3772 = vpow.pop %v3771
        %v3773 = vmul.f32 %v3296, 1.442695
        %v3774 = vpow.pop %v3773
        %v3775 = vmul.f32 %v3297, 1.442695
        %v3776 = vpow.pop %v3775
        %v3777 = vmul.f32 %v3298, 1.442695
        %v3778 = vpow.pop %v3777
        %v3779 = vmul.f32 %v3299, 1.442695
        %v3780 = vpow.pop %v3779
        %v3781 = vmul.f32 %v3300, 1.442695
        %v3782 = vpow.pop %v3781
        %v3783 = vmul.f32 %v3301, 1.442695
        %v3784 = vpow.pop %v3783
        %v3785 = vmul.f32 %v3302, 1.442695
        %v3786 = vpow.pop %v3785
        %v3787 = vmul.f32 %v3303, 1.442695
        %v3788 = vpow.pop %v3787
        %v3789 = vmul.f32 %v3304, 1.442695
        %v3790 = vpow.pop %v3789
        %v3791 = vmul.f32 %v3305, 1.442695
        %v3792 = vpow.pop %v3791
        %v3793 = vmul.f32 %v3306, 1.442695
        %v3794 = vpow.pop %v3793
        %v3795 = vmul.f32 %v3307, 1.442695
        %v3796 = vpow.pop %v3795
        %v3797 = vmul.f32 %v3308, 1.442695
        %v3798 = vpow.pop %v3797
        %v3799 = vmul.f32 %v3309, 1.442695
        %v3800 = vpow.pop %v3799
        %v3801 = vmul.f32 %v3310, 1.442695
        %v3802 = vpow.pop %v3801
        %v3803 = vmul.f32 %v3311, 1.442695
        %v3804 = vpow.pop %v3803
        %v3805 = vmul.f32 %v3312, 1.442695
        %v3806 = vpow.pop %v3805
        %v3807 = vmul.f32 %v3313, 1.442695
        %v3808 = vpow.pop %v3807
        %v3809 = vmul.f32 %v3314, 1.442695
        %v3810 = vpow.pop %v3809
        %v3811 = vmul.f32 %v3315, 1.442695
        %v3812 = vpow.pop %v3811
        %v3813 = vmul.f32 %v3316, 1.442695
        %v3814 = vpow.pop %v3813
        %v3815 = vmul.f32 %v3317, 1.442695
        %v3816 = vpow.pop %v3815
        %v3817 = vmul.f32 %v3318, 1.442695
        %v3818 = vpow.pop %v3817
        %v3819 = vmul.f32 %v3319, 1.442695
        %v3820 = vpow.pop %v3819
        %v3821 = vmul.f32 %v3320, 1.442695
        %v3822 = vpow.pop %v3821
        %v3823 = vmul.f32 %v3321, 1.442695
        %v3824 = vpow.pop %v3823
        %v3825 = vmul.f32 %v3322, 1.442695
        %v3826 = vpow.pop %v3825
        %v3827 = vmul.f32 %v3323, 1.442695
        %v3828 = vpow.pop %v3827
        %v3829 = vmul.f32 %v3324, 1.442695
        %v3830 = vpow.pop %v3829
        %v3831 = vmul.f32 %v3325, 1.442695
        %v3832 = vpow.pop %v3831
        %v3833 = vmul.f32 %v3326, 1.442695
        %v3834 = vpow.pop %v3833
        %v3835 = vmul.f32 %v3327, 1.442695
        %v3836 = vpow.pop %v3835
        %v3837 = vmul.f32 %v3328, 1.442695
        %v3838 = vpow.pop %v3837
        %v3839 = vmul.f32 %v3329, 1.442695
        %v3840 = vpow.pop %v3839
        %v3841 = vmul.f32 %v3330, 1.442695
        %v3842 = vpow.pop %v3841
        %v3843 = vmul.f32 %v3331, 1.442695
        %v3844 = vpow.pop %v3843
        %v3845 = vmul.f32 %v3332, 1.442695
        %v3846 = vpow.pop %v3845
        %v3847 = vmul.f32 %v3333, 1.442695
        %v3848 = vpow.pop %v3847
        %v3849 = vmul.f32 %v3334, 1.442695
        %v3850 = vpow.pop %v3849
        %v3851 = vmul.f32 %v3335, 1.442695
        %v3852 = vpow.pop %v3851
        %v3853 = vmul.f32 %v3336, 1.442695
        %v3854 = vpow.pop %v3853
        %v3855 = vmul.f32 %v3337, 1.442695
        %v3856 = vpow.pop %v3855
        %v3857 = vmul.f32 %v3338, 1.442695
        %v3858 = vpow.pop %v3857
        %v3859 = vmul.f32 %v3339, 1.442695
        %v3860 = vpow.pop %v3859
        %v3861 = vmul.f32 %v3340, 1.442695
        %v3862 = vpow.pop %v3861
        %v3863 = vmul.f32 %v3341, 1.442695
        %v3864 = vpow.pop %v3863
        %v3865 = vmul.f32 %v3342, 1.442695
        %v3866 = vpow.pop %v3865
        %v3867 = vmul.f32 %v3343, 1.442695
        %v3868 = vpow.pop %v3867
        %v3869 = vmul.f32 %v3344, 1.442695
        %v3870 = vpow.pop %v3869
        %v3871 = vmul.f32 %v3345, 1.442695
        %v3872 = vpow.pop %v3871
        %v3873 = vmul.f32 %v3346, 1.442695
        %v3874 = vpow.pop %v3873
        %v3875 = vmul.f32 %v3347, 1.442695
        %v3876 = vpow.pop %v3875
        %v3877 = vmul.f32 %v3348, 1.442695
        %v3878 = vpow.pop %v3877
        %v3879 = vmul.f32 %v3349, 1.442695
        %v3880 = vpow.pop %v3879
        %v3881 = vmul.f32 %v3350, 1.442695
        %v3882 = vpow.pop %v3881
        %v3883 = vmul.f32 %v3351, 1.442695
        %v3884 = vpow.pop %v3883
        %v3885 = vmul.f32 %v3352, 1.442695
        %v3886 = vpow.pop %v3885
        %v3887 = vmul.f32 %v3353, 1.442695
        %v3888 = vpow.pop %v3887
        %v3889 = vmul.f32 %v3354, 1.442695
        %v3890 = vpow.pop %v3889
        %v3891 = vmul.f32 %v3355, 1.442695
        %v3892 = vpow.pop %v3891
        %v3893 = vmul.f32 %v3356, 1.442695
        %v3894 = vpow.pop %v3893
        %v3895 = vmul.f32 %v3357, 1.442695
        %v3896 = vpow.pop %v3895
        %v3897 = vmul.f32 %v3358, 1.442695
        %v3898 = vpow.pop %v3897
        %v3899 = vmul.f32 %v3359, 1.442695
        %v3900 = vpow.pop %v3899
        %v3901 = vmul.f32 %v3360, 1.442695
        %v3902 = vpow.pop %v3901
        %v3903 = vmul.f32 %v3361, 1.442695
        %v3904 = vpow.pop %v3903
        %v3905 = vmul.f32 %v3362, 1.442695
        %v3906 = vpow.pop %v3905
        %v3907 = vmul.f32 %v3363, 1.442695
        %v3908 = vpow.pop %v3907
        %v3909 = vmul.f32 %v3364, 1.442695
        %v3910 = vpow.pop %v3909
        %v3911 = vmul.f32 %v3365, 1.442695
        %v3912 = vpow.pop %v3911
        %v3913 = vmul.f32 %v3366, 1.442695
        %v3914 = vpow.pop %v3913
        %v3915 = vmul.f32 %v3367, 1.442695
        %v3916 = vpow.pop %v3915
        %v3917 = vmul.f32 %v3368, 1.442695
        %v3918 = vpow.pop %v3917
        %v3919 = vmul.f32 %v3369, 1.442695
        %v3920 = vpow.pop %v3919
        %v3921 = vmul.f32 %v3370, 1.442695
        %v3922 = vpow.pop %v3921
        %v3923 = vmul.f32 %v3371, 1.442695
        %v3924 = vpow.pop %v3923
        %v3925 = vmul.f32 %v3372, 1.442695
        %v3926 = vpow.pop %v3925
        %v3927 = vmul.f32 %v3373, 1.442695
        %v3928 = vpow.pop %v3927
        %v3929 = vmul.f32 %v3374, 1.442695
        %v3930 = vpow.pop %v3929
        %v3931 = vmul.f32 %v3375, 1.442695
        %v3932 = vpow.pop %v3931
        %v3933 = vmul.f32 %v3376, 1.442695
        %v3934 = vpow.pop %v3933
        %v3935 = vmul.f32 %v3377, 1.442695
        %v3936 = vpow.pop %v3935
        %v3937 = vmul.f32 %v3378, 1.442695
        %v3938 = vpow.pop %v3937
        %v3939 = vmul.f32 %v3379, 1.442695
        %v3940 = vpow.pop %v3939
        %v3941 = vmul.f32 %v3380, 1.442695
        %v3942 = vpow.pop %v3941
        %v3943 = vmul.f32 %v3381, 1.442695
        %v3944 = vpow.pop %v3943
        %v3945 = vmul.f32 %v3382, 1.442695
        %v3946 = vpow.pop %v3945
        %v3947 = vmul.f32 %v3383, 1.442695
        %v3948 = vpow.pop %v3947
        %v3949 = vmul.f32 %v3384, 1.442695
        %v3950 = vpow.pop %v3949
        %v3951 = vmul.f32 %v3385, 1.442695
        %v3952 = vpow.pop %v3951
        %v3953 = vmul.f32 %v3386, 1.442695
        %v3954 = vpow.pop %v3953
        %v3955 = vmul.f32 %v3387, 1.442695
        %v3956 = vpow.pop %v3955
        %v3957 = vmul.f32 %v3388, 1.442695
        %v3958 = vpow.pop %v3957
        %v3959 = vmul.f32 %v3389, 1.442695
        %v3960 = vpow.pop %v3959
        %v3961 = vmul.f32 %v3390, 1.442695
        %v3962 = vpow.pop %v3961
        %v3963 = vmul.f32 %v3391, 1.442695
        %v3964 = vpow.pop %v3963
        %v3965 = vmul.f32 %v3392, 1.442695
        %v3966 = vpow.pop %v3965
        %v3967 = vmul.f32 %v3393, 1.442695
        %v3968 = vpow.pop %v3967
        %v3969 = vmul.f32 %v3394, 1.442695
        %v3970 = vpow.pop %v3969
        %v3971 = vmul.f32 %v3395, 1.442695
        %v3972 = vpow.pop %v3971
        %v3973 = vmul.f32 %v3396, 1.442695
        %v3974 = vpow.pop %v3973
        %v3975 = vmul.f32 %v3397, 1.442695
        %v3976 = vpow.pop %v3975
        %v3977 = vmul.f32 %v3398, 1.442695
        %v3978 = vpow.pop %v3977
        %v3979 = vmul.f32 %v3399, 1.442695
        %v3980 = vpow.pop %v3979
        %v3981 = vmul.f32 %v3400, 1.442695
        %v3982 = vpow.pop %v3981
        %v3983 = vmul.f32 %v3401, 1.442695
        %v3984 = vpow.pop %v3983
        %v3985 = vmul.f32 %v3402, 1.442695
        %v3986 = vpow.pop %v3985
        %v3987 = vmul.f32 %v3403, 1.442695
        %v3988 = vpow.pop %v3987
        %v3989 = vmul.f32 %v3404, 1.442695
        %v3990 = vpow.pop %v3989
        %v3991 = vmul.f32 %v3405, 1.442695
        %v3992 = vpow.pop %v3991
        %v3993 = vmul.f32 %v3406, 1.442695
        %v3994 = vpow.pop %v3993
        %v3995 = vmul.f32 %v3407, 1.442695
        %v3996 = vpow.pop %v3995
        %v3997 = vmul.f32 %v3408, 1.442695
        %v3998 = vpow.pop %v3997
        %v3999 = vmul.f32 %v3409, 1.442695
        %v4000 = vpow.pop %v3999
        %v4001 = vmul.f32 %v3410, 1.442695
        %v4002 = vpow.pop %v4001
        %v4003 = vmul.f32 %v3411, 1.442695
        %v4004 = vpow.pop %v4003
        %v4005 = vmul.f32 %v3412, 1.442695
        %v4006 = vpow.pop %v4005
        %v4007 = vmul.f32 %v3413, 1.442695
        %v4008 = vpow.pop %v4007
        %v4009 = vmul.f32 %v3414, 1.442695
        %v4010 = vpow.pop %v4009
        %v4011 = vmul.f32 %v3415, 1.442695
        %v4012 = vpow.pop %v4011
        %v4013 = vmul.f32 %v3416, 1.442695
        %v4014 = vpow.pop %v4013
        %v4015 = vmul.f32 %v3417, 1.442695
        %v4016 = vpow.pop %v4015
        %v4017 = vmul.f32 %v3418, 1.442695
        %v4018 = vpow.pop %v4017
        %v4019 = vmul.f32 %v3419, 1.442695
        %v4020 = vpow.pop %v4019
        %v4021 = vmul.f32 %v3420, 1.442695
        %v4022 = vpow.pop %v4021
        %v4023 = vmul.f32 %v3421, 1.442695
        %v4024 = vpow.pop %v4023
        %v4025 = vmul.f32 %v3422, 1.442695
        %v4026 = vpow.pop %v4025
        %v4027 = vmul.f32 %v3423, 1.442695
        %v4028 = vpow.pop %v4027
        %v4029 = vmul.f32 %v3424, 1.442695
        %v4030 = vpow.pop %v4029
        %v4031 = vmul.f32 %v3425, 1.442695
        %v4032 = vpow.pop %v4031
        %v4033 = vmul.f32 %v3426, 1.442695
        %v4034 = vpow.pop %v4033
        %v4035 = vmul.f32 %v3427, 1.442695
        %v4036 = vpow.pop %v4035
        %v4037 = vmul.f32 %v3428, 1.442695
        %v4038 = vpow.pop %v4037
        %v4039 = vmul.f32 %v3429, 1.442695
        %v4040 = vpow.pop %v4039
        %v4041 = vmul.f32 %v3430, 1.442695
        %v4042 = vpow.pop %v4041
        %v4043 = vmul.f32 %v3431, 1.442695
        %v4044 = vpow.pop %v4043
        %v4045 = vmul.f32 %v3432, 1.442695
        %v4046 = vpow.pop %v4045
        %v4047 = vmul.f32 %v3433, 1.442695
        %v4048 = vpow.pop %v4047
        %v4049 = vmul.f32 %v3434, 1.442695
        %v4050 = vpow.pop %v4049
        %v4051 = vmul.f32 %v3435, 1.442695
        %v4052 = vpow.pop %v4051
        %v4053 = vmul.f32 %v3436, 1.442695
        %v4054 = vpow.pop %v4053
        %v4055 = vmul.f32 %v3437, 1.442695
        %v4056 = vpow.pop %v4055
        %v4057 = vmul.f32 %v3438, 1.442695
        %v4058 = vpow.pop %v4057
        %v4059 = vmul.f32 %v3439, 1.442695
        %v4060 = vpow.pop %v4059
        %v4061 = vmul.f32 %v3440, 1.442695
        %v4062 = vpow.pop %v4061
        %v4063 = vmul.f32 %v3441, 1.442695
        %v4064 = vpow.pop %v4063
        %v4065 = vmul.f32 %v3442, 1.442695
        %v4066 = vpow.pop %v4065
        %v4067 = vmul.f32 %v3443, 1.442695
        %v4068 = vpow.pop %v4067
        %v4069 = vmul.f32 %v3444, 1.442695
        %v4070 = vpow.pop %v4069
        %v4071 = vmul.f32 %v3445, 1.442695
        %v4072 = vpow.pop %v4071
        %v4073 = vmul.f32 %v3446, 1.442695
        %v4074 = vpow.pop %v4073
        %v4075 = vmul.f32 %v3447, 1.442695
        %v4076 = vpow.pop %v4075
        %v4077 = vmul.f32 %v3448, 1.442695
        %v4078 = vpow.pop %v4077
        %v4079 = vmul.f32 %v3449, 1.442695
        %v4080 = vpow.pop %v4079
        %v4081 = vmul.f32 %v3450, 1.442695
        %v4082 = vpow.pop %v4081
        %v4083 = vmul.f32 %v3451, 1.442695
        %v4084 = vpow.pop %v4083
        %v4085 = vmul.f32 %v3452, 1.442695
        %v4086 = vpow.pop %v4085
        %v4087 = vmul.f32 %v3453, 1.442695
        %v4088 = vpow.pop %v4087
        %v4089 = vmul.f32 %v3454, 1.442695
        %v4090 = vpow.pop %v4089
        %v4091 = vmul.f32 %v3455, 1.442695
        %v4092 = vpow.pop %v4091
        %v4093 = vmul.f32 %v3456, 1.442695
        %v4094 = vpow.pop %v4093
        %v4095 = vmul.f32 %v3457, 1.442695
        %v4096 = vpow.pop %v4095
        %v4097 = vmul.f32 %v3458, 1.442695
        %v4098 = vpow.pop %v4097
        %v4099 = vadd.f32 %v3460, 1.0
        %v4100 = vadd.f32 %v3462, 1.0
        %v4101 = vadd.f32 %v3464, 1.0
        %v4102 = vadd.f32 %v3466, 1.0
        %v4103 = vadd.f32 %v3468, 1.0
        %v4104 = vadd.f32 %v3470, 1.0
        %v4105 = vadd.f32 %v3472, 1.0
        %v4106 = vadd.f32 %v3474, 1.0
        %v4107 = vadd.f32 %v3476, 1.0
        %v4108 = vadd.f32 %v3478, 1.0
        %v4109 = vadd.f32 %v3480, 1.0
        %v4110 = vadd.f32 %v3482, 1.0
        %v4111 = vadd.f32 %v3484, 1.0
        %v4112 = vadd.f32 %v3486, 1.0
        %v4113 = vadd.f32 %v3488, 1.0
        %v4114 = vadd.f32 %v3490, 1.0
        %v4115 = vadd.f32 %v3492, 1.0
        %v4116 = vadd.f32 %v3494, 1.0
        %v4117 = vadd.f32 %v3496, 1.0
        %v4118 = vadd.f32 %v3498, 1.0
        %v4119 = vadd.f32 %v3500, 1.0
        %v4120 = vadd.f32 %v3502, 1.0
        %v4121 = vadd.f32 %v3504, 1.0
        %v4122 = vadd.f32 %v3506, 1.0
        %v4123 = vadd.f32 %v3508, 1.0
        %v4124 = vadd.f32 %v3510, 1.0
        %v4125 = vadd.f32 %v3512, 1.0
        %v4126 = vadd.f32 %v3514, 1.0
        %v4127 = vadd.f32 %v3516, 1.0
        %v4128 = vadd.f32 %v3518, 1.0
        %v4129 = vadd.f32 %v3520, 1.0
        %v4130 = vadd.f32 %v3522, 1.0
        %v4131 = vadd.f32 %v3524, 1.0
        %v4132 = vadd.f32 %v3526, 1.0
        %v4133 = vadd.f32 %v3528, 1.0
        %v4134 = vadd.f32 %v3530, 1.0
        %v4135 = vadd.f32 %v3532, 1.0
        %v4136 = vadd.f32 %v3534, 1.0
        %v4137 = vadd.f32 %v3536, 1.0
        %v4138 = vadd.f32 %v3538, 1.0
        %v4139 = vadd.f32 %v3540, 1.0
        %v4140 = vadd.f32 %v3542, 1.0
        %v4141 = vadd.f32 %v3544, 1.0
        %v4142 = vadd.f32 %v3546, 1.0
        %v4143 = vadd.f32 %v3548, 1.0
        %v4144 = vadd.f32 %v3550, 1.0
        %v4145 = vadd.f32 %v3552, 1.0
        %v4146 = vadd.f32 %v3554, 1.0
        %v4147 = vadd.f32 %v3556, 1.0
        %v4148 = vadd.f32 %v3558, 1.0
        %v4149 = vadd.f32 %v3560, 1.0
        %v4150 = vadd.f32 %v3562, 1.0
        %v4151 = vadd.f32 %v3564, 1.0
        %v4152 = vadd.f32 %v3566, 1.0
        %v4153 = vadd.f32 %v3568, 1.0
        %v4154 = vadd.f32 %v3570, 1.0
        %v4155 = vadd.f32 %v3572, 1.0
        %v4156 = vadd.f32 %v3574, 1.0
        %v4157 = vadd.f32 %v3576, 1.0
        %v4158 = vadd.f32 %v3578, 1.0
        %v4159 = vadd.f32 %v3580, 1.0
        %v4160 = vadd.f32 %v3582, 1.0
        %v4161 = vadd.f32 %v3584, 1.0
        %v4162 = vadd.f32 %v3586, 1.0
        %v4163 = vadd.f32 %v3588, 1.0
        %v4164 = vadd.f32 %v3590, 1.0
        %v4165 = vadd.f32 %v3592, 1.0
        %v4166 = vadd.f32 %v3594, 1.0
        %v4167 = vadd.f32 %v3596, 1.0
        %v4168 = vadd.f32 %v3598, 1.0
        %v4169 = vadd.f32 %v3600, 1.0
        %v4170 = vadd.f32 %v3602, 1.0
        %v4171 = vadd.f32 %v3604, 1.0
        %v4172 = vadd.f32 %v3606, 1.0
        %v4173 = vadd.f32 %v3608, 1.0
        %v4174 = vadd.f32 %v3610, 1.0
        %v4175 = vadd.f32 %v3612, 1.0
        %v4176 = vadd.f32 %v3614, 1.0
        %v4177 = vadd.f32 %v3616, 1.0
        %v4178 = vadd.f32 %v3618, 1.0
        %v4179 = vadd.f32 %v3620, 1.0
        %v4180 = vadd.f32 %v3622, 1.0
        %v4181 = vadd.f32 %v3624, 1.0
        %v4182 = vadd.f32 %v3626, 1.0
        %v4183 = vadd.f32 %v3628, 1.0
        %v4184 = vadd.f32 %v3630, 1.0
        %v4185 = vadd.f32 %v3632, 1.0
        %v4186 = vadd.f32 %v3634, 1.0
        %v4187 = vadd.f32 %v3636, 1.0
        %v4188 = vadd.f32 %v3638, 1.0
        %v4189 = vadd.f32 %v3640, 1.0
        %v4190 = vadd.f32 %v3642, 1.0
        %v4191 = vadd.f32 %v3644, 1.0
        %v4192 = vadd.f32 %v3646, 1.0
        %v4193 = vadd.f32 %v3648, 1.0
        %v4194 = vadd.f32 %v3650, 1.0
        %v4195 = vadd.f32 %v3652, 1.0
        %v4196 = vadd.f32 %v3654, 1.0
        %v4197 = vadd.f32 %v3656, 1.0
        %v4198 = vadd.f32 %v3658, 1.0
        %v4199 = vadd.f32 %v3660, 1.0
        %v4200 = vadd.f32 %v3662, 1.0
        %v4201 = vadd.f32 %v3664, 1.0
        %v4202 = vadd.f32 %v3666, 1.0
        %v4203 = vadd.f32 %v3668, 1.0
        %v4204 = vadd.f32 %v3670, 1.0
        %v4205 = vadd.f32 %v3672, 1.0
        %v4206 = vadd.f32 %v3674, 1.0
        %v4207 = vadd.f32 %v3676, 1.0
        %v4208 = vadd.f32 %v3678, 1.0
        %v4209 = vadd.f32 %v3680, 1.0
        %v4210 = vadd.f32 %v3682, 1.0
        %v4211 = vadd.f32 %v3684, 1.0
        %v4212 = vadd.f32 %v3686, 1.0
        %v4213 = vadd.f32 %v3688, 1.0
        %v4214 = vadd.f32 %v3690, 1.0
        %v4215 = vadd.f32 %v3692, 1.0
        %v4216 = vadd.f32 %v3694, 1.0
        %v4217 = vadd.f32 %v3696, 1.0
        %v4218 = vadd.f32 %v3698, 1.0
        %v4219 = vadd.f32 %v3700, 1.0
        %v4220 = vadd.f32 %v3702, 1.0
        %v4221 = vadd.f32 %v3704, 1.0
        %v4222 = vadd.f32 %v3706, 1.0
        %v4223 = vadd.f32 %v3708, 1.0
        %v4224 = vadd.f32 %v3710, 1.0
        %v4225 = vadd.f32 %v3712, 1.0
        %v4226 = vadd.f32 %v3714, 1.0
        %v4227 = vadd.f32 %v3716, 1.0
        %v4228 = vadd.f32 %v3718, 1.0
        %v4229 = vadd.f32 %v3720, 1.0
        %v4230 = vadd.f32 %v3722, 1.0
        %v4231 = vadd.f32 %v3724, 1.0
        %v4232 = vadd.f32 %v3726, 1.0
        %v4233 = vadd.f32 %v3728, 1.0
        %v4234 = vadd.f32 %v3730, 1.0
        %v4235 = vadd.f32 %v3732, 1.0
        %v4236 = vadd.f32 %v3734, 1.0
        %v4237 = vadd.f32 %v3736, 1.0
        %v4238 = vadd.f32 %v3738, 1.0
        %v4239 = vadd.f32 %v3740, 1.0
        %v4240 = vadd.f32 %v3742, 1.0
        %v4241 = vadd.f32 %v3744, 1.0
        %v4242 = vadd.f32 %v3746, 1.0
        %v4243 = vadd.f32 %v3748, 1.0
        %v4244 = vadd.f32 %v3750, 1.0
        %v4245 = vadd.f32 %v3752, 1.0
        %v4246 = vadd.f32 %v3754, 1.0
        %v4247 = vadd.f32 %v3756, 1.0
        %v4248 = vadd.f32 %v3758, 1.0
        %v4249 = vadd.f32 %v3760, 1.0
        %v4250 = vadd.f32 %v3762, 1.0
        %v4251 = vadd.f32 %v3764, 1.0
        %v4252 = vadd.f32 %v3766, 1.0
        %v4253 = vadd.f32 %v3768, 1.0
        %v4254 = vadd.f32 %v3770, 1.0
        %v4255 = vadd.f32 %v3772, 1.0
        %v4256 = vadd.f32 %v3774, 1.0
        %v4257 = vadd.f32 %v3776, 1.0
        %v4258 = vadd.f32 %v3778, 1.0
        %v4259 = vadd.f32 %v3780, 1.0
        %v4260 = vadd.f32 %v3782, 1.0
        %v4261 = vadd.f32 %v3784, 1.0
        %v4262 = vadd.f32 %v3786, 1.0
        %v4263 = vadd.f32 %v3788, 1.0
        %v4264 = vadd.f32 %v3790, 1.0
        %v4265 = vadd.f32 %v3792, 1.0
        %v4266 = vadd.f32 %v3794, 1.0
        %v4267 = vadd.f32 %v3796, 1.0
        %v4268 = vadd.f32 %v3798, 1.0
        %v4269 = vadd.f32 %v3800, 1.0
        %v4270 = vadd.f32 %v3802, 1.0
        %v4271 = vadd.f32 %v3804, 1.0
        %v4272 = vadd.f32 %v3806, 1.0
        %v4273 = vadd.f32 %v3808, 1.0
        %v4274 = vadd.f32 %v3810, 1.0
        %v4275 = vadd.f32 %v3812, 1.0
        %v4276 = vadd.f32 %v3814, 1.0
        %v4277 = vadd.f32 %v3816, 1.0
        %v4278 = vadd.f32 %v3818, 1.0
        %v4279 = vadd.f32 %v3820, 1.0
        %v4280 = vadd.f32 %v3822, 1.0
        %v4281 = vadd.f32 %v3824, 1.0
        %v4282 = vadd.f32 %v3826, 1.0
        %v4283 = vadd.f32 %v3828, 1.0
        %v4284 = vadd.f32 %v3830, 1.0
        %v4285 = vadd.f32 %v3832, 1.0
        %v4286 = vadd.f32 %v3834, 1.0
        %v4287 = vadd.f32 %v3836, 1.0
        %v4288 = vadd.f32 %v3838, 1.0
        %v4289 = vadd.f32 %v3840, 1.0
        %v4290 = vadd.f32 %v3842, 1.0
        %v4291 = vadd.f32 %v3844, 1.0
        %v4292 = vadd.f32 %v3846, 1.0
        %v4293 = vadd.f32 %v3848, 1.0
        %v4294 = vadd.f32 %v3850, 1.0
        %v4295 = vadd.f32 %v3852, 1.0
        %v4296 = vadd.f32 %v3854, 1.0
        %v4297 = vadd.f32 %v3856, 1.0
        %v4298 = vadd.f32 %v3858, 1.0
        %v4299 = vadd.f32 %v3860, 1.0
        %v4300 = vadd.f32 %v3862, 1.0
        %v4301 = vadd.f32 %v3864, 1.0
        %v4302 = vadd.f32 %v3866, 1.0
        %v4303 = vadd.f32 %v3868, 1.0
        %v4304 = vadd.f32 %v3870, 1.0
        %v4305 = vadd.f32 %v3872, 1.0
        %v4306 = vadd.f32 %v3874, 1.0
        %v4307 = vadd.f32 %v3876, 1.0
        %v4308 = vadd.f32 %v3878, 1.0
        %v4309 = vadd.f32 %v3880, 1.0
        %v4310 = vadd.f32 %v3882, 1.0
        %v4311 = vadd.f32 %v3884, 1.0
        %v4312 = vadd.f32 %v3886, 1.0
        %v4313 = vadd.f32 %v3888, 1.0
        %v4314 = vadd.f32 %v3890, 1.0
        %v4315 = vadd.f32 %v3892, 1.0
        %v4316 = vadd.f32 %v3894, 1.0
        %v4317 = vadd.f32 %v3896, 1.0
        %v4318 = vadd.f32 %v3898, 1.0
        %v4319 = vadd.f32 %v3900, 1.0
        %v4320 = vadd.f32 %v3902, 1.0
        %v4321 = vadd.f32 %v3904, 1.0
        %v4322 = vadd.f32 %v3906, 1.0
        %v4323 = vadd.f32 %v3908, 1.0
        %v4324 = vadd.f32 %v3910, 1.0
        %v4325 = vadd.f32 %v3912, 1.0
        %v4326 = vadd.f32 %v3914, 1.0
        %v4327 = vadd.f32 %v3916, 1.0
        %v4328 = vadd.f32 %v3918, 1.0
        %v4329 = vadd.f32 %v3920, 1.0
        %v4330 = vadd.f32 %v3922, 1.0
        %v4331 = vadd.f32 %v3924, 1.0
        %v4332 = vadd.f32 %v3926, 1.0
        %v4333 = vadd.f32 %v3928, 1.0
        %v4334 = vadd.f32 %v3930, 1.0
        %v4335 = vadd.f32 %v3932, 1.0
        %v4336 = vadd.f32 %v3934, 1.0
        %v4337 = vadd.f32 %v3936, 1.0
        %v4338 = vadd.f32 %v3938, 1.0
        %v4339 = vadd.f32 %v3940, 1.0
        %v4340 = vadd.f32 %v3942, 1.0
        %v4341 = vadd.f32 %v3944, 1.0
        %v4342 = vadd.f32 %v3946, 1.0
        %v4343 = vadd.f32 %v3948, 1.0
        %v4344 = vadd.f32 %v3950, 1.0
        %v4345 = vadd.f32 %v3952, 1.0
        %v4346 = vadd.f32 %v3954, 1.0
        %v4347 = vadd.f32 %v3956, 1.0
        %v4348 = vadd.f32 %v3958, 1.0
        %v4349 = vadd.f32 %v3960, 1.0
        %v4350 = vadd.f32 %v3962, 1.0
        %v4351 = vadd.f32 %v3964, 1.0
        %v4352 = vadd.f32 %v3966, 1.0
        %v4353 = vadd.f32 %v3968, 1.0
        %v4354 = vadd.f32 %v3970, 1.0
        %v4355 = vadd.f32 %v3972, 1.0
        %v4356 = vadd.f32 %v3974, 1.0
        %v4357 = vadd.f32 %v3976, 1.0
        %v4358 = vadd.f32 %v3978, 1.0
        %v4359 = vadd.f32 %v3980, 1.0
        %v4360 = vadd.f32 %v3982, 1.0
        %v4361 = vadd.f32 %v3984, 1.0
        %v4362 = vadd.f32 %v3986, 1.0
        %v4363 = vadd.f32 %v3988, 1.0
        %v4364 = vadd.f32 %v3990, 1.0
        %v4365 = vadd.f32 %v3992, 1.0
        %v4366 = vadd.f32 %v3994, 1.0
        %v4367 = vadd.f32 %v3996, 1.0
        %v4368 = vadd.f32 %v3998, 1.0
        %v4369 = vadd.f32 %v4000, 1.0
        %v4370 = vadd.f32 %v4002, 1.0
        %v4371 = vadd.f32 %v4004, 1.0
        %v4372 = vadd.f32 %v4006, 1.0
        %v4373 = vadd.f32 %v4008, 1.0
        %v4374 = vadd.f32 %v4010, 1.0
        %v4375 = vadd.f32 %v4012, 1.0
        %v4376 = vadd.f32 %v4014, 1.0
        %v4377 = vadd.f32 %v4016, 1.0
        %v4378 = vadd.f32 %v4018, 1.0
        %v4379 = vadd.f32 %v4020, 1.0
        %v4380 = vadd.f32 %v4022, 1.0
        %v4381 = vadd.f32 %v4024, 1.0
        %v4382 = vadd.f32 %v4026, 1.0
        %v4383 = vadd.f32 %v4028, 1.0
        %v4384 = vadd.f32 %v4030, 1.0
        %v4385 = vadd.f32 %v4032, 1.0
        %v4386 = vadd.f32 %v4034, 1.0
        %v4387 = vadd.f32 %v4036, 1.0
        %v4388 = vadd.f32 %v4038, 1.0
        %v4389 = vadd.f32 %v4040, 1.0
        %v4390 = vadd.f32 %v4042, 1.0
        %v4391 = vadd.f32 %v4044, 1.0
        %v4392 = vadd.f32 %v4046, 1.0
        %v4393 = vadd.f32 %v4048, 1.0
        %v4394 = vadd.f32 %v4050, 1.0
        %v4395 = vadd.f32 %v4052, 1.0
        %v4396 = vadd.f32 %v4054, 1.0
        %v4397 = vadd.f32 %v4056, 1.0
        %v4398 = vadd.f32 %v4058, 1.0
        %v4399 = vadd.f32 %v4060, 1.0
        %v4400 = vadd.f32 %v4062, 1.0
        %v4401 = vadd.f32 %v4064, 1.0
        %v4402 = vadd.f32 %v4066, 1.0
        %v4403 = vadd.f32 %v4068, 1.0
        %v4404 = vadd.f32 %v4070, 1.0
        %v4405 = vadd.f32 %v4072, 1.0
        %v4406 = vadd.f32 %v4074, 1.0
        %v4407 = vadd.f32 %v4076, 1.0
        %v4408 = vadd.f32 %v4078, 1.0
        %v4409 = vadd.f32 %v4080, 1.0
        %v4410 = vadd.f32 %v4082, 1.0
        %v4411 = vadd.f32 %v4084, 1.0
        %v4412 = vadd.f32 %v4086, 1.0
        %v4413 = vadd.f32 %v4088, 1.0
        %v4414 = vadd.f32 %v4090, 1.0
        %v4415 = vadd.f32 %v4092, 1.0
        %v4416 = vadd.f32 %v4094, 1.0
        %v4417 = vadd.f32 %v4096, 1.0
        %v4418 = vadd.f32 %v4098, 1.0
        %v4419 = vrcp.pop %v4099
        %v4420 = vmul.f32 1.0, %v4419
        %v4421 = vrcp.pop %v4100
        %v4422 = vmul.f32 1.0, %v4421
        %v4423 = vrcp.pop %v4101
        %v4424 = vmul.f32 1.0, %v4423
        %v4425 = vrcp.pop %v4102
        %v4426 = vmul.f32 1.0, %v4425
        %v4427 = vrcp.pop %v4103
        %v4428 = vmul.f32 1.0, %v4427
        %v4429 = vrcp.pop %v4104
        %v4430 = vmul.f32 1.0, %v4429
        %v4431 = vrcp.pop %v4105
        %v4432 = vmul.f32 1.0, %v4431
        %v4433 = vrcp.pop %v4106
        %v4434 = vmul.f32 1.0, %v4433
        %v4435 = vrcp.pop %v4107
        %v4436 = vmul.f32 1.0, %v4435
        %v4437 = vrcp.pop %v4108
        %v4438 = vmul.f32 1.0, %v4437
        %v4439 = vrcp.pop %v4109
        %v4440 = vmul.f32 1.0, %v4439
        %v4441 = vrcp.pop %v4110
        %v4442 = vmul.f32 1.0, %v4441
        %v4443 = vrcp.pop %v4111
        %v4444 = vmul.f32 1.0, %v4443
        %v4445 = vrcp.pop %v4112
        %v4446 = vmul.f32 1.0, %v4445
        %v4447 = vrcp.pop %v4113
        %v4448 = vmul.f32 1.0, %v4447
        %v4449 = vrcp.pop %v4114
        %v4450 = vmul.f32 1.0, %v4449
        %v4451 = vrcp.pop %v4115
        %v4452 = vmul.f32 1.0, %v4451
        %v4453 = vrcp.pop %v4116
        %v4454 = vmul.f32 1.0, %v4453
        %v4455 = vrcp.pop %v4117
        %v4456 = vmul.f32 1.0, %v4455
        %v4457 = vrcp.pop %v4118
        %v4458 = vmul.f32 1.0, %v4457
        %v4459 = vrcp.pop %v4119
        %v4460 = vmul.f32 1.0, %v4459
        %v4461 = vrcp.pop %v4120
        %v4462 = vmul.f32 1.0, %v4461
        %v4463 = vrcp.pop %v4121
        %v4464 = vmul.f32 1.0, %v4463
        %v4465 = vrcp.pop %v4122
        %v4466 = vmul.f32 1.0, %v4465
        %v4467 = vrcp.pop %v4123
        %v4468 = vmul.f32 1.0, %v4467
        %v4469 = vrcp.pop %v4124
        %v4470 = vmul.f32 1.0, %v4469
        %v4471 = vrcp.pop %v4125
        %v4472 = vmul.f32 1.0, %v4471
        %v4473 = vrcp.pop %v4126
        %v4474 = vmul.f32 1.0, %v4473
        %v4475 = vrcp.pop %v4127
        %v4476 = vmul.f32 1.0, %v4475
        %v4477 = vrcp.pop %v4128
        %v4478 = vmul.f32 1.0, %v4477
        %v4479 = vrcp.pop %v4129
        %v4480 = vmul.f32 1.0, %v4479
        %v4481 = vrcp.pop %v4130
        %v4482 = vmul.f32 1.0, %v4481
        %v4483 = vrcp.pop %v4131
        %v4484 = vmul.f32 1.0, %v4483
        %v4485 = vrcp.pop %v4132
        %v4486 = vmul.f32 1.0, %v4485
        %v4487 = vrcp.pop %v4133
        %v4488 = vmul.f32 1.0, %v4487
        %v4489 = vrcp.pop %v4134
        %v4490 = vmul.f32 1.0, %v4489
        %v4491 = vrcp.pop %v4135
        %v4492 = vmul.f32 1.0, %v4491
        %v4493 = vrcp.pop %v4136
        %v4494 = vmul.f32 1.0, %v4493
        %v4495 = vrcp.pop %v4137
        %v4496 = vmul.f32 1.0, %v4495
        %v4497 = vrcp.pop %v4138
        %v4498 = vmul.f32 1.0, %v4497
        %v4499 = vrcp.pop %v4139
        %v4500 = vmul.f32 1.0, %v4499
        %v4501 = vrcp.pop %v4140
        %v4502 = vmul.f32 1.0, %v4501
        %v4503 = vrcp.pop %v4141
        %v4504 = vmul.f32 1.0, %v4503
        %v4505 = vrcp.pop %v4142
        %v4506 = vmul.f32 1.0, %v4505
        %v4507 = vrcp.pop %v4143
        %v4508 = vmul.f32 1.0, %v4507
        %v4509 = vrcp.pop %v4144
        %v4510 = vmul.f32 1.0, %v4509
        %v4511 = vrcp.pop %v4145
        %v4512 = vmul.f32 1.0, %v4511
        %v4513 = vrcp.pop %v4146
        %v4514 = vmul.f32 1.0, %v4513
        %v4515 = vrcp.pop %v4147
        %v4516 = vmul.f32 1.0, %v4515
        %v4517 = vrcp.pop %v4148
        %v4518 = vmul.f32 1.0, %v4517
        %v4519 = vrcp.pop %v4149
        %v4520 = vmul.f32 1.0, %v4519
        %v4521 = vrcp.pop %v4150
        %v4522 = vmul.f32 1.0, %v4521
        %v4523 = vrcp.pop %v4151
        %v4524 = vmul.f32 1.0, %v4523
        %v4525 = vrcp.pop %v4152
        %v4526 = vmul.f32 1.0, %v4525
        %v4527 = vrcp.pop %v4153
        %v4528 = vmul.f32 1.0, %v4527
        %v4529 = vrcp.pop %v4154
        %v4530 = vmul.f32 1.0, %v4529
        %v4531 = vrcp.pop %v4155
        %v4532 = vmul.f32 1.0, %v4531
        %v4533 = vrcp.pop %v4156
        %v4534 = vmul.f32 1.0, %v4533
        %v4535 = vrcp.pop %v4157
        %v4536 = vmul.f32 1.0, %v4535
        %v4537 = vrcp.pop %v4158
        %v4538 = vmul.f32 1.0, %v4537
        %v4539 = vrcp.pop %v4159
        %v4540 = vmul.f32 1.0, %v4539
        %v4541 = vrcp.pop %v4160
        %v4542 = vmul.f32 1.0, %v4541
        %v4543 = vrcp.pop %v4161
        %v4544 = vmul.f32 1.0, %v4543
        %v4545 = vrcp.pop %v4162
        %v4546 = vmul.f32 1.0, %v4545
        %v4547 = vrcp.pop %v4163
        %v4548 = vmul.f32 1.0, %v4547
        %v4549 = vrcp.pop %v4164
        %v4550 = vmul.f32 1.0, %v4549
        %v4551 = vrcp.pop %v4165
        %v4552 = vmul.f32 1.0, %v4551
        %v4553 = vrcp.pop %v4166
        %v4554 = vmul.f32 1.0, %v4553
        %v4555 = vrcp.pop %v4167
        %v4556 = vmul.f32 1.0, %v4555
        %v4557 = vrcp.pop %v4168
        %v4558 = vmul.f32 1.0, %v4557
        %v4559 = vrcp.pop %v4169
        %v4560 = vmul.f32 1.0, %v4559
        %v4561 = vrcp.pop %v4170
        %v4562 = vmul.f32 1.0, %v4561
        %v4563 = vrcp.pop %v4171
        %v4564 = vmul.f32 1.0, %v4563
        %v4565 = vrcp.pop %v4172
        %v4566 = vmul.f32 1.0, %v4565
        %v4567 = vrcp.pop %v4173
        %v4568 = vmul.f32 1.0, %v4567
        %v4569 = vrcp.pop %v4174
        %v4570 = vmul.f32 1.0, %v4569
        %v4571 = vrcp.pop %v4175
        %v4572 = vmul.f32 1.0, %v4571
        %v4573 = vrcp.pop %v4176
        %v4574 = vmul.f32 1.0, %v4573
        %v4575 = vrcp.pop %v4177
        %v4576 = vmul.f32 1.0, %v4575
        %v4577 = vrcp.pop %v4178
        %v4578 = vmul.f32 1.0, %v4577
        %v4579 = vrcp.pop %v4179
        %v4580 = vmul.f32 1.0, %v4579
        %v4581 = vrcp.pop %v4180
        %v4582 = vmul.f32 1.0, %v4581
        %v4583 = vrcp.pop %v4181
        %v4584 = vmul.f32 1.0, %v4583
        %v4585 = vrcp.pop %v4182
        %v4586 = vmul.f32 1.0, %v4585
        %v4587 = vrcp.pop %v4183
        %v4588 = vmul.f32 1.0, %v4587
        %v4589 = vrcp.pop %v4184
        %v4590 = vmul.f32 1.0, %v4589
        %v4591 = vrcp.pop %v4185
        %v4592 = vmul.f32 1.0, %v4591
        %v4593 = vrcp.pop %v4186
        %v4594 = vmul.f32 1.0, %v4593
        %v4595 = vrcp.pop %v4187
        %v4596 = vmul.f32 1.0, %v4595
        %v4597 = vrcp.pop %v4188
        %v4598 = vmul.f32 1.0, %v4597
        %v4599 = vrcp.pop %v4189
        %v4600 = vmul.f32 1.0, %v4599
        %v4601 = vrcp.pop %v4190
        %v4602 = vmul.f32 1.0, %v4601
        %v4603 = vrcp.pop %v4191
        %v4604 = vmul.f32 1.0, %v4603
        %v4605 = vrcp.pop %v4192
        %v4606 = vmul.f32 1.0, %v4605
        %v4607 = vrcp.pop %v4193
        %v4608 = vmul.f32 1.0, %v4607
        %v4609 = vrcp.pop %v4194
        %v4610 = vmul.f32 1.0, %v4609
        %v4611 = vrcp.pop %v4195
        %v4612 = vmul.f32 1.0, %v4611
        %v4613 = vrcp.pop %v4196
        %v4614 = vmul.f32 1.0, %v4613
        %v4615 = vrcp.pop %v4197
        %v4616 = vmul.f32 1.0, %v4615
        %v4617 = vrcp.pop %v4198
        %v4618 = vmul.f32 1.0, %v4617
        %v4619 = vrcp.pop %v4199
        %v4620 = vmul.f32 1.0, %v4619
        %v4621 = vrcp.pop %v4200
        %v4622 = vmul.f32 1.0, %v4621
        %v4623 = vrcp.pop %v4201
        %v4624 = vmul.f32 1.0, %v4623
        %v4625 = vrcp.pop %v4202
        %v4626 = vmul.f32 1.0, %v4625
        %v4627 = vrcp.pop %v4203
        %v4628 = vmul.f32 1.0, %v4627
        %v4629 = vrcp.pop %v4204
        %v4630 = vmul.f32 1.0, %v4629
        %v4631 = vrcp.pop %v4205
        %v4632 = vmul.f32 1.0, %v4631
        %v4633 = vrcp.pop %v4206
        %v4634 = vmul.f32 1.0, %v4633
        %v4635 = vrcp.pop %v4207
        %v4636 = vmul.f32 1.0, %v4635
        %v4637 = vrcp.pop %v4208
        %v4638 = vmul.f32 1.0, %v4637
        %v4639 = vrcp.pop %v4209
        %v4640 = vmul.f32 1.0, %v4639
        %v4641 = vrcp.pop %v4210
        %v4642 = vmul.f32 1.0, %v4641
        %v4643 = vrcp.pop %v4211
        %v4644 = vmul.f32 1.0, %v4643
        %v4645 = vrcp.pop %v4212
        %v4646 = vmul.f32 1.0, %v4645
        %v4647 = vrcp.pop %v4213
        %v4648 = vmul.f32 1.0, %v4647
        %v4649 = vrcp.pop %v4214
        %v4650 = vmul.f32 1.0, %v4649
        %v4651 = vrcp.pop %v4215
        %v4652 = vmul.f32 1.0, %v4651
        %v4653 = vrcp.pop %v4216
        %v4654 = vmul.f32 1.0, %v4653
        %v4655 = vrcp.pop %v4217
        %v4656 = vmul.f32 1.0, %v4655
        %v4657 = vrcp.pop %v4218
        %v4658 = vmul.f32 1.0, %v4657
        %v4659 = vrcp.pop %v4219
        %v4660 = vmul.f32 1.0, %v4659
        %v4661 = vrcp.pop %v4220
        %v4662 = vmul.f32 1.0, %v4661
        %v4663 = vrcp.pop %v4221
        %v4664 = vmul.f32 1.0, %v4663
        %v4665 = vrcp.pop %v4222
        %v4666 = vmul.f32 1.0, %v4665
        %v4667 = vrcp.pop %v4223
        %v4668 = vmul.f32 1.0, %v4667
        %v4669 = vrcp.pop %v4224
        %v4670 = vmul.f32 1.0, %v4669
        %v4671 = vrcp.pop %v4225
        %v4672 = vmul.f32 1.0, %v4671
        %v4673 = vrcp.pop %v4226
        %v4674 = vmul.f32 1.0, %v4673
        %v4675 = vrcp.pop %v4227
        %v4676 = vmul.f32 1.0, %v4675
        %v4677 = vrcp.pop %v4228
        %v4678 = vmul.f32 1.0, %v4677
        %v4679 = vrcp.pop %v4229
        %v4680 = vmul.f32 1.0, %v4679
        %v4681 = vrcp.pop %v4230
        %v4682 = vmul.f32 1.0, %v4681
        %v4683 = vrcp.pop %v4231
        %v4684 = vmul.f32 1.0, %v4683
        %v4685 = vrcp.pop %v4232
        %v4686 = vmul.f32 1.0, %v4685
        %v4687 = vrcp.pop %v4233
        %v4688 = vmul.f32 1.0, %v4687
        %v4689 = vrcp.pop %v4234
        %v4690 = vmul.f32 1.0, %v4689
        %v4691 = vrcp.pop %v4235
        %v4692 = vmul.f32 1.0, %v4691
        %v4693 = vrcp.pop %v4236
        %v4694 = vmul.f32 1.0, %v4693
        %v4695 = vrcp.pop %v4237
        %v4696 = vmul.f32 1.0, %v4695
        %v4697 = vrcp.pop %v4238
        %v4698 = vmul.f32 1.0, %v4697
        %v4699 = vrcp.pop %v4239
        %v4700 = vmul.f32 1.0, %v4699
        %v4701 = vrcp.pop %v4240
        %v4702 = vmul.f32 1.0, %v4701
        %v4703 = vrcp.pop %v4241
        %v4704 = vmul.f32 1.0, %v4703
        %v4705 = vrcp.pop %v4242
        %v4706 = vmul.f32 1.0, %v4705
        %v4707 = vrcp.pop %v4243
        %v4708 = vmul.f32 1.0, %v4707
        %v4709 = vrcp.pop %v4244
        %v4710 = vmul.f32 1.0, %v4709
        %v4711 = vrcp.pop %v4245
        %v4712 = vmul.f32 1.0, %v4711
        %v4713 = vrcp.pop %v4246
        %v4714 = vmul.f32 1.0, %v4713
        %v4715 = vrcp.pop %v4247
        %v4716 = vmul.f32 1.0, %v4715
        %v4717 = vrcp.pop %v4248
        %v4718 = vmul.f32 1.0, %v4717
        %v4719 = vrcp.pop %v4249
        %v4720 = vmul.f32 1.0, %v4719
        %v4721 = vrcp.pop %v4250
        %v4722 = vmul.f32 1.0, %v4721
        %v4723 = vrcp.pop %v4251
        %v4724 = vmul.f32 1.0, %v4723
        %v4725 = vrcp.pop %v4252
        %v4726 = vmul.f32 1.0, %v4725
        %v4727 = vrcp.pop %v4253
        %v4728 = vmul.f32 1.0, %v4727
        %v4729 = vrcp.pop %v4254
        %v4730 = vmul.f32 1.0, %v4729
        %v4731 = vrcp.pop %v4255
        %v4732 = vmul.f32 1.0, %v4731
        %v4733 = vrcp.pop %v4256
        %v4734 = vmul.f32 1.0, %v4733
        %v4735 = vrcp.pop %v4257
        %v4736 = vmul.f32 1.0, %v4735
        %v4737 = vrcp.pop %v4258
        %v4738 = vmul.f32 1.0, %v4737
        %v4739 = vrcp.pop %v4259
        %v4740 = vmul.f32 1.0, %v4739
        %v4741 = vrcp.pop %v4260
        %v4742 = vmul.f32 1.0, %v4741
        %v4743 = vrcp.pop %v4261
        %v4744 = vmul.f32 1.0, %v4743
        %v4745 = vrcp.pop %v4262
        %v4746 = vmul.f32 1.0, %v4745
        %v4747 = vrcp.pop %v4263
        %v4748 = vmul.f32 1.0, %v4747
        %v4749 = vrcp.pop %v4264
        %v4750 = vmul.f32 1.0, %v4749
        %v4751 = vrcp.pop %v4265
        %v4752 = vmul.f32 1.0, %v4751
        %v4753 = vrcp.pop %v4266
        %v4754 = vmul.f32 1.0, %v4753
        %v4755 = vrcp.pop %v4267
        %v4756 = vmul.f32 1.0, %v4755
        %v4757 = vrcp.pop %v4268
        %v4758 = vmul.f32 1.0, %v4757
        %v4759 = vrcp.pop %v4269
        %v4760 = vmul.f32 1.0, %v4759
        %v4761 = vrcp.pop %v4270
        %v4762 = vmul.f32 1.0, %v4761
        %v4763 = vrcp.pop %v4271
        %v4764 = vmul.f32 1.0, %v4763
        %v4765 = vrcp.pop %v4272
        %v4766 = vmul.f32 1.0, %v4765
        %v4767 = vrcp.pop %v4273
        %v4768 = vmul.f32 1.0, %v4767
        %v4769 = vrcp.pop %v4274
        %v4770 = vmul.f32 1.0, %v4769
        %v4771 = vrcp.pop %v4275
        %v4772 = vmul.f32 1.0, %v4771
        %v4773 = vrcp.pop %v4276
        %v4774 = vmul.f32 1.0, %v4773
        %v4775 = vrcp.pop %v4277
        %v4776 = vmul.f32 1.0, %v4775
        %v4777 = vrcp.pop %v4278
        %v4778 = vmul.f32 1.0, %v4777
        %v4779 = vrcp.pop %v4279
        %v4780 = vmul.f32 1.0, %v4779
        %v4781 = vrcp.pop %v4280
        %v4782 = vmul.f32 1.0, %v4781
        %v4783 = vrcp.pop %v4281
        %v4784 = vmul.f32 1.0, %v4783
        %v4785 = vrcp.pop %v4282
        %v4786 = vmul.f32 1.0, %v4785
        %v4787 = vrcp.pop %v4283
        %v4788 = vmul.f32 1.0, %v4787
        %v4789 = vrcp.pop %v4284
        %v4790 = vmul.f32 1.0, %v4789
        %v4791 = vrcp.pop %v4285
        %v4792 = vmul.f32 1.0, %v4791
        %v4793 = vrcp.pop %v4286
        %v4794 = vmul.f32 1.0, %v4793
        %v4795 = vrcp.pop %v4287
        %v4796 = vmul.f32 1.0, %v4795
        %v4797 = vrcp.pop %v4288
        %v4798 = vmul.f32 1.0, %v4797
        %v4799 = vrcp.pop %v4289
        %v4800 = vmul.f32 1.0, %v4799
        %v4801 = vrcp.pop %v4290
        %v4802 = vmul.f32 1.0, %v4801
        %v4803 = vrcp.pop %v4291
        %v4804 = vmul.f32 1.0, %v4803
        %v4805 = vrcp.pop %v4292
        %v4806 = vmul.f32 1.0, %v4805
        %v4807 = vrcp.pop %v4293
        %v4808 = vmul.f32 1.0, %v4807
        %v4809 = vrcp.pop %v4294
        %v4810 = vmul.f32 1.0, %v4809
        %v4811 = vrcp.pop %v4295
        %v4812 = vmul.f32 1.0, %v4811
        %v4813 = vrcp.pop %v4296
        %v4814 = vmul.f32 1.0, %v4813
        %v4815 = vrcp.pop %v4297
        %v4816 = vmul.f32 1.0, %v4815
        %v4817 = vrcp.pop %v4298
        %v4818 = vmul.f32 1.0, %v4817
        %v4819 = vrcp.pop %v4299
        %v4820 = vmul.f32 1.0, %v4819
        %v4821 = vrcp.pop %v4300
        %v4822 = vmul.f32 1.0, %v4821
        %v4823 = vrcp.pop %v4301
        %v4824 = vmul.f32 1.0, %v4823
        %v4825 = vrcp.pop %v4302
        %v4826 = vmul.f32 1.0, %v4825
        %v4827 = vrcp.pop %v4303
        %v4828 = vmul.f32 1.0, %v4827
        %v4829 = vrcp.pop %v4304
        %v4830 = vmul.f32 1.0, %v4829
        %v4831 = vrcp.pop %v4305
        %v4832 = vmul.f32 1.0, %v4831
        %v4833 = vrcp.pop %v4306
        %v4834 = vmul.f32 1.0, %v4833
        %v4835 = vrcp.pop %v4307
        %v4836 = vmul.f32 1.0, %v4835
        %v4837 = vrcp.pop %v4308
        %v4838 = vmul.f32 1.0, %v4837
        %v4839 = vrcp.pop %v4309
        %v4840 = vmul.f32 1.0, %v4839
        %v4841 = vrcp.pop %v4310
        %v4842 = vmul.f32 1.0, %v4841
        %v4843 = vrcp.pop %v4311
        %v4844 = vmul.f32 1.0, %v4843
        %v4845 = vrcp.pop %v4312
        %v4846 = vmul.f32 1.0, %v4845
        %v4847 = vrcp.pop %v4313
        %v4848 = vmul.f32 1.0, %v4847
        %v4849 = vrcp.pop %v4314
        %v4850 = vmul.f32 1.0, %v4849
        %v4851 = vrcp.pop %v4315
        %v4852 = vmul.f32 1.0, %v4851
        %v4853 = vrcp.pop %v4316
        %v4854 = vmul.f32 1.0, %v4853
        %v4855 = vrcp.pop %v4317
        %v4856 = vmul.f32 1.0, %v4855
        %v4857 = vrcp.pop %v4318
        %v4858 = vmul.f32 1.0, %v4857
        %v4859 = vrcp.pop %v4319
        %v4860 = vmul.f32 1.0, %v4859
        %v4861 = vrcp.pop %v4320
        %v4862 = vmul.f32 1.0, %v4861
        %v4863 = vrcp.pop %v4321
        %v4864 = vmul.f32 1.0, %v4863
        %v4865 = vrcp.pop %v4322
        %v4866 = vmul.f32 1.0, %v4865
        %v4867 = vrcp.pop %v4323
        %v4868 = vmul.f32 1.0, %v4867
        %v4869 = vrcp.pop %v4324
        %v4870 = vmul.f32 1.0, %v4869
        %v4871 = vrcp.pop %v4325
        %v4872 = vmul.f32 1.0, %v4871
        %v4873 = vrcp.pop %v4326
        %v4874 = vmul.f32 1.0, %v4873
        %v4875 = vrcp.pop %v4327
        %v4876 = vmul.f32 1.0, %v4875
        %v4877 = vrcp.pop %v4328
        %v4878 = vmul.f32 1.0, %v4877
        %v4879 = vrcp.pop %v4329
        %v4880 = vmul.f32 1.0, %v4879
        %v4881 = vrcp.pop %v4330
        %v4882 = vmul.f32 1.0, %v4881
        %v4883 = vrcp.pop %v4331
        %v4884 = vmul.f32 1.0, %v4883
        %v4885 = vrcp.pop %v4332
        %v4886 = vmul.f32 1.0, %v4885
        %v4887 = vrcp.pop %v4333
        %v4888 = vmul.f32 1.0, %v4887
        %v4889 = vrcp.pop %v4334
        %v4890 = vmul.f32 1.0, %v4889
        %v4891 = vrcp.pop %v4335
        %v4892 = vmul.f32 1.0, %v4891
        %v4893 = vrcp.pop %v4336
        %v4894 = vmul.f32 1.0, %v4893
        %v4895 = vrcp.pop %v4337
        %v4896 = vmul.f32 1.0, %v4895
        %v4897 = vrcp.pop %v4338
        %v4898 = vmul.f32 1.0, %v4897
        %v4899 = vrcp.pop %v4339
        %v4900 = vmul.f32 1.0, %v4899
        %v4901 = vrcp.pop %v4340
        %v4902 = vmul.f32 1.0, %v4901
        %v4903 = vrcp.pop %v4341
        %v4904 = vmul.f32 1.0, %v4903
        %v4905 = vrcp.pop %v4342
        %v4906 = vmul.f32 1.0, %v4905
        %v4907 = vrcp.pop %v4343
        %v4908 = vmul.f32 1.0, %v4907
        %v4909 = vrcp.pop %v4344
        %v4910 = vmul.f32 1.0, %v4909
        %v4911 = vrcp.pop %v4345
        %v4912 = vmul.f32 1.0, %v4911
        %v4913 = vrcp.pop %v4346
        %v4914 = vmul.f32 1.0, %v4913
        %v4915 = vrcp.pop %v4347
        %v4916 = vmul.f32 1.0, %v4915
        %v4917 = vrcp.pop %v4348
        %v4918 = vmul.f32 1.0, %v4917
        %v4919 = vrcp.pop %v4349
        %v4920 = vmul.f32 1.0, %v4919
        %v4921 = vrcp.pop %v4350
        %v4922 = vmul.f32 1.0, %v4921
        %v4923 = vrcp.pop %v4351
        %v4924 = vmul.f32 1.0, %v4923
        %v4925 = vrcp.pop %v4352
        %v4926 = vmul.f32 1.0, %v4925
        %v4927 = vrcp.pop %v4353
        %v4928 = vmul.f32 1.0, %v4927
        %v4929 = vrcp.pop %v4354
        %v4930 = vmul.f32 1.0, %v4929
        %v4931 = vrcp.pop %v4355
        %v4932 = vmul.f32 1.0, %v4931
        %v4933 = vrcp.pop %v4356
        %v4934 = vmul.f32 1.0, %v4933
        %v4935 = vrcp.pop %v4357
        %v4936 = vmul.f32 1.0, %v4935
        %v4937 = vrcp.pop %v4358
        %v4938 = vmul.f32 1.0, %v4937
        %v4939 = vrcp.pop %v4359
        %v4940 = vmul.f32 1.0, %v4939
        %v4941 = vrcp.pop %v4360
        %v4942 = vmul.f32 1.0, %v4941
        %v4943 = vrcp.pop %v4361
        %v4944 = vmul.f32 1.0, %v4943
        %v4945 = vrcp.pop %v4362
        %v4946 = vmul.f32 1.0, %v4945
        %v4947 = vrcp.pop %v4363
        %v4948 = vmul.f32 1.0, %v4947
        %v4949 = vrcp.pop %v4364
        %v4950 = vmul.f32 1.0, %v4949
        %v4951 = vrcp.pop %v4365
        %v4952 = vmul.f32 1.0, %v4951
        %v4953 = vrcp.pop %v4366
        %v4954 = vmul.f32 1.0, %v4953
        %v4955 = vrcp.pop %v4367
        %v4956 = vmul.f32 1.0, %v4955
        %v4957 = vrcp.pop %v4368
        %v4958 = vmul.f32 1.0, %v4957
        %v4959 = vrcp.pop %v4369
        %v4960 = vmul.f32 1.0, %v4959
        %v4961 = vrcp.pop %v4370
        %v4962 = vmul.f32 1.0, %v4961
        %v4963 = vrcp.pop %v4371
        %v4964 = vmul.f32 1.0, %v4963
        %v4965 = vrcp.pop %v4372
        %v4966 = vmul.f32 1.0, %v4965
        %v4967 = vrcp.pop %v4373
        %v4968 = vmul.f32 1.0, %v4967
        %v4969 = vrcp.pop %v4374
        %v4970 = vmul.f32 1.0, %v4969
        %v4971 = vrcp.pop %v4375
        %v4972 = vmul.f32 1.0, %v4971
        %v4973 = vrcp.pop %v4376
        %v4974 = vmul.f32 1.0, %v4973
        %v4975 = vrcp.pop %v4377
        %v4976 = vmul.f32 1.0, %v4975
        %v4977 = vrcp.pop %v4378
        %v4978 = vmul.f32 1.0, %v4977
        %v4979 = vrcp.pop %v4379
        %v4980 = vmul.f32 1.0, %v4979
        %v4981 = vrcp.pop %v4380
        %v4982 = vmul.f32 1.0, %v4981
        %v4983 = vrcp.pop %v4381
        %v4984 = vmul.f32 1.0, %v4983
        %v4985 = vrcp.pop %v4382
        %v4986 = vmul.f32 1.0, %v4985
        %v4987 = vrcp.pop %v4383
        %v4988 = vmul.f32 1.0, %v4987
        %v4989 = vrcp.pop %v4384
        %v4990 = vmul.f32 1.0, %v4989
        %v4991 = vrcp.pop %v4385
        %v4992 = vmul.f32 1.0, %v4991
        %v4993 = vrcp.pop %v4386
        %v4994 = vmul.f32 1.0, %v4993
        %v4995 = vrcp.pop %v4387
        %v4996 = vmul.f32 1.0, %v4995
        %v4997 = vrcp.pop %v4388
        %v4998 = vmul.f32 1.0, %v4997
        %v4999 = vrcp.pop %v4389
        %v5000 = vmul.f32 1.0, %v4999
        %v5001 = vrcp.pop %v4390
        %v5002 = vmul.f32 1.0, %v5001
        %v5003 = vrcp.pop %v4391
        %v5004 = vmul.f32 1.0, %v5003
        %v5005 = vrcp.pop %v4392
        %v5006 = vmul.f32 1.0, %v5005
        %v5007 = vrcp.pop %v4393
        %v5008 = vmul.f32 1.0, %v5007
        %v5009 = vrcp.pop %v4394
        %v5010 = vmul.f32 1.0, %v5009
        %v5011 = vrcp.pop %v4395
        %v5012 = vmul.f32 1.0, %v5011
        %v5013 = vrcp.pop %v4396
        %v5014 = vmul.f32 1.0, %v5013
        %v5015 = vrcp.pop %v4397
        %v5016 = vmul.f32 1.0, %v5015
        %v5017 = vrcp.pop %v4398
        %v5018 = vmul.f32 1.0, %v5017
        %v5019 = vrcp.pop %v4399
        %v5020 = vmul.f32 1.0, %v5019
        %v5021 = vrcp.pop %v4400
        %v5022 = vmul.f32 1.0, %v5021
        %v5023 = vrcp.pop %v4401
        %v5024 = vmul.f32 1.0, %v5023
        %v5025 = vrcp.pop %v4402
        %v5026 = vmul.f32 1.0, %v5025
        %v5027 = vrcp.pop %v4403
        %v5028 = vmul.f32 1.0, %v5027
        %v5029 = vrcp.pop %v4404
        %v5030 = vmul.f32 1.0, %v5029
        %v5031 = vrcp.pop %v4405
        %v5032 = vmul.f32 1.0, %v5031
        %v5033 = vrcp.pop %v4406
        %v5034 = vmul.f32 1.0, %v5033
        %v5035 = vrcp.pop %v4407
        %v5036 = vmul.f32 1.0, %v5035
        %v5037 = vrcp.pop %v4408
        %v5038 = vmul.f32 1.0, %v5037
        %v5039 = vrcp.pop %v4409
        %v5040 = vmul.f32 1.0, %v5039
        %v5041 = vrcp.pop %v4410
        %v5042 = vmul.f32 1.0, %v5041
        %v5043 = vrcp.pop %v4411
        %v5044 = vmul.f32 1.0, %v5043
        %v5045 = vrcp.pop %v4412
        %v5046 = vmul.f32 1.0, %v5045
        %v5047 = vrcp.pop %v4413
        %v5048 = vmul.f32 1.0, %v5047
        %v5049 = vrcp.pop %v4414
        %v5050 = vmul.f32 1.0, %v5049
        %v5051 = vrcp.pop %v4415
        %v5052 = vmul.f32 1.0, %v5051
        %v5053 = vrcp.pop %v4416
        %v5054 = vmul.f32 1.0, %v5053
        %v5055 = vrcp.pop %v4417
        %v5056 = vmul.f32 1.0, %v5055
        %v5057 = vrcp.pop %v4418
        %v5058 = vmul.f32 1.0, %v5057
        %v5059 = vmul.f32 %v2819, %v4420
        %v5060 = vmul.f32 %v2820, %v4422
        %v5061 = vmul.f32 %v2821, %v4424
        %v5062 = vmul.f32 %v2822, %v4426
        %v5063 = vmul.f32 %v2823, %v4428
        %v5064 = vmul.f32 %v2824, %v4430
        %v5065 = vmul.f32 %v2825, %v4432
        %v5066 = vmul.f32 %v2826, %v4434
        %v5067 = vmul.f32 %v2827, %v4436
        %v5068 = vmul.f32 %v2828, %v4438
        %v5069 = vmul.f32 %v2829, %v4440
        %v5070 = vmul.f32 %v2830, %v4442
        %v5071 = vmul.f32 %v2831, %v4444
        %v5072 = vmul.f32 %v2832, %v4446
        %v5073 = vmul.f32 %v2833, %v4448
        %v5074 = vmul.f32 %v2834, %v4450
        %v5075 = vmul.f32 %v2835, %v4452
        %v5076 = vmul.f32 %v2836, %v4454
        %v5077 = vmul.f32 %v2837, %v4456
        %v5078 = vmul.f32 %v2838, %v4458
        %v5079 = vmul.f32 %v2839, %v4460
        %v5080 = vmul.f32 %v2840, %v4462
        %v5081 = vmul.f32 %v2841, %v4464
        %v5082 = vmul.f32 %v2842, %v4466
        %v5083 = vmul.f32 %v2843, %v4468
        %v5084 = vmul.f32 %v2844, %v4470
        %v5085 = vmul.f32 %v2845, %v4472
        %v5086 = vmul.f32 %v2846, %v4474
        %v5087 = vmul.f32 %v2847, %v4476
        %v5088 = vmul.f32 %v2848, %v4478
        %v5089 = vmul.f32 %v2849, %v4480
        %v5090 = vmul.f32 %v2850, %v4482
        %v5091 = vmul.f32 %v2851, %v4484
        %v5092 = vmul.f32 %v2852, %v4486
        %v5093 = vmul.f32 %v2853, %v4488
        %v5094 = vmul.f32 %v2854, %v4490
        %v5095 = vmul.f32 %v2855, %v4492
        %v5096 = vmul.f32 %v2856, %v4494
        %v5097 = vmul.f32 %v2857, %v4496
        %v5098 = vmul.f32 %v2858, %v4498
        %v5099 = vmul.f32 %v2859, %v4500
        %v5100 = vmul.f32 %v2860, %v4502
        %v5101 = vmul.f32 %v2861, %v4504
        %v5102 = vmul.f32 %v2862, %v4506
        %v5103 = vmul.f32 %v2863, %v4508
        %v5104 = vmul.f32 %v2864, %v4510
        %v5105 = vmul.f32 %v2865, %v4512
        %v5106 = vmul.f32 %v2866, %v4514
        %v5107 = vmul.f32 %v2867, %v4516
        %v5108 = vmul.f32 %v2868, %v4518
        %v5109 = vmul.f32 %v2869, %v4520
        %v5110 = vmul.f32 %v2870, %v4522
        %v5111 = vmul.f32 %v2871, %v4524
        %v5112 = vmul.f32 %v2872, %v4526
        %v5113 = vmul.f32 %v2873, %v4528
        %v5114 = vmul.f32 %v2874, %v4530
        %v5115 = vmul.f32 %v2875, %v4532
        %v5116 = vmul.f32 %v2876, %v4534
        %v5117 = vmul.f32 %v2877, %v4536
        %v5118 = vmul.f32 %v2878, %v4538
        %v5119 = vmul.f32 %v2879, %v4540
        %v5120 = vmul.f32 %v2880, %v4542
        %v5121 = vmul.f32 %v2881, %v4544
        %v5122 = vmul.f32 %v2882, %v4546
        %v5123 = vmul.f32 %v2883, %v4548
        %v5124 = vmul.f32 %v2884, %v4550
        %v5125 = vmul.f32 %v2885, %v4552
        %v5126 = vmul.f32 %v2886, %v4554
        %v5127 = vmul.f32 %v2887, %v4556
        %v5128 = vmul.f32 %v2888, %v4558
        %v5129 = vmul.f32 %v2889, %v4560
        %v5130 = vmul.f32 %v2890, %v4562
        %v5131 = vmul.f32 %v2891, %v4564
        %v5132 = vmul.f32 %v2892, %v4566
        %v5133 = vmul.f32 %v2893, %v4568
        %v5134 = vmul.f32 %v2894, %v4570
        %v5135 = vmul.f32 %v2895, %v4572
        %v5136 = vmul.f32 %v2896, %v4574
        %v5137 = vmul.f32 %v2897, %v4576
        %v5138 = vmul.f32 %v2898, %v4578
        %v5139 = vmul.f32 %v2899, %v4580
        %v5140 = vmul.f32 %v2900, %v4582
        %v5141 = vmul.f32 %v2901, %v4584
        %v5142 = vmul.f32 %v2902, %v4586
        %v5143 = vmul.f32 %v2903, %v4588
        %v5144 = vmul.f32 %v2904, %v4590
        %v5145 = vmul.f32 %v2905, %v4592
        %v5146 = vmul.f32 %v2906, %v4594
        %v5147 = vmul.f32 %v2907, %v4596
        %v5148 = vmul.f32 %v2908, %v4598
        %v5149 = vmul.f32 %v2909, %v4600
        %v5150 = vmul.f32 %v2910, %v4602
        %v5151 = vmul.f32 %v2911, %v4604
        %v5152 = vmul.f32 %v2912, %v4606
        %v5153 = vmul.f32 %v2913, %v4608
        %v5154 = vmul.f32 %v2914, %v4610
        %v5155 = vmul.f32 %v2915, %v4612
        %v5156 = vmul.f32 %v2916, %v4614
        %v5157 = vmul.f32 %v2917, %v4616
        %v5158 = vmul.f32 %v2918, %v4618
        %v5159 = vmul.f32 %v2919, %v4620
        %v5160 = vmul.f32 %v2920, %v4622
        %v5161 = vmul.f32 %v2921, %v4624
        %v5162 = vmul.f32 %v2922, %v4626
        %v5163 = vmul.f32 %v2923, %v4628
        %v5164 = vmul.f32 %v2924, %v4630
        %v5165 = vmul.f32 %v2925, %v4632
        %v5166 = vmul.f32 %v2926, %v4634
        %v5167 = vmul.f32 %v2927, %v4636
        %v5168 = vmul.f32 %v2928, %v4638
        %v5169 = vmul.f32 %v2929, %v4640
        %v5170 = vmul.f32 %v2930, %v4642
        %v5171 = vmul.f32 %v2931, %v4644
        %v5172 = vmul.f32 %v2932, %v4646
        %v5173 = vmul.f32 %v2933, %v4648
        %v5174 = vmul.f32 %v2934, %v4650
        %v5175 = vmul.f32 %v2935, %v4652
        %v5176 = vmul.f32 %v2936, %v4654
        %v5177 = vmul.f32 %v2937, %v4656
        %v5178 = vmul.f32 %v2938, %v4658
        %v5179 = vmul.f32 %v2939, %v4660
        %v5180 = vmul.f32 %v2940, %v4662
        %v5181 = vmul.f32 %v2941, %v4664
        %v5182 = vmul.f32 %v2942, %v4666
        %v5183 = vmul.f32 %v2943, %v4668
        %v5184 = vmul.f32 %v2944, %v4670
        %v5185 = vmul.f32 %v2945, %v4672
        %v5186 = vmul.f32 %v2946, %v4674
        %v5187 = vmul.f32 %v2947, %v4676
        %v5188 = vmul.f32 %v2948, %v4678
        %v5189 = vmul.f32 %v2949, %v4680
        %v5190 = vmul.f32 %v2950, %v4682
        %v5191 = vmul.f32 %v2951, %v4684
        %v5192 = vmul.f32 %v2952, %v4686
        %v5193 = vmul.f32 %v2953, %v4688
        %v5194 = vmul.f32 %v2954, %v4690
        %v5195 = vmul.f32 %v2955, %v4692
        %v5196 = vmul.f32 %v2956, %v4694
        %v5197 = vmul.f32 %v2957, %v4696
        %v5198 = vmul.f32 %v2958, %v4698
        %v5199 = vmul.f32 %v2959, %v4700
        %v5200 = vmul.f32 %v2960, %v4702
        %v5201 = vmul.f32 %v2961, %v4704
        %v5202 = vmul.f32 %v2962, %v4706
        %v5203 = vmul.f32 %v2963, %v4708
        %v5204 = vmul.f32 %v2964, %v4710
        %v5205 = vmul.f32 %v2965, %v4712
        %v5206 = vmul.f32 %v2966, %v4714
        %v5207 = vmul.f32 %v2967, %v4716
        %v5208 = vmul.f32 %v2968, %v4718
        %v5209 = vmul.f32 %v2969, %v4720
        %v5210 = vmul.f32 %v2970, %v4722
        %v5211 = vmul.f32 %v2971, %v4724
        %v5212 = vmul.f32 %v2972, %v4726
        %v5213 = vmul.f32 %v2973, %v4728
        %v5214 = vmul.f32 %v2974, %v4730
        %v5215 = vmul.f32 %v2975, %v4732
        %v5216 = vmul.f32 %v2976, %v4734
        %v5217 = vmul.f32 %v2977, %v4736
        %v5218 = vmul.f32 %v2978, %v4738
        %v5219 = vmul.f32 %v2979, %v4740
        %v5220 = vmul.f32 %v2980, %v4742
        %v5221 = vmul.f32 %v2981, %v4744
        %v5222 = vmul.f32 %v2982, %v4746
        %v5223 = vmul.f32 %v2983, %v4748
        %v5224 = vmul.f32 %v2984, %v4750
        %v5225 = vmul.f32 %v2985, %v4752
        %v5226 = vmul.f32 %v2986, %v4754
        %v5227 = vmul.f32 %v2987, %v4756
        %v5228 = vmul.f32 %v2988, %v4758
        %v5229 = vmul.f32 %v2989, %v4760
        %v5230 = vmul.f32 %v2990, %v4762
        %v5231 = vmul.f32 %v2991, %v4764
        %v5232 = vmul.f32 %v2992, %v4766
        %v5233 = vmul.f32 %v2993, %v4768
        %v5234 = vmul.f32 %v2994, %v4770
        %v5235 = vmul.f32 %v2995, %v4772
        %v5236 = vmul.f32 %v2996, %v4774
        %v5237 = vmul.f32 %v2997, %v4776
        %v5238 = vmul.f32 %v2998, %v4778
        %v5239 = vmul.f32 %v2999, %v4780
        %v5240 = vmul.f32 %v3000, %v4782
        %v5241 = vmul.f32 %v3001, %v4784
        %v5242 = vmul.f32 %v3002, %v4786
        %v5243 = vmul.f32 %v3003, %v4788
        %v5244 = vmul.f32 %v3004, %v4790
        %v5245 = vmul.f32 %v3005, %v4792
        %v5246 = vmul.f32 %v3006, %v4794
        %v5247 = vmul.f32 %v3007, %v4796
        %v5248 = vmul.f32 %v3008, %v4798
        %v5249 = vmul.f32 %v3009, %v4800
        %v5250 = vmul.f32 %v3010, %v4802
        %v5251 = vmul.f32 %v3011, %v4804
        %v5252 = vmul.f32 %v3012, %v4806
        %v5253 = vmul.f32 %v3013, %v4808
        %v5254 = vmul.f32 %v3014, %v4810
        %v5255 = vmul.f32 %v3015, %v4812
        %v5256 = vmul.f32 %v3016, %v4814
        %v5257 = vmul.f32 %v3017, %v4816
        %v5258 = vmul.f32 %v3018, %v4818
        %v5259 = vmul.f32 %v3019, %v4820
        %v5260 = vmul.f32 %v3020, %v4822
        %v5261 = vmul.f32 %v3021, %v4824
        %v5262 = vmul.f32 %v3022, %v4826
        %v5263 = vmul.f32 %v3023, %v4828
        %v5264 = vmul.f32 %v3024, %v4830
        %v5265 = vmul.f32 %v3025, %v4832
        %v5266 = vmul.f32 %v3026, %v4834
        %v5267 = vmul.f32 %v3027, %v4836
        %v5268 = vmul.f32 %v3028, %v4838
        %v5269 = vmul.f32 %v3029, %v4840
        %v5270 = vmul.f32 %v3030, %v4842
        %v5271 = vmul.f32 %v3031, %v4844
        %v5272 = vmul.f32 %v3032, %v4846
        %v5273 = vmul.f32 %v3033, %v4848
        %v5274 = vmul.f32 %v3034, %v4850
        %v5275 = vmul.f32 %v3035, %v4852
        %v5276 = vmul.f32 %v3036, %v4854
        %v5277 = vmul.f32 %v3037, %v4856
        %v5278 = vmul.f32 %v3038, %v4858
        %v5279 = vmul.f32 %v3039, %v4860
        %v5280 = vmul.f32 %v3040, %v4862
        %v5281 = vmul.f32 %v3041, %v4864
        %v5282 = vmul.f32 %v3042, %v4866
        %v5283 = vmul.f32 %v3043, %v4868
        %v5284 = vmul.f32 %v3044, %v4870
        %v5285 = vmul.f32 %v3045, %v4872
        %v5286 = vmul.f32 %v3046, %v4874
        %v5287 = vmul.f32 %v3047, %v4876
        %v5288 = vmul.f32 %v3048, %v4878
        %v5289 = vmul.f32 %v3049, %v4880
        %v5290 = vmul.f32 %v3050, %v4882
        %v5291 = vmul.f32 %v3051, %v4884
        %v5292 = vmul.f32 %v3052, %v4886
        %v5293 = vmul.f32 %v3053, %v4888
        %v5294 = vmul.f32 %v3054, %v4890
        %v5295 = vmul.f32 %v3055, %v4892
        %v5296 = vmul.f32 %v3056, %v4894
        %v5297 = vmul.f32 %v3057, %v4896
        %v5298 = vmul.f32 %v3058, %v4898
        %v5299 = vmul.f32 %v3059, %v4900
        %v5300 = vmul.f32 %v3060, %v4902
        %v5301 = vmul.f32 %v3061, %v4904
        %v5302 = vmul.f32 %v3062, %v4906
        %v5303 = vmul.f32 %v3063, %v4908
        %v5304 = vmul.f32 %v3064, %v4910
        %v5305 = vmul.f32 %v3065, %v4912
        %v5306 = vmul.f32 %v3066, %v4914
        %v5307 = vmul.f32 %v3067, %v4916
        %v5308 = vmul.f32 %v3068, %v4918
        %v5309 = vmul.f32 %v3069, %v4920
        %v5310 = vmul.f32 %v3070, %v4922
        %v5311 = vmul.f32 %v3071, %v4924
        %v5312 = vmul.f32 %v3072, %v4926
        %v5313 = vmul.f32 %v3073, %v4928
        %v5314 = vmul.f32 %v3074, %v4930
        %v5315 = vmul.f32 %v3075, %v4932
        %v5316 = vmul.f32 %v3076, %v4934
        %v5317 = vmul.f32 %v3077, %v4936
        %v5318 = vmul.f32 %v3078, %v4938
        %v5319 = vmul.f32 %v3079, %v4940
        %v5320 = vmul.f32 %v3080, %v4942
        %v5321 = vmul.f32 %v3081, %v4944
        %v5322 = vmul.f32 %v3082, %v4946
        %v5323 = vmul.f32 %v3083, %v4948
        %v5324 = vmul.f32 %v3084, %v4950
        %v5325 = vmul.f32 %v3085, %v4952
        %v5326 = vmul.f32 %v3086, %v4954
        %v5327 = vmul.f32 %v3087, %v4956
        %v5328 = vmul.f32 %v3088, %v4958
        %v5329 = vmul.f32 %v3089, %v4960
        %v5330 = vmul.f32 %v3090, %v4962
        %v5331 = vmul.f32 %v3091, %v4964
        %v5332 = vmul.f32 %v3092, %v4966
        %v5333 = vmul.f32 %v3093, %v4968
        %v5334 = vmul.f32 %v3094, %v4970
        %v5335 = vmul.f32 %v3095, %v4972
        %v5336 = vmul.f32 %v3096, %v4974
        %v5337 = vmul.f32 %v3097, %v4976
        %v5338 = vmul.f32 %v3098, %v4978
        %v5339 = vmul.f32 %v3099, %v4980
        %v5340 = vmul.f32 %v3100, %v4982
        %v5341 = vmul.f32 %v3101, %v4984
        %v5342 = vmul.f32 %v3102, %v4986
        %v5343 = vmul.f32 %v3103, %v4988
        %v5344 = vmul.f32 %v3104, %v4990
        %v5345 = vmul.f32 %v3105, %v4992
        %v5346 = vmul.f32 %v3106, %v4994
        %v5347 = vmul.f32 %v3107, %v4996
        %v5348 = vmul.f32 %v3108, %v4998
        %v5349 = vmul.f32 %v3109, %v5000
        %v5350 = vmul.f32 %v3110, %v5002
        %v5351 = vmul.f32 %v3111, %v5004
        %v5352 = vmul.f32 %v3112, %v5006
        %v5353 = vmul.f32 %v3113, %v5008
        %v5354 = vmul.f32 %v3114, %v5010
        %v5355 = vmul.f32 %v3115, %v5012
        %v5356 = vmul.f32 %v3116, %v5014
        %v5357 = vmul.f32 %v3117, %v5016
        %v5358 = vmul.f32 %v3118, %v5018
        %v5359 = vmul.f32 %v3119, %v5020
        %v5360 = vmul.f32 %v3120, %v5022
        %v5361 = vmul.f32 %v3121, %v5024
        %v5362 = vmul.f32 %v3122, %v5026
        %v5363 = vmul.f32 %v3123, %v5028
        %v5364 = vmul.f32 %v3124, %v5030
        %v5365 = vmul.f32 %v3125, %v5032
        %v5366 = vmul.f32 %v3126, %v5034
        %v5367 = vmul.f32 %v3127, %v5036
        %v5368 = vmul.f32 %v3128, %v5038
        %v5369 = vmul.f32 %v3129, %v5040
        %v5370 = vmul.f32 %v3130, %v5042
        %v5371 = vmul.f32 %v3131, %v5044
        %v5372 = vmul.f32 %v3132, %v5046
        %v5373 = vmul.f32 %v3133, %v5048
        %v5374 = vmul.f32 %v3134, %v5050
        %v5375 = vmul.f32 %v3135, %v5052
        %v5376 = vmul.f32 %v3136, %v5054
        %v5377 = vmul.f32 %v3137, %v5056
        %v5378 = vmul.f32 %v3138, %v5058
        %v5379 = vld [vmem:[#allocation2] sm:$0xff]
        %v5380 = vld [vmem:[#allocation2 + $0x8] sm:$0xff]
        %v5381 = vld [vmem:[#allocation2 + $0x10] sm:$0xff]
        %v5382 = vld [vmem:[#allocation2 + $0x18] sm:$0xff]
        %v5383 = vld [vmem:[#allocation2 + $0x20] sm:$0xff]
        %v5384 = vld [vmem:[#allocation2 + $0x28] sm:$0xff]
        %v5385 = vld [vmem:[#allocation2 + $0x30] sm:$0xff]
        %v5386 = vld [vmem:[#allocation2 + $0x38] sm:$0xff]
        %v5387 = vld [vmem:[#allocation2 + $0x40] sm:$0xff]
        %v5388 = vld [vmem:[#allocation2 + $0x48] sm:$0xff]
        %v5389 = vadd.f32 %v5059, %v5069
        %v5390 = vadd.f32 %v5389, %v5079
        %v5391 = vadd.f32 %v5390, %v5089
        %v5392 = vrot.slane %v5391, 4
        %v5393 = vadd.f32 %v5391, %v5392
        %v5394 = vrot.slane %v5393, 2
        %v5395 = vadd.f32 %v5393, %v5394
        %v5396 = vrot.slane %v5395, 1
        %v5397 = vadd.f32 %v5395, %v5396
        %v5398 = vadd.f32 %v5060, %v5070
        %v5399 = vadd.f32 %v5398, %v5080
        %v5400 = vadd.f32 %v5399, %v5090
        %v5401 = vrot.slane %v5400, 4
        %v5402 = vadd.f32 %v5400, %v5401
        %v5403 = vrot.slane %v5402, 2
        %v5404 = vadd.f32 %v5402, %v5403
        %v5405 = vrot.slane %v5404, 1
        %v5406 = vadd.f32 %v5404, %v5405
        %v5407 = vadd.f32 %v5061, %v5071
        %v5408 = vadd.f32 %v5407, %v5081
        %v5409 = vadd.f32 %v5408, %v5091
        %v5410 = vrot.slane %v5409, 4
        %v5411 = vadd.f32 %v5409, %v5410
        %v5412 = vrot.slane %v5411, 2
        %v5413 = vadd.f32 %v5411, %v5412
        %v5414 = vrot.slane %v5413, 1
        %v5415 = vadd.f32 %v5413, %v5414
        %v5416 = vadd.f32 %v5062, %v5072
        %v5417 = vadd.f32 %v5416, %v5082
        %v5418 = vadd.f32 %v5417, %v5092
        %v5419 = vrot.slane %v5418, 4
        %v5420 = vadd.f32 %v5418, %v5419
        %v5421 = vrot.slane %v5420, 2
        %v5422 = vadd.f32 %v5420, %v5421
        %v5423 = vrot.slane %v5422, 1
        %v5424 = vadd.f32 %v5422, %v5423
        %v5425 = vadd.f32 %v5063, %v5073
        %v5426 = vadd.f32 %v5425, %v5083
        %v5427 = vadd.f32 %v5426, %v5093
        %v5428 = vrot.slane %v5427, 4
        %v5429 = vadd.f32 %v5427, %v5428
        %v5430 = vrot.slane %v5429, 2
        %v5431 = vadd.f32 %v5429, %v5430
        %v5432 = vrot.slane %v5431, 1
        %v5433 = vadd.f32 %v5431, %v5432
        %v5434 = vadd.f32 %v5064, %v5074
        %v5435 = vadd.f32 %v5434, %v5084
        %v5436 = vadd.f32 %v5435, %v5094
        %v5437 = vrot.slane %v5436, 4
        %v5438 = vadd.f32 %v5436, %v5437
        %v5439 = vrot.slane %v5438, 2
        %v5440 = vadd.f32 %v5438, %v5439
        %v5441 = vrot.slane %v5440, 1
        %v5442 = vadd.f32 %v5440, %v5441
        %v5443 = vadd.f32 %v5065, %v5075
        %v5444 = vadd.f32 %v5443, %v5085
        %v5445 = vadd.f32 %v5444, %v5095
        %v5446 = vrot.slane %v5445, 4
        %v5447 = vadd.f32 %v5445, %v5446
        %v5448 = vrot.slane %v5447, 2
        %v5449 = vadd.f32 %v5447, %v5448
        %v5450 = vrot.slane %v5449, 1
        %v5451 = vadd.f32 %v5449, %v5450
        %v5452 = vadd.f32 %v5066, %v5076
        %v5453 = vadd.f32 %v5452, %v5086
        %v5454 = vadd.f32 %v5453, %v5096
        %v5455 = vrot.slane %v5454, 4
        %v5456 = vadd.f32 %v5454, %v5455
        %v5457 = vrot.slane %v5456, 2
        %v5458 = vadd.f32 %v5456, %v5457
        %v5459 = vrot.slane %v5458, 1
        %v5460 = vadd.f32 %v5458, %v5459
        %v5461 = vadd.f32 %v5067, %v5077
        %v5462 = vadd.f32 %v5461, %v5087
        %v5463 = vadd.f32 %v5462, %v5097
        %v5464 = vrot.slane %v5463, 4
        %v5465 = vadd.f32 %v5463, %v5464
        %v5466 = vrot.slane %v5465, 2
        %v5467 = vadd.f32 %v5465, %v5466
        %v5468 = vrot.slane %v5467, 1
        %v5469 = vadd.f32 %v5467, %v5468
        %v5470 = vadd.f32 %v5068, %v5078
        %v5471 = vadd.f32 %v5470, %v5088
        %v5472 = vadd.f32 %v5471, %v5098
        %v5473 = vrot.slane %v5472, 4
        %v5474 = vadd.f32 %v5472, %v5473
        %v5475 = vrot.slane %v5474, 2
        %v5476 = vadd.f32 %v5474, %v5475
        %v5477 = vrot.slane %v5476, 1
        %v5478 = vadd.f32 %v5476, %v5477
        %v5479 = vadd.f32 %v5099, %v5109
        %v5480 = vadd.f32 %v5479, %v5119
        %v5481 = vadd.f32 %v5480, %v5129
        %v5482 = vrot.slane %v5481, 4
        %v5483 = vadd.f32 %v5481, %v5482
        %v5484 = vrot.slane %v5483, 2
        %v5485 = vadd.f32 %v5483, %v5484
        %v5486 = vrot.slane %v5485, 1
        %v5487 = vadd.f32 %v5485, %v5486
        %v5488 = vadd.f32 %v5100, %v5110
        %v5489 = vadd.f32 %v5488, %v5120
        %v5490 = vadd.f32 %v5489, %v5130
        %v5491 = vrot.slane %v5490, 4
        %v5492 = vadd.f32 %v5490, %v5491
        %v5493 = vrot.slane %v5492, 2
        %v5494 = vadd.f32 %v5492, %v5493
        %v5495 = vrot.slane %v5494, 1
        %v5496 = vadd.f32 %v5494, %v5495
        %v5497 = vadd.f32 %v5101, %v5111
        %v5498 = vadd.f32 %v5497, %v5121
        %v5499 = vadd.f32 %v5498, %v5131
        %v5500 = vrot.slane %v5499, 4
        %v5501 = vadd.f32 %v5499, %v5500
        %v5502 = vrot.slane %v5501, 2
        %v5503 = vadd.f32 %v5501, %v5502
        %v5504 = vrot.slane %v5503, 1
        %v5505 = vadd.f32 %v5503, %v5504
        %v5506 = vadd.f32 %v5102, %v5112
        %v5507 = vadd.f32 %v5506, %v5122
        %v5508 = vadd.f32 %v5507, %v5132
        %v5509 = vrot.slane %v5508, 4
        %v5510 = vadd.f32 %v5508, %v5509
        %v5511 = vrot.slane %v5510, 2
        %v5512 = vadd.f32 %v5510, %v5511
        %v5513 = vrot.slane %v5512, 1
        %v5514 = vadd.f32 %v5512, %v5513
        %v5515 = vadd.f32 %v5103, %v5113
        %v5516 = vadd.f32 %v5515, %v5123
        %v5517 = vadd.f32 %v5516, %v5133
        %v5518 = vrot.slane %v5517, 4
        %v5519 = vadd.f32 %v5517, %v5518
        %v5520 = vrot.slane %v5519, 2
        %v5521 = vadd.f32 %v5519, %v5520
        %v5522 = vrot.slane %v5521, 1
        %v5523 = vadd.f32 %v5521, %v5522
        %v5524 = vadd.f32 %v5104, %v5114
        %v5525 = vadd.f32 %v5524, %v5124
        %v5526 = vadd.f32 %v5525, %v5134
        %v5527 = vrot.slane %v5526, 4
        %v5528 = vadd.f32 %v5526, %v5527
        %v5529 = vrot.slane %v5528, 2
        %v5530 = vadd.f32 %v5528, %v5529
        %v5531 = vrot.slane %v5530, 1
        %v5532 = vadd.f32 %v5530, %v5531
        %v5533 = vadd.f32 %v5105, %v5115
        %v5534 = vadd.f32 %v5533, %v5125
        %v5535 = vadd.f32 %v5534, %v5135
        %v5536 = vrot.slane %v5535, 4
        %v5537 = vadd.f32 %v5535, %v5536
        %v5538 = vrot.slane %v5537, 2
        %v5539 = vadd.f32 %v5537, %v5538
        %v5540 = vrot.slane %v5539, 1
        %v5541 = vadd.f32 %v5539, %v5540
        %v5542 = vadd.f32 %v5106, %v5116
        %v5543 = vadd.f32 %v5542, %v5126
        %v5544 = vadd.f32 %v5543, %v5136
        %v5545 = vrot.slane %v5544, 4
        %v5546 = vadd.f32 %v5544, %v5545
        %v5547 = vrot.slane %v5546, 2
        %v5548 = vadd.f32 %v5546, %v5547
        %v5549 = vrot.slane %v5548, 1
        %v5550 = vadd.f32 %v5548, %v5549
        %v5551 = vadd.f32 %v5107, %v5117
        %v5552 = vadd.f32 %v5551, %v5127
        %v5553 = vadd.f32 %v5552, %v5137
        %v5554 = vrot.slane %v5553, 4
        %v5555 = vadd.f32 %v5553, %v5554
        %v5556 = vrot.slane %v5555, 2
        %v5557 = vadd.f32 %v5555, %v5556
        %v5558 = vrot.slane %v5557, 1
        %v5559 = vadd.f32 %v5557, %v5558
        %v5560 = vadd.f32 %v5108, %v5118
        %v5561 = vadd.f32 %v5560, %v5128
        %v5562 = vadd.f32 %v5561, %v5138
        %v5563 = vrot.slane %v5562, 4
        %v5564 = vadd.f32 %v5562, %v5563
        %v5565 = vrot.slane %v5564, 2
        %v5566 = vadd.f32 %v5564, %v5565
        %v5567 = vrot.slane %v5566, 1
        %v5568 = vadd.f32 %v5566, %v5567
        %v5569 = vadd.f32 %v5139, %v5149
        %v5570 = vadd.f32 %v5569, %v5159
        %v5571 = vadd.f32 %v5570, %v5169
        %v5572 = vrot.slane %v5571, 4
        %v5573 = vadd.f32 %v5571, %v5572
        %v5574 = vrot.slane %v5573, 2
        %v5575 = vadd.f32 %v5573, %v5574
        %v5576 = vrot.slane %v5575, 1
        %v5577 = vadd.f32 %v5575, %v5576
        %v5578 = vadd.f32 %v5140, %v5150
        %v5579 = vadd.f32 %v5578, %v5160
        %v5580 = vadd.f32 %v5579, %v5170
        %v5581 = vrot.slane %v5580, 4
        %v5582 = vadd.f32 %v5580, %v5581
        %v5583 = vrot.slane %v5582, 2
        %v5584 = vadd.f32 %v5582, %v5583
        %v5585 = vrot.slane %v5584, 1
        %v5586 = vadd.f32 %v5584, %v5585
        %v5587 = vadd.f32 %v5141, %v5151
        %v5588 = vadd.f32 %v5587, %v5161
        %v5589 = vadd.f32 %v5588, %v5171
        %v5590 = vrot.slane %v5589, 4
        %v5591 = vadd.f32 %v5589, %v5590
        %v5592 = vrot.slane %v5591, 2
        %v5593 = vadd.f32 %v5591, %v5592
        %v5594 = vrot.slane %v5593, 1
        %v5595 = vadd.f32 %v5593, %v5594
        %v5596 = vadd.f32 %v5142, %v5152
        %v5597 = vadd.f32 %v5596, %v5162
        %v5598 = vadd.f32 %v5597, %v5172
        %v5599 = vrot.slane %v5598, 4
        %v5600 = vadd.f32 %v5598, %v5599
        %v5601 = vrot.slane %v5600, 2
        %v5602 = vadd.f32 %v5600, %v5601
        %v5603 = vrot.slane %v5602, 1
        %v5604 = vadd.f32 %v5602, %v5603
        %v5605 = vadd.f32 %v5143, %v5153
        %v5606 = vadd.f32 %v5605, %v5163
        %v5607 = vadd.f32 %v5606, %v5173
        %v5608 = vrot.slane %v5607, 4
        %v5609 = vadd.f32 %v5607, %v5608
        %v5610 = vrot.slane %v5609, 2
        %v5611 = vadd.f32 %v5609, %v5610
        %v5612 = vrot.slane %v5611, 1
        %v5613 = vadd.f32 %v5611, %v5612
        %v5614 = vadd.f32 %v5144, %v5154
        %v5615 = vadd.f32 %v5614, %v5164
        %v5616 = vadd.f32 %v5615, %v5174
        %v5617 = vrot.slane %v5616, 4
        %v5618 = vadd.f32 %v5616, %v5617
        %v5619 = vrot.slane %v5618, 2
        %v5620 = vadd.f32 %v5618, %v5619
        %v5621 = vrot.slane %v5620, 1
        %v5622 = vadd.f32 %v5620, %v5621
        %v5623 = vadd.f32 %v5145, %v5155
        %v5624 = vadd.f32 %v5623, %v5165
        %v5625 = vadd.f32 %v5624, %v5175
        %v5626 = vrot.slane %v5625, 4
        %v5627 = vadd.f32 %v5625, %v5626
        %v5628 = vrot.slane %v5627, 2
        %v5629 = vadd.f32 %v5627, %v5628
        %v5630 = vrot.slane %v5629, 1
        %v5631 = vadd.f32 %v5629, %v5630
        %v5632 = vadd.f32 %v5146, %v5156
        %v5633 = vadd.f32 %v5632, %v5166
        %v5634 = vadd.f32 %v5633, %v5176
        %v5635 = vrot.slane %v5634, 4
        %v5636 = vadd.f32 %v5634, %v5635
        %v5637 = vrot.slane %v5636, 2
        %v5638 = vadd.f32 %v5636, %v5637
        %v5639 = vrot.slane %v5638, 1
        %v5640 = vadd.f32 %v5638, %v5639
        %v5641 = vadd.f32 %v5147, %v5157
        %v5642 = vadd.f32 %v5641, %v5167
        %v5643 = vadd.f32 %v5642, %v5177
        %v5644 = vrot.slane %v5643, 4
        %v5645 = vadd.f32 %v5643, %v5644
        %v5646 = vrot.slane %v5645, 2
        %v5647 = vadd.f32 %v5645, %v5646
        %v5648 = vrot.slane %v5647, 1
        %v5649 = vadd.f32 %v5647, %v5648
        %v5650 = vadd.f32 %v5148, %v5158
        %v5651 = vadd.f32 %v5650, %v5168
        %v5652 = vadd.f32 %v5651, %v5178
        %v5653 = vrot.slane %v5652, 4
        %v5654 = vadd.f32 %v5652, %v5653
        %v5655 = vrot.slane %v5654, 2
        %v5656 = vadd.f32 %v5654, %v5655
        %v5657 = vrot.slane %v5656, 1
        %v5658 = vadd.f32 %v5656, %v5657
        %v5659 = vadd.f32 %v5179, %v5189
        %v5660 = vadd.f32 %v5659, %v5199
        %v5661 = vadd.f32 %v5660, %v5209
        %v5662 = vrot.slane %v5661, 4
        %v5663 = vadd.f32 %v5661, %v5662
        %v5664 = vrot.slane %v5663, 2
        %v5665 = vadd.f32 %v5663, %v5664
        %v5666 = vrot.slane %v5665, 1
        %v5667 = vadd.f32 %v5665, %v5666
        %v5668 = vadd.f32 %v5180, %v5190
        %v5669 = vadd.f32 %v5668, %v5200
        %v5670 = vadd.f32 %v5669, %v5210
        %v5671 = vrot.slane %v5670, 4
        %v5672 = vadd.f32 %v5670, %v5671
        %v5673 = vrot.slane %v5672, 2
        %v5674 = vadd.f32 %v5672, %v5673
        %v5675 = vrot.slane %v5674, 1
        %v5676 = vadd.f32 %v5674, %v5675
        %v5677 = vadd.f32 %v5181, %v5191
        %v5678 = vadd.f32 %v5677, %v5201
        %v5679 = vadd.f32 %v5678, %v5211
        %v5680 = vrot.slane %v5679, 4
        %v5681 = vadd.f32 %v5679, %v5680
        %v5682 = vrot.slane %v5681, 2
        %v5683 = vadd.f32 %v5681, %v5682
        %v5684 = vrot.slane %v5683, 1
        %v5685 = vadd.f32 %v5683, %v5684
        %v5686 = vadd.f32 %v5182, %v5192
        %v5687 = vadd.f32 %v5686, %v5202
        %v5688 = vadd.f32 %v5687, %v5212
        %v5689 = vrot.slane %v5688, 4
        %v5690 = vadd.f32 %v5688, %v5689
        %v5691 = vrot.slane %v5690, 2
        %v5692 = vadd.f32 %v5690, %v5691
        %v5693 = vrot.slane %v5692, 1
        %v5694 = vadd.f32 %v5692, %v5693
        %v5695 = vadd.f32 %v5183, %v5193
        %v5696 = vadd.f32 %v5695, %v5203
        %v5697 = vadd.f32 %v5696, %v5213
        %v5698 = vrot.slane %v5697, 4
        %v5699 = vadd.f32 %v5697, %v5698
        %v5700 = vrot.slane %v5699, 2
        %v5701 = vadd.f32 %v5699, %v5700
        %v5702 = vrot.slane %v5701, 1
        %v5703 = vadd.f32 %v5701, %v5702
        %v5704 = vadd.f32 %v5184, %v5194
        %v5705 = vadd.f32 %v5704, %v5204
        %v5706 = vadd.f32 %v5705, %v5214
        %v5707 = vrot.slane %v5706, 4
        %v5708 = vadd.f32 %v5706, %v5707
        %v5709 = vrot.slane %v5708, 2
        %v5710 = vadd.f32 %v5708, %v5709
        %v5711 = vrot.slane %v5710, 1
        %v5712 = vadd.f32 %v5710, %v5711
        %v5713 = vadd.f32 %v5185, %v5195
        %v5714 = vadd.f32 %v5713, %v5205
        %v5715 = vadd.f32 %v5714, %v5215
        %v5716 = vrot.slane %v5715, 4
        %v5717 = vadd.f32 %v5715, %v5716
        %v5718 = vrot.slane %v5717, 2
        %v5719 = vadd.f32 %v5717, %v5718
        %v5720 = vrot.slane %v5719, 1
        %v5721 = vadd.f32 %v5719, %v5720
        %v5722 = vadd.f32 %v5186, %v5196
        %v5723 = vadd.f32 %v5722, %v5206
        %v5724 = vadd.f32 %v5723, %v5216
        %v5725 = vrot.slane %v5724, 4
        %v5726 = vadd.f32 %v5724, %v5725
        %v5727 = vrot.slane %v5726, 2
        %v5728 = vadd.f32 %v5726, %v5727
        %v5729 = vrot.slane %v5728, 1
        %v5730 = vadd.f32 %v5728, %v5729
        %v5731 = vadd.f32 %v5187, %v5197
        %v5732 = vadd.f32 %v5731, %v5207
        %v5733 = vadd.f32 %v5732, %v5217
        %v5734 = vrot.slane %v5733, 4
        %v5735 = vadd.f32 %v5733, %v5734
        %v5736 = vrot.slane %v5735, 2
        %v5737 = vadd.f32 %v5735, %v5736
        %v5738 = vrot.slane %v5737, 1
        %v5739 = vadd.f32 %v5737, %v5738
        %v5740 = vadd.f32 %v5188, %v5198
        %v5741 = vadd.f32 %v5740, %v5208
        %v5742 = vadd.f32 %v5741, %v5218
        %v5743 = vrot.slane %v5742, 4
        %v5744 = vadd.f32 %v5742, %v5743
        %v5745 = vrot.slane %v5744, 2
        %v5746 = vadd.f32 %v5744, %v5745
        %v5747 = vrot.slane %v5746, 1
        %v5748 = vadd.f32 %v5746, %v5747
        %v5749 = vadd.f32 %v5219, %v5229
        %v5750 = vadd.f32 %v5749, %v5239
        %v5751 = vadd.f32 %v5750, %v5249
        %v5752 = vrot.slane %v5751, 4
        %v5753 = vadd.f32 %v5751, %v5752
        %v5754 = vrot.slane %v5753, 2
        %v5755 = vadd.f32 %v5753, %v5754
        %v5756 = vrot.slane %v5755, 1
        %v5757 = vadd.f32 %v5755, %v5756
        %v5758 = vadd.f32 %v5220, %v5230
        %v5759 = vadd.f32 %v5758, %v5240
        %v5760 = vadd.f32 %v5759, %v5250
        %v5761 = vrot.slane %v5760, 4
        %v5762 = vadd.f32 %v5760, %v5761
        %v5763 = vrot.slane %v5762, 2
        %v5764 = vadd.f32 %v5762, %v5763
        %v5765 = vrot.slane %v5764, 1
        %v5766 = vadd.f32 %v5764, %v5765
        %v5767 = vadd.f32 %v5221, %v5231
        %v5768 = vadd.f32 %v5767, %v5241
        %v5769 = vadd.f32 %v5768, %v5251
        %v5770 = vrot.slane %v5769, 4
        %v5771 = vadd.f32 %v5769, %v5770
        %v5772 = vrot.slane %v5771, 2
        %v5773 = vadd.f32 %v5771, %v5772
        %v5774 = vrot.slane %v5773, 1
        %v5775 = vadd.f32 %v5773, %v5774
        %v5776 = vadd.f32 %v5222, %v5232
        %v5777 = vadd.f32 %v5776, %v5242
        %v5778 = vadd.f32 %v5777, %v5252
        %v5779 = vrot.slane %v5778, 4
        %v5780 = vadd.f32 %v5778, %v5779
        %v5781 = vrot.slane %v5780, 2
        %v5782 = vadd.f32 %v5780, %v5781
        %v5783 = vrot.slane %v5782, 1
        %v5784 = vadd.f32 %v5782, %v5783
        %v5785 = vadd.f32 %v5223, %v5233
        %v5786 = vadd.f32 %v5785, %v5243
        %v5787 = vadd.f32 %v5786, %v5253
        %v5788 = vrot.slane %v5787, 4
        %v5789 = vadd.f32 %v5787, %v5788
        %v5790 = vrot.slane %v5789, 2
        %v5791 = vadd.f32 %v5789, %v5790
        %v5792 = vrot.slane %v5791, 1
        %v5793 = vadd.f32 %v5791, %v5792
        %v5794 = vadd.f32 %v5224, %v5234
        %v5795 = vadd.f32 %v5794, %v5244
        %v5796 = vadd.f32 %v5795, %v5254
        %v5797 = vrot.slane %v5796, 4
        %v5798 = vadd.f32 %v5796, %v5797
        %v5799 = vrot.slane %v5798, 2
        %v5800 = vadd.f32 %v5798, %v5799
        %v5801 = vrot.slane %v5800, 1
        %v5802 = vadd.f32 %v5800, %v5801
        %v5803 = vadd.f32 %v5225, %v5235
        %v5804 = vadd.f32 %v5803, %v5245
        %v5805 = vadd.f32 %v5804, %v5255
        %v5806 = vrot.slane %v5805, 4
        %v5807 = vadd.f32 %v5805, %v5806
        %v5808 = vrot.slane %v5807, 2
        %v5809 = vadd.f32 %v5807, %v5808
        %v5810 = vrot.slane %v5809, 1
        %v5811 = vadd.f32 %v5809, %v5810
        %v5812 = vadd.f32 %v5226, %v5236
        %v5813 = vadd.f32 %v5812, %v5246
        %v5814 = vadd.f32 %v5813, %v5256
        %v5815 = vrot.slane %v5814, 4
        %v5816 = vadd.f32 %v5814, %v5815
        %v5817 = vrot.slane %v5816, 2
        %v5818 = vadd.f32 %v5816, %v5817
        %v5819 = vrot.slane %v5818, 1
        %v5820 = vadd.f32 %v5818, %v5819
        %v5821 = vadd.f32 %v5227, %v5237
        %v5822 = vadd.f32 %v5821, %v5247
        %v5823 = vadd.f32 %v5822, %v5257
        %v5824 = vrot.slane %v5823, 4
        %v5825 = vadd.f32 %v5823, %v5824
        %v5826 = vrot.slane %v5825, 2
        %v5827 = vadd.f32 %v5825, %v5826
        %v5828 = vrot.slane %v5827, 1
        %v5829 = vadd.f32 %v5827, %v5828
        %v5830 = vadd.f32 %v5228, %v5238
        %v5831 = vadd.f32 %v5830, %v5248
        %v5832 = vadd.f32 %v5831, %v5258
        %v5833 = vrot.slane %v5832, 4
        %v5834 = vadd.f32 %v5832, %v5833
        %v5835 = vrot.slane %v5834, 2
        %v5836 = vadd.f32 %v5834, %v5835
        %v5837 = vrot.slane %v5836, 1
        %v5838 = vadd.f32 %v5836, %v5837
        %v5839 = vadd.f32 %v5259, %v5269
        %v5840 = vadd.f32 %v5839, %v5279
        %v5841 = vadd.f32 %v5840, %v5289
        %v5842 = vrot.slane %v5841, 4
        %v5843 = vadd.f32 %v5841, %v5842
        %v5844 = vrot.slane %v5843, 2
        %v5845 = vadd.f32 %v5843, %v5844
        %v5846 = vrot.slane %v5845, 1
        %v5847 = vadd.f32 %v5845, %v5846
        %v5848 = vadd.f32 %v5260, %v5270
        %v5849 = vadd.f32 %v5848, %v5280
        %v5850 = vadd.f32 %v5849, %v5290
        %v5851 = vrot.slane %v5850, 4
        %v5852 = vadd.f32 %v5850, %v5851
        %v5853 = vrot.slane %v5852, 2
        %v5854 = vadd.f32 %v5852, %v5853
        %v5855 = vrot.slane %v5854, 1
        %v5856 = vadd.f32 %v5854, %v5855
        %v5857 = vadd.f32 %v5261, %v5271
        %v5858 = vadd.f32 %v5857, %v5281
        %v5859 = vadd.f32 %v5858, %v5291
        %v5860 = vrot.slane %v5859, 4
        %v5861 = vadd.f32 %v5859, %v5860
        %v5862 = vrot.slane %v5861, 2
        %v5863 = vadd.f32 %v5861, %v5862
        %v5864 = vrot.slane %v5863, 1
        %v5865 = vadd.f32 %v5863, %v5864
        %v5866 = vadd.f32 %v5262, %v5272
        %v5867 = vadd.f32 %v5866, %v5282
        %v5868 = vadd.f32 %v5867, %v5292
        %v5869 = vrot.slane %v5868, 4
        %v5870 = vadd.f32 %v5868, %v5869
        %v5871 = vrot.slane %v5870, 2
        %v5872 = vadd.f32 %v5870, %v5871
        %v5873 = vrot.slane %v5872, 1
        %v5874 = vadd.f32 %v5872, %v5873
        %v5875 = vadd.f32 %v5263, %v5273
        %v5876 = vadd.f32 %v5875, %v5283
        %v5877 = vadd.f32 %v5876, %v5293
        %v5878 = vrot.slane %v5877, 4
        %v5879 = vadd.f32 %v5877, %v5878
        %v5880 = vrot.slane %v5879, 2
        %v5881 = vadd.f32 %v5879, %v5880
        %v5882 = vrot.slane %v5881, 1
        %v5883 = vadd.f32 %v5881, %v5882
        %v5884 = vadd.f32 %v5264, %v5274
        %v5885 = vadd.f32 %v5884, %v5284
        %v5886 = vadd.f32 %v5885, %v5294
        %v5887 = vrot.slane %v5886, 4
        %v5888 = vadd.f32 %v5886, %v5887
        %v5889 = vrot.slane %v5888, 2
        %v5890 = vadd.f32 %v5888, %v5889
        %v5891 = vrot.slane %v5890, 1
        %v5892 = vadd.f32 %v5890, %v5891
        %v5893 = vadd.f32 %v5265, %v5275
        %v5894 = vadd.f32 %v5893, %v5285
        %v5895 = vadd.f32 %v5894, %v5295
        %v5896 = vrot.slane %v5895, 4
        %v5897 = vadd.f32 %v5895, %v5896
        %v5898 = vrot.slane %v5897, 2
        %v5899 = vadd.f32 %v5897, %v5898
        %v5900 = vrot.slane %v5899, 1
        %v5901 = vadd.f32 %v5899, %v5900
        %v5902 = vadd.f32 %v5266, %v5276
        %v5903 = vadd.f32 %v5902, %v5286
        %v5904 = vadd.f32 %v5903, %v5296
        %v5905 = vrot.slane %v5904, 4
        %v5906 = vadd.f32 %v5904, %v5905
        %v5907 = vrot.slane %v5906, 2
        %v5908 = vadd.f32 %v5906, %v5907
        %v5909 = vrot.slane %v5908, 1
        %v5910 = vadd.f32 %v5908, %v5909
        %v5911 = vadd.f32 %v5267, %v5277
        %v5912 = vadd.f32 %v5911, %v5287
        %v5913 = vadd.f32 %v5912, %v5297
        %v5914 = vrot.slane %v5913, 4
        %v5915 = vadd.f32 %v5913, %v5914
        %v5916 = vrot.slane %v5915, 2
        %v5917 = vadd.f32 %v5915, %v5916
        %v5918 = vrot.slane %v5917, 1
        %v5919 = vadd.f32 %v5917, %v5918
        %v5920 = vadd.f32 %v5268, %v5278
        %v5921 = vadd.f32 %v5920, %v5288
        %v5922 = vadd.f32 %v5921, %v5298
        %v5923 = vrot.slane %v5922, 4
        %v5924 = vadd.f32 %v5922, %v5923
        %v5925 = vrot.slane %v5924, 2
        %v5926 = vadd.f32 %v5924, %v5925
        %v5927 = vrot.slane %v5926, 1
        %v5928 = vadd.f32 %v5926, %v5927
        %v5929 = vadd.f32 %v5299, %v5309
        %v5930 = vadd.f32 %v5929, %v5319
        %v5931 = vadd.f32 %v5930, %v5329
        %v5932 = vrot.slane %v5931, 4
        %v5933 = vadd.f32 %v5931, %v5932
        %v5934 = vrot.slane %v5933, 2
        %v5935 = vadd.f32 %v5933, %v5934
        %v5936 = vrot.slane %v5935, 1
        %v5937 = vadd.f32 %v5935, %v5936
        %v5938 = vadd.f32 %v5300, %v5310
        %v5939 = vadd.f32 %v5938, %v5320
        %v5940 = vadd.f32 %v5939, %v5330
        %v5941 = vrot.slane %v5940, 4
        %v5942 = vadd.f32 %v5940, %v5941
        %v5943 = vrot.slane %v5942, 2
        %v5944 = vadd.f32 %v5942, %v5943
        %v5945 = vrot.slane %v5944, 1
        %v5946 = vadd.f32 %v5944, %v5945
        %v5947 = vadd.f32 %v5301, %v5311
        %v5948 = vadd.f32 %v5947, %v5321
        %v5949 = vadd.f32 %v5948, %v5331
        %v5950 = vrot.slane %v5949, 4
        %v5951 = vadd.f32 %v5949, %v5950
        %v5952 = vrot.slane %v5951, 2
        %v5953 = vadd.f32 %v5951, %v5952
        %v5954 = vrot.slane %v5953, 1
        %v5955 = vadd.f32 %v5953, %v5954
        %v5956 = vadd.f32 %v5302, %v5312
        %v5957 = vadd.f32 %v5956, %v5322
        %v5958 = vadd.f32 %v5957, %v5332
        %v5959 = vrot.slane %v5958, 4
        %v5960 = vadd.f32 %v5958, %v5959
        %v5961 = vrot.slane %v5960, 2
        %v5962 = vadd.f32 %v5960, %v5961
        %v5963 = vrot.slane %v5962, 1
        %v5964 = vadd.f32 %v5962, %v5963
        %v5965 = vadd.f32 %v5303, %v5313
        %v5966 = vadd.f32 %v5965, %v5323
        %v5967 = vadd.f32 %v5966, %v5333
        %v5968 = vrot.slane %v5967, 4
        %v5969 = vadd.f32 %v5967, %v5968
        %v5970 = vrot.slane %v5969, 2
        %v5971 = vadd.f32 %v5969, %v5970
        %v5972 = vrot.slane %v5971, 1
        %v5973 = vadd.f32 %v5971, %v5972
        %v5974 = vadd.f32 %v5304, %v5314
        %v5975 = vadd.f32 %v5974, %v5324
        %v5976 = vadd.f32 %v5975, %v5334
        %v5977 = vrot.slane %v5976, 4
        %v5978 = vadd.f32 %v5976, %v5977
        %v5979 = vrot.slane %v5978, 2
        %v5980 = vadd.f32 %v5978, %v5979
        %v5981 = vrot.slane %v5980, 1
        %v5982 = vadd.f32 %v5980, %v5981
        %v5983 = vadd.f32 %v5305, %v5315
        %v5984 = vadd.f32 %v5983, %v5325
        %v5985 = vadd.f32 %v5984, %v5335
        %v5986 = vrot.slane %v5985, 4
        %v5987 = vadd.f32 %v5985, %v5986
        %v5988 = vrot.slane %v5987, 2
        %v5989 = vadd.f32 %v5987, %v5988
        %v5990 = vrot.slane %v5989, 1
        %v5991 = vadd.f32 %v5989, %v5990
        %v5992 = vadd.f32 %v5306, %v5316
        %v5993 = vadd.f32 %v5992, %v5326
        %v5994 = vadd.f32 %v5993, %v5336
        %v5995 = vrot.slane %v5994, 4
        %v5996 = vadd.f32 %v5994, %v5995
        %v5997 = vrot.slane %v5996, 2
        %v5998 = vadd.f32 %v5996, %v5997
        %v5999 = vrot.slane %v5998, 1
        %v6000 = vadd.f32 %v5998, %v5999
        %v6001 = vadd.f32 %v5307, %v5317
        %v6002 = vadd.f32 %v6001, %v5327
        %v6003 = vadd.f32 %v6002, %v5337
        %v6004 = vrot.slane %v6003, 4
        %v6005 = vadd.f32 %v6003, %v6004
        %v6006 = vrot.slane %v6005, 2
        %v6007 = vadd.f32 %v6005, %v6006
        %v6008 = vrot.slane %v6007, 1
        %v6009 = vadd.f32 %v6007, %v6008
        %v6010 = vadd.f32 %v5308, %v5318
        %v6011 = vadd.f32 %v6010, %v5328
        %v6012 = vadd.f32 %v6011, %v5338
        %v6013 = vrot.slane %v6012, 4
        %v6014 = vadd.f32 %v6012, %v6013
        %v6015 = vrot.slane %v6014, 2
        %v6016 = vadd.f32 %v6014, %v6015
        %v6017 = vrot.slane %v6016, 1
        %v6018 = vadd.f32 %v6016, %v6017
        %v6019 = vadd.f32 %v5339, %v5349
        %v6020 = vadd.f32 %v6019, %v5359
        %v6021 = vadd.f32 %v6020, %v5369
        %v6022 = vrot.slane %v6021, 4
        %v6023 = vadd.f32 %v6021, %v6022
        %v6024 = vrot.slane %v6023, 2
        %v6025 = vadd.f32 %v6023, %v6024
        %v6026 = vrot.slane %v6025, 1
        %v6027 = vadd.f32 %v6025, %v6026
        %v6028 = vadd.f32 %v5340, %v5350
        %v6029 = vadd.f32 %v6028, %v5360
        %v6030 = vadd.f32 %v6029, %v5370
        %v6031 = vrot.slane %v6030, 4
        %v6032 = vadd.f32 %v6030, %v6031
        %v6033 = vrot.slane %v6032, 2
        %v6034 = vadd.f32 %v6032, %v6033
        %v6035 = vrot.slane %v6034, 1
        %v6036 = vadd.f32 %v6034, %v6035
        %v6037 = vadd.f32 %v5341, %v5351
        %v6038 = vadd.f32 %v6037, %v5361
        %v6039 = vadd.f32 %v6038, %v5371
        %v6040 = vrot.slane %v6039, 4
        %v6041 = vadd.f32 %v6039, %v6040
        %v6042 = vrot.slane %v6041, 2
        %v6043 = vadd.f32 %v6041, %v6042
        %v6044 = vrot.slane %v6043, 1
        %v6045 = vadd.f32 %v6043, %v6044
        %v6046 = vadd.f32 %v5342, %v5352
        %v6047 = vadd.f32 %v6046, %v5362
        %v6048 = vadd.f32 %v6047, %v5372
        %v6049 = vrot.slane %v6048, 4
        %v6050 = vadd.f32 %v6048, %v6049
        %v6051 = vrot.slane %v6050, 2
        %v6052 = vadd.f32 %v6050, %v6051
        %v6053 = vrot.slane %v6052, 1
        %v6054 = vadd.f32 %v6052, %v6053
        %v6055 = vadd.f32 %v5343, %v5353
        %v6056 = vadd.f32 %v6055, %v5363
        %v6057 = vadd.f32 %v6056, %v5373
        %v6058 = vrot.slane %v6057, 4
        %v6059 = vadd.f32 %v6057, %v6058
        %v6060 = vrot.slane %v6059, 2
        %v6061 = vadd.f32 %v6059, %v6060
        %v6062 = vrot.slane %v6061, 1
        %v6063 = vadd.f32 %v6061, %v6062
        %v6064 = vadd.f32 %v5344, %v5354
        %v6065 = vadd.f32 %v6064, %v5364
        %v6066 = vadd.f32 %v6065, %v5374
        %v6067 = vrot.slane %v6066, 4
        %v6068 = vadd.f32 %v6066, %v6067
        %v6069 = vrot.slane %v6068, 2
        %v6070 = vadd.f32 %v6068, %v6069
        %v6071 = vrot.slane %v6070, 1
        %v6072 = vadd.f32 %v6070, %v6071
        %v6073 = vadd.f32 %v5345, %v5355
        %v6074 = vadd.f32 %v6073, %v5365
        %v6075 = vadd.f32 %v6074, %v5375
        %v6076 = vrot.slane %v6075, 4
        %v6077 = vadd.f32 %v6075, %v6076
        %v6078 = vrot.slane %v6077, 2
        %v6079 = vadd.f32 %v6077, %v6078
        %v6080 = vrot.slane %v6079, 1
        %v6081 = vadd.f32 %v6079, %v6080
        %v6082 = vadd.f32 %v5346, %v5356
        %v6083 = vadd.f32 %v6082, %v5366
        %v6084 = vadd.f32 %v6083, %v5376
        %v6085 = vrot.slane %v6084, 4
        %v6086 = vadd.f32 %v6084, %v6085
        %v6087 = vrot.slane %v6086, 2
        %v6088 = vadd.f32 %v6086, %v6087
        %v6089 = vrot.slane %v6088, 1
        %v6090 = vadd.f32 %v6088, %v6089
        %v6091 = vadd.f32 %v5347, %v5357
        %v6092 = vadd.f32 %v6091, %v5367
        %v6093 = vadd.f32 %v6092, %v5377
        %v6094 = vrot.slane %v6093, 4
        %v6095 = vadd.f32 %v6093, %v6094
        %v6096 = vrot.slane %v6095, 2
        %v6097 = vadd.f32 %v6095, %v6096
        %v6098 = vrot.slane %v6097, 1
        %v6099 = vadd.f32 %v6097, %v6098
        %v6100 = vadd.f32 %v5348, %v5358
        %v6101 = vadd.f32 %v6100, %v5368
        %v6102 = vadd.f32 %v6101, %v5378
        %v6103 = vrot.slane %v6102, 4
        %v6104 = vadd.f32 %v6102, %v6103
        %v6105 = vrot.slane %v6104, 2
        %v6106 = vadd.f32 %v6104, %v6105
        %v6107 = vrot.slane %v6106, 1
        %v6108 = vadd.f32 %v6106, %v6107
        %vm6189 = vcmask 1041409
        %v6190 = vsel %vm6189, %v5487, %v5397
        %vm6191 = vcmask 1042434
        %v6192 = vsel %vm6191, %v5577, %v6190
        %vm6193 = vcmask 1043459
        %v6194 = vsel %vm6193, %v5667, %v6192
        %vm6195 = vcmask 1044484
        %v6196 = vsel %vm6195, %v5757, %v6194
        %vm6197 = vcmask 1045509
        %v6198 = vsel %vm6197, %v5847, %v6196
        %vm6199 = vcmask 1046534
        %v6200 = vsel %vm6199, %v5937, %v6198
        %vm6201 = vcmask 1047559
        %v6202 = vsel %vm6201, %v6027, %v6200
        %v6203 = vsel %vm6189, %v5496, %v5406
        %v6204 = vsel %vm6191, %v5586, %v6203
        %v6205 = vsel %vm6193, %v5676, %v6204
        %v6206 = vsel %vm6195, %v5766, %v6205
        %v6207 = vsel %vm6197, %v5856, %v6206
        %v6208 = vsel %vm6199, %v5946, %v6207
        %v6209 = vsel %vm6201, %v6036, %v6208
        %v6210 = vsel %vm6189, %v5505, %v5415
        %v6211 = vsel %vm6191, %v5595, %v6210
        %v6212 = vsel %vm6193, %v5685, %v6211
        %v6213 = vsel %vm6195, %v5775, %v6212
        %v6214 = vsel %vm6197, %v5865, %v6213
        %v6215 = vsel %vm6199, %v5955, %v6214
        %v6216 = vsel %vm6201, %v6045, %v6215
        %v6217 = vsel %vm6189, %v5514, %v5424
        %v6218 = vsel %vm6191, %v5604, %v6217
        %v6219 = vsel %vm6193, %v5694, %v6218
        %v6220 = vsel %vm6195, %v5784, %v6219
        %v6221 = vsel %vm6197, %v5874, %v6220
        %v6222 = vsel %vm6199, %v5964, %v6221
        %v6223 = vsel %vm6201, %v6054, %v6222
        %v6224 = vsel %vm6189, %v5523, %v5433
        %v6225 = vsel %vm6191, %v5613, %v6224
        %v6226 = vsel %vm6193, %v5703, %v6225
        %v6227 = vsel %vm6195, %v5793, %v6226
        %v6228 = vsel %vm6197, %v5883, %v6227
        %v6229 = vsel %vm6199, %v5973, %v6228
        %v6230 = vsel %vm6201, %v6063, %v6229
        %v6231 = vsel %vm6189, %v5532, %v5442
        %v6232 = vsel %vm6191, %v5622, %v6231
        %v6233 = vsel %vm6193, %v5712, %v6232
        %v6234 = vsel %vm6195, %v5802, %v6233
        %v6235 = vsel %vm6197, %v5892, %v6234
        %v6236 = vsel %vm6199, %v5982, %v6235
        %v6237 = vsel %vm6201, %v6072, %v6236
        %v6238 = vsel %vm6189, %v5541, %v5451
        %v6239 = vsel %vm6191, %v5631, %v6238
        %v6240 = vsel %vm6193, %v5721, %v6239
        %v6241 = vsel %vm6195, %v5811, %v6240
        %v6242 = vsel %vm6197, %v5901, %v6241
        %v6243 = vsel %vm6199, %v5991, %v6242
        %v6244 = vsel %vm6201, %v6081, %v6243
        %v6245 = vsel %vm6189, %v5550, %v5460
        %v6246 = vsel %vm6191, %v5640, %v6245
        %v6247 = vsel %vm6193, %v5730, %v6246
        %v6248 = vsel %vm6195, %v5820, %v6247
        %v6249 = vsel %vm6197, %v5910, %v6248
        %v6250 = vsel %vm6199, %v6000, %v6249
        %v6251 = vsel %vm6201, %v6090, %v6250
        %v6252 = vsel %vm6189, %v5559, %v5469
        %v6253 = vsel %vm6191, %v5649, %v6252
        %v6254 = vsel %vm6193, %v5739, %v6253
        %v6255 = vsel %vm6195, %v5829, %v6254
        %v6256 = vsel %vm6197, %v5919, %v6255
        %v6257 = vsel %vm6199, %v6009, %v6256
        %v6258 = vsel %vm6201, %v6099, %v6257
        %v6259 = vsel %vm6189, %v5568, %v5478
        %v6260 = vsel %vm6191, %v5658, %v6259
        %v6261 = vsel %vm6193, %v5748, %v6260
        %v6262 = vsel %vm6195, %v5838, %v6261
        %v6263 = vsel %vm6197, %v5928, %v6262
        %v6264 = vsel %vm6199, %v6018, %v6263
        %v6265 = vsel %vm6201, %v6108, %v6264
        %v6276 = vadd.f32 %v5379, %v6202
        %v6277 = vadd.f32 %v5380, %v6209
        %v6278 = vadd.f32 %v5381, %v6216
        %v6279 = vadd.f32 %v5382, %v6223
        %v6280 = vadd.f32 %v5383, %v6230
        %v6281 = vadd.f32 %v5384, %v6237
        %v6282 = vadd.f32 %v5385, %v6244
        %v6283 = vadd.f32 %v5386, %v6251
        %v6284 = vadd.f32 %v5387, %v6258
        %v6285 = vadd.f32 %v5388, %v6265
        %6286 = vst [vmem:[#allocation2] sm:$0xff] %v6276
        %6287 = vst [vmem:[#allocation2 + $0x8] sm:$0xff] %v6277
        %6288 = vst [vmem:[#allocation2 + $0x10] sm:$0xff] %v6278
        %6289 = vst [vmem:[#allocation2 + $0x18] sm:$0xff] %v6279
        %6290 = vst [vmem:[#allocation2 + $0x20] sm:$0xff] %v6280
        %6291 = vst [vmem:[#allocation2 + $0x28] sm:$0xff] %v6281
        %6292 = vst [vmem:[#allocation2 + $0x30] sm:$0xff] %v6282
        %6293 = vst [vmem:[#allocation2 + $0x38] sm:$0xff] %v6283
        %6294 = vst [vmem:[#allocation2 + $0x40] sm:$0xff] %v6284
        %6295 = vst [vmem:[#allocation2 + $0x48] sm:$0xff] %v6285
        %p6296 = scmp.eq.s32.totalorder %s29, 1
        // Predicated region
        $region114: #{tpu_custom_call.1} parent=100 // pred_check
          %p6297 = pneg %p6296
        $region115: #{tpu_custom_call.1} parent=100 // pred_check_branch
          %6299 = sbr.rel (%p6297) target = $region117
        $region116: #{tpu_custom_call.1} parent=100 // pred_region
          %v6300 = vld [vmem:[#allocation2] sm:$0xff]
          %v6301 = vld [vmem:[#allocation2 + $0x8] sm:$0xff]
          %v6302 = vld [vmem:[#allocation2 + $0x10] sm:$0xff]
          %v6303 = vld [vmem:[#allocation2 + $0x18] sm:$0xff]
          %v6304 = vld [vmem:[#allocation2 + $0x20] sm:$0xff]
          %v6305 = vld [vmem:[#allocation2 + $0x28] sm:$0xff]
          %v6306 = vld [vmem:[#allocation2 + $0x30] sm:$0xff]
          %v6307 = vld [vmem:[#allocation2 + $0x38] sm:$0xff]
          %v6308 = vld [vmem:[#allocation2 + $0x40] sm:$0xff]
          %v6309 = vld [vmem:[#allocation2 + $0x48] sm:$0xff]
          %v6310 = vmul.f32 %v6300, 0.015625
          %v6311 = vmul.f32 %v6301, 0.015625
          %v6312 = vmul.f32 %v6302, 0.015625
          %v6313 = vmul.f32 %v6303, 0.015625
          %v6314 = vmul.f32 %v6304, 0.015625
          %v6315 = vmul.f32 %v6305, 0.015625
          %v6316 = vmul.f32 %v6306, 0.015625
          %v6317 = vmul.f32 %v6307, 0.015625
          %v6318 = vmul.f32 %v6308, 0.015625
          %v6319 = vmul.f32 %v6309, 0.015625
          %v6320 = vpack.c.bf16 %v6310, %v6310
          %v6321 = vpack.c.bf16 %v6311, %v6311
          %v6322 = vpack.c.bf16 %v6312, %v6312
          %v6323 = vpack.c.bf16 %v6313, %v6313
          %v6324 = vpack.c.bf16 %v6314, %v6314
          %v6325 = vpack.c.bf16 %v6315, %v6315
          %v6326 = vpack.c.bf16 %v6316, %v6316
          %v6327 = vpack.c.bf16 %v6317, %v6317
          %v6328 = vpack.c.bf16 %v6318, %v6318
          %v6329 = vpack.c.bf16 %v6319, %v6319
          %v6330 = vld [vmem:[#allocation4] sm:$0xf]
          %v6331 = vld [vmem:[#allocation4 + $0x4] sm:$0xf]
          %v6332 = vld [vmem:[#allocation4 + $0x8] sm:$0xf]
          %v6333 = vld [vmem:[#allocation4 + $0xc] sm:$0xf]
          %v6334 = vld [vmem:[#allocation4 + $0x10] sm:$0xf]
          %v6335 = vld [vmem:[#allocation4 + $0x14] sm:$0xf]
          %v6336 = vld [vmem:[#allocation4 + $0x18] sm:$0xf]
          %v6337 = vld [vmem:[#allocation4 + $0x1c] sm:$0xf]
          %v6338 = vld [vmem:[#allocation4 + $0x20] sm:$0xf]
          %v6339 = vld [vmem:[#allocation4 + $0x24] sm:$0xf]
          %v6340 = vld [vmem:[#allocation4 + $0x28] sm:$0xf]
          %v6341 = vld [vmem:[#allocation4 + $0x2c] sm:$0xf]
          %v6342 = vld [vmem:[#allocation4 + $0x30] sm:$0xf]
          %v6343 = vld [vmem:[#allocation4 + $0x34] sm:$0xf]
          %v6344 = vld [vmem:[#allocation4 + $0x38] sm:$0xf]
          %v6345 = vld [vmem:[#allocation4 + $0x3c] sm:$0xf]
          %v6346 = vld [vmem:[#allocation4 + $0x40] sm:$0xf]
          %v6347 = vld [vmem:[#allocation4 + $0x44] sm:$0xf]
          %v6348 = vld [vmem:[#allocation4 + $0x48] sm:$0xf]
          %v6349 = vld [vmem:[#allocation4 + $0x4c] sm:$0xf]
          %v6350 = vld [vmem:[#allocation4 + $0x50] sm:$0xf]
          %v6351 = vld [vmem:[#allocation4 + $0x54] sm:$0xf]
          %v6352 = vld [vmem:[#allocation4 + $0x58] sm:$0xf]
          %v6353 = vld [vmem:[#allocation4 + $0x5c] sm:$0xf]
          %v6354 = vld [vmem:[#allocation4 + $0x60] sm:$0xf]
          %v6355 = vld [vmem:[#allocation4 + $0x64] sm:$0xf]
          %v6356 = vld [vmem:[#allocation4 + $0x68] sm:$0xf]
          %v6357 = vld [vmem:[#allocation4 + $0x6c] sm:$0xf]
          %v6358 = vld [vmem:[#allocation4 + $0x70] sm:$0xf]
          %v6359 = vld [vmem:[#allocation4 + $0x74] sm:$0xf]
          %v6360 = vld [vmem:[#allocation4 + $0x78] sm:$0xf]
          %v6361 = vld [vmem:[#allocation4 + $0x7c] sm:$0xf]
          %v6362 = vld [vmem:[#allocation4 + $0x80] sm:$0xf]
          %v6363 = vld [vmem:[#allocation4 + $0x84] sm:$0xf]
          %v6364 = vld [vmem:[#allocation4 + $0x88] sm:$0xf]
          %v6365 = vld [vmem:[#allocation4 + $0x8c] sm:$0xf]
          %v6366 = vld [vmem:[#allocation4 + $0x90] sm:$0xf]
          %v6367 = vld [vmem:[#allocation4 + $0x94] sm:$0xf]
          %v6368 = vld [vmem:[#allocation4 + $0x98] sm:$0xf]
          %v6369 = vld [vmem:[#allocation4 + $0x9c] sm:$0xf]
          %v6370 = vld [vmem:[#allocation4 + $0xa0] sm:$0xf]
          %v6371 = vld [vmem:[#allocation4 + $0xa4] sm:$0xf]
          %v6372 = vld [vmem:[#allocation4 + $0xa8] sm:$0xf]
          %v6373 = vld [vmem:[#allocation4 + $0xac] sm:$0xf]
          %v6374 = vld [vmem:[#allocation4 + $0xb0] sm:$0xf]
          %v6375 = vld [vmem:[#allocation4 + $0xb4] sm:$0xf]
          %v6376 = vld [vmem:[#allocation4 + $0xb8] sm:$0xf]
          %v6377 = vld [vmem:[#allocation4 + $0xbc] sm:$0xf]
          %v6378 = vld [vmem:[#allocation4 + $0xc0] sm:$0xf]
          %v6379 = vld [vmem:[#allocation4 + $0xc4] sm:$0xf]
          %v6380 = vld [vmem:[#allocation4 + $0xc8] sm:$0xf]
          %v6381 = vld [vmem:[#allocation4 + $0xcc] sm:$0xf]
          %v6382 = vld [vmem:[#allocation4 + $0xd0] sm:$0xf]
          %v6383 = vld [vmem:[#allocation4 + $0xd4] sm:$0xf]
          %v6384 = vld [vmem:[#allocation4 + $0xd8] sm:$0xf]
          %v6385 = vld [vmem:[#allocation4 + $0xdc] sm:$0xf]
          %v6386 = vld [vmem:[#allocation4 + $0xe0] sm:$0xf]
          %v6387 = vld [vmem:[#allocation4 + $0xe4] sm:$0xf]
          %v6388 = vld [vmem:[#allocation4 + $0xe8] sm:$0xf]
          %v6389 = vld [vmem:[#allocation4 + $0xec] sm:$0xf]
          %v6390 = vld [vmem:[#allocation4 + $0xf0] sm:$0xf]
          %v6391 = vld [vmem:[#allocation4 + $0xf4] sm:$0xf]
          %v6392 = vld [vmem:[#allocation4 + $0xf8] sm:$0xf]
          %v6393 = vld [vmem:[#allocation4 + $0xfc] sm:$0xf]
          %v6394 = vld [vmem:[#allocation4 + $0x100] sm:$0xf]
          %v6395 = vld [vmem:[#allocation4 + $0x104] sm:$0xf]
          %v6396 = vld [vmem:[#allocation4 + $0x108] sm:$0xf]
          %v6397 = vld [vmem:[#allocation4 + $0x10c] sm:$0xf]
          %v6398 = vld [vmem:[#allocation4 + $0x110] sm:$0xf]
          %v6399 = vld [vmem:[#allocation4 + $0x114] sm:$0xf]
          %v6400 = vld [vmem:[#allocation4 + $0x118] sm:$0xf]
          %v6401 = vld [vmem:[#allocation4 + $0x11c] sm:$0xf]
          %v6402 = vld [vmem:[#allocation4 + $0x120] sm:$0xf]
          %v6403 = vld [vmem:[#allocation4 + $0x124] sm:$0xf]
          %v6404 = vld [vmem:[#allocation4 + $0x128] sm:$0xf]
          %v6405 = vld [vmem:[#allocation4 + $0x12c] sm:$0xf]
          %v6406 = vld [vmem:[#allocation4 + $0x130] sm:$0xf]
          %v6407 = vld [vmem:[#allocation4 + $0x134] sm:$0xf]
          %v6408 = vld [vmem:[#allocation4 + $0x138] sm:$0xf]
          %v6409 = vld [vmem:[#allocation4 + $0x13c] sm:$0xf]
          %v6410 = vld [vmem:[#allocation4 + $0x140] sm:$0xf]
          %v6411 = vld [vmem:[#allocation4 + $0x144] sm:$0xf]
          %v6412 = vld [vmem:[#allocation4 + $0x148] sm:$0xf]
          %v6413 = vld [vmem:[#allocation4 + $0x14c] sm:$0xf]
          %v6414 = vld [vmem:[#allocation4 + $0x150] sm:$0xf]
          %v6415 = vld [vmem:[#allocation4 + $0x154] sm:$0xf]
          %v6416 = vld [vmem:[#allocation4 + $0x158] sm:$0xf]
          %v6417 = vld [vmem:[#allocation4 + $0x15c] sm:$0xf]
          %v6418 = vld [vmem:[#allocation4 + $0x160] sm:$0xf]
          %v6419 = vld [vmem:[#allocation4 + $0x164] sm:$0xf]
          %v6420 = vld [vmem:[#allocation4 + $0x168] sm:$0xf]
          %v6421 = vld [vmem:[#allocation4 + $0x16c] sm:$0xf]
          %v6422 = vld [vmem:[#allocation4 + $0x170] sm:$0xf]
          %v6423 = vld [vmem:[#allocation4 + $0x174] sm:$0xf]
          %v6424 = vld [vmem:[#allocation4 + $0x178] sm:$0xf]
          %v6425 = vld [vmem:[#allocation4 + $0x17c] sm:$0xf]
          %v6426 = vld [vmem:[#allocation4 + $0x180] sm:$0xf]
          %v6427 = vld [vmem:[#allocation4 + $0x184] sm:$0xf]
          %v6428 = vld [vmem:[#allocation4 + $0x188] sm:$0xf]
          %v6429 = vld [vmem:[#allocation4 + $0x18c] sm:$0xf]
          %v6430 = vld [vmem:[#allocation4 + $0x190] sm:$0xf]
          %v6431 = vld [vmem:[#allocation4 + $0x194] sm:$0xf]
          %v6432 = vld [vmem:[#allocation4 + $0x198] sm:$0xf]
          %v6433 = vld [vmem:[#allocation4 + $0x19c] sm:$0xf]
          %v6434 = vld [vmem:[#allocation4 + $0x1a0] sm:$0xf]
          %v6435 = vld [vmem:[#allocation4 + $0x1a4] sm:$0xf]
          %v6436 = vld [vmem:[#allocation4 + $0x1a8] sm:$0xf]
          %v6437 = vld [vmem:[#allocation4 + $0x1ac] sm:$0xf]
          %v6438 = vld [vmem:[#allocation4 + $0x1b0] sm:$0xf]
          %v6439 = vld [vmem:[#allocation4 + $0x1b4] sm:$0xf]
          %v6440 = vld [vmem:[#allocation4 + $0x1b8] sm:$0xf]
          %v6441 = vld [vmem:[#allocation4 + $0x1bc] sm:$0xf]
          %v6442 = vld [vmem:[#allocation4 + $0x1c0] sm:$0xf]
          %v6443 = vld [vmem:[#allocation4 + $0x1c4] sm:$0xf]
          %v6444 = vld [vmem:[#allocation4 + $0x1c8] sm:$0xf]
          %v6445 = vld [vmem:[#allocation4 + $0x1cc] sm:$0xf]
          %v6446 = vld [vmem:[#allocation4 + $0x1d0] sm:$0xf]
          %v6447 = vld [vmem:[#allocation4 + $0x1d4] sm:$0xf]
          %v6448 = vld [vmem:[#allocation4 + $0x1d8] sm:$0xf]
          %v6449 = vld [vmem:[#allocation4 + $0x1dc] sm:$0xf]
          %v6450 = vld [vmem:[#allocation4 + $0x1e0] sm:$0xf]
          %v6451 = vld [vmem:[#allocation4 + $0x1e4] sm:$0xf]
          %v6452 = vld [vmem:[#allocation4 + $0x1e8] sm:$0xf]
          %v6453 = vld [vmem:[#allocation4 + $0x1ec] sm:$0xf]
          %v6454 = vld [vmem:[#allocation4 + $0x1f0] sm:$0xf]
          %v6455 = vld [vmem:[#allocation4 + $0x1f4] sm:$0xf]
          %v6456 = vld [vmem:[#allocation4 + $0x1f8] sm:$0xf]
          %v6457 = vld [vmem:[#allocation4 + $0x1fc] sm:$0xf]
          %v6458 = vld [vmem:[#allocation4 + $0x200] sm:$0xf]
          %v6459 = vld [vmem:[#allocation4 + $0x204] sm:$0xf]
          %v6460 = vld [vmem:[#allocation4 + $0x208] sm:$0xf]
          %v6461 = vld [vmem:[#allocation4 + $0x20c] sm:$0xf]
          %v6462 = vld [vmem:[#allocation4 + $0x210] sm:$0xf]
          %v6463 = vld [vmem:[#allocation4 + $0x214] sm:$0xf]
          %v6464 = vld [vmem:[#allocation4 + $0x218] sm:$0xf]
          %v6465 = vld [vmem:[#allocation4 + $0x21c] sm:$0xf]
          %v6466 = vld [vmem:[#allocation4 + $0x220] sm:$0xf]
          %v6467 = vld [vmem:[#allocation4 + $0x224] sm:$0xf]
          %v6468 = vld [vmem:[#allocation4 + $0x228] sm:$0xf]
          %v6469 = vld [vmem:[#allocation4 + $0x22c] sm:$0xf]
          %v6470 = vld [vmem:[#allocation4 + $0x230] sm:$0xf]
          %v6471 = vld [vmem:[#allocation4 + $0x234] sm:$0xf]
          %v6472 = vld [vmem:[#allocation4 + $0x238] sm:$0xf]
          %v6473 = vld [vmem:[#allocation4 + $0x23c] sm:$0xf]
          %v6474 = vld [vmem:[#allocation4 + $0x240] sm:$0xf]
          %v6475 = vld [vmem:[#allocation4 + $0x244] sm:$0xf]
          %v6476 = vld [vmem:[#allocation4 + $0x248] sm:$0xf]
          %v6477 = vld [vmem:[#allocation4 + $0x24c] sm:$0xf]
          %v6478 = vld [vmem:[#allocation4 + $0x250] sm:$0xf]
          %v6479 = vld [vmem:[#allocation4 + $0x254] sm:$0xf]
          %v6480 = vld [vmem:[#allocation4 + $0x258] sm:$0xf]
          %v6481 = vld [vmem:[#allocation4 + $0x25c] sm:$0xf]
          %v6482 = vld [vmem:[#allocation4 + $0x260] sm:$0xf]
          %v6483 = vld [vmem:[#allocation4 + $0x264] sm:$0xf]
          %v6484 = vld [vmem:[#allocation4 + $0x268] sm:$0xf]
          %v6485 = vld [vmem:[#allocation4 + $0x26c] sm:$0xf]
          %v6486 = vld [vmem:[#allocation4 + $0x270] sm:$0xf]
          %v6487 = vld [vmem:[#allocation4 + $0x274] sm:$0xf]
          %v6488 = vld [vmem:[#allocation4 + $0x278] sm:$0xf]
          %v6489 = vld [vmem:[#allocation4 + $0x27c] sm:$0xf]
          %v6490 = vld [vmem:[%s8] sm:$0x1]
          %v6492 = vlaneseq
          %v6493 = vshrl.u32 %v6492, 7
          %v6494 = vsub.s32 0, %v6493
          %v6495 = vrot.slane %v6490, %v6494
          %v6657 = vunpack.c.l.b16 %v6330
          %v6658 = vunpack.c.l.b16 %v6331
          %v6659 = vunpack.c.l.b16 %v6332
          %v6660 = vunpack.c.l.b16 %v6333
          %v6661 = vunpack.c.l.b16 %v6334
          %v6662 = vunpack.c.l.b16 %v6335
          %v6663 = vunpack.c.l.b16 %v6336
          %v6664 = vunpack.c.l.b16 %v6337
          %v6665 = vunpack.c.l.b16 %v6338
          %v6666 = vunpack.c.l.b16 %v6339
          %v6667 = vunpack.c.l.b16 %v6340
          %v6668 = vunpack.c.l.b16 %v6341
          %v6669 = vunpack.c.l.b16 %v6342
          %v6670 = vunpack.c.l.b16 %v6343
          %v6671 = vunpack.c.l.b16 %v6344
          %v6672 = vunpack.c.l.b16 %v6345
          %v6673 = vunpack.c.l.b16 %v6346
          %v6674 = vunpack.c.l.b16 %v6347
          %v6675 = vunpack.c.l.b16 %v6348
          %v6676 = vunpack.c.l.b16 %v6349
          %v6677 = vunpack.c.l.b16 %v6350
          %v6678 = vunpack.c.l.b16 %v6351
          %v6679 = vunpack.c.l.b16 %v6352
          %v6680 = vunpack.c.l.b16 %v6353
          %v6681 = vunpack.c.l.b16 %v6354
          %v6682 = vunpack.c.l.b16 %v6355
          %v6683 = vunpack.c.l.b16 %v6356
          %v6684 = vunpack.c.l.b16 %v6357
          %v6685 = vunpack.c.l.b16 %v6358
          %v6686 = vunpack.c.l.b16 %v6359
          %v6687 = vunpack.c.l.b16 %v6360
          %v6688 = vunpack.c.l.b16 %v6361
          %v6689 = vunpack.c.l.b16 %v6362
          %v6690 = vunpack.c.l.b16 %v6363
          %v6691 = vunpack.c.l.b16 %v6364
          %v6692 = vunpack.c.l.b16 %v6365
          %v6693 = vunpack.c.l.b16 %v6366
          %v6694 = vunpack.c.l.b16 %v6367
          %v6695 = vunpack.c.l.b16 %v6368
          %v6696 = vunpack.c.l.b16 %v6369
          %v6697 = vunpack.c.l.b16 %v6370
          %v6698 = vunpack.c.l.b16 %v6371
          %v6699 = vunpack.c.l.b16 %v6372
          %v6700 = vunpack.c.l.b16 %v6373
          %v6701 = vunpack.c.l.b16 %v6374
          %v6702 = vunpack.c.l.b16 %v6375
          %v6703 = vunpack.c.l.b16 %v6376
          %v6704 = vunpack.c.l.b16 %v6377
          %v6705 = vunpack.c.l.b16 %v6378
          %v6706 = vunpack.c.l.b16 %v6379
          %v6707 = vunpack.c.l.b16 %v6380
          %v6708 = vunpack.c.l.b16 %v6381
          %v6709 = vunpack.c.l.b16 %v6382
          %v6710 = vunpack.c.l.b16 %v6383
          %v6711 = vunpack.c.l.b16 %v6384
          %v6712 = vunpack.c.l.b16 %v6385
          %v6713 = vunpack.c.l.b16 %v6386
          %v6714 = vunpack.c.l.b16 %v6387
          %v6715 = vunpack.c.l.b16 %v6388
          %v6716 = vunpack.c.l.b16 %v6389
          %v6717 = vunpack.c.l.b16 %v6390
          %v6718 = vunpack.c.l.b16 %v6391
          %v6719 = vunpack.c.l.b16 %v6392
          %v6720 = vunpack.c.l.b16 %v6393
          %v6721 = vunpack.c.l.b16 %v6394
          %v6722 = vunpack.c.l.b16 %v6395
          %v6723 = vunpack.c.l.b16 %v6396
          %v6724 = vunpack.c.l.b16 %v6397
          %v6725 = vunpack.c.l.b16 %v6398
          %v6726 = vunpack.c.l.b16 %v6399
          %v6727 = vunpack.c.l.b16 %v6400
          %v6728 = vunpack.c.l.b16 %v6401
          %v6729 = vunpack.c.l.b16 %v6402
          %v6730 = vunpack.c.l.b16 %v6403
          %v6731 = vunpack.c.l.b16 %v6404
          %v6732 = vunpack.c.l.b16 %v6405
          %v6733 = vunpack.c.l.b16 %v6406
          %v6734 = vunpack.c.l.b16 %v6407
          %v6735 = vunpack.c.l.b16 %v6408
          %v6736 = vunpack.c.l.b16 %v6409
          %v6737 = vunpack.c.l.b16 %v6410
          %v6738 = vunpack.c.l.b16 %v6411
          %v6739 = vunpack.c.l.b16 %v6412
          %v6740 = vunpack.c.l.b16 %v6413
          %v6741 = vunpack.c.l.b16 %v6414
          %v6742 = vunpack.c.l.b16 %v6415
          %v6743 = vunpack.c.l.b16 %v6416
          %v6744 = vunpack.c.l.b16 %v6417
          %v6745 = vunpack.c.l.b16 %v6418
          %v6746 = vunpack.c.l.b16 %v6419
          %v6747 = vunpack.c.l.b16 %v6420
          %v6748 = vunpack.c.l.b16 %v6421
          %v6749 = vunpack.c.l.b16 %v6422
          %v6750 = vunpack.c.l.b16 %v6423
          %v6751 = vunpack.c.l.b16 %v6424
          %v6752 = vunpack.c.l.b16 %v6425
          %v6753 = vunpack.c.l.b16 %v6426
          %v6754 = vunpack.c.l.b16 %v6427
          %v6755 = vunpack.c.l.b16 %v6428
          %v6756 = vunpack.c.l.b16 %v6429
          %v6757 = vunpack.c.l.b16 %v6430
          %v6758 = vunpack.c.l.b16 %v6431
          %v6759 = vunpack.c.l.b16 %v6432
          %v6760 = vunpack.c.l.b16 %v6433
          %v6761 = vunpack.c.l.b16 %v6434
          %v6762 = vunpack.c.l.b16 %v6435
          %v6763 = vunpack.c.l.b16 %v6436
          %v6764 = vunpack.c.l.b16 %v6437
          %v6765 = vunpack.c.l.b16 %v6438
          %v6766 = vunpack.c.l.b16 %v6439
          %v6767 = vunpack.c.l.b16 %v6440
          %v6768 = vunpack.c.l.b16 %v6441
          %v6769 = vunpack.c.l.b16 %v6442
          %v6770 = vunpack.c.l.b16 %v6443
          %v6771 = vunpack.c.l.b16 %v6444
          %v6772 = vunpack.c.l.b16 %v6445
          %v6773 = vunpack.c.l.b16 %v6446
          %v6774 = vunpack.c.l.b16 %v6447
          %v6775 = vunpack.c.l.b16 %v6448
          %v6776 = vunpack.c.l.b16 %v6449
          %v6777 = vunpack.c.l.b16 %v6450
          %v6778 = vunpack.c.l.b16 %v6451
          %v6779 = vunpack.c.l.b16 %v6452
          %v6780 = vunpack.c.l.b16 %v6453
          %v6781 = vunpack.c.l.b16 %v6454
          %v6782 = vunpack.c.l.b16 %v6455
          %v6783 = vunpack.c.l.b16 %v6456
          %v6784 = vunpack.c.l.b16 %v6457
          %v6785 = vunpack.c.l.b16 %v6458
          %v6786 = vunpack.c.l.b16 %v6459
          %v6787 = vunpack.c.l.b16 %v6460
          %v6788 = vunpack.c.l.b16 %v6461
          %v6789 = vunpack.c.l.b16 %v6462
          %v6790 = vunpack.c.l.b16 %v6463
          %v6791 = vunpack.c.l.b16 %v6464
          %v6792 = vunpack.c.l.b16 %v6465
          %v6793 = vunpack.c.l.b16 %v6466
          %v6794 = vunpack.c.l.b16 %v6467
          %v6795 = vunpack.c.l.b16 %v6468
          %v6796 = vunpack.c.l.b16 %v6469
          %v6797 = vunpack.c.l.b16 %v6470
          %v6798 = vunpack.c.l.b16 %v6471
          %v6799 = vunpack.c.l.b16 %v6472
          %v6800 = vunpack.c.l.b16 %v6473
          %v6801 = vunpack.c.l.b16 %v6474
          %v6802 = vunpack.c.l.b16 %v6475
          %v6803 = vunpack.c.l.b16 %v6476
          %v6804 = vunpack.c.l.b16 %v6477
          %v6805 = vunpack.c.l.b16 %v6478
          %v6806 = vunpack.c.l.b16 %v6479
          %v6807 = vunpack.c.l.b16 %v6480
          %v6808 = vunpack.c.l.b16 %v6481
          %v6809 = vunpack.c.l.b16 %v6482
          %v6810 = vunpack.c.l.b16 %v6483
          %v6811 = vunpack.c.l.b16 %v6484
          %v6812 = vunpack.c.l.b16 %v6485
          %v6813 = vunpack.c.l.b16 %v6486
          %v6814 = vunpack.c.l.b16 %v6487
          %v6815 = vunpack.c.l.b16 %v6488
          %v6816 = vunpack.c.l.b16 %v6489
          %v6817 = vpack.c.b16 %v6658, %v6657
          %v6818 = vpack.c.b16 %v6660, %v6659
          %v6819 = vpack.c.b16 %v6662, %v6661
          %v6820 = vpack.c.b16 %v6664, %v6663
          %v6821 = vpack.c.b16 %v6666, %v6665
          %v6822 = vpack.c.b16 %v6668, %v6667
          %v6823 = vpack.c.b16 %v6670, %v6669
          %v6824 = vpack.c.b16 %v6672, %v6671
          %v6825 = vpack.c.b16 %v6674, %v6673
          %v6826 = vpack.c.b16 %v6676, %v6675
          %v6827 = vpack.c.b16 %v6678, %v6677
          %v6828 = vpack.c.b16 %v6680, %v6679
          %v6829 = vpack.c.b16 %v6682, %v6681
          %v6830 = vpack.c.b16 %v6684, %v6683
          %v6831 = vpack.c.b16 %v6686, %v6685
          %v6832 = vpack.c.b16 %v6688, %v6687
          %v6833 = vpack.c.b16 %v6690, %v6689
          %v6834 = vpack.c.b16 %v6692, %v6691
          %v6835 = vpack.c.b16 %v6694, %v6693
          %v6836 = vpack.c.b16 %v6696, %v6695
          %v6837 = vpack.c.b16 %v6698, %v6697
          %v6838 = vpack.c.b16 %v6700, %v6699
          %v6839 = vpack.c.b16 %v6702, %v6701
          %v6840 = vpack.c.b16 %v6704, %v6703
          %v6841 = vpack.c.b16 %v6706, %v6705
          %v6842 = vpack.c.b16 %v6708, %v6707
          %v6843 = vpack.c.b16 %v6710, %v6709
          %v6844 = vpack.c.b16 %v6712, %v6711
          %v6845 = vpack.c.b16 %v6714, %v6713
          %v6846 = vpack.c.b16 %v6716, %v6715
          %v6847 = vpack.c.b16 %v6718, %v6717
          %v6848 = vpack.c.b16 %v6720, %v6719
          %v6849 = vpack.c.b16 %v6722, %v6721
          %v6850 = vpack.c.b16 %v6724, %v6723
          %v6851 = vpack.c.b16 %v6726, %v6725
          %v6852 = vpack.c.b16 %v6728, %v6727
          %v6853 = vpack.c.b16 %v6730, %v6729
          %v6854 = vpack.c.b16 %v6732, %v6731
          %v6855 = vpack.c.b16 %v6734, %v6733
          %v6856 = vpack.c.b16 %v6736, %v6735
          %v6857 = vpack.c.b16 %v6738, %v6737
          %v6858 = vpack.c.b16 %v6740, %v6739
          %v6859 = vpack.c.b16 %v6742, %v6741
          %v6860 = vpack.c.b16 %v6744, %v6743
          %v6861 = vpack.c.b16 %v6746, %v6745
          %v6862 = vpack.c.b16 %v6748, %v6747
          %v6863 = vpack.c.b16 %v6750, %v6749
          %v6864 = vpack.c.b16 %v6752, %v6751
          %v6865 = vpack.c.b16 %v6754, %v6753
          %v6866 = vpack.c.b16 %v6756, %v6755
          %v6867 = vpack.c.b16 %v6758, %v6757
          %v6868 = vpack.c.b16 %v6760, %v6759
          %v6869 = vpack.c.b16 %v6762, %v6761
          %v6870 = vpack.c.b16 %v6764, %v6763
          %v6871 = vpack.c.b16 %v6766, %v6765
          %v6872 = vpack.c.b16 %v6768, %v6767
          %v6873 = vpack.c.b16 %v6770, %v6769
          %v6874 = vpack.c.b16 %v6772, %v6771
          %v6875 = vpack.c.b16 %v6774, %v6773
          %v6876 = vpack.c.b16 %v6776, %v6775
          %v6877 = vpack.c.b16 %v6778, %v6777
          %v6878 = vpack.c.b16 %v6780, %v6779
          %v6879 = vpack.c.b16 %v6782, %v6781
          %v6880 = vpack.c.b16 %v6784, %v6783
          %v6881 = vpack.c.b16 %v6786, %v6785
          %v6882 = vpack.c.b16 %v6788, %v6787
          %v6883 = vpack.c.b16 %v6790, %v6789
          %v6884 = vpack.c.b16 %v6792, %v6791
          %v6885 = vpack.c.b16 %v6794, %v6793
          %v6886 = vpack.c.b16 %v6796, %v6795
          %v6887 = vpack.c.b16 %v6798, %v6797
          %v6888 = vpack.c.b16 %v6800, %v6799
          %v6889 = vpack.c.b16 %v6802, %v6801
          %v6890 = vpack.c.b16 %v6804, %v6803
          %v6891 = vpack.c.b16 %v6806, %v6805
          %v6892 = vpack.c.b16 %v6808, %v6807
          %v6893 = vpack.c.b16 %v6810, %v6809
          %v6894 = vpack.c.b16 %v6812, %v6811
          %v6895 = vpack.c.b16 %v6814, %v6813
          %v6896 = vpack.c.b16 %v6816, %v6815
          %6977 = vmatprep.subr.bf16.mxu0 0
          %6978 = vmatpush1.bf16.msra.mxu0 %v6817
          %6979 = vmatprep.subr.bf16.mxu0 0
          %6980 = vmatpush1.bf16.msra.mxu0 %v6818
          %6981 = vmatprep.subr.bf16.mxu0 0
          %6982 = vmatpush1.bf16.msra.mxu0 %v6819
          %6983 = vmatprep.subr.bf16.mxu0 0
          %6984 = vmatpush1.bf16.msra.mxu0 %v6820
          %6985 = vmatprep.subr.bf16.mxu0 0
          %6986 = vmatpush1.bf16.msra.mxu0 %v6821
          %6987 = vmatprep.subr.bf16.mxu0 0
          %6988 = vmatpush1.bf16.msra.mxu0 %v6822
          %6989 = vmatprep.subr.bf16.mxu0 0
          %6990 = vmatpush1.bf16.msra.mxu0 %v6823
          %6991 = vmatprep.subr.bf16.mxu0 0
          %6992 = vmatpush1.bf16.msra.mxu0 %v6824
          %6993 = vmatprep.subr.bf16.mxu0 0
          %6994 = vmatpush1.bf16.msra.mxu0 %v6825
          %6995 = vmatprep.subr.bf16.mxu0 0
          %6996 = vmatpush1.bf16.msra.mxu0 %v6826
          %6997 = vmatprep.subr.bf16.mxu0 0
          %6998 = vmatpush1.bf16.msra.mxu0 %v6827
          %6999 = vmatprep.subr.bf16.mxu0 0
          %7000 = vmatpush1.bf16.msra.mxu0 %v6828
          %7001 = vmatprep.subr.bf16.mxu0 0
          %7002 = vmatpush1.bf16.msra.mxu0 %v6829
          %7003 = vmatprep.subr.bf16.mxu0 0
          %7004 = vmatpush1.bf16.msra.mxu0 %v6830
          %7005 = vmatprep.subr.bf16.mxu0 0
          %7006 = vmatpush1.bf16.msra.mxu0 %v6831
          %7007 = vmatprep.subr.bf16.mxu0 0
          %7008 = vmatpush1.bf16.msra.mxu0 %v6832
          %7009 = vmatprep.mubr.bf16.mxu0 %v6321
          %7010 = vmatmul.mubr.bf16.gmra.mrb[0].mxu0 %v6320
          %v7011 = vpop.f32.mrb[0].mxu0
          %v7012 = vadd.f32 %v6495, %v7011
          %v7013 = vpop.f32.mrb[0].mxu0
          %v7014 = vpop.f32.mrb[0].mxu0
          %v7015 = vpop.f32.mrb[0].mxu0
          %7016 = vdwg.mxu0
          %7017 = vmatprep.subr.bf16.mxu0 0
          %7018 = vmatpush1.bf16.msra.mxu0 %v6833
          %7019 = vmatprep.subr.bf16.mxu0 0
          %7020 = vmatpush1.bf16.msra.mxu0 %v6834
          %7021 = vmatprep.subr.bf16.mxu0 0
          %7022 = vmatpush1.bf16.msra.mxu0 %v6835
          %7023 = vmatprep.subr.bf16.mxu0 0
          %7024 = vmatpush1.bf16.msra.mxu0 %v6836
          %7025 = vmatprep.subr.bf16.mxu0 0
          %7026 = vmatpush1.bf16.msra.mxu0 %v6837
          %7027 = vmatprep.subr.bf16.mxu0 0
          %7028 = vmatpush1.bf16.msra.mxu0 %v6838
          %7029 = vmatprep.subr.bf16.mxu0 0
          %7030 = vmatpush1.bf16.msra.mxu0 %v6839
          %7031 = vmatprep.subr.bf16.mxu0 0
          %7032 = vmatpush1.bf16.msra.mxu0 %v6840
          %7033 = vmatprep.subr.bf16.mxu0 0
          %7034 = vmatpush1.bf16.msra.mxu0 %v6841
          %7035 = vmatprep.subr.bf16.mxu0 0
          %7036 = vmatpush1.bf16.msra.mxu0 %v6842
          %7037 = vmatprep.subr.bf16.mxu0 0
          %7038 = vmatpush1.bf16.msra.mxu0 %v6843
          %7039 = vmatprep.subr.bf16.mxu0 0
          %7040 = vmatpush1.bf16.msra.mxu0 %v6844
          %7041 = vmatprep.subr.bf16.mxu0 0
          %7042 = vmatpush1.bf16.msra.mxu0 %v6845
          %7043 = vmatprep.subr.bf16.mxu0 0
          %7044 = vmatpush1.bf16.msra.mxu0 %v6846
          %7045 = vmatprep.subr.bf16.mxu0 0
          %7046 = vmatpush1.bf16.msra.mxu0 %v6847
          %7047 = vmatprep.subr.bf16.mxu0 0
          %7048 = vmatpush1.bf16.msra.mxu0 %v6848
          %7049 = vmatprep.mubr.bf16.mxu0 %v6323
          %7050 = vmatmul.mubr.bf16.gmra.mrb[0].mxu0 %v6322
          %v7051 = vpop.f32.mrb[0].mxu0
          %v7052 = vadd.f32 %v7012, %v7051
          %v7053 = vpop.f32.mrb[0].mxu0
          %v7054 = vpop.f32.mrb[0].mxu0
          %v7055 = vpop.f32.mrb[0].mxu0
          %7056 = vdwg.mxu0
          %7057 = vmatprep.subr.bf16.mxu0 0
          %7058 = vmatpush1.bf16.msra.mxu0 %v6849
          %7059 = vmatprep.subr.bf16.mxu0 0
          %7060 = vmatpush1.bf16.msra.mxu0 %v6850
          %7061 = vmatprep.subr.bf16.mxu0 0
          %7062 = vmatpush1.bf16.msra.mxu0 %v6851
          %7063 = vmatprep.subr.bf16.mxu0 0
          %7064 = vmatpush1.bf16.msra.mxu0 %v6852
          %7065 = vmatprep.subr.bf16.mxu0 0
          %7066 = vmatpush1.bf16.msra.mxu0 %v6853
          %7067 = vmatprep.subr.bf16.mxu0 0
          %7068 = vmatpush1.bf16.msra.mxu0 %v6854
          %7069 = vmatprep.subr.bf16.mxu0 0
          %7070 = vmatpush1.bf16.msra.mxu0 %v6855
          %7071 = vmatprep.subr.bf16.mxu0 0
          %7072 = vmatpush1.bf16.msra.mxu0 %v6856
          %7073 = vmatprep.subr.bf16.mxu0 0
          %7074 = vmatpush1.bf16.msra.mxu0 %v6857
          %7075 = vmatprep.subr.bf16.mxu0 0
          %7076 = vmatpush1.bf16.msra.mxu0 %v6858
          %7077 = vmatprep.subr.bf16.mxu0 0
          %7078 = vmatpush1.bf16.msra.mxu0 %v6859
          %7079 = vmatprep.subr.bf16.mxu0 0
          %7080 = vmatpush1.bf16.msra.mxu0 %v6860
          %7081 = vmatprep.subr.bf16.mxu0 0
          %7082 = vmatpush1.bf16.msra.mxu0 %v6861
          %7083 = vmatprep.subr.bf16.mxu0 0
          %7084 = vmatpush1.bf16.msra.mxu0 %v6862
          %7085 = vmatprep.subr.bf16.mxu0 0
          %7086 = vmatpush1.bf16.msra.mxu0 %v6863
          %7087 = vmatprep.subr.bf16.mxu0 0
          %7088 = vmatpush1.bf16.msra.mxu0 %v6864
          %7089 = vmatprep.mubr.bf16.mxu0 %v6325
          %7090 = vmatmul.mubr.bf16.gmra.mrb[0].mxu0 %v6324
          %v7091 = vpop.f32.mrb[0].mxu0
          %v7092 = vadd.f32 %v7052, %v7091
          %v7093 = vpop.f32.mrb[0].mxu0
          %v7094 = vpop.f32.mrb[0].mxu0
          %v7095 = vpop.f32.mrb[0].mxu0
          %7096 = vdwg.mxu0
          %7097 = vmatprep.subr.bf16.mxu0 0
          %7098 = vmatpush1.bf16.msra.mxu0 %v6865
          %7099 = vmatprep.subr.bf16.mxu0 0
          %7100 = vmatpush1.bf16.msra.mxu0 %v6866
          %7101 = vmatprep.subr.bf16.mxu0 0
          %7102 = vmatpush1.bf16.msra.mxu0 %v6867
          %7103 = vmatprep.subr.bf16.mxu0 0
          %7104 = vmatpush1.bf16.msra.mxu0 %v6868
          %7105 = vmatprep.subr.bf16.mxu0 0
          %7106 = vmatpush1.bf16.msra.mxu0 %v6869
          %7107 = vmatprep.subr.bf16.mxu0 0
          %7108 = vmatpush1.bf16.msra.mxu0 %v6870
          %7109 = vmatprep.subr.bf16.mxu0 0
          %7110 = vmatpush1.bf16.msra.mxu0 %v6871
          %7111 = vmatprep.subr.bf16.mxu0 0
          %7112 = vmatpush1.bf16.msra.mxu0 %v6872
          %7113 = vmatprep.subr.bf16.mxu0 0
          %7114 = vmatpush1.bf16.msra.mxu0 %v6873
          %7115 = vmatprep.subr.bf16.mxu0 0
          %7116 = vmatpush1.bf16.msra.mxu0 %v6874
          %7117 = vmatprep.subr.bf16.mxu0 0
          %7118 = vmatpush1.bf16.msra.mxu0 %v6875
          %7119 = vmatprep.subr.bf16.mxu0 0
          %7120 = vmatpush1.bf16.msra.mxu0 %v6876
          %7121 = vmatprep.subr.bf16.mxu0 0
          %7122 = vmatpush1.bf16.msra.mxu0 %v6877
          %7123 = vmatprep.subr.bf16.mxu0 0
          %7124 = vmatpush1.bf16.msra.mxu0 %v6878
          %7125 = vmatprep.subr.bf16.mxu0 0
          %7126 = vmatpush1.bf16.msra.mxu0 %v6879
          %7127 = vmatprep.subr.bf16.mxu0 0
          %7128 = vmatpush1.bf16.msra.mxu0 %v6880
          %7129 = vmatprep.mubr.bf16.mxu0 %v6327
          %7130 = vmatmul.mubr.bf16.gmra.mrb[0].mxu0 %v6326
          %v7131 = vpop.f32.mrb[0].mxu0
          %v7132 = vadd.f32 %v7092, %v7131
          %v7133 = vpop.f32.mrb[0].mxu0
          %v7134 = vpop.f32.mrb[0].mxu0
          %v7135 = vpop.f32.mrb[0].mxu0
          %7136 = vdwg.mxu0
          %7137 = vmatprep.subr.bf16.mxu0 0
          %7138 = vmatpush1.bf16.msra.mxu0 %v6881
          %7139 = vmatprep.subr.bf16.mxu0 0
          %7140 = vmatpush1.bf16.msra.mxu0 %v6882
          %7141 = vmatprep.subr.bf16.mxu0 0
          %7142 = vmatpush1.bf16.msra.mxu0 %v6883
          %7143 = vmatprep.subr.bf16.mxu0 0
          %7144 = vmatpush1.bf16.msra.mxu0 %v6884
          %7145 = vmatprep.subr.bf16.mxu0 0
          %7146 = vmatpush1.bf16.msra.mxu0 %v6885
          %7147 = vmatprep.subr.bf16.mxu0 0
          %7148 = vmatpush1.bf16.msra.mxu0 %v6886
          %7149 = vmatprep.subr.bf16.mxu0 0
          %7150 = vmatpush1.bf16.msra.mxu0 %v6887
          %7151 = vmatprep.subr.bf16.mxu0 0
          %7152 = vmatpush1.bf16.msra.mxu0 %v6888
          %7153 = vmatprep.subr.bf16.mxu0 0
          %7154 = vmatpush1.bf16.msra.mxu0 %v6889
          %7155 = vmatprep.subr.bf16.mxu0 0
          %7156 = vmatpush1.bf16.msra.mxu0 %v6890
          %7157 = vmatprep.subr.bf16.mxu0 0
          %7158 = vmatpush1.bf16.msra.mxu0 %v6891
          %7159 = vmatprep.subr.bf16.mxu0 0
          %7160 = vmatpush1.bf16.msra.mxu0 %v6892
          %7161 = vmatprep.subr.bf16.mxu0 0
          %7162 = vmatpush1.bf16.msra.mxu0 %v6893
          %7163 = vmatprep.subr.bf16.mxu0 0
          %7164 = vmatpush1.bf16.msra.mxu0 %v6894
          %7165 = vmatprep.subr.bf16.mxu0 0
          %7166 = vmatpush1.bf16.msra.mxu0 %v6895
          %7167 = vmatprep.subr.bf16.mxu0 0
          %7168 = vmatpush1.bf16.msra.mxu0 %v6896
          %7169 = vmatprep.mubr.bf16.mxu0 %v6329
          %7170 = vmatmul.mubr.bf16.gmra.mrb[0].mxu0 %v6328
          %v7171 = vpop.f32.mrb[0].mxu0
          %v7172 = vadd.f32 %v7132, %v7171
          %v7173 = vpop.f32.mrb[0].mxu0
          %v7174 = vpop.f32.mrb[0].mxu0
          %v7175 = vpop.f32.mrb[0].mxu0
          %7176 = vdwg.mxu0
          %v7177 = vpack.c.bf16 %v7172, %v7172
          %v7178 = vld [vmem:[%s9] sm:$0xff]
          %v7179 = vld [vmem:[%s9 + $0x8] sm:$0xff]
          %v7180 = vld [vmem:[%s9 + $0x10] sm:$0xff]
          %v7181 = vld [vmem:[%s9 + $0x18] sm:$0xff]
          %v7182 = vld [vmem:[%s9 + $0x20] sm:$0xff]
          %v7183 = vld [vmem:[%s9 + $0x28] sm:$0xff]
          %v7184 = vld [vmem:[%s9 + $0x30] sm:$0xff]
          %v7185 = vld [vmem:[%s9 + $0x38] sm:$0xff]
          %v7186 = vld [vmem:[%s9 + $0x40] sm:$0xff]
          %v7187 = vld [vmem:[%s9 + $0x48] sm:$0xff]
          %v7188 = vld [vmem:[%s9 + $0x50] sm:$0xff]
          %v7189 = vld [vmem:[%s9 + $0x58] sm:$0xff]
          %v7190 = vld [vmem:[%s9 + $0x60] sm:$0xff]
          %v7191 = vld [vmem:[%s9 + $0x68] sm:$0xff]
          %v7192 = vld [vmem:[%s9 + $0x70] sm:$0xff]
          %v7193 = vld [vmem:[%s9 + $0x78] sm:$0xff]
          %v7194 = vld [vmem:[%s9 + $0x80] sm:$0xff]
          %v7195 = vld [vmem:[%s9 + $0x88] sm:$0xff]
          %v7196 = vld [vmem:[%s9 + $0x90] sm:$0xff]
          %v7197 = vld [vmem:[%s9 + $0x98] sm:$0xff]
          %v7198 = vld [vmem:[%s9 + $0xa0] sm:$0xff]
          %v7199 = vld [vmem:[%s9 + $0xa8] sm:$0xff]
          %v7200 = vld [vmem:[%s9 + $0xb0] sm:$0xff]
          %v7201 = vld [vmem:[%s9 + $0xb8] sm:$0xff]
          %v7202 = vld [vmem:[%s9 + $0xc0] sm:$0xff]
          %v7203 = vld [vmem:[%s9 + $0xc8] sm:$0xff]
          %v7204 = vld [vmem:[%s9 + $0xd0] sm:$0xff]
          %v7205 = vld [vmem:[%s9 + $0xd8] sm:$0xff]
          %v7206 = vld [vmem:[%s9 + $0xe0] sm:$0xff]
          %v7207 = vld [vmem:[%s9 + $0xe8] sm:$0xff]
          %v7208 = vld [vmem:[%s9 + $0xf0] sm:$0xff]
          %v7209 = vld [vmem:[%s9 + $0xf8] sm:$0xff]
          %v7210 = vld [vmem:[%s10] sm:$0xf]
          %v7212 = vlaneseq
          %v7213 = vshrl.u32 %v7212, 7
          %v7214 = vsub.s32 0, %v7213
          %v7215 = vrot.slane %v7210, %v7214
          %v7216 = vlaneseq
          %v7217 = vshrl.u32 %v7216, 7
          %v7218 = vsub.s32 1, %v7217
          %v7219 = vrot.slane %v7210, %v7218
          %v7220 = vlaneseq
          %v7221 = vshrl.u32 %v7220, 7
          %v7222 = vsub.s32 2, %v7221
          %v7223 = vrot.slane %v7210, %v7222
          %v7224 = vlaneseq
          %v7225 = vshrl.u32 %v7224, 7
          %v7226 = vsub.s32 3, %v7225
          %v7227 = vrot.slane %v7210, %v7226
          %v7264 = vunpack.c.l.b16 %v7178
          %v7265 = vunpack.c.h.b16 %v7178
          %v7266 = vunpack.c.l.b16 %v7179
          %v7267 = vunpack.c.h.b16 %v7179
          %v7268 = vunpack.c.l.b16 %v7180
          %v7269 = vunpack.c.h.b16 %v7180
          %v7270 = vunpack.c.l.b16 %v7181
          %v7271 = vunpack.c.h.b16 %v7181
          %v7272 = vunpack.c.l.b16 %v7182
          %v7273 = vunpack.c.h.b16 %v7182
          %v7274 = vunpack.c.l.b16 %v7183
          %v7275 = vunpack.c.h.b16 %v7183
          %v7276 = vunpack.c.l.b16 %v7184
          %v7277 = vunpack.c.h.b16 %v7184
          %v7278 = vunpack.c.l.b16 %v7185
          %v7279 = vunpack.c.h.b16 %v7185
          %v7280 = vunpack.c.l.b16 %v7186
          %v7281 = vunpack.c.h.b16 %v7186
          %v7282 = vunpack.c.l.b16 %v7187
          %v7283 = vunpack.c.h.b16 %v7187
          %v7284 = vunpack.c.l.b16 %v7188
          %v7285 = vunpack.c.h.b16 %v7188
          %v7286 = vunpack.c.l.b16 %v7189
          %v7287 = vunpack.c.h.b16 %v7189
          %v7288 = vunpack.c.l.b16 %v7190
          %v7289 = vunpack.c.h.b16 %v7190
          %v7290 = vunpack.c.l.b16 %v7191
          %v7291 = vunpack.c.h.b16 %v7191
          %v7292 = vunpack.c.l.b16 %v7192
          %v7293 = vunpack.c.h.b16 %v7192
          %v7294 = vunpack.c.l.b16 %v7193
          %v7295 = vunpack.c.h.b16 %v7193
          %v7296 = vunpack.c.l.b16 %v7194
          %v7297 = vunpack.c.h.b16 %v7194
          %v7298 = vunpack.c.l.b16 %v7195
          %v7299 = vunpack.c.h.b16 %v7195
          %v7300 = vunpack.c.l.b16 %v7196
          %v7301 = vunpack.c.h.b16 %v7196
          %v7302 = vunpack.c.l.b16 %v7197
          %v7303 = vunpack.c.h.b16 %v7197
          %v7304 = vunpack.c.l.b16 %v7198
          %v7305 = vunpack.c.h.b16 %v7198
          %v7306 = vunpack.c.l.b16 %v7199
          %v7307 = vunpack.c.h.b16 %v7199
          %v7308 = vunpack.c.l.b16 %v7200
          %v7309 = vunpack.c.h.b16 %v7200
          %v7310 = vunpack.c.l.b16 %v7201
          %v7311 = vunpack.c.h.b16 %v7201
          %v7312 = vunpack.c.l.b16 %v7202
          %v7313 = vunpack.c.h.b16 %v7202
          %v7314 = vunpack.c.l.b16 %v7203
          %v7315 = vunpack.c.h.b16 %v7203
          %v7316 = vunpack.c.l.b16 %v7204
          %v7317 = vunpack.c.h.b16 %v7204
          %v7318 = vunpack.c.l.b16 %v7205
          %v7319 = vunpack.c.h.b16 %v7205
          %v7320 = vunpack.c.l.b16 %v7206
          %v7321 = vunpack.c.h.b16 %v7206
          %v7322 = vunpack.c.l.b16 %v7207
          %v7323 = vunpack.c.h.b16 %v7207
          %v7324 = vunpack.c.l.b16 %v7208
          %v7325 = vunpack.c.h.b16 %v7208
          %v7326 = vunpack.c.l.b16 %v7209
          %v7327 = vunpack.c.h.b16 %v7209
          %v7328 = vpack.c.b16 %v7268, %v7264
          %v7329 = vpack.c.b16 %v7269, %v7265
          %v7330 = vpack.c.b16 %v7270, %v7266
          %v7331 = vpack.c.b16 %v7271, %v7267
          %v7332 = vpack.c.b16 %v7276, %v7272
          %v7333 = vpack.c.b16 %v7277, %v7273
          %v7334 = vpack.c.b16 %v7278, %v7274
          %v7335 = vpack.c.b16 %v7279, %v7275
          %v7336 = vpack.c.b16 %v7284, %v7280
          %v7337 = vpack.c.b16 %v7285, %v7281
          %v7338 = vpack.c.b16 %v7286, %v7282
          %v7339 = vpack.c.b16 %v7287, %v7283
          %v7340 = vpack.c.b16 %v7292, %v7288
          %v7341 = vpack.c.b16 %v7293, %v7289
          %v7342 = vpack.c.b16 %v7294, %v7290
          %v7343 = vpack.c.b16 %v7295, %v7291
          %v7344 = vpack.c.b16 %v7300, %v7296
          %v7345 = vpack.c.b16 %v7301, %v7297
          %v7346 = vpack.c.b16 %v7302, %v7298
          %v7347 = vpack.c.b16 %v7303, %v7299
          %v7348 = vpack.c.b16 %v7308, %v7304
          %v7349 = vpack.c.b16 %v7309, %v7305
          %v7350 = vpack.c.b16 %v7310, %v7306
          %v7351 = vpack.c.b16 %v7311, %v7307
          %v7352 = vpack.c.b16 %v7316, %v7312
          %v7353 = vpack.c.b16 %v7317, %v7313
          %v7354 = vpack.c.b16 %v7318, %v7314
          %v7355 = vpack.c.b16 %v7319, %v7315
          %v7356 = vpack.c.b16 %v7324, %v7320
          %v7357 = vpack.c.b16 %v7325, %v7321
          %v7358 = vpack.c.b16 %v7326, %v7322
          %v7359 = vpack.c.b16 %v7327, %v7323
          %7392 = vmatprep.subr.bf16.mxu0 %v7329
          %7393 = vmatpush1.bf16.msra.mxu0 %v7328
          %7394 = vmatprep.subr.bf16.mxu0 %v7333
          %7395 = vmatpush1.bf16.msra.mxu0 %v7332
          %7396 = vmatprep.subr.bf16.mxu0 %v7337
          %7397 = vmatpush1.bf16.msra.mxu0 %v7336
          %7398 = vmatprep.subr.bf16.mxu0 %v7341
          %7399 = vmatpush1.bf16.msra.mxu0 %v7340
          %7400 = vmatprep.subr.bf16.mxu0 %v7345
          %7401 = vmatpush1.bf16.msra.mxu0 %v7344
          %7402 = vmatprep.subr.bf16.mxu0 %v7349
          %7403 = vmatpush1.bf16.msra.mxu0 %v7348
          %7404 = vmatprep.subr.bf16.mxu0 %v7353
          %7405 = vmatpush1.bf16.msra.mxu0 %v7352
          %7406 = vmatprep.subr.bf16.mxu0 %v7357
          %7407 = vmatpush1.bf16.msra.mxu0 %v7356
          %7408 = vmatprep.subr.bf16.mxu0 0
          %7409 = vmatpush1.bf16.msra.mxu0 0
          %7410 = vmatprep.subr.bf16.mxu0 0
          %7411 = vmatpush1.bf16.msra.mxu0 0
          %7412 = vmatprep.subr.bf16.mxu0 0
          %7413 = vmatpush1.bf16.msra.mxu0 0
          %7414 = vmatprep.subr.bf16.mxu0 0
          %7415 = vmatpush1.bf16.msra.mxu0 0
          %7416 = vmatprep.subr.bf16.mxu0 0
          %7417 = vmatpush1.bf16.msra.mxu0 0
          %7418 = vmatprep.subr.bf16.mxu0 0
          %7419 = vmatpush1.bf16.msra.mxu0 0
          %7420 = vmatprep.subr.bf16.mxu0 0
          %7421 = vmatpush1.bf16.msra.mxu0 0
          %7422 = vmatprep.subr.bf16.mxu0 0
          %7423 = vmatpush1.bf16.msra.mxu0 0
          %7424 = vmatprep.mubr.bf16.mxu0 0
          %7425 = vmatmul.mubr.bf16.gmra.mrb[0].mxu0 %v7177
          %v7426 = vpop.f32.mrb[0].mxu0
          %v7427 = vadd.f32 %v7215, %v7426
          %v7428 = vpop.f32.mrb[0].mxu0
          %v7429 = vadd.f32 %v7219, %v7428
          %v7430 = vpop.f32.mrb[0].mxu0
          %v7431 = vpop.f32.mrb[0].mxu0
          %7432 = vdwg.mxu0
          %7433 = vmatprep.subr.bf16.mxu0 %v7331
          %7434 = vmatpush1.bf16.msra.mxu0 %v7330
          %7435 = vmatprep.subr.bf16.mxu0 %v7335
          %7436 = vmatpush1.bf16.msra.mxu0 %v7334
          %7437 = vmatprep.subr.bf16.mxu0 %v7339
          %7438 = vmatpush1.bf16.msra.mxu0 %v7338
          %7439 = vmatprep.subr.bf16.mxu0 %v7343
          %7440 = vmatpush1.bf16.msra.mxu0 %v7342
          %7441 = vmatprep.subr.bf16.mxu0 %v7347
          %7442 = vmatpush1.bf16.msra.mxu0 %v7346
          %7443 = vmatprep.subr.bf16.mxu0 %v7351
          %7444 = vmatpush1.bf16.msra.mxu0 %v7350
          %7445 = vmatprep.subr.bf16.mxu0 %v7355
          %7446 = vmatpush1.bf16.msra.mxu0 %v7354
          %7447 = vmatprep.subr.bf16.mxu0 %v7359
          %7448 = vmatpush1.bf16.msra.mxu0 %v7358
          %7449 = vmatprep.subr.bf16.mxu0 0
          %7450 = vmatpush1.bf16.msra.mxu0 0
          %7451 = vmatprep.subr.bf16.mxu0 0
          %7452 = vmatpush1.bf16.msra.mxu0 0
          %7453 = vmatprep.subr.bf16.mxu0 0
          %7454 = vmatpush1.bf16.msra.mxu0 0
          %7455 = vmatprep.subr.bf16.mxu0 0
          %7456 = vmatpush1.bf16.msra.mxu0 0
          %7457 = vmatprep.subr.bf16.mxu0 0
          %7458 = vmatpush1.bf16.msra.mxu0 0
          %7459 = vmatprep.subr.bf16.mxu0 0
          %7460 = vmatpush1.bf16.msra.mxu0 0
          %7461 = vmatprep.subr.bf16.mxu0 0
          %7462 = vmatpush1.bf16.msra.mxu0 0
          %7463 = vmatprep.subr.bf16.mxu0 0
          %7464 = vmatpush1.bf16.msra.mxu0 0
          %7465 = vmatprep.mubr.bf16.mxu0 0
          %7466 = vmatmul.mubr.bf16.gmra.mrb[0].mxu0 %v7177
          %v7467 = vpop.f32.mrb[0].mxu0
          %v7468 = vadd.f32 %v7223, %v7467
          %v7469 = vpop.f32.mrb[0].mxu0
          %v7470 = vadd.f32 %v7227, %v7469
          %v7471 = vpop.f32.mrb[0].mxu0
          %v7472 = vpop.f32.mrb[0].mxu0
          %7473 = vdwg.mxu0
          %7474 = vst [vmem:[#allocation7] sm:$0xff] %v7427
          %7475 = vst [vmem:[#allocation7 + $0x8] sm:$0xff] %v7429
          %7476 = vst [vmem:[#allocation7 + $0x10] sm:$0xff] %v7468
          %7477 = vst [vmem:[#allocation7 + $0x18] sm:$0xff] %v7470
        $region117: #{tpu_custom_call.1} parent=100 // pred_fallthru
          _
        // Predicated region
        $region118: #{tpu_custom_call.1} parent=100 // pred_check
          %p7478 = pneg %p292
        $region119: #{tpu_custom_call.1} parent=100 // pred_check_branch
          %7480 = sbr.rel (%p7478) target = $region121
        $region120: #{tpu_custom_call.1} parent=100 // pred_region
          %s7482 = ssub.s32 512, 512
          %7483 = vsyncadd [#allocation6], %s7482
          %s7484 = smul.addr %s28, 4
          %s7485 = smul.addr %s7484, 128
          %s7486 = scalar_lea.hbm %s11, %s7485
          %s7488 = sshll.u32 [#allocation7], 4
          %s7489 = int_to_ptr.vmem [resolvable:$true] %s7488
          %7491 = dma.vmem_to_hbm [thread:$0]  %s7489, 512, %s7486, [#allocation6]
        $region121: #{tpu_custom_call.1} parent=100 // pred_fallthru
          _
        // Predicated region
        $region122: #{tpu_custom_call.1} parent=100 // pred_check
          %p7492 = pneg %p292
        $region123: #{tpu_custom_call.1} parent=100 // pred_check_branch
          %7494 = sbr.rel (%p7492) target = $region125
        $region124: #{tpu_custom_call.1} parent=100 // pred_region
          %7495 = dma.done [#allocation6], 512
        $region125: #{tpu_custom_call.1} parent=100 // pred_fallthru
          _
      $region101: #{tpu_custom_call.1} parent=5 // pred_fallthru
        _
      %p7496 = scmp.le.s32.totalorder 2, %s19
      // Predicated region
      $region126: #{tpu_custom_call.1} parent=5 // pred_check
        %p7497 = pneg %p7496
      $region127: #{tpu_custom_call.1} parent=5 // pred_check_branch
        %7499 = sbr.rel (%p7497) target = $region129
      $region128: #{tpu_custom_call.1} parent=5 // pred_region
        %s7500 = ssub.s32 %s19, 2
      $region129: #{tpu_custom_call.1} parent=5 // pred_fallthru
        _
    $region6: #{tpu_custom_call.1} parent=1 // loop_footer
      %s23 = sadd.s32 1, %s19
    $region7: #{tpu_custom_call.1} parent=1 // loop_footer_branch
      %18 = sbr.rel target = $region3
    $region8: #{tpu_custom_call.1} parent=1 // loop_exit
      _
    %7501 = vsyncpa [#allocation5], 1
    %s7502 = scalar_lea.sflag [#allocation5], 1
    %7503 = vsyncpa %s7502, 1
    %7504 = vsyncpa [#allocation6], 1
    %s7505 = scalar_lea.sflag [#allocation6], 1
    %7506 = vsyncpa %s7505, 1

</llo_original>
